<compile_context>
chip_gen: v7x
topology: tpu7x:2x2x1
jax: 0.10.0
libtpu: 0.0.40
codegen_flags: <defaults>
</compile_context>

<pallas_src>
import functools

import jax
import jax.numpy as jnp
from jax import lax
from jax.experimental import pallas as pl
from jax.experimental.pallas import tpu as pltpu

BN_EPS = 1e-5
NEG = -1.0e30  # acts as -inf for the maxpool padding / invalid-row sentinel


def _round_up(v, m):
    return ((v + m - 1) // m) * m


# ---------------------------------------------------------------------------
# Fused Inception kernel (one grid step == one batch element)
# ---------------------------------------------------------------------------
def _inception_kernel(xpf_ref, w1_ref, b1_ref, w2_ref, b2_ref,
                      w3_ref, b3_ref, w4_ref, b4_ref, o_ref,
                      s2_ref, s3_ref, tp_ref, *,
                      Lp, Wp, MX, M2, M3, G, Cin,
                      c_out1, c_mid3, c_out3, c_mid5, c_out5, c_proj_pad):
    cdt = w1_ref.dtype                       # MXU operand dtype (bf16 or f32)
    f32 = jnp.float32

    # Validity mask from the appended sentinel channel (1.0 inside the image,
    # NEG on the pad ring / alignment columns). No extra DMA, no int div/mod.
    valid = xpf_ref[MX:MX + Lp, Cin:Cin + 1] > 0.0          # (Lp, 1) bool

    # ---- fused 1x1 stage: [out1 | h2 | h3] in one wide-N MXU matmul --------
    # Zero the pad ring before the matmul so no +-1e30 ever enters the MXU.
    xc = jnp.where(valid, xpf_ref[MX:MX + Lp, 0:Cin], jnp.zeros((), cdt))
    y1 = jnp.dot(xc, w1_ref[...], preferred_element_type=f32) + b1_ref[...]
    o_ref[:, 0:c_out1] = jnp.maximum(y1[:, 0:c_out1], 0.0).astype(o_ref.dtype)

    # ReLU + ring masking stays f32 (v5e-friendly); cast to the MXU operand
    # dtype only when storing into the tap slabs.
    h2 = jnp.where(valid, jnp.maximum(y1[:, c_out1:c_out1 + c_mid3], 0.0), 0.0)
    h3 = jnp.where(
        valid,
        jnp.maximum(y1[:, c_out1 + c_mid3:c_out1 + c_mid3 + c_mid5], 0.0),
        0.0)
    h2 = h2.astype(cdt)
    h3 = h3.astype(cdt)

    # ---- dx-shifted, lane-packed tap slabs ---------------------------------
    # Slab lane-group g holds h shifted by dx = g - r; every dy tap read below
    # is then an aligned (dy - r) * Wp row offset (Wp and the margins are
    # sublane-aligned).  Only the margin rows are re-zeroed each step; they
    # cover every row a tap can read that this step's copies do not write.
    W2 = 3 * c_mid3
    s2_ref[0:M2 + 1, :] = jnp.zeros((M2 + 1, W2), cdt)
    s2_ref[M2 + Lp - 1:M2 + Lp - 1 + (M2 + 1), :] = jnp.zeros((M2 + 1, W2), cdt)
    for g in range(3):
        d = g - 1
        s2_ref[M2 - d:M2 - d + Lp, g * c_mid3:(g + 1) * c_mid3] = h2

    W3 = 5 * c_mid5
    s3_ref[0:M3 + 2, :] = jnp.zeros((M3 + 2, W3), cdt)
    s3_ref[M3 + Lp - 2:M3 + Lp - 2 + (M3 + 2), :] = jnp.zeros((M3 + 2, W3), cdt)
    for g in range(5):
        d = g - 2
        s3_ref[M3 - d:M3 - d + Lp, g * c_mid5:(g + 1) * c_mid5] = h3

    # ---- 3x3 conv: 3 MXU matmuls with K = 3*c_mid3 (taps packed along K) ---
    acc = jnp.dot(s2_ref[M2 - Wp:M2 - Wp + Lp, :], w2_ref[0],
                  preferred_element_type=f32)
    for ky in range(1, 3):
        off = M2 + (ky - 1) * Wp
        acc = acc + jnp.dot(s2_ref[off:off + Lp, :], w2_ref[ky],
                            preferred_element_type=f32)
    o_ref[:, c_out1:c_out1 + c_out3] = jnp.maximum(
        acc + b2_ref[...], 0.0).astype(o_ref.dtype)

    # ---- 5x5 conv: 5 MXU matmuls with K = 5*c_mid5 -------------------------
    acc = jnp.dot(s3_ref[M3 - 2 * Wp:M3 - 2 * Wp + Lp, :], w3_ref[0],
                  preferred_element_type=f32)
    for ky in range(1, 5):
        off = M3 + (ky - 2) * Wp
        acc = acc + jnp.dot(s3_ref[off:off + Lp, :], w3_ref[ky],
                            preferred_element_type=f32)
    o_ref[:, c_out1 + c_out3:c_out1 + c_out3 + c_out5] = jnp.maximum(
        acc + b3_ref[...], 0.0).astype(o_ref.dtype)

    # ---- maxpool(3,1,1): separable dy-max (aligned) then dx-max ------------
    colmax = jnp.maximum(
        jnp.maximum(xpf_ref[MX - Wp:MX - Wp + Lp, 0:Cin],
                    xpf_ref[MX:MX + Lp, 0:Cin]),
        xpf_ref[MX + Wp:MX + Wp + Lp, 0:Cin])
    tp_ref[0:G, :] = jnp.full((G, Cin), NEG, cdt)
    tp_ref[G + Lp:G + Lp + G, :] = jnp.full((G, Cin), NEG, cdt)
    tp_ref[G:G + Lp, :] = colmax
    pooled = jnp.maximum(
        jnp.maximum(tp_ref[G - 1:G - 1 + Lp, :], tp_ref[G:G + Lp, :]),
        tp_ref[G + 1:G + 1 + Lp, :])
    y4 = jnp.dot(pooled, w4_ref[...], preferred_element_type=f32) + b4_ref[...]
    c0 = c_out1 + c_out3 + c_out5
    o_ref[:, c0:c0 + c_proj_pad] = jnp.maximum(y4, 0.0).astype(o_ref.dtype)


# ---------------------------------------------------------------------------
# Wrapper: layout plumbing, BN folding, BlockSpecs
# ---------------------------------------------------------------------------
def _fold_bn(p):
    scale = p["gamma"] / jnp.sqrt(p["var"] + BN_EPS)
    bias = p["beta"] - p["mean"] * scale
    return scale, bias


def inception_forward(params, x_nchw, *, compute_dtype=jnp.bfloat16,
                      out_dtype=jnp.float32):
    """Inception forward, NCHW in / NCHW out (matches the PyTorch module).

    compute_dtype: MXU operand dtype (bf16 default; accumulation and the
    bias+ReLU epilogue stay f32).  Use jnp.float32 for bit-closer numerics.
    """
    x = jnp.transpose(x_nchw, (0, 2, 3, 1)).astype(jnp.float32)   # -> NHWC
    N, H, W, Cin = x.shape

    P = 2                                     # max halo (5x5 conv radius)
    sub = max(8, 32 // jnp.dtype(compute_dtype).itemsize)  # sublane packing
    Hp = H + 2 * P
    Wp = _round_up(W + 2 * P, sub)            # aligned padded row pitch
    Lp = Hp * Wp                              # padded-flat spatial length
    MX = Wp                                   # xpf margin   (pool needs +-Wp)
    M2 = Wp                                   # 3x3 slab margin (+-Wp)
    M3 = 2 * Wp                               # 5x5 slab margin (+-2*Wp)
    G = sub                                   # pool-temp margin
    Ltot_x = Lp + 2 * MX

    # Sentinel channel (1 inside the image) + NEG spatial / alignment / margin
    # padding.  NEG acts as -inf for the maxpool and marks invalid rows.
    xs = jnp.concatenate([x, jnp.ones((N, H, W, 1), jnp.float32)], axis=-1)
    xp = jnp.pad(xs, ((0, 0), (P, P), (P, Wp - W - P), (0, 0)),
                 constant_values=NEG)
    xpf = jnp.pad(xp.reshape(N, Lp, Cin + 1), ((0, 0), (MX, MX), (0, 0)),
                  constant_values=NEG).astype(compute_dtype)

    p1, p2a, p2b = params["b1"][0], params["b2"][0], params["b2"][1]
    p3a, p3b, p4 = params["b3"][0], params["b3"][1], params["b4"][0]
    s1, bi1 = _fold_bn(p1)
    s2a, bi2a = _fold_bn(p2a)
    s2b, bi2b = _fold_bn(p2b)
    s3a, bi3a = _fold_bn(p3a)
    s3b, bi3b = _fold_bn(p3b)
    s4, bi4 = _fold_bn(p4)

    c_out1, c_mid3, c_out3 = (p1["w"].shape[-1], p2a["w"].shape[-1],
                              p2b["w"].shape[-1])
    c_mid5, c_out5, c_proj = (p3a["w"].shape[-1], p3b["w"].shape[-1],
                              p4["w"].shape[-1])
    c_tot = c_out1 + c_out3 + c_out5 + c_proj
    c_tot_pad = _round_up(c_tot, 128)         # lane-dense output block
    c_proj_pad = c_proj + (c_tot_pad - c_tot)

    # Fold BN scale into the conv weights host-side; biases stay f32.
    w1 = jnp.concatenate([p1["w"][0, 0] * s1, p2a["w"][0, 0] * s2a,
                          p3a["w"][0, 0] * s3a], axis=-1).astype(compute_dtype)
    b1 = jnp.concatenate([bi1, bi2a, bi3a])[None, :].astype(jnp.float32)
    # Tap-packed kxk weights: (ky, kx*cin, cout) matches the slab lane layout.
    w2 = (p2b["w"] * s2b).reshape(3, 3 * c_mid3, c_out3).astype(compute_dtype)
    b2 = bi2b[None, :].astype(jnp.float32)
    w3 = (p3b["w"] * s3b).reshape(5, 5 * c_mid5, c_out5).astype(compute_dtype)
    b3 = bi3b[None, :].astype(jnp.float32)
    w4 = jnp.pad(p4["w"][0, 0] * s4,
                 ((0, 0), (0, c_proj_pad - c_proj))).astype(compute_dtype)
    b4 = jnp.pad(bi4, (0, c_proj_pad - c_proj))[None, :].astype(jnp.float32)

    # Explicit scoped-VMEM budget (v5e default is only 16 MiB); cap keeps it
    # legal on v7x's 64 MiB physical VMEM.
    bpe = jnp.dtype(compute_dtype).itemsize
    obe = jnp.dtype(out_dtype).itemsize
    step_bytes = (2 * Ltot_x * (Cin + 1) * bpe             # xpf (double buf)
                  + 2 * Lp * c_tot_pad * obe               # output block
                  + (Lp + 2 * M2) * 3 * c_mid3 * bpe       # s2 slab
                  + (Lp + 2 * M3) * 5 * c_mid5 * bpe       # s3 slab
                  + (Lp + 2 * G) * Cin * bpe               # pool temp
                  + (w1.size + w2.size + w3.size + w4.size) * bpe
                  + 4 * Lp * max(c_out3, c_out5, 128) * 4)  # f32 acc temps
    vmem_limit = int(min(max(2 * step_bytes, 32 * 1024 * 1024),
                         56 * 1024 * 1024))

    kern = functools.partial(
        _inception_kernel, Lp=Lp, Wp=Wp, MX=MX, M2=M2, M3=M3, G=G, Cin=Cin,
        c_out1=c_out1, c_mid3=c_mid3, c_out3=c_out3, c_mid5=c_mid5,
        c_out5=c_out5, c_proj_pad=c_proj_pad)

    out_pf = pl.pallas_call(
        kern,
        out_shape=jax.ShapeDtypeStruct((N, Lp, c_tot_pad), out_dtype),
        grid=(N,),
        in_specs=[
            pl.BlockSpec((None, Ltot_x, Cin + 1), lambda n: (n, 0, 0)),  # xpf
            pl.BlockSpec(w1.shape, lambda n: (0, 0)),
            pl.BlockSpec(b1.shape, lambda n: (0, 0)),
            pl.BlockSpec(w2.shape, lambda n: (0, 0, 0)),
            pl.BlockSpec(b2.shape, lambda n: (0, 0)),
            pl.BlockSpec(w3.shape, lambda n: (0, 0, 0)),
            pl.BlockSpec(b3.shape, lambda n: (0, 0)),
            pl.BlockSpec(w4.shape, lambda n: (0, 0)),
            pl.BlockSpec(b4.shape, lambda n: (0, 0)),
        ],
        # Fused branch concat: one lane-dense output block per image.
        out_specs=pl.BlockSpec((None, Lp, c_tot_pad), lambda n: (n, 0, 0)),
        scratch_shapes=[
            pltpu.VMEM((Lp + 2 * M2, 3 * c_mid3), compute_dtype),  # s2 slab
            pltpu.VMEM((Lp + 2 * M3, 5 * c_mid5), compute_dtype),  # s3 slab
            pltpu.VMEM((Lp + 2 * G, Cin), compute_dtype),          # pool temp
        ],
        compiler_params=pltpu.CompilerParams(
            dimension_semantics=("parallel",),
            vmem_limit_bytes=vmem_limit),
    )(xpf, w1, b1, w2, b2, w3, b3, w4, b4)

    # Strip the pad ring / alignment columns / padded channels; back to NCHW.
    out = out_pf.reshape(N, Hp, Wp, c_tot_pad)[:, P:P + H, P:P + W, :c_tot]
    return jnp.transpose(out, (0, 3, 1, 2))


# ---------------------------------------------------------------------------
# Parameter init (deterministic, synthetic)
# ---------------------------------------------------------------------------
def _basic_conv_params(key, cin, cout, k):
    kw, kg, kb, km, kv = jax.random.split(key, 5)
    fan_in = k * k * cin
    return {
        "w": jax.random.normal(kw, (k, k, cin, cout), jnp.float32)
             / jnp.sqrt(float(fan_in)),
        "gamma": 1.0 + 0.1 * jax.random.normal(kg, (cout,), jnp.float32),
        "beta": 0.1 * jax.random.normal(kb, (cout,), jnp.float32),
        "mean": 0.1 * jax.random.normal(km, (cout,), jnp.float32),
        "var": 0.5 + jnp.abs(jax.random.normal(kv, (cout,), jnp.float32)),
    }


def init_inception_params(key, in_ch, out1, mid3, out3, mid5, out5, proj):
    ks = jax.random.split(key, 6)
    return {
        "b1": [_basic_conv_params(ks[0], in_ch, out1, 1)],
        "b2": [_basic_conv_params(ks[1], in_ch, mid3, 1),
               _basic_conv_params(ks[2], mid3, out3, 3)],
        "b3": [_basic_conv_params(ks[3], in_ch, mid5, 1),
               _basic_conv_params(ks[4], mid5, out5, 5)],
        "b4": [_basic_conv_params(ks[5], in_ch, proj, 1)],
    }


# ---------------------------------------------------------------------------
# Pure-JAX reference (correctness check only)
# ---------------------------------------------------------------------------
def _ref_basic_conv(x_nhwc, p, pad):
    y = lax.conv_general_dilated(
        x_nhwc, p["w"], window_strides=(1, 1),
        padding=[(pad, pad), (pad, pad)],
        dimension_numbers=("NHWC", "HWIO", "NHWC"))
    scale = p["gamma"] / jnp.sqrt(p["var"] + BN_EPS)
    y = y * scale + (p["beta"] - p["mean"] * scale)
    return jnp.maximum(y, 0.0)


def _ref_maxpool(x_nhwc):
    return lax.reduce_window(
        x_nhwc, -jnp.inf, lax.max, (1, 3, 3, 1), (1, 1, 1, 1),
        ((0, 0), (1, 1), (1, 1), (0, 0)))


def inception_reference(params, x_nchw):
    x = jnp.transpose(x_nchw, (0, 2, 3, 1)).astype(jnp.float32)
    o1 = _ref_basic_conv(x, params["b1"][0], 0)
    o2 = _ref_basic_conv(_ref_basic_conv(x, params["b2"][0], 0),
                         params["b2"][1], 1)
    o3 = _ref_basic_conv(_ref_basic_conv(x, params["b3"][0], 0),
                         params["b3"][1], 2)
    o4 = _ref_basic_conv(_ref_maxpool(x), params["b4"][0], 0)
    return jnp.transpose(jnp.concatenate([o1, o2, o3, o4], axis=-1),
                         (0, 3, 1, 2))


# ---------------------------------------------------------------------------
if __name__ == "__main__":
    key = jax.random.PRNGKey(0)
    k_x, k_p = jax.random.split(key)

    N, Cin, H, W = 2, 4, 16, 16
    out_ch1x1, mid_ch3x3, out_ch3x3 = 8, 4, 8
    mid_ch5x5, out_ch5x5, out_proj = 4, 8, 8

    x = jax.random.normal(k_x, (N, Cin, H, W), jnp.float32)
    params = init_inception_params(k_p, Cin, out_ch1x1, mid_ch3x3, out_ch3x3,
                                   mid_ch5x5, out_ch5x5, out_proj)

    expected_ch = out_ch1x1 + out_ch3x3 + out_ch5x5 + out_proj
    ref = jax.block_until_ready(inception_reference(params, x))

    # f32-operand path: tight structural/numerical check.
    out_f32 = jax.block_until_ready(
        inception_forward(params, x, compute_dtype=jnp.float32))
    assert out_f32.shape == (N, expected_ch, H, W), out_f32.shape
    assert jnp.allclose(out_f32, ref, atol=5e-4, rtol=5e-4), (
        float(jnp.max(jnp.abs(out_f32 - ref))))

    # bf16-operand default path (f32 accumulate + f32 epilogue): loose check.
    out_bf16 = jax.block_until_ready(inception_forward(params, x))
    assert out_bf16.shape == (N, expected_ch, H, W), out_bf16.shape
    assert jnp.allclose(out_bf16, ref, atol=1e-1, rtol=5e-2), (
        float(jnp.max(jnp.abs(out_bf16 - ref))))

    print("KERNEL_OK")
</pallas_src>

<mosaic_0001>
module attributes {stable_mosaic.version = 11 : i64} {
  func.func @_inception_kernel(%arg0: i32, %arg1: memref<1x528x5xf32, #tpu.memory_space<vmem>>, %arg2: memref<4x16xf32, #tpu.memory_space<vmem>>, %arg3: memref<1x16xf32, #tpu.memory_space<vmem>>, %arg4: memref<3x12x8xf32, #tpu.memory_space<vmem>>, %arg5: memref<1x8xf32, #tpu.memory_space<vmem>>, %arg6: memref<5x20x8xf32, #tpu.memory_space<vmem>>, %arg7: memref<1x8xf32, #tpu.memory_space<vmem>>, %arg8: memref<4x104xf32, #tpu.memory_space<vmem>>, %arg9: memref<1x104xf32, #tpu.memory_space<vmem>>, %arg10: memref<1x480x128xf32, #tpu.memory_space<vmem>>, %arg11: memref<528x12xf32, #tpu.memory_space<vmem>>, %arg12: memref<576x20xf32, #tpu.memory_space<vmem>>, %arg13: memref<496x4xf32, #tpu.memory_space<vmem>>) attributes {dimension_semantics = [#tpu.dimension_semantics<parallel>], iteration_bounds = array<i64: 2>, scalar_prefetch = 0 : i64, scratch_operands = 3 : i64, tpu.core_type = #tpu.core_type<tc>, window_params = [{transform_indices = @transform_0, window_bounds = array<i64: 1, 528, 5>}, {pipeline_mode = #tpu.pipeline_mode<synchronous>, transform_indices = @transform_1, window_bounds = array<i64: 4, 16>}, {pipeline_mode = #tpu.pipeline_mode<synchronous>, transform_indices = @transform_2, window_bounds = array<i64: 1, 16>}, {pipeline_mode = #tpu.pipeline_mode<synchronous>, transform_indices = @transform_3, window_bounds = array<i64: 3, 12, 8>}, {pipeline_mode = #tpu.pipeline_mode<synchronous>, transform_indices = @transform_4, window_bounds = array<i64: 1, 8>}, {pipeline_mode = #tpu.pipeline_mode<synchronous>, transform_indices = @transform_5, window_bounds = array<i64: 5, 20, 8>}, {pipeline_mode = #tpu.pipeline_mode<synchronous>, transform_indices = @transform_6, window_bounds = array<i64: 1, 8>}, {pipeline_mode = #tpu.pipeline_mode<synchronous>, transform_indices = @transform_7, window_bounds = array<i64: 4, 104>}, {pipeline_mode = #tpu.pipeline_mode<synchronous>, transform_indices = @transform_8, window_bounds = array<i64: 1, 104>}, {transform_indices = @transform_9, window_bounds = array<i64: 1, 480, 128>}]} {
    %c0 = arith.constant 0 : index
    %c24 = arith.constant 24 : index
    %c4 = arith.constant 4 : index
    %0 = vector.load %arg1[%c0, %c24, %c4] : memref<1x528x5xf32, #tpu.memory_space<vmem>>, vector<1x480x1xf32>
    %1 = vector.shape_cast %0 : vector<1x480x1xf32> to vector<480x1xf32>
    %cst = arith.constant 0.000000e+00 : f32
    %2 = vector.broadcast %cst : f32 to vector<480x1xf32>
    %3 = arith.cmpf ogt, %1, %2 : vector<480x1xf32>
    %c0_0 = arith.constant 0 : index
    %c24_1 = arith.constant 24 : index
    %c0_2 = arith.constant 0 : index
    %4 = vector.load %arg1[%c0_0, %c24_1, %c0_2] : memref<1x528x5xf32, #tpu.memory_space<vmem>>, vector<1x480x4xf32>
    %5 = vector.shape_cast %4 : vector<1x480x4xf32> to vector<480x4xf32>
    %cst_3 = arith.constant 0.000000e+00 : f32
    %6 = vector.shape_cast %3 : vector<480x1xi1> to vector<480x1xi1>
    %7 = vector.broadcast %6 : vector<480x1xi1> to vector<480x4xi1>
    %8 = vector.broadcast %cst_3 : f32 to vector<480x4xf32>
    %9 = arith.select %7, %5, %8 : vector<480x4xi1>, vector<480x4xf32>
    %c0_4 = arith.constant 0 : index
    %c0_5 = arith.constant 0 : index
    %10 = vector.load %arg2[%c0_4, %c0_5] : memref<4x16xf32, #tpu.memory_space<vmem>>, vector<4x16xf32>
    %cst_6 = arith.constant dense<0.000000e+00> : vector<480x16xf32>
    %11 = tpu.matmul %9, %10, %cst_6 {dimension_numbers = #tpu.dot_dimension_numbers<[1], [0], [0], [1], [0, 0, 1, 1], [], []>} : vector<480x4xf32>, vector<4x16xf32>, vector<480x16xf32> -> vector<480x16xf32>
    %c0_7 = arith.constant 0 : index
    %c0_8 = arith.constant 0 : index
    %12 = vector.load %arg3[%c0_7, %c0_8] : memref<1x16xf32, #tpu.memory_space<vmem>>, vector<1x16xf32>
    %13 = vector.broadcast %12 : vector<1x16xf32> to vector<480x16xf32>
    %14 = arith.addf %11, %13 : vector<480x16xf32>
    %15 = vector.extract_strided_slice %14 {offsets = [0, 0], sizes = [480, 8], strides = [1, 1]} : vector<480x16xf32> to vector<480x8xf32>
    %cst_9 = arith.constant 0.000000e+00 : f32
    %16 = vector.broadcast %cst_9 : f32 to vector<480x8xf32>
    %17 = arith.maximumf %15, %16 : vector<480x8xf32>
    %c0_10 = arith.constant 0 : index
    %c0_11 = arith.constant 0 : index
    %c0_12 = arith.constant 0 : index
    %18 = vector.load %arg10[%c0_10, %c0_11, %c0_12] : memref<1x480x128xf32, #tpu.memory_space<vmem>>, vector<1x480x8xf32>
    %19 = vector.shape_cast %18 : vector<1x480x8xf32> to vector<480x8xf32>
    %20 = vector.shape_cast %17 : vector<480x8xf32> to vector<1x480x8xf32>
    tpu.vector_store %arg10[%c0_10, %c0_11, %c0_12], %20 {strides = array<i32>} : memref<1x480x128xf32, #tpu.memory_space<vmem>>, vector<1x480x8xf32>,
    %21 = vector.extract_strided_slice %14 {offsets = [0, 8], sizes = [480, 4], strides = [1, 1]} : vector<480x16xf32> to vector<480x4xf32>
    %cst_13 = arith.constant 0.000000e+00 : f32
    %22 = vector.broadcast %cst_13 : f32 to vector<480x4xf32>
    %23 = arith.maximumf %21, %22 : vector<480x4xf32>
    %cst_14 = arith.constant 0.000000e+00 : f32
    %24 = vector.shape_cast %3 : vector<480x1xi1> to vector<480x1xi1>
    %25 = vector.broadcast %24 : vector<480x1xi1> to vector<480x4xi1>
    %26 = vector.broadcast %cst_14 : f32 to vector<480x4xf32>
    %27 = arith.select %25, %23, %26 : vector<480x4xi1>, vector<480x4xf32>
    %28 = vector.extract_strided_slice %14 {offsets = [0, 12], sizes = [480, 4], strides = [1, 1]} : vector<480x16xf32> to vector<480x4xf32>
    %cst_15 = arith.constant 0.000000e+00 : f32
    %29 = vector.broadcast %cst_15 : f32 to vector<480x4xf32>
    %30 = arith.maximumf %28, %29 : vector<480x4xf32>
    %cst_16 = arith.constant 0.000000e+00 : f32
    %31 = vector.shape_cast %3 : vector<480x1xi1> to vector<480x1xi1>
    %32 = vector.broadcast %31 : vector<480x1xi1> to vector<480x4xi1>
    %33 = vector.broadcast %cst_16 : f32 to vector<480x4xf32>
    %34 = arith.select %32, %30, %33 : vector<480x4xi1>, vector<480x4xf32>
    %cst_17 = arith.constant 0.000000e+00 : f32
    %35 = vector.broadcast %cst_17 : f32 to vector<25x12xf32>
    %c0_18 = arith.constant 0 : index
    %c0_19 = arith.constant 0 : index
    %36 = vector.load %arg11[%c0_18, %c0_19] : memref<528x12xf32, #tpu.memory_space<vmem>>, vector<25x12xf32>
    tpu.vector_store %arg11[%c0_18, %c0_19], %35 {strides = array<i32>} : memref<528x12xf32, #tpu.memory_space<vmem>>, vector<25x12xf32>,
    %cst_20 = arith.constant 0.000000e+00 : f32
    %37 = vector.broadcast %cst_20 : f32 to vector<25x12xf32>
    %c503 = arith.constant 503 : index
    %c0_21 = arith.constant 0 : index
    %38 = vector.load %arg11[%c503, %c0_21] : memref<528x12xf32, #tpu.memory_space<vmem>>, vector<25x12xf32>
    tpu.vector_store %arg11[%c503, %c0_21], %37 {strides = array<i32>} : memref<528x12xf32, #tpu.memory_space<vmem>>, vector<25x12xf32>,
    %c25 = arith.constant 25 : index
    %c0_22 = arith.constant 0 : index
    %39 = vector.load %arg11[%c25, %c0_22] : memref<528x12xf32, #tpu.memory_space<vmem>>, vector<480x4xf32>
    tpu.vector_store %arg11[%c25, %c0_22], %27 {strides = array<i32>} : memref<528x12xf32, #tpu.memory_space<vmem>>, vector<480x4xf32>,
    %c24_23 = arith.constant 24 : index
    %c4_24 = arith.constant 4 : index
    %40 = vector.load %arg11[%c24_23, %c4_24] : memref<528x12xf32, #tpu.memory_space<vmem>>, vector<480x4xf32>
    tpu.vector_store %arg11[%c24_23, %c4_24], %27 {strides = array<i32>} : memref<528x12xf32, #tpu.memory_space<vmem>>, vector<480x4xf32>,
    %c23 = arith.constant 23 : index
    %c8 = arith.constant 8 : index
    %41 = vector.load %arg11[%c23, %c8] : memref<528x12xf32, #tpu.memory_space<vmem>>, vector<480x4xf32>
    tpu.vector_store %arg11[%c23, %c8], %27 {strides = array<i32>} : memref<528x12xf32, #tpu.memory_space<vmem>>, vector<480x4xf32>,
    %cst_25 = arith.constant 0.000000e+00 : f32
    %42 = vector.broadcast %cst_25 : f32 to vector<50x20xf32>
    %c0_26 = arith.constant 0 : index
    %c0_27 = arith.constant 0 : index
    %43 = vector.load %arg12[%c0_26, %c0_27] : memref<576x20xf32, #tpu.memory_space<vmem>>, vector<50x20xf32>
    tpu.vector_store %arg12[%c0_26, %c0_27], %42 {strides = array<i32>} : memref<576x20xf32, #tpu.memory_space<vmem>>, vector<50x20xf32>,
    %cst_28 = arith.constant 0.000000e+00 : f32
    %44 = vector.broadcast %cst_28 : f32 to vector<50x20xf32>
    %c526 = arith.constant 526 : index
    %c0_29 = arith.constant 0 : index
    %45 = vector.load %arg12[%c526, %c0_29] : memref<576x20xf32, #tpu.memory_space<vmem>>, vector<50x20xf32>
    tpu.vector_store %arg12[%c526, %c0_29], %44 {strides = array<i32>} : memref<576x20xf32, #tpu.memory_space<vmem>>, vector<50x20xf32>,
    %c50 = arith.constant 50 : index
    %c0_30 = arith.constant 0 : index
    %46 = vector.load %arg12[%c50, %c0_30] : memref<576x20xf32, #tpu.memory_space<vmem>>, vector<480x4xf32>
    tpu.vector_store %arg12[%c50, %c0_30], %34 {strides = array<i32>} : memref<576x20xf32, #tpu.memory_space<vmem>>, vector<480x4xf32>,
    %c49 = arith.constant 49 : index
    %c4_31 = arith.constant 4 : index
    %47 = vector.load %arg12[%c49, %c4_31] : memref<576x20xf32, #tpu.memory_space<vmem>>, vector<480x4xf32>
    tpu.vector_store %arg12[%c49, %c4_31], %34 {strides = array<i32>} : memref<576x20xf32, #tpu.memory_space<vmem>>, vector<480x4xf32>,
    %c48 = arith.constant 48 : index
    %c8_32 = arith.constant 8 : index
    %48 = vector.load %arg12[%c48, %c8_32] : memref<576x20xf32, #tpu.memory_space<vmem>>, vector<480x4xf32>
    tpu.vector_store %arg12[%c48, %c8_32], %34 {strides = array<i32>} : memref<576x20xf32, #tpu.memory_space<vmem>>, vector<480x4xf32>,
    %c47 = arith.constant 47 : index
    %c12 = arith.constant 12 : index
    %49 = vector.load %arg12[%c47, %c12] : memref<576x20xf32, #tpu.memory_space<vmem>>, vector<480x4xf32>
    tpu.vector_store %arg12[%c47, %c12], %34 {strides = array<i32>} : memref<576x20xf32, #tpu.memory_space<vmem>>, vector<480x4xf32>,
    %c46 = arith.constant 46 : index
    %c16 = arith.constant 16 : index
    %50 = vector.load %arg12[%c46, %c16] : memref<576x20xf32, #tpu.memory_space<vmem>>, vector<480x4xf32>
    tpu.vector_store %arg12[%c46, %c16], %34 {strides = array<i32>} : memref<576x20xf32, #tpu.memory_space<vmem>>, vector<480x4xf32>,
    %c0_33 = arith.constant 0 : index
    %c0_34 = arith.constant 0 : index
    %51 = vector.load %arg11[%c0_33, %c0_34] : memref<528x12xf32, #tpu.memory_space<vmem>>, vector<480x12xf32>
    %c0_35 = arith.constant 0 : index
    %c0_36 = arith.constant 0 : index
    %c0_37 = arith.constant 0 : index
    %52 = vector.load %arg4[%c0_35, %c0_36, %c0_37] : memref<3x12x8xf32, #tpu.memory_space<vmem>>, vector<1x12x8xf32>
    %53 = vector.shape_cast %52 : vector<1x12x8xf32> to vector<12x8xf32>
    %cst_38 = arith.constant dense<0.000000e+00> : vector<480x8xf32>
    %54 = tpu.matmul %51, %53, %cst_38 {dimension_numbers = #tpu.dot_dimension_numbers<[1], [0], [0], [1], [0, 0, 1, 1], [], []>} : vector<480x12xf32>, vector<12x8xf32>, vector<480x8xf32> -> vector<480x8xf32>
    %c24_39 = arith.constant 24 : index
    %c0_40 = arith.constant 0 : index
    %55 = vector.load %arg11[%c24_39, %c0_40] : memref<528x12xf32, #tpu.memory_space<vmem>>, vector<480x12xf32>
    %c1 = arith.constant 1 : index
    %c0_41 = arith.constant 0 : index
    %c0_42 = arith.constant 0 : index
    %56 = vector.load %arg4[%c1, %c0_41, %c0_42] : memref<3x12x8xf32, #tpu.memory_space<vmem>>, vector<1x12x8xf32>
    %57 = vector.shape_cast %56 : vector<1x12x8xf32> to vector<12x8xf32>
    %cst_43 = arith.constant dense<0.000000e+00> : vector<480x8xf32>
    %58 = tpu.matmul %55, %57, %cst_43 {dimension_numbers = #tpu.dot_dimension_numbers<[1], [0], [0], [1], [0, 0, 1, 1], [], []>} : vector<480x12xf32>, vector<12x8xf32>, vector<480x8xf32> -> vector<480x8xf32>
    %59 = arith.addf %54, %58 : vector<480x8xf32>
    %c48_44 = arith.constant 48 : index
    %c0_45 = arith.constant 0 : index
    %60 = vector.load %arg11[%c48_44, %c0_45] : memref<528x12xf32, #tpu.memory_space<vmem>>, vector<480x12xf32>
    %c2 = arith.constant 2 : index
    %c0_46 = arith.constant 0 : index
    %c0_47 = arith.constant 0 : index
    %61 = vector.load %arg4[%c2, %c0_46, %c0_47] : memref<3x12x8xf32, #tpu.memory_space<vmem>>, vector<1x12x8xf32>
    %62 = vector.shape_cast %61 : vector<1x12x8xf32> to vector<12x8xf32>
    %cst_48 = arith.constant dense<0.000000e+00> : vector<480x8xf32>
    %63 = tpu.matmul %60, %62, %cst_48 {dimension_numbers = #tpu.dot_dimension_numbers<[1], [0], [0], [1], [0, 0, 1, 1], [], []>} : vector<480x12xf32>, vector<12x8xf32>, vector<480x8xf32> -> vector<480x8xf32>
    %64 = arith.addf %59, %63 : vector<480x8xf32>
    %c0_49 = arith.constant 0 : index
    %c0_50 = arith.constant 0 : index
    %65 = vector.load %arg5[%c0_49, %c0_50] : memref<1x8xf32, #tpu.memory_space<vmem>>, vector<1x8xf32>
    %66 = vector.broadcast %65 : vector<1x8xf32> to vector<480x8xf32>
    %67 = arith.addf %64, %66 : vector<480x8xf32>
    %cst_51 = arith.constant 0.000000e+00 : f32
    %68 = vector.broadcast %cst_51 : f32 to vector<480x8xf32>
    %69 = arith.maximumf %67, %68 : vector<480x8xf32>
    %c0_52 = arith.constant 0 : index
    %c0_53 = arith.constant 0 : index
    %c8_54 = arith.constant 8 : index
    %70 = vector.load %arg10[%c0_52, %c0_53, %c8_54] : memref<1x480x128xf32, #tpu.memory_space<vmem>>, vector<1x480x8xf32>
    %71 = vector.shape_cast %70 : vector<1x480x8xf32> to vector<480x8xf32>
    %72 = vector.shape_cast %69 : vector<480x8xf32> to vector<1x480x8xf32>
    tpu.vector_store %arg10[%c0_52, %c0_53, %c8_54], %72 {strides = array<i32>} : memref<1x480x128xf32, #tpu.memory_space<vmem>>, vector<1x480x8xf32>,
    %c0_55 = arith.constant 0 : index
    %c0_56 = arith.constant 0 : index
    %73 = vector.load %arg12[%c0_55, %c0_56] : memref<576x20xf32, #tpu.memory_space<vmem>>, vector<480x20xf32>
    %c0_57 = arith.constant 0 : index
    %c0_58 = arith.constant 0 : index
    %c0_59 = arith.constant 0 : index
    %74 = vector.load %arg6[%c0_57, %c0_58, %c0_59] : memref<5x20x8xf32, #tpu.memory_space<vmem>>, vector<1x20x8xf32>
    %75 = vector.shape_cast %74 : vector<1x20x8xf32> to vector<20x8xf32>
    %cst_60 = arith.constant dense<0.000000e+00> : vector<480x8xf32>
    %76 = tpu.matmul %73, %75, %cst_60 {dimension_numbers = #tpu.dot_dimension_numbers<[1], [0], [0], [1], [0, 0, 1, 1], [], []>} : vector<480x20xf32>, vector<20x8xf32>, vector<480x8xf32> -> vector<480x8xf32>
    %c24_61 = arith.constant 24 : index
    %c0_62 = arith.constant 0 : index
    %77 = vector.load %arg12[%c24_61, %c0_62] : memref<576x20xf32, #tpu.memory_space<vmem>>, vector<480x20xf32>
    %c1_63 = arith.constant 1 : index
    %c0_64 = arith.constant 0 : index
    %c0_65 = arith.constant 0 : index
    %78 = vector.load %arg6[%c1_63, %c0_64, %c0_65] : memref<5x20x8xf32, #tpu.memory_space<vmem>>, vector<1x20x8xf32>
    %79 = vector.shape_cast %78 : vector<1x20x8xf32> to vector<20x8xf32>
    %cst_66 = arith.constant dense<0.000000e+00> : vector<480x8xf32>
    %80 = tpu.matmul %77, %79, %cst_66 {dimension_numbers = #tpu.dot_dimension_numbers<[1], [0], [0], [1], [0, 0, 1, 1], [], []>} : vector<480x20xf32>, vector<20x8xf32>, vector<480x8xf32> -> vector<480x8xf32>
    %81 = arith.addf %76, %80 : vector<480x8xf32>
    %c48_67 = arith.constant 48 : index
    %c0_68 = arith.constant 0 : index
    %82 = vector.load %arg12[%c48_67, %c0_68] : memref<576x20xf32, #tpu.memory_space<vmem>>, vector<480x20xf32>
    %c2_69 = arith.constant 2 : index
    %c0_70 = arith.constant 0 : index
    %c0_71 = arith.constant 0 : index
    %83 = vector.load %arg6[%c2_69, %c0_70, %c0_71] : memref<5x20x8xf32, #tpu.memory_space<vmem>>, vector<1x20x8xf32>
    %84 = vector.shape_cast %83 : vector<1x20x8xf32> to vector<20x8xf32>
    %cst_72 = arith.constant dense<0.000000e+00> : vector<480x8xf32>
    %85 = tpu.matmul %82, %84, %cst_72 {dimension_numbers = #tpu.dot_dimension_numbers<[1], [0], [0], [1], [0, 0, 1, 1], [], []>} : vector<480x20xf32>, vector<20x8xf32>, vector<480x8xf32> -> vector<480x8xf32>
    %86 = arith.addf %81, %85 : vector<480x8xf32>
    %c72 = arith.constant 72 : index
    %c0_73 = arith.constant 0 : index
    %87 = vector.load %arg12[%c72, %c0_73] : memref<576x20xf32, #tpu.memory_space<vmem>>, vector<480x20xf32>
    %c3 = arith.constant 3 : index
    %c0_74 = arith.constant 0 : index
    %c0_75 = arith.constant 0 : index
    %88 = vector.load %arg6[%c3, %c0_74, %c0_75] : memref<5x20x8xf32, #tpu.memory_space<vmem>>, vector<1x20x8xf32>
    %89 = vector.shape_cast %88 : vector<1x20x8xf32> to vector<20x8xf32>
    %cst_76 = arith.constant dense<0.000000e+00> : vector<480x8xf32>
    %90 = tpu.matmul %87, %89, %cst_76 {dimension_numbers = #tpu.dot_dimension_numbers<[1], [0], [0], [1], [0, 0, 1, 1], [], []>} : vector<480x20xf32>, vector<20x8xf32>, vector<480x8xf32> -> vector<480x8xf32>
    %91 = arith.addf %86, %90 : vector<480x8xf32>
    %c96 = arith.constant 96 : index
    %c0_77 = arith.constant 0 : index
    %92 = vector.load %arg12[%c96, %c0_77] : memref<576x20xf32, #tpu.memory_space<vmem>>, vector<480x20xf32>
    %c4_78 = arith.constant 4 : index
    %c0_79 = arith.constant 0 : index
    %c0_80 = arith.constant 0 : index
    %93 = vector.load %arg6[%c4_78, %c0_79, %c0_80] : memref<5x20x8xf32, #tpu.memory_space<vmem>>, vector<1x20x8xf32>
    %94 = vector.shape_cast %93 : vector<1x20x8xf32> to vector<20x8xf32>
    %cst_81 = arith.constant dense<0.000000e+00> : vector<480x8xf32>
    %95 = tpu.matmul %92, %94, %cst_81 {dimension_numbers = #tpu.dot_dimension_numbers<[1], [0], [0], [1], [0, 0, 1, 1], [], []>} : vector<480x20xf32>, vector<20x8xf32>, vector<480x8xf32> -> vector<480x8xf32>
    %96 = arith.addf %91, %95 : vector<480x8xf32>
    %c0_82 = arith.constant 0 : index
    %c0_83 = arith.constant 0 : index
    %97 = vector.load %arg7[%c0_82, %c0_83] : memref<1x8xf32, #tpu.memory_space<vmem>>, vector<1x8xf32>
    %98 = vector.broadcast %97 : vector<1x8xf32> to vector<480x8xf32>
    %99 = arith.addf %96, %98 : vector<480x8xf32>
    %cst_84 = arith.constant 0.000000e+00 : f32
    %100 = vector.broadcast %cst_84 : f32 to vector<480x8xf32>
    %101 = arith.maximumf %99, %100 : vector<480x8xf32>
    %c0_85 = arith.constant 0 : index
    %c0_86 = arith.constant 0 : index
    %c16_87 = arith.constant 16 : index
    %102 = vector.load %arg10[%c0_85, %c0_86, %c16_87] : memref<1x480x128xf32, #tpu.memory_space<vmem>>, vector<1x480x8xf32>
    %103 = vector.shape_cast %102 : vector<1x480x8xf32> to vector<480x8xf32>
    %104 = vector.shape_cast %101 : vector<480x8xf32> to vector<1x480x8xf32>
    tpu.vector_store %arg10[%c0_85, %c0_86, %c16_87], %104 {strides = array<i32>} : memref<1x480x128xf32, #tpu.memory_space<vmem>>, vector<1x480x8xf32>,
    %c0_88 = arith.constant 0 : index
    %c0_89 = arith.constant 0 : index
    %c0_90 = arith.constant 0 : index
    %105 = vector.load %arg1[%c0_88, %c0_89, %c0_90] : memref<1x528x5xf32, #tpu.memory_space<vmem>>, vector<1x480x4xf32>
    %106 = vector.shape_cast %105 : vector<1x480x4xf32> to vector<480x4xf32>
    %c0_91 = arith.constant 0 : index
    %c24_92 = arith.constant 24 : index
    %c0_93 = arith.constant 0 : index
    %107 = vector.load %arg1[%c0_91, %c24_92, %c0_93] : memref<1x528x5xf32, #tpu.memory_space<vmem>>, vector<1x480x4xf32>
    %108 = vector.shape_cast %107 : vector<1x480x4xf32> to vector<480x4xf32>
    %109 = arith.maximumf %106, %108 : vector<480x4xf32>
    %c0_94 = arith.constant 0 : index
    %c48_95 = arith.constant 48 : index
    %c0_96 = arith.constant 0 : index
    %110 = vector.load %arg1[%c0_94, %c48_95, %c0_96] : memref<1x528x5xf32, #tpu.memory_space<vmem>>, vector<1x480x4xf32>
    %111 = vector.shape_cast %110 : vector<1x480x4xf32> to vector<480x4xf32>
    %112 = arith.maximumf %109, %111 : vector<480x4xf32>
    %cst_97 = arith.constant -1.000000e+30 : f32
    %113 = vector.broadcast %cst_97 : f32 to vector<8x4xf32>
    %c0_98 = arith.constant 0 : index
    %c0_99 = arith.constant 0 : index
    %114 = vector.load %arg13[%c0_98, %c0_99] : memref<496x4xf32, #tpu.memory_space<vmem>>, vector<8x4xf32>
    tpu.vector_store %arg13[%c0_98, %c0_99], %113 {strides = array<i32>} : memref<496x4xf32, #tpu.memory_space<vmem>>, vector<8x4xf32>,
    %cst_100 = arith.constant -1.000000e+30 : f32
    %115 = vector.broadcast %cst_100 : f32 to vector<8x4xf32>
    %c488 = arith.constant 488 : index
    %c0_101 = arith.constant 0 : index
    %116 = vector.load %arg13[%c488, %c0_101] : memref<496x4xf32, #tpu.memory_space<vmem>>, vector<8x4xf32>
    tpu.vector_store %arg13[%c488, %c0_101], %115 {strides = array<i32>} : memref<496x4xf32, #tpu.memory_space<vmem>>, vector<8x4xf32>,
    %c8_102 = arith.constant 8 : index
    %c0_103 = arith.constant 0 : index
    %117 = vector.load %arg13[%c8_102, %c0_103] : memref<496x4xf32, #tpu.memory_space<vmem>>, vector<480x4xf32>
    tpu.vector_store %arg13[%c8_102, %c0_103], %112 {strides = array<i32>} : memref<496x4xf32, #tpu.memory_space<vmem>>, vector<480x4xf32>,
    %c7 = arith.constant 7 : index
    %c0_104 = arith.constant 0 : index
    %118 = vector.load %arg13[%c7, %c0_104] : memref<496x4xf32, #tpu.memory_space<vmem>>, vector<480x4xf32>
    %c8_105 = arith.constant 8 : index
    %c0_106 = arith.constant 0 : index
    %119 = vector.load %arg13[%c8_105, %c0_106] : memref<496x4xf32, #tpu.memory_space<vmem>>, vector<480x4xf32>
    %120 = arith.maximumf %118, %119 : vector<480x4xf32>
    %c9 = arith.constant 9 : index
    %c0_107 = arith.constant 0 : index
    %121 = vector.load %arg13[%c9, %c0_107] : memref<496x4xf32, #tpu.memory_space<vmem>>, vector<480x4xf32>
    %122 = arith.maximumf %120, %121 : vector<480x4xf32>
    %c0_108 = arith.constant 0 : index
    %c0_109 = arith.constant 0 : index
    %123 = vector.load %arg8[%c0_108, %c0_109] : memref<4x104xf32, #tpu.memory_space<vmem>>, vector<4x104xf32>
    %cst_110 = arith.constant dense<0.000000e+00> : vector<480x104xf32>
    %124 = tpu.matmul %122, %123, %cst_110 {dimension_numbers = #tpu.dot_dimension_numbers<[1], [0], [0], [1], [0, 0, 1, 1], [], []>} : vector<480x4xf32>, vector<4x104xf32>, vector<480x104xf32> -> vector<480x104xf32>
    %c0_111 = arith.constant 0 : index
    %c0_112 = arith.constant 0 : index
    %125 = vector.load %arg9[%c0_111, %c0_112] : memref<1x104xf32, #tpu.memory_space<vmem>>, vector<1x104xf32>
    %126 = vector.broadcast %125 : vector<1x104xf32> to vector<480x104xf32>
    %127 = arith.addf %124, %126 : vector<480x104xf32>
    %cst_113 = arith.constant 0.000000e+00 : f32
    %128 = vector.broadcast %cst_113 : f32 to vector<480x104xf32>
    %129 = arith.maximumf %127, %128 : vector<480x104xf32>
    %c0_114 = arith.constant 0 : index
    %c0_115 = arith.constant 0 : index
    %c24_116 = arith.constant 24 : index
    %130 = vector.load %arg10[%c0_114, %c0_115, %c24_116] : memref<1x480x128xf32, #tpu.memory_space<vmem>>, vector<1x480x104xf32>
    %131 = vector.shape_cast %130 : vector<1x480x104xf32> to vector<480x104xf32>
    %132 = vector.shape_cast %129 : vector<480x104xf32> to vector<1x480x104xf32>
    tpu.vector_store %arg10[%c0_114, %c0_115, %c24_116], %132 {strides = array<i32>} : memref<1x480x128xf32, #tpu.memory_space<vmem>>, vector<1x480x104xf32>,
    return
  }
  func.func @transform_0(%arg0: i32) -> (i32, i32, i32) {
    %c0_i32 = arith.constant 0 : i32
    %c0_i32_0 = arith.constant 0 : i32
    %c0_i32_1 = arith.constant 0 : i32
    return %arg0, %c0_i32, %c0_i32_0 : i32, i32, i32
  }
  func.func @transform_1(%arg0: i32) -> (i32, i32) {
    %c0_i32 = arith.constant 0 : i32
    %c0_i32_0 = arith.constant 0 : i32
    %c0_i32_1 = arith.constant 0 : i32
    return %c0_i32, %c0_i32_0 : i32, i32
  }
  func.func @transform_2(%arg0: i32) -> (i32, i32) {
    %c0_i32 = arith.constant 0 : i32
    %c0_i32_0 = arith.constant 0 : i32
    %c0_i32_1 = arith.constant 0 : i32
    return %c0_i32, %c0_i32_0 : i32, i32
  }
  func.func @transform_3(%arg0: i32) -> (i32, i32, i32) {
    %c0_i32 = arith.constant 0 : i32
    %c0_i32_0 = arith.constant 0 : i32
    %c0_i32_1 = arith.constant 0 : i32
    %c0_i32_2 = arith.constant 0 : i32
    return %c0_i32, %c0_i32_0, %c0_i32_1 : i32, i32, i32
  }
  func.func @transform_4(%arg0: i32) -> (i32, i32) {
    %c0_i32 = arith.constant 0 : i32
    %c0_i32_0 = arith.constant 0 : i32
    %c0_i32_1 = arith.constant 0 : i32
    return %c0_i32, %c0_i32_0 : i32, i32
  }
  func.func @transform_5(%arg0: i32) -> (i32, i32, i32) {
    %c0_i32 = arith.constant 0 : i32
    %c0_i32_0 = arith.constant 0 : i32
    %c0_i32_1 = arith.constant 0 : i32
    %c0_i32_2 = arith.constant 0 : i32
    return %c0_i32, %c0_i32_0, %c0_i32_1 : i32, i32, i32
  }
  func.func @transform_6(%arg0: i32) -> (i32, i32) {
    %c0_i32 = arith.constant 0 : i32
    %c0_i32_0 = arith.constant 0 : i32
    %c0_i32_1 = arith.constant 0 : i32
    return %c0_i32, %c0_i32_0 : i32, i32
  }
  func.func @transform_7(%arg0: i32) -> (i32, i32) {
    %c0_i32 = arith.constant 0 : i32
    %c0_i32_0 = arith.constant 0 : i32
    %c0_i32_1 = arith.constant 0 : i32
    return %c0_i32, %c0_i32_0 : i32, i32
  }
  func.func @transform_8(%arg0: i32) -> (i32, i32) {
    %c0_i32 = arith.constant 0 : i32
    %c0_i32_0 = arith.constant 0 : i32
    %c0_i32_1 = arith.constant 0 : i32
    return %c0_i32, %c0_i32_0 : i32, i32
  }
  func.func @transform_9(%arg0: i32) -> (i32, i32, i32) {
    %c0_i32 = arith.constant 0 : i32
    %c0_i32_0 = arith.constant 0 : i32
    %c0_i32_1 = arith.constant 0 : i32
    return %arg0, %c0_i32, %c0_i32_0 : i32, i32, i32
  }
}

</mosaic_0001>

<llo_original>
// kernel: tpu_custom_call.1
$region0: #{tpu_custom_call.1}
  #allocation0 [shape = 'u32[]', space=smem, size = 0x4, offset = 0x4, fixed_abs, tag = 'smem constant byte address 0x4 - core index']
  #allocation1 [shape = 'u32[144,128]{1,0:T(1,128)}', space=vmem, size = 0x12000, scoped, tag = 'internal scratch']
  #allocation2 [shape = 'f32[528,12]{1,0:T(8,128)}', space=vmem, size = 0x42000, scoped, tag = 'scratch operand']
  #allocation3 [shape = 'f32[576,20]{1,0:T(8,128)}', space=vmem, size = 0x48000, scoped, tag = 'scratch operand']
  #allocation4 [shape = 'f32[496,4]{1,0:T(8,128)}', space=vmem, size = 0x3e000, scoped, tag = 'scratch operand']
  %s0 = inlined_call_operand.vmem [shape: f32[2,528,5], index: 0, kind: input, shape index: {}]
  %s1 = inlined_call_operand.vmem [shape: f32[4,16], index: 1, kind: input, shape index: {}]
  %s2 = inlined_call_operand.vmem [shape: f32[1,16], index: 2, kind: input, shape index: {}]
  %s3 = inlined_call_operand.vmem [shape: f32[3,12,8], index: 3, kind: input, shape index: {}]
  %s4 = inlined_call_operand.vmem [shape: f32[1,8], index: 4, kind: input, shape index: {}]
  %s5 = inlined_call_operand.vmem [shape: f32[5,20,8], index: 5, kind: input, shape index: {}]
  %s6 = inlined_call_operand.vmem [shape: f32[1,8], index: 6, kind: input, shape index: {}]
  %s7 = inlined_call_operand.vmem [shape: f32[4,104], index: 7, kind: input, shape index: {}]
  %s8 = inlined_call_operand.vmem [shape: f32[1,104], index: 8, kind: input, shape index: {}]
  %s9 = inlined_call_operand.hbm [shape: f32[2,480,128], index: 9, kind: output, shape index: {}]
  %s10 = sld [smem:[#allocation0]]
  $region69: #{tpu_custom_call.1} parent=0
    _
  %s12 = ssub.s32 1, %s10
  %s13 = scalar_select 0, %s12, %s10
  $region1: #{tpu_custom_call.1} parent=0
    #allocation5 [shape = 'u8[491520]{0}', space=vmem, size = 0x78000, scoped, tag = 'output window, operand 0']
    #allocation6 [shape = 's32[2]{0}', space=sflag, size = 0x8, scoped, tag = 'scoped memory for tpu_custom_call.1']
    %14 = vsyncpa [#allocation6], 0
    %s15 = scalar_lea.sflag [#allocation6], 1
    %16 = vsyncpa %s15, 0
    loop: start=0, step=1, limit=4
    $region2: #{tpu_custom_call.1} parent=1 // loop_pre_header
      _
    $region3: #{tpu_custom_call.1} parent=1 // loop_header
      %s18 = sphi 0, %s22
      %p19 = scmp.ge.s32.totalorder %s18, 4
      %s28 = sphi 0, %s30
      %s31 = sphi 0, %s28
      %s32 = sphi 0, %s31
      %s48 = sphi 0, %s32
      %s52 = sphi 0, %s52
      %s54 = sphi 0, %s52
      %s55 = sphi 0, %s54
      %s69 = sphi 0, %s55
      %s73 = sphi 0, %s73
      %s75 = sphi 0, %s73
      %s76 = sphi 0, %s75
      %s90 = sphi 0, %s76
      %s94 = sphi 0, %s94
      %s96 = sphi 0, %s94
      %s97 = sphi 0, %s96
      %s111 = sphi 0, %s97
      %s115 = sphi 0, %s115
      %s117 = sphi 0, %s115
      %s118 = sphi 0, %s117
      %s132 = sphi 0, %s118
      %s136 = sphi 0, %s136
      %s138 = sphi 0, %s136
      %s139 = sphi 0, %s138
      %s153 = sphi 0, %s139
      %s157 = sphi 0, %s157
      %s159 = sphi 0, %s157
      %s160 = sphi 0, %s159
      %s174 = sphi 0, %s160
      %s178 = sphi 0, %s178
      %s180 = sphi 0, %s178
      %s181 = sphi 0, %s180
      %s195 = sphi 0, %s181
      %s199 = sphi 0, %s199
      %s201 = sphi 0, %s199
      %s202 = sphi 0, %s201
      %s216 = sphi 0, %s202
      %s222 = sphi 0, %s224
      %s225 = sphi 0, %s222
      %s226 = sphi 0, %s225
      %s242 = sphi 0, %s226
    $region4: #{tpu_custom_call.1} parent=1 // loop_header_branch
      %21 = sbr.rel (%p19) target = $region8
    $region5: #{tpu_custom_call.1} parent=1 // loop_body
      %s23 = ssub.s32 %s18, 1
      %s24 = ssub.s32 %s18, 2
      %s25 = sadd.s32 %s18, 1
      %s26 = ssub.s32 %s18, %s25
      %p27 = scmp.eq.s32.totalorder %s26, 0
      %s29 = sadd.s32 %s28, 1
      %s30 = scalar_select %p27, %s28, %s29
      %p33 = pneg %p27
      %p34 = scmp.eq.s32.totalorder %s18, 1
      %p35 = por %p33, %p34
      %p36 = scmp.ne.s32.totalorder %s28, %s31
      %p37 = scmp.eq.s32.totalorder %s18, 0
      %p38 = por %p36, %p37
      %p39 = scmp.ne.s32.totalorder %s28, %s31
      %p40 = scmp.eq.s32.totalorder %s23, 1
      %p41 = por %p39, %p40
      %p42 = scmp.ne.s32.totalorder %s31, %s32
      %p43 = scmp.eq.s32.totalorder %s23, 0
      %p44 = por %p42, %p43
      %p45 = scmp.ne.s32.totalorder %s31, %s32
      %p46 = scmp.eq.s32.totalorder %s24, 1
      %p47 = por %p45, %p46
      %p49 = scmp.ne.s32.totalorder %s32, %s48
      %p50 = scmp.eq.s32.totalorder %s24, 0
      %p51 = por %p49, %p50
      %s53 = sadd.s32 %s52, 1
      %p56 = scmp.eq.s32.totalorder %s18, 1
      %p57 = scmp.ne.s32.totalorder %s52, %s54
      %p58 = scmp.eq.s32.totalorder %s18, 0
      %p59 = por %p57, %p58
      %p60 = scmp.ne.s32.totalorder %s52, %s54
      %p61 = scmp.eq.s32.totalorder %s23, 1
      %p62 = por %p60, %p61
      %p63 = scmp.ne.s32.totalorder %s54, %s55
      %p64 = scmp.eq.s32.totalorder %s23, 0
      %p65 = por %p63, %p64
      %p66 = scmp.ne.s32.totalorder %s54, %s55
      %p67 = scmp.eq.s32.totalorder %s24, 1
      %p68 = por %p66, %p67
      %p70 = scmp.ne.s32.totalorder %s55, %s69
      %p71 = scmp.eq.s32.totalorder %s24, 0
      %p72 = por %p70, %p71
      %s74 = sadd.s32 %s73, 1
      %p77 = scmp.eq.s32.totalorder %s18, 1
      %p78 = scmp.ne.s32.totalorder %s73, %s75
      %p79 = scmp.eq.s32.totalorder %s18, 0
      %p80 = por %p78, %p79
      %p81 = scmp.ne.s32.totalorder %s73, %s75
      %p82 = scmp.eq.s32.totalorder %s23, 1
      %p83 = por %p81, %p82
      %p84 = scmp.ne.s32.totalorder %s75, %s76
      %p85 = scmp.eq.s32.totalorder %s23, 0
      %p86 = por %p84, %p85
      %p87 = scmp.ne.s32.totalorder %s75, %s76
      %p88 = scmp.eq.s32.totalorder %s24, 1
      %p89 = por %p87, %p88
      %p91 = scmp.ne.s32.totalorder %s76, %s90
      %p92 = scmp.eq.s32.totalorder %s24, 0
      %p93 = por %p91, %p92
      %s95 = sadd.s32 %s94, 1
      %p98 = scmp.eq.s32.totalorder %s18, 1
      %p99 = scmp.ne.s32.totalorder %s94, %s96
      %p100 = scmp.eq.s32.totalorder %s18, 0
      %p101 = por %p99, %p100
      %p102 = scmp.ne.s32.totalorder %s94, %s96
      %p103 = scmp.eq.s32.totalorder %s23, 1
      %p104 = por %p102, %p103
      %p105 = scmp.ne.s32.totalorder %s96, %s97
      %p106 = scmp.eq.s32.totalorder %s23, 0
      %p107 = por %p105, %p106
      %p108 = scmp.ne.s32.totalorder %s96, %s97
      %p109 = scmp.eq.s32.totalorder %s24, 1
      %p110 = por %p108, %p109
      %p112 = scmp.ne.s32.totalorder %s97, %s111
      %p113 = scmp.eq.s32.totalorder %s24, 0
      %p114 = por %p112, %p113
      %s116 = sadd.s32 %s115, 1
      %p119 = scmp.eq.s32.totalorder %s18, 1
      %p120 = scmp.ne.s32.totalorder %s115, %s117
      %p121 = scmp.eq.s32.totalorder %s18, 0
      %p122 = por %p120, %p121
      %p123 = scmp.ne.s32.totalorder %s115, %s117
      %p124 = scmp.eq.s32.totalorder %s23, 1
      %p125 = por %p123, %p124
      %p126 = scmp.ne.s32.totalorder %s117, %s118
      %p127 = scmp.eq.s32.totalorder %s23, 0
      %p128 = por %p126, %p127
      %p129 = scmp.ne.s32.totalorder %s117, %s118
      %p130 = scmp.eq.s32.totalorder %s24, 1
      %p131 = por %p129, %p130
      %p133 = scmp.ne.s32.totalorder %s118, %s132
      %p134 = scmp.eq.s32.totalorder %s24, 0
      %p135 = por %p133, %p134
      %s137 = sadd.s32 %s136, 1
      %p140 = scmp.eq.s32.totalorder %s18, 1
      %p141 = scmp.ne.s32.totalorder %s136, %s138
      %p142 = scmp.eq.s32.totalorder %s18, 0
      %p143 = por %p141, %p142
      %p144 = scmp.ne.s32.totalorder %s136, %s138
      %p145 = scmp.eq.s32.totalorder %s23, 1
      %p146 = por %p144, %p145
      %p147 = scmp.ne.s32.totalorder %s138, %s139
      %p148 = scmp.eq.s32.totalorder %s23, 0
      %p149 = por %p147, %p148
      %p150 = scmp.ne.s32.totalorder %s138, %s139
      %p151 = scmp.eq.s32.totalorder %s24, 1
      %p152 = por %p150, %p151
      %p154 = scmp.ne.s32.totalorder %s139, %s153
      %p155 = scmp.eq.s32.totalorder %s24, 0
      %p156 = por %p154, %p155
      %s158 = sadd.s32 %s157, 1
      %p161 = scmp.eq.s32.totalorder %s18, 1
      %p162 = scmp.ne.s32.totalorder %s157, %s159
      %p163 = scmp.eq.s32.totalorder %s18, 0
      %p164 = por %p162, %p163
      %p165 = scmp.ne.s32.totalorder %s157, %s159
      %p166 = scmp.eq.s32.totalorder %s23, 1
      %p167 = por %p165, %p166
      %p168 = scmp.ne.s32.totalorder %s159, %s160
      %p169 = scmp.eq.s32.totalorder %s23, 0
      %p170 = por %p168, %p169
      %p171 = scmp.ne.s32.totalorder %s159, %s160
      %p172 = scmp.eq.s32.totalorder %s24, 1
      %p173 = por %p171, %p172
      %p175 = scmp.ne.s32.totalorder %s160, %s174
      %p176 = scmp.eq.s32.totalorder %s24, 0
      %p177 = por %p175, %p176
      %s179 = sadd.s32 %s178, 1
      %p182 = scmp.eq.s32.totalorder %s18, 1
      %p183 = scmp.ne.s32.totalorder %s178, %s180
      %p184 = scmp.eq.s32.totalorder %s18, 0
      %p185 = por %p183, %p184
      %p186 = scmp.ne.s32.totalorder %s178, %s180
      %p187 = scmp.eq.s32.totalorder %s23, 1
      %p188 = por %p186, %p187
      %p189 = scmp.ne.s32.totalorder %s180, %s181
      %p190 = scmp.eq.s32.totalorder %s23, 0
      %p191 = por %p189, %p190
      %p192 = scmp.ne.s32.totalorder %s180, %s181
      %p193 = scmp.eq.s32.totalorder %s24, 1
      %p194 = por %p192, %p193
      %p196 = scmp.ne.s32.totalorder %s181, %s195
      %p197 = scmp.eq.s32.totalorder %s24, 0
      %p198 = por %p196, %p197
      %s200 = sadd.s32 %s199, 1
      %p203 = scmp.eq.s32.totalorder %s18, 1
      %p204 = scmp.ne.s32.totalorder %s199, %s201
      %p205 = scmp.eq.s32.totalorder %s18, 0
      %p206 = por %p204, %p205
      %p207 = scmp.ne.s32.totalorder %s199, %s201
      %p208 = scmp.eq.s32.totalorder %s23, 1
      %p209 = por %p207, %p208
      %p210 = scmp.ne.s32.totalorder %s201, %s202
      %p211 = scmp.eq.s32.totalorder %s23, 0
      %p212 = por %p210, %p211
      %p213 = scmp.ne.s32.totalorder %s201, %s202
      %p214 = scmp.eq.s32.totalorder %s24, 1
      %p215 = por %p213, %p214
      %p217 = scmp.ne.s32.totalorder %s202, %s216
      %p218 = scmp.eq.s32.totalorder %s24, 0
      %p219 = por %p217, %p218
      %s220 = ssub.s32 %s18, %s25
      %p221 = scmp.eq.s32.totalorder %s220, 0
      %s223 = sadd.s32 %s222, 1
      %s224 = scalar_select %p221, %s222, %s223
      %p227 = pneg %p221
      %p228 = scmp.eq.s32.totalorder %s18, 1
      %p229 = por %p227, %p228
      %p230 = scmp.ne.s32.totalorder %s222, %s225
      %p231 = scmp.eq.s32.totalorder %s18, 0
      %p232 = por %p230, %p231
      %p233 = scmp.ne.s32.totalorder %s222, %s225
      %p234 = scmp.eq.s32.totalorder %s23, 1
      %p235 = por %p233, %p234
      %p236 = scmp.ne.s32.totalorder %s225, %s226
      %p237 = scmp.eq.s32.totalorder %s23, 0
      %p238 = por %p236, %p237
      %p239 = scmp.ne.s32.totalorder %s225, %s226
      %p240 = scmp.eq.s32.totalorder %s24, 1
      %p241 = por %p239, %p240
      %p243 = scmp.ne.s32.totalorder %s226, %s242
      %p244 = scmp.eq.s32.totalorder %s24, 0
      %p245 = por %p243, %p244
      %p246 = scmp.le.s32.totalorder 1, %s18
      %p247 = scmp.lt.s32.totalorder %s18, 3
      %p248 = pnand %p246, %p247
      %p249 = pneg %p248
      // Predicated region
      $region9: #{tpu_custom_call.1} parent=5 // pred_check
        _
      $region10: #{tpu_custom_call.1} parent=5 // pred_check_branch
        %251 = sbr.rel (%p248) target = $region12
      $region11: #{tpu_custom_call.1} parent=5 // pred_region
        %s252 = ssub.s32 %s18, 1
        // Predicated region
        $region13: #{tpu_custom_call.1} parent=11 // pred_check
          %p253 = pneg %p65
        $region14: #{tpu_custom_call.1} parent=11 // pred_check_branch
          %255 = sbr.rel (%p253) target = $region16
        $region15: #{tpu_custom_call.1} parent=11 // pred_region
          _
        $region16: #{tpu_custom_call.1} parent=11 // pred_fallthru
          _
        // Predicated region
        $region17: #{tpu_custom_call.1} parent=11 // pred_check
          %p256 = pneg %p86
        $region18: #{tpu_custom_call.1} parent=11 // pred_check_branch
          %258 = sbr.rel (%p256) target = $region20
        $region19: #{tpu_custom_call.1} parent=11 // pred_region
          _
        $region20: #{tpu_custom_call.1} parent=11 // pred_fallthru
          _
        // Predicated region
        $region21: #{tpu_custom_call.1} parent=11 // pred_check
          %p259 = pneg %p107
        $region22: #{tpu_custom_call.1} parent=11 // pred_check_branch
          %261 = sbr.rel (%p259) target = $region24
        $region23: #{tpu_custom_call.1} parent=11 // pred_region
          _
        $region24: #{tpu_custom_call.1} parent=11 // pred_fallthru
          _
        // Predicated region
        $region25: #{tpu_custom_call.1} parent=11 // pred_check
          %p262 = pneg %p128
        $region26: #{tpu_custom_call.1} parent=11 // pred_check_branch
          %264 = sbr.rel (%p262) target = $region28
        $region27: #{tpu_custom_call.1} parent=11 // pred_region
          _
        $region28: #{tpu_custom_call.1} parent=11 // pred_fallthru
          _
        // Predicated region
        $region29: #{tpu_custom_call.1} parent=11 // pred_check
          %p265 = pneg %p149
        $region30: #{tpu_custom_call.1} parent=11 // pred_check_branch
          %267 = sbr.rel (%p265) target = $region32
        $region31: #{tpu_custom_call.1} parent=11 // pred_region
          _
        $region32: #{tpu_custom_call.1} parent=11 // pred_fallthru
          _
        // Predicated region
        $region33: #{tpu_custom_call.1} parent=11 // pred_check
          %p268 = pneg %p170
        $region34: #{tpu_custom_call.1} parent=11 // pred_check_branch
          %270 = sbr.rel (%p268) target = $region36
        $region35: #{tpu_custom_call.1} parent=11 // pred_region
          _
        $region36: #{tpu_custom_call.1} parent=11 // pred_fallthru
          _
        // Predicated region
        $region37: #{tpu_custom_call.1} parent=11 // pred_check
          %p271 = pneg %p191
        $region38: #{tpu_custom_call.1} parent=11 // pred_check_branch
          %273 = sbr.rel (%p271) target = $region40
        $region39: #{tpu_custom_call.1} parent=11 // pred_region
          _
        $region40: #{tpu_custom_call.1} parent=11 // pred_fallthru
          _
        // Predicated region
        $region41: #{tpu_custom_call.1} parent=11 // pred_check
          %p274 = pneg %p212
        $region42: #{tpu_custom_call.1} parent=11 // pred_check_branch
          %276 = sbr.rel (%p274) target = $region44
        $region43: #{tpu_custom_call.1} parent=11 // pred_region
          _
        $region44: #{tpu_custom_call.1} parent=11 // pred_fallthru
          _
      $region12: #{tpu_custom_call.1} parent=5 // pred_fallthru
        _
      %p277 = scmp.lt.s32.totalorder %s18, 2
      // Predicated region
      $region45: #{tpu_custom_call.1} parent=5 // pred_check
        %p278 = pneg %p277
      $region46: #{tpu_custom_call.1} parent=5 // pred_check_branch
        %280 = sbr.rel (%p278) target = $region48
      $region47: #{tpu_custom_call.1} parent=5 // pred_region
        // Predicated region
        $region49: #{tpu_custom_call.1} parent=47 // pred_check
          %p281 = pneg %p38
        $region50: #{tpu_custom_call.1} parent=47 // pred_check_branch
          %283 = sbr.rel (%p281) target = $region52
        $region51: #{tpu_custom_call.1} parent=47 // pred_region
          %p284 = scmp.lt.s32.totalorder %s18, 1
          %s285 = scalar_select %p284, %s18, 1
          %s286 = smul.addr %s285, 66
          %s287 = smul.addr %s286, 8
          %s288 = scalar_lea.vmem %s0, %s287
        $region52: #{tpu_custom_call.1} parent=47 // pred_fallthru
          _
      $region48: #{tpu_custom_call.1} parent=5 // pred_fallthru
        _
      %p289 = scmp.le.s32.totalorder 1, %s18
      %p290 = scmp.lt.s32.totalorder %s18, 3
      %p291 = pnand %p289, %p290
      %p292 = pneg %p291
      // Predicated region
      $region53: #{tpu_custom_call.1} parent=5 // pred_check
        _
      $region54: #{tpu_custom_call.1} parent=5 // pred_check_branch
        %294 = sbr.rel (%p291) target = $region56
      $region55: #{tpu_custom_call.1} parent=5 // pred_region
        %s295 = ssub.s32 %s18, 1
        %p296 = scmp.lt.s32.totalorder %s23, 1
        %s297 = scalar_select %p296, %s23, 1
        %s298 = smul.addr %s297, 66
        %s299 = smul.addr %s298, 8
        %s300 = scalar_lea.vmem %s0, %s299
        %p301 = pneg %p44
        %p302 = pneg %p41
        %p303 = pneg %p65
        %p304 = pneg %p62
        %p305 = pneg %p86
        %p306 = pneg %p83
        %p307 = pneg %p107
        %p308 = pneg %p104
        %p309 = pneg %p128
        %p310 = pneg %p125
        %p311 = pneg %p149
        %p312 = pneg %p146
        %p313 = pneg %p170
        %p314 = pneg %p167
        %p315 = pneg %p191
        %p316 = pneg %p188
        %p317 = pneg %p212
        %p318 = pneg %p209
        %p319 = pneg %p238
        %p320 = pneg %p235
        %s321 = sand.u32 %s225, 1
        %s322 = scalar_lea.sflag [#allocation6], %s321
        %s323 = sand.u32 %s225, 1
        %s324 = smul.addr %s323, 480
        %s325 = scalar_lea.vmem [#allocation5], %s324
        %p326 = scmp.lt.s32.totalorder %s23, 1
        %s327 = scalar_select %p326, %s23, 1
        %s328 = smul.addr %s327, 66
        %s329 = smul.addr %s328, 8
        %s330 = scalar_lea.vmem %s0, %s329
        %v331 = vld [vmem:[%s330 + $0x18] sm:$0xff]
        %v332 = vld [vmem:[%s330 + $0x20] sm:$0xff]
        %v333 = vld [vmem:[%s330 + $0x28] sm:$0xff]
        %v334 = vld [vmem:[%s330 + $0x30] sm:$0xff]
        %v335 = vld [vmem:[%s330 + $0x38] sm:$0xff]
        %v336 = vld [vmem:[%s330 + $0x40] sm:$0xff]
        %v337 = vld [vmem:[%s330 + $0x48] sm:$0xff]
        %v338 = vld [vmem:[%s330 + $0x50] sm:$0xff]
        %v339 = vld [vmem:[%s330 + $0x58] sm:$0xff]
        %v340 = vld [vmem:[%s330 + $0x60] sm:$0xff]
        %v341 = vld [vmem:[%s330 + $0x68] sm:$0xff]
        %v342 = vld [vmem:[%s330 + $0x70] sm:$0xff]
        %v343 = vld [vmem:[%s330 + $0x78] sm:$0xff]
        %v344 = vld [vmem:[%s330 + $0x80] sm:$0xff]
        %v345 = vld [vmem:[%s330 + $0x88] sm:$0xff]
        %v346 = vld [vmem:[%s330 + $0x90] sm:$0xff]
        %v347 = vld [vmem:[%s330 + $0x98] sm:$0xff]
        %v348 = vld [vmem:[%s330 + $0xa0] sm:$0xff]
        %v349 = vld [vmem:[%s330 + $0xa8] sm:$0xff]
        %v350 = vld [vmem:[%s330 + $0xb0] sm:$0xff]
        %v351 = vld [vmem:[%s330 + $0xb8] sm:$0xff]
        %v352 = vld [vmem:[%s330 + $0xc0] sm:$0xff]
        %v353 = vld [vmem:[%s330 + $0xc8] sm:$0xff]
        %v354 = vld [vmem:[%s330 + $0xd0] sm:$0xff]
        %v355 = vld [vmem:[%s330 + $0xd8] sm:$0xff]
        %v356 = vld [vmem:[%s330 + $0xe0] sm:$0xff]
        %v357 = vld [vmem:[%s330 + $0xe8] sm:$0xff]
        %v358 = vld [vmem:[%s330 + $0xf0] sm:$0xff]
        %v359 = vld [vmem:[%s330 + $0xf8] sm:$0xff]
        %v360 = vld [vmem:[%s330 + $0x100] sm:$0xff]
        %v361 = vld [vmem:[%s330 + $0x108] sm:$0xff]
        %v362 = vld [vmem:[%s330 + $0x110] sm:$0xff]
        %v363 = vld [vmem:[%s330 + $0x118] sm:$0xff]
        %v364 = vld [vmem:[%s330 + $0x120] sm:$0xff]
        %v365 = vld [vmem:[%s330 + $0x128] sm:$0xff]
        %v366 = vld [vmem:[%s330 + $0x130] sm:$0xff]
        %v367 = vld [vmem:[%s330 + $0x138] sm:$0xff]
        %v368 = vld [vmem:[%s330 + $0x140] sm:$0xff]
        %v369 = vld [vmem:[%s330 + $0x148] sm:$0xff]
        %v370 = vld [vmem:[%s330 + $0x150] sm:$0xff]
        %v371 = vld [vmem:[%s330 + $0x158] sm:$0xff]
        %v372 = vld [vmem:[%s330 + $0x160] sm:$0xff]
        %v373 = vld [vmem:[%s330 + $0x168] sm:$0xff]
        %v374 = vld [vmem:[%s330 + $0x170] sm:$0xff]
        %v375 = vld [vmem:[%s330 + $0x178] sm:$0xff]
        %v376 = vld [vmem:[%s330 + $0x180] sm:$0xff]
        %v377 = vld [vmem:[%s330 + $0x188] sm:$0xff]
        %v378 = vld [vmem:[%s330 + $0x190] sm:$0xff]
        %v379 = vld [vmem:[%s330 + $0x198] sm:$0xff]
        %v380 = vld [vmem:[%s330 + $0x1a0] sm:$0xff]
        %v381 = vld [vmem:[%s330 + $0x1a8] sm:$0xff]
        %v382 = vld [vmem:[%s330 + $0x1b0] sm:$0xff]
        %v383 = vld [vmem:[%s330 + $0x1b8] sm:$0xff]
        %v384 = vld [vmem:[%s330 + $0x1c0] sm:$0xff]
        %v385 = vld [vmem:[%s330 + $0x1c8] sm:$0xff]
        %v386 = vld [vmem:[%s330 + $0x1d0] sm:$0xff]
        %v387 = vld [vmem:[%s330 + $0x1d8] sm:$0xff]
        %v388 = vld [vmem:[%s330 + $0x1e0] sm:$0xff]
        %v389 = vld [vmem:[%s330 + $0x1e8] sm:$0xff]
        %v390 = vld [vmem:[%s330 + $0x1f0] sm:$0xff]
        %vm391 = vcmp.gt.f32.partialorder %v331, 0.0
        %vm392 = vcmp.gt.f32.partialorder %v332, 0.0
        %vm393 = vcmp.gt.f32.partialorder %v333, 0.0
        %vm394 = vcmp.gt.f32.partialorder %v334, 0.0
        %vm395 = vcmp.gt.f32.partialorder %v335, 0.0
        %vm396 = vcmp.gt.f32.partialorder %v336, 0.0
        %vm397 = vcmp.gt.f32.partialorder %v337, 0.0
        %vm398 = vcmp.gt.f32.partialorder %v338, 0.0
        %vm399 = vcmp.gt.f32.partialorder %v339, 0.0
        %vm400 = vcmp.gt.f32.partialorder %v340, 0.0
        %vm401 = vcmp.gt.f32.partialorder %v341, 0.0
        %vm402 = vcmp.gt.f32.partialorder %v342, 0.0
        %vm403 = vcmp.gt.f32.partialorder %v343, 0.0
        %vm404 = vcmp.gt.f32.partialorder %v344, 0.0
        %vm405 = vcmp.gt.f32.partialorder %v345, 0.0
        %vm406 = vcmp.gt.f32.partialorder %v346, 0.0
        %vm407 = vcmp.gt.f32.partialorder %v347, 0.0
        %vm408 = vcmp.gt.f32.partialorder %v348, 0.0
        %vm409 = vcmp.gt.f32.partialorder %v349, 0.0
        %vm410 = vcmp.gt.f32.partialorder %v350, 0.0
        %vm411 = vcmp.gt.f32.partialorder %v351, 0.0
        %vm412 = vcmp.gt.f32.partialorder %v352, 0.0
        %vm413 = vcmp.gt.f32.partialorder %v353, 0.0
        %vm414 = vcmp.gt.f32.partialorder %v354, 0.0
        %vm415 = vcmp.gt.f32.partialorder %v355, 0.0
        %vm416 = vcmp.gt.f32.partialorder %v356, 0.0
        %vm417 = vcmp.gt.f32.partialorder %v357, 0.0
        %vm418 = vcmp.gt.f32.partialorder %v358, 0.0
        %vm419 = vcmp.gt.f32.partialorder %v359, 0.0
        %vm420 = vcmp.gt.f32.partialorder %v360, 0.0
        %vm421 = vcmp.gt.f32.partialorder %v361, 0.0
        %vm422 = vcmp.gt.f32.partialorder %v362, 0.0
        %vm423 = vcmp.gt.f32.partialorder %v363, 0.0
        %vm424 = vcmp.gt.f32.partialorder %v364, 0.0
        %vm425 = vcmp.gt.f32.partialorder %v365, 0.0
        %vm426 = vcmp.gt.f32.partialorder %v366, 0.0
        %vm427 = vcmp.gt.f32.partialorder %v367, 0.0
        %vm428 = vcmp.gt.f32.partialorder %v368, 0.0
        %vm429 = vcmp.gt.f32.partialorder %v369, 0.0
        %vm430 = vcmp.gt.f32.partialorder %v370, 0.0
        %vm431 = vcmp.gt.f32.partialorder %v371, 0.0
        %vm432 = vcmp.gt.f32.partialorder %v372, 0.0
        %vm433 = vcmp.gt.f32.partialorder %v373, 0.0
        %vm434 = vcmp.gt.f32.partialorder %v374, 0.0
        %vm435 = vcmp.gt.f32.partialorder %v375, 0.0
        %vm436 = vcmp.gt.f32.partialorder %v376, 0.0
        %vm437 = vcmp.gt.f32.partialorder %v377, 0.0
        %vm438 = vcmp.gt.f32.partialorder %v378, 0.0
        %vm439 = vcmp.gt.f32.partialorder %v379, 0.0
        %vm440 = vcmp.gt.f32.partialorder %v380, 0.0
        %vm441 = vcmp.gt.f32.partialorder %v381, 0.0
        %vm442 = vcmp.gt.f32.partialorder %v382, 0.0
        %vm443 = vcmp.gt.f32.partialorder %v383, 0.0
        %vm444 = vcmp.gt.f32.partialorder %v384, 0.0
        %vm445 = vcmp.gt.f32.partialorder %v385, 0.0
        %vm446 = vcmp.gt.f32.partialorder %v386, 0.0
        %vm447 = vcmp.gt.f32.partialorder %v387, 0.0
        %vm448 = vcmp.gt.f32.partialorder %v388, 0.0
        %vm449 = vcmp.gt.f32.partialorder %v389, 0.0
        %vm450 = vcmp.gt.f32.partialorder %v390, 0.0
        %v451 = vsel %vm391, 1, 0
        %v452 = vsel %vm392, 1, 0
        %v453 = vsel %vm393, 1, 0
        %v454 = vsel %vm394, 1, 0
        %v455 = vsel %vm395, 1, 0
        %v456 = vsel %vm396, 1, 0
        %v457 = vsel %vm397, 1, 0
        %v458 = vsel %vm398, 1, 0
        %v459 = vsel %vm399, 1, 0
        %v460 = vsel %vm400, 1, 0
        %v461 = vsel %vm401, 1, 0
        %v462 = vsel %vm402, 1, 0
        %v463 = vsel %vm403, 1, 0
        %v464 = vsel %vm404, 1, 0
        %v465 = vsel %vm405, 1, 0
        %v466 = vsel %vm406, 1, 0
        %v467 = vsel %vm407, 1, 0
        %v468 = vsel %vm408, 1, 0
        %v469 = vsel %vm409, 1, 0
        %v470 = vsel %vm410, 1, 0
        %v471 = vsel %vm411, 1, 0
        %v472 = vsel %vm412, 1, 0
        %v473 = vsel %vm413, 1, 0
        %v474 = vsel %vm414, 1, 0
        %v475 = vsel %vm415, 1, 0
        %v476 = vsel %vm416, 1, 0
        %v477 = vsel %vm417, 1, 0
        %v478 = vsel %vm418, 1, 0
        %v479 = vsel %vm419, 1, 0
        %v480 = vsel %vm420, 1, 0
        %v481 = vsel %vm421, 1, 0
        %v482 = vsel %vm422, 1, 0
        %v483 = vsel %vm423, 1, 0
        %v484 = vsel %vm424, 1, 0
        %v485 = vsel %vm425, 1, 0
        %v486 = vsel %vm426, 1, 0
        %v487 = vsel %vm427, 1, 0
        %v488 = vsel %vm428, 1, 0
        %v489 = vsel %vm429, 1, 0
        %v490 = vsel %vm430, 1, 0
        %v491 = vsel %vm431, 1, 0
        %v492 = vsel %vm432, 1, 0
        %v493 = vsel %vm433, 1, 0
        %v494 = vsel %vm434, 1, 0
        %v495 = vsel %vm435, 1, 0
        %v496 = vsel %vm436, 1, 0
        %v497 = vsel %vm437, 1, 0
        %v498 = vsel %vm438, 1, 0
        %v499 = vsel %vm439, 1, 0
        %v500 = vsel %vm440, 1, 0
        %v501 = vsel %vm441, 1, 0
        %v502 = vsel %vm442, 1, 0
        %v503 = vsel %vm443, 1, 0
        %v504 = vsel %vm444, 1, 0
        %v505 = vsel %vm445, 1, 0
        %v506 = vsel %vm446, 1, 0
        %v507 = vsel %vm447, 1, 0
        %v508 = vsel %vm448, 1, 0
        %v509 = vsel %vm449, 1, 0
        %v510 = vsel %vm450, 1, 0
        %511 = vset.pattern.permute.xlu0 4
        %512 = vperm.xlu0 %511, %v451
        %v513 = vpop.permute.xlu0 %512
        %514 = vset.pattern.permute.xlu0 4
        %515 = vperm.xlu0 %514, %v452
        %v516 = vpop.permute.xlu0 %515
        %517 = vset.pattern.permute.xlu0 4
        %518 = vperm.xlu0 %517, %v453
        %v519 = vpop.permute.xlu0 %518
        %520 = vset.pattern.permute.xlu0 4
        %521 = vperm.xlu0 %520, %v454
        %v522 = vpop.permute.xlu0 %521
        %523 = vset.pattern.permute.xlu0 4
        %524 = vperm.xlu0 %523, %v455
        %v525 = vpop.permute.xlu0 %524
        %526 = vset.pattern.permute.xlu0 4
        %527 = vperm.xlu0 %526, %v456
        %v528 = vpop.permute.xlu0 %527
        %529 = vset.pattern.permute.xlu0 4
        %530 = vperm.xlu0 %529, %v457
        %v531 = vpop.permute.xlu0 %530
        %532 = vset.pattern.permute.xlu0 4
        %533 = vperm.xlu0 %532, %v458
        %v534 = vpop.permute.xlu0 %533
        %535 = vset.pattern.permute.xlu0 4
        %536 = vperm.xlu0 %535, %v459
        %v537 = vpop.permute.xlu0 %536
        %538 = vset.pattern.permute.xlu0 4
        %539 = vperm.xlu0 %538, %v460
        %v540 = vpop.permute.xlu0 %539
        %541 = vset.pattern.permute.xlu0 4
        %542 = vperm.xlu0 %541, %v461
        %v543 = vpop.permute.xlu0 %542
        %544 = vset.pattern.permute.xlu0 4
        %545 = vperm.xlu0 %544, %v462
        %v546 = vpop.permute.xlu0 %545
        %547 = vset.pattern.permute.xlu0 4
        %548 = vperm.xlu0 %547, %v463
        %v549 = vpop.permute.xlu0 %548
        %550 = vset.pattern.permute.xlu0 4
        %551 = vperm.xlu0 %550, %v464
        %v552 = vpop.permute.xlu0 %551
        %553 = vset.pattern.permute.xlu0 4
        %554 = vperm.xlu0 %553, %v465
        %v555 = vpop.permute.xlu0 %554
        %556 = vset.pattern.permute.xlu0 4
        %557 = vperm.xlu0 %556, %v466
        %v558 = vpop.permute.xlu0 %557
        %559 = vset.pattern.permute.xlu0 4
        %560 = vperm.xlu0 %559, %v467
        %v561 = vpop.permute.xlu0 %560
        %562 = vset.pattern.permute.xlu0 4
        %563 = vperm.xlu0 %562, %v468
        %v564 = vpop.permute.xlu0 %563
        %565 = vset.pattern.permute.xlu0 4
        %566 = vperm.xlu0 %565, %v469
        %v567 = vpop.permute.xlu0 %566
        %568 = vset.pattern.permute.xlu0 4
        %569 = vperm.xlu0 %568, %v470
        %v570 = vpop.permute.xlu0 %569
        %571 = vset.pattern.permute.xlu0 4
        %572 = vperm.xlu0 %571, %v471
        %v573 = vpop.permute.xlu0 %572
        %574 = vset.pattern.permute.xlu0 4
        %575 = vperm.xlu0 %574, %v472
        %v576 = vpop.permute.xlu0 %575
        %577 = vset.pattern.permute.xlu0 4
        %578 = vperm.xlu0 %577, %v473
        %v579 = vpop.permute.xlu0 %578
        %580 = vset.pattern.permute.xlu0 4
        %581 = vperm.xlu0 %580, %v474
        %v582 = vpop.permute.xlu0 %581
        %583 = vset.pattern.permute.xlu0 4
        %584 = vperm.xlu0 %583, %v475
        %v585 = vpop.permute.xlu0 %584
        %586 = vset.pattern.permute.xlu0 4
        %587 = vperm.xlu0 %586, %v476
        %v588 = vpop.permute.xlu0 %587
        %589 = vset.pattern.permute.xlu0 4
        %590 = vperm.xlu0 %589, %v477
        %v591 = vpop.permute.xlu0 %590
        %592 = vset.pattern.permute.xlu0 4
        %593 = vperm.xlu0 %592, %v478
        %v594 = vpop.permute.xlu0 %593
        %595 = vset.pattern.permute.xlu0 4
        %596 = vperm.xlu0 %595, %v479
        %v597 = vpop.permute.xlu0 %596
        %598 = vset.pattern.permute.xlu0 4
        %599 = vperm.xlu0 %598, %v480
        %v600 = vpop.permute.xlu0 %599
        %601 = vset.pattern.permute.xlu0 4
        %602 = vperm.xlu0 %601, %v481
        %v603 = vpop.permute.xlu0 %602
        %604 = vset.pattern.permute.xlu0 4
        %605 = vperm.xlu0 %604, %v482
        %v606 = vpop.permute.xlu0 %605
        %607 = vset.pattern.permute.xlu0 4
        %608 = vperm.xlu0 %607, %v483
        %v609 = vpop.permute.xlu0 %608
        %610 = vset.pattern.permute.xlu0 4
        %611 = vperm.xlu0 %610, %v484
        %v612 = vpop.permute.xlu0 %611
        %613 = vset.pattern.permute.xlu0 4
        %614 = vperm.xlu0 %613, %v485
        %v615 = vpop.permute.xlu0 %614
        %616 = vset.pattern.permute.xlu0 4
        %617 = vperm.xlu0 %616, %v486
        %v618 = vpop.permute.xlu0 %617
        %619 = vset.pattern.permute.xlu0 4
        %620 = vperm.xlu0 %619, %v487
        %v621 = vpop.permute.xlu0 %620
        %622 = vset.pattern.permute.xlu0 4
        %623 = vperm.xlu0 %622, %v488
        %v624 = vpop.permute.xlu0 %623
        %625 = vset.pattern.permute.xlu0 4
        %626 = vperm.xlu0 %625, %v489
        %v627 = vpop.permute.xlu0 %626
        %628 = vset.pattern.permute.xlu0 4
        %629 = vperm.xlu0 %628, %v490
        %v630 = vpop.permute.xlu0 %629
        %631 = vset.pattern.permute.xlu0 4
        %632 = vperm.xlu0 %631, %v491
        %v633 = vpop.permute.xlu0 %632
        %634 = vset.pattern.permute.xlu0 4
        %635 = vperm.xlu0 %634, %v492
        %v636 = vpop.permute.xlu0 %635
        %637 = vset.pattern.permute.xlu0 4
        %638 = vperm.xlu0 %637, %v493
        %v639 = vpop.permute.xlu0 %638
        %640 = vset.pattern.permute.xlu0 4
        %641 = vperm.xlu0 %640, %v494
        %v642 = vpop.permute.xlu0 %641
        %643 = vset.pattern.permute.xlu0 4
        %644 = vperm.xlu0 %643, %v495
        %v645 = vpop.permute.xlu0 %644
        %646 = vset.pattern.permute.xlu0 4
        %647 = vperm.xlu0 %646, %v496
        %v648 = vpop.permute.xlu0 %647
        %649 = vset.pattern.permute.xlu0 4
        %650 = vperm.xlu0 %649, %v497
        %v651 = vpop.permute.xlu0 %650
        %652 = vset.pattern.permute.xlu0 4
        %653 = vperm.xlu0 %652, %v498
        %v654 = vpop.permute.xlu0 %653
        %655 = vset.pattern.permute.xlu0 4
        %656 = vperm.xlu0 %655, %v499
        %v657 = vpop.permute.xlu0 %656
        %658 = vset.pattern.permute.xlu0 4
        %659 = vperm.xlu0 %658, %v500
        %v660 = vpop.permute.xlu0 %659
        %661 = vset.pattern.permute.xlu0 4
        %662 = vperm.xlu0 %661, %v501
        %v663 = vpop.permute.xlu0 %662
        %664 = vset.pattern.permute.xlu0 4
        %665 = vperm.xlu0 %664, %v502
        %v666 = vpop.permute.xlu0 %665
        %667 = vset.pattern.permute.xlu0 4
        %668 = vperm.xlu0 %667, %v503
        %v669 = vpop.permute.xlu0 %668
        %670 = vset.pattern.permute.xlu0 4
        %671 = vperm.xlu0 %670, %v504
        %v672 = vpop.permute.xlu0 %671
        %673 = vset.pattern.permute.xlu0 4
        %674 = vperm.xlu0 %673, %v505
        %v675 = vpop.permute.xlu0 %674
        %676 = vset.pattern.permute.xlu0 4
        %677 = vperm.xlu0 %676, %v506
        %v678 = vpop.permute.xlu0 %677
        %679 = vset.pattern.permute.xlu0 4
        %680 = vperm.xlu0 %679, %v507
        %v681 = vpop.permute.xlu0 %680
        %682 = vset.pattern.permute.xlu0 4
        %683 = vperm.xlu0 %682, %v508
        %v684 = vpop.permute.xlu0 %683
        %685 = vset.pattern.permute.xlu0 4
        %686 = vperm.xlu0 %685, %v509
        %v687 = vpop.permute.xlu0 %686
        %688 = vset.pattern.permute.xlu0 4
        %689 = vperm.xlu0 %688, %v510
        %v690 = vpop.permute.xlu0 %689
        %vm691 = vcmp.eq.s32.totalorder %v513, 1
        %vm692 = vcmp.eq.s32.totalorder %v516, 1
        %vm693 = vcmp.eq.s32.totalorder %v519, 1
        %vm694 = vcmp.eq.s32.totalorder %v522, 1
        %vm695 = vcmp.eq.s32.totalorder %v525, 1
        %vm696 = vcmp.eq.s32.totalorder %v528, 1
        %vm697 = vcmp.eq.s32.totalorder %v531, 1
        %vm698 = vcmp.eq.s32.totalorder %v534, 1
        %vm699 = vcmp.eq.s32.totalorder %v537, 1
        %vm700 = vcmp.eq.s32.totalorder %v540, 1
        %vm701 = vcmp.eq.s32.totalorder %v543, 1
        %vm702 = vcmp.eq.s32.totalorder %v546, 1
        %vm703 = vcmp.eq.s32.totalorder %v549, 1
        %vm704 = vcmp.eq.s32.totalorder %v552, 1
        %vm705 = vcmp.eq.s32.totalorder %v555, 1
        %vm706 = vcmp.eq.s32.totalorder %v558, 1
        %vm707 = vcmp.eq.s32.totalorder %v561, 1
        %vm708 = vcmp.eq.s32.totalorder %v564, 1
        %vm709 = vcmp.eq.s32.totalorder %v567, 1
        %vm710 = vcmp.eq.s32.totalorder %v570, 1
        %vm711 = vcmp.eq.s32.totalorder %v573, 1
        %vm712 = vcmp.eq.s32.totalorder %v576, 1
        %vm713 = vcmp.eq.s32.totalorder %v579, 1
        %vm714 = vcmp.eq.s32.totalorder %v582, 1
        %vm715 = vcmp.eq.s32.totalorder %v585, 1
        %vm716 = vcmp.eq.s32.totalorder %v588, 1
        %vm717 = vcmp.eq.s32.totalorder %v591, 1
        %vm718 = vcmp.eq.s32.totalorder %v594, 1
        %vm719 = vcmp.eq.s32.totalorder %v597, 1
        %vm720 = vcmp.eq.s32.totalorder %v600, 1
        %vm721 = vcmp.eq.s32.totalorder %v603, 1
        %vm722 = vcmp.eq.s32.totalorder %v606, 1
        %vm723 = vcmp.eq.s32.totalorder %v609, 1
        %vm724 = vcmp.eq.s32.totalorder %v612, 1
        %vm725 = vcmp.eq.s32.totalorder %v615, 1
        %vm726 = vcmp.eq.s32.totalorder %v618, 1
        %vm727 = vcmp.eq.s32.totalorder %v621, 1
        %vm728 = vcmp.eq.s32.totalorder %v624, 1
        %vm729 = vcmp.eq.s32.totalorder %v627, 1
        %vm730 = vcmp.eq.s32.totalorder %v630, 1
        %vm731 = vcmp.eq.s32.totalorder %v633, 1
        %vm732 = vcmp.eq.s32.totalorder %v636, 1
        %vm733 = vcmp.eq.s32.totalorder %v639, 1
        %vm734 = vcmp.eq.s32.totalorder %v642, 1
        %vm735 = vcmp.eq.s32.totalorder %v645, 1
        %vm736 = vcmp.eq.s32.totalorder %v648, 1
        %vm737 = vcmp.eq.s32.totalorder %v651, 1
        %vm738 = vcmp.eq.s32.totalorder %v654, 1
        %vm739 = vcmp.eq.s32.totalorder %v657, 1
        %vm740 = vcmp.eq.s32.totalorder %v660, 1
        %vm741 = vcmp.eq.s32.totalorder %v663, 1
        %vm742 = vcmp.eq.s32.totalorder %v666, 1
        %vm743 = vcmp.eq.s32.totalorder %v669, 1
        %vm744 = vcmp.eq.s32.totalorder %v672, 1
        %vm745 = vcmp.eq.s32.totalorder %v675, 1
        %vm746 = vcmp.eq.s32.totalorder %v678, 1
        %vm747 = vcmp.eq.s32.totalorder %v681, 1
        %vm748 = vcmp.eq.s32.totalorder %v684, 1
        %vm749 = vcmp.eq.s32.totalorder %v687, 1
        %vm750 = vcmp.eq.s32.totalorder %v690, 1
        %v751 = vsel %vm691, %v331, 0.0
        %v752 = vsel %vm692, %v332, 0.0
        %v753 = vsel %vm693, %v333, 0.0
        %v754 = vsel %vm694, %v334, 0.0
        %v755 = vsel %vm695, %v335, 0.0
        %v756 = vsel %vm696, %v336, 0.0
        %v757 = vsel %vm697, %v337, 0.0
        %v758 = vsel %vm698, %v338, 0.0
        %v759 = vsel %vm699, %v339, 0.0
        %v760 = vsel %vm700, %v340, 0.0
        %v761 = vsel %vm701, %v341, 0.0
        %v762 = vsel %vm702, %v342, 0.0
        %v763 = vsel %vm703, %v343, 0.0
        %v764 = vsel %vm704, %v344, 0.0
        %v765 = vsel %vm705, %v345, 0.0
        %v766 = vsel %vm706, %v346, 0.0
        %v767 = vsel %vm707, %v347, 0.0
        %v768 = vsel %vm708, %v348, 0.0
        %v769 = vsel %vm709, %v349, 0.0
        %v770 = vsel %vm710, %v350, 0.0
        %v771 = vsel %vm711, %v351, 0.0
        %v772 = vsel %vm712, %v352, 0.0
        %v773 = vsel %vm713, %v353, 0.0
        %v774 = vsel %vm714, %v354, 0.0
        %v775 = vsel %vm715, %v355, 0.0
        %v776 = vsel %vm716, %v356, 0.0
        %v777 = vsel %vm717, %v357, 0.0
        %v778 = vsel %vm718, %v358, 0.0
        %v779 = vsel %vm719, %v359, 0.0
        %v780 = vsel %vm720, %v360, 0.0
        %v781 = vsel %vm721, %v361, 0.0
        %v782 = vsel %vm722, %v362, 0.0
        %v783 = vsel %vm723, %v363, 0.0
        %v784 = vsel %vm724, %v364, 0.0
        %v785 = vsel %vm725, %v365, 0.0
        %v786 = vsel %vm726, %v366, 0.0
        %v787 = vsel %vm727, %v367, 0.0
        %v788 = vsel %vm728, %v368, 0.0
        %v789 = vsel %vm729, %v369, 0.0
        %v790 = vsel %vm730, %v370, 0.0
        %v791 = vsel %vm731, %v371, 0.0
        %v792 = vsel %vm732, %v372, 0.0
        %v793 = vsel %vm733, %v373, 0.0
        %v794 = vsel %vm734, %v374, 0.0
        %v795 = vsel %vm735, %v375, 0.0
        %v796 = vsel %vm736, %v376, 0.0
        %v797 = vsel %vm737, %v377, 0.0
        %v798 = vsel %vm738, %v378, 0.0
        %v799 = vsel %vm739, %v379, 0.0
        %v800 = vsel %vm740, %v380, 0.0
        %v801 = vsel %vm741, %v381, 0.0
        %v802 = vsel %vm742, %v382, 0.0
        %v803 = vsel %vm743, %v383, 0.0
        %v804 = vsel %vm744, %v384, 0.0
        %v805 = vsel %vm745, %v385, 0.0
        %v806 = vsel %vm746, %v386, 0.0
        %v807 = vsel %vm747, %v387, 0.0
        %v808 = vsel %vm748, %v388, 0.0
        %v809 = vsel %vm749, %v389, 0.0
        %v810 = vsel %vm750, %v390, 0.0
        %v811 = vld [vmem:[%s1] sm:$0xf]
        %v812 = vld [vmem:[%s2] sm:$0x1]
        %v814 = vlaneseq
        %v815 = vshrl.u32 %v814, 7
        %v816 = vsub.s32 0, %v815
        %v817 = vrot.slane %v812, %v816
        %vm819 = vcmask 31744
        %v821 = vsel %vm819, %v751, 0
        %v824 = vsel %vm819, %v752, 0
        %v827 = vsel %vm819, %v753, 0
        %v830 = vsel %vm819, %v754, 0
        %v833 = vsel %vm819, %v755, 0
        %v836 = vsel %vm819, %v756, 0
        %v839 = vsel %vm819, %v757, 0
        %v842 = vsel %vm819, %v758, 0
        %v845 = vsel %vm819, %v759, 0
        %v848 = vsel %vm819, %v760, 0
        %v851 = vsel %vm819, %v761, 0
        %v854 = vsel %vm819, %v762, 0
        %v857 = vsel %vm819, %v763, 0
        %v860 = vsel %vm819, %v764, 0
        %v863 = vsel %vm819, %v765, 0
        %v866 = vsel %vm819, %v766, 0
        %v869 = vsel %vm819, %v767, 0
        %v872 = vsel %vm819, %v768, 0
        %v875 = vsel %vm819, %v769, 0
        %v878 = vsel %vm819, %v770, 0
        %v881 = vsel %vm819, %v771, 0
        %v884 = vsel %vm819, %v772, 0
        %v887 = vsel %vm819, %v773, 0
        %v890 = vsel %vm819, %v774, 0
        %v893 = vsel %vm819, %v775, 0
        %v896 = vsel %vm819, %v776, 0
        %v899 = vsel %vm819, %v777, 0
        %v902 = vsel %vm819, %v778, 0
        %v905 = vsel %vm819, %v779, 0
        %v908 = vsel %vm819, %v780, 0
        %v911 = vsel %vm819, %v781, 0
        %v914 = vsel %vm819, %v782, 0
        %v917 = vsel %vm819, %v783, 0
        %v920 = vsel %vm819, %v784, 0
        %v923 = vsel %vm819, %v785, 0
        %v926 = vsel %vm819, %v786, 0
        %v929 = vsel %vm819, %v787, 0
        %v932 = vsel %vm819, %v788, 0
        %v935 = vsel %vm819, %v789, 0
        %v938 = vsel %vm819, %v790, 0
        %v941 = vsel %vm819, %v791, 0
        %v944 = vsel %vm819, %v792, 0
        %v947 = vsel %vm819, %v793, 0
        %v950 = vsel %vm819, %v794, 0
        %v953 = vsel %vm819, %v795, 0
        %v956 = vsel %vm819, %v796, 0
        %v959 = vsel %vm819, %v797, 0
        %v962 = vsel %vm819, %v798, 0
        %v965 = vsel %vm819, %v799, 0
        %v968 = vsel %vm819, %v800, 0
        %v971 = vsel %vm819, %v801, 0
        %v974 = vsel %vm819, %v802, 0
        %v977 = vsel %vm819, %v803, 0
        %v980 = vsel %vm819, %v804, 0
        %v983 = vsel %vm819, %v805, 0
        %v986 = vsel %vm819, %v806, 0
        %v989 = vsel %vm819, %v807, 0
        %v992 = vsel %vm819, %v808, 0
        %v995 = vsel %vm819, %v809, 0
        %v998 = vsel %vm819, %v810, 0
        %vm1000 = vcmask 1043456
        %v1002 = vsel %vm1000, %v811, 0
        %1004 = vmatprep.subr.mxu0 0.0
        %1005 = vmatpush1.msra.mxu0 %v1002
        %1006 = vmatprep.subr.mxu0 0.0
        %1007 = vmatpush1.msra.mxu0 0.0
        %1008 = vmatprep.subr.mxu0 0.0
        %1009 = vmatpush1.msra.mxu0 0.0
        %1010 = vmatprep.subr.mxu0 0.0
        %1011 = vmatpush1.msra.mxu0 0.0
        %1012 = vmatprep.subr.mxu0 0.0
        %1013 = vmatpush1.msra.mxu0 0.0
        %1014 = vmatprep.subr.mxu0 0.0
        %1015 = vmatpush1.msra.mxu0 0.0
        %1016 = vmatprep.subr.mxu0 0.0
        %1017 = vmatpush1.msra.mxu0 0.0
        %1018 = vmatprep.subr.mxu0 0.0
        %1019 = vmatpush1.msra.mxu0 0.0
        %1020 = vmatprep.subr.mxu0 0.0
        %1021 = vmatpush1.msra.mxu0 0.0
        %1022 = vmatprep.subr.mxu0 0.0
        %1023 = vmatpush1.msra.mxu0 0.0
        %1024 = vmatprep.subr.mxu0 0.0
        %1025 = vmatpush1.msra.mxu0 0.0
        %1026 = vmatprep.subr.mxu0 0.0
        %1027 = vmatpush1.msra.mxu0 0.0
        %1028 = vmatprep.subr.mxu0 0.0
        %1029 = vmatpush1.msra.mxu0 0.0
        %1030 = vmatprep.subr.mxu0 0.0
        %1031 = vmatpush1.msra.mxu0 0.0
        %1032 = vmatprep.subr.mxu0 0.0
        %1033 = vmatpush1.msra.mxu0 0.0
        %1034 = vmatprep.subr.mxu0 0.0
        %1035 = vmatpush1.msra.mxu0 0.0
        %1036 = vmatprep.subr.mxu0 0.0
        %1037 = vmatpush1.msra.mxu0 0.0
        %1038 = vmatprep.subr.mxu0 0.0
        %1039 = vmatpush1.msra.mxu0 0.0
        %1040 = vmatprep.subr.mxu0 0.0
        %1041 = vmatpush1.msra.mxu0 0.0
        %1042 = vmatprep.subr.mxu0 0.0
        %1043 = vmatpush1.msra.mxu0 0.0
        %1044 = vmatprep.subr.mxu0 0.0
        %1045 = vmatpush1.msra.mxu0 0.0
        %1046 = vmatprep.subr.mxu0 0.0
        %1047 = vmatpush1.msra.mxu0 0.0
        %1048 = vmatprep.subr.mxu0 0.0
        %1049 = vmatpush1.msra.mxu0 0.0
        %1050 = vmatprep.subr.mxu0 0.0
        %1051 = vmatpush1.msra.mxu0 0.0
        %1052 = vmatprep.subr.mxu0 0.0
        %1053 = vmatpush1.msra.mxu0 0.0
        %1054 = vmatprep.subr.mxu0 0.0
        %1055 = vmatpush1.msra.mxu0 0.0
        %1056 = vmatprep.subr.mxu0 0.0
        %1057 = vmatpush1.msra.mxu0 0.0
        %1058 = vmatprep.subr.mxu0 0.0
        %1059 = vmatpush1.msra.mxu0 0.0
        %1060 = vmatprep.subr.mxu0 0.0
        %1061 = vmatpush1.msra.mxu0 0.0
        %1062 = vmatprep.subr.mxu0 0.0
        %1063 = vmatpush1.msra.mxu0 0.0
        %1064 = vmatprep.subr.mxu0 0.0
        %1065 = vmatpush1.msra.mxu0 0.0
        %1066 = vmatprep.subr.mxu0 0.0
        %1067 = vmatpush1.msra.mxu0 0.0
        %1068 = vmatprep.mubr.f32.mxu0 0.0
        %1069 = vmatmul.mubr.f32.gmra.mrb[0].mxu0 %v821
        %v1070 = vpop.f32.mrb[0].mxu0
        %v1071 = vadd.f32 %v817, %v1070
        %v1072 = vpop.f32.mrb[0].mxu0
        %1073 = vmatprep.mubr.f32.mxu0 0.0
        %1074 = vmatmul.mubr.f32.gmra.mrb[0].mxu0 %v824
        %v1075 = vpop.f32.mrb[0].mxu0
        %v1076 = vadd.f32 %v817, %v1075
        %v1077 = vpop.f32.mrb[0].mxu0
        %1078 = vmatprep.mubr.f32.mxu0 0.0
        %1079 = vmatmul.mubr.f32.gmra.mrb[0].mxu0 %v827
        %v1080 = vpop.f32.mrb[0].mxu0
        %v1081 = vadd.f32 %v817, %v1080
        %v1082 = vpop.f32.mrb[0].mxu0
        %1083 = vmatprep.mubr.f32.mxu0 0.0
        %1084 = vmatmul.mubr.f32.gmra.mrb[0].mxu0 %v830
        %v1085 = vpop.f32.mrb[0].mxu0
        %v1086 = vadd.f32 %v817, %v1085
        %v1087 = vpop.f32.mrb[0].mxu0
        %1088 = vmatprep.mubr.f32.mxu0 0.0
        %1089 = vmatmul.mubr.f32.gmra.mrb[0].mxu0 %v833
        %v1090 = vpop.f32.mrb[0].mxu0
        %v1091 = vadd.f32 %v817, %v1090
        %v1092 = vpop.f32.mrb[0].mxu0
        %1093 = vmatprep.mubr.f32.mxu0 0.0
        %1094 = vmatmul.mubr.f32.gmra.mrb[0].mxu0 %v836
        %v1095 = vpop.f32.mrb[0].mxu0
        %v1096 = vadd.f32 %v817, %v1095
        %v1097 = vpop.f32.mrb[0].mxu0
        %1098 = vmatprep.mubr.f32.mxu0 0.0
        %1099 = vmatmul.mubr.f32.gmra.mrb[0].mxu0 %v839
        %v1100 = vpop.f32.mrb[0].mxu0
        %v1101 = vadd.f32 %v817, %v1100
        %v1102 = vpop.f32.mrb[0].mxu0
        %1103 = vmatprep.mubr.f32.mxu0 0.0
        %1104 = vmatmul.mubr.f32.gmra.mrb[0].mxu0 %v842
        %v1105 = vpop.f32.mrb[0].mxu0
        %v1106 = vadd.f32 %v817, %v1105
        %v1107 = vpop.f32.mrb[0].mxu0
        %1108 = vmatprep.mubr.f32.mxu0 0.0
        %1109 = vmatmul.mubr.f32.gmra.mrb[0].mxu0 %v845
        %v1110 = vpop.f32.mrb[0].mxu0
        %v1111 = vadd.f32 %v817, %v1110
        %v1112 = vpop.f32.mrb[0].mxu0
        %1113 = vmatprep.mubr.f32.mxu0 0.0
        %1114 = vmatmul.mubr.f32.gmra.mrb[0].mxu0 %v848
        %v1115 = vpop.f32.mrb[0].mxu0
        %v1116 = vadd.f32 %v817, %v1115
        %v1117 = vpop.f32.mrb[0].mxu0
        %1118 = vmatprep.mubr.f32.mxu0 0.0
        %1119 = vmatmul.mubr.f32.gmra.mrb[0].mxu0 %v851
        %v1120 = vpop.f32.mrb[0].mxu0
        %v1121 = vadd.f32 %v817, %v1120
        %v1122 = vpop.f32.mrb[0].mxu0
        %1123 = vmatprep.mubr.f32.mxu0 0.0
        %1124 = vmatmul.mubr.f32.gmra.mrb[0].mxu0 %v854
        %v1125 = vpop.f32.mrb[0].mxu0
        %v1126 = vadd.f32 %v817, %v1125
        %v1127 = vpop.f32.mrb[0].mxu0
        %1128 = vmatprep.mubr.f32.mxu0 0.0
        %1129 = vmatmul.mubr.f32.gmra.mrb[0].mxu0 %v857
        %v1130 = vpop.f32.mrb[0].mxu0
        %v1131 = vadd.f32 %v817, %v1130
        %v1132 = vpop.f32.mrb[0].mxu0
        %1133 = vmatprep.mubr.f32.mxu0 0.0
        %1134 = vmatmul.mubr.f32.gmra.mrb[0].mxu0 %v860
        %v1135 = vpop.f32.mrb[0].mxu0
        %v1136 = vadd.f32 %v817, %v1135
        %v1137 = vpop.f32.mrb[0].mxu0
        %1138 = vmatprep.mubr.f32.mxu0 0.0
        %1139 = vmatmul.mubr.f32.gmra.mrb[0].mxu0 %v863
        %v1140 = vpop.f32.mrb[0].mxu0
        %v1141 = vadd.f32 %v817, %v1140
        %v1142 = vpop.f32.mrb[0].mxu0
        %1143 = vmatprep.mubr.f32.mxu0 0.0
        %1144 = vmatmul.mubr.f32.gmra.mrb[0].mxu0 %v866
        %v1145 = vpop.f32.mrb[0].mxu0
        %v1146 = vadd.f32 %v817, %v1145
        %v1147 = vpop.f32.mrb[0].mxu0
        %1148 = vmatprep.mubr.f32.mxu0 0.0
        %1149 = vmatmul.mubr.f32.gmra.mrb[0].mxu0 %v869
        %v1150 = vpop.f32.mrb[0].mxu0
        %v1151 = vadd.f32 %v817, %v1150
        %v1152 = vpop.f32.mrb[0].mxu0
        %1153 = vmatprep.mubr.f32.mxu0 0.0
        %1154 = vmatmul.mubr.f32.gmra.mrb[0].mxu0 %v872
        %v1155 = vpop.f32.mrb[0].mxu0
        %v1156 = vadd.f32 %v817, %v1155
        %v1157 = vpop.f32.mrb[0].mxu0
        %1158 = vmatprep.mubr.f32.mxu0 0.0
        %1159 = vmatmul.mubr.f32.gmra.mrb[0].mxu0 %v875
        %v1160 = vpop.f32.mrb[0].mxu0
        %v1161 = vadd.f32 %v817, %v1160
        %v1162 = vpop.f32.mrb[0].mxu0
        %1163 = vmatprep.mubr.f32.mxu0 0.0
        %1164 = vmatmul.mubr.f32.gmra.mrb[0].mxu0 %v878
        %v1165 = vpop.f32.mrb[0].mxu0
        %v1166 = vadd.f32 %v817, %v1165
        %v1167 = vpop.f32.mrb[0].mxu0
        %1168 = vmatprep.mubr.f32.mxu0 0.0
        %1169 = vmatmul.mubr.f32.gmra.mrb[0].mxu0 %v881
        %v1170 = vpop.f32.mrb[0].mxu0
        %v1171 = vadd.f32 %v817, %v1170
        %v1172 = vpop.f32.mrb[0].mxu0
        %1173 = vmatprep.mubr.f32.mxu0 0.0
        %1174 = vmatmul.mubr.f32.gmra.mrb[0].mxu0 %v884
        %v1175 = vpop.f32.mrb[0].mxu0
        %v1176 = vadd.f32 %v817, %v1175
        %v1177 = vpop.f32.mrb[0].mxu0
        %1178 = vmatprep.mubr.f32.mxu0 0.0
        %1179 = vmatmul.mubr.f32.gmra.mrb[0].mxu0 %v887
        %v1180 = vpop.f32.mrb[0].mxu0
        %v1181 = vadd.f32 %v817, %v1180
        %v1182 = vpop.f32.mrb[0].mxu0
        %1183 = vmatprep.mubr.f32.mxu0 0.0
        %1184 = vmatmul.mubr.f32.gmra.mrb[0].mxu0 %v890
        %v1185 = vpop.f32.mrb[0].mxu0
        %v1186 = vadd.f32 %v817, %v1185
        %v1187 = vpop.f32.mrb[0].mxu0
        %1188 = vmatprep.mubr.f32.mxu0 0.0
        %1189 = vmatmul.mubr.f32.gmra.mrb[0].mxu0 %v893
        %v1190 = vpop.f32.mrb[0].mxu0
        %v1191 = vadd.f32 %v817, %v1190
        %v1192 = vpop.f32.mrb[0].mxu0
        %1193 = vmatprep.mubr.f32.mxu0 0.0
        %1194 = vmatmul.mubr.f32.gmra.mrb[0].mxu0 %v896
        %v1195 = vpop.f32.mrb[0].mxu0
        %v1196 = vadd.f32 %v817, %v1195
        %v1197 = vpop.f32.mrb[0].mxu0
        %1198 = vmatprep.mubr.f32.mxu0 0.0
        %1199 = vmatmul.mubr.f32.gmra.mrb[0].mxu0 %v899
        %v1200 = vpop.f32.mrb[0].mxu0
        %v1201 = vadd.f32 %v817, %v1200
        %v1202 = vpop.f32.mrb[0].mxu0
        %1203 = vmatprep.mubr.f32.mxu0 0.0
        %1204 = vmatmul.mubr.f32.gmra.mrb[0].mxu0 %v902
        %v1205 = vpop.f32.mrb[0].mxu0
        %v1206 = vadd.f32 %v817, %v1205
        %v1207 = vpop.f32.mrb[0].mxu0
        %1208 = vmatprep.mubr.f32.mxu0 0.0
        %1209 = vmatmul.mubr.f32.gmra.mrb[0].mxu0 %v905
        %v1210 = vpop.f32.mrb[0].mxu0
        %v1211 = vadd.f32 %v817, %v1210
        %v1212 = vpop.f32.mrb[0].mxu0
        %1213 = vmatprep.mubr.f32.mxu0 0.0
        %1214 = vmatmul.mubr.f32.gmra.mrb[0].mxu0 %v908
        %v1215 = vpop.f32.mrb[0].mxu0
        %v1216 = vadd.f32 %v817, %v1215
        %v1217 = vpop.f32.mrb[0].mxu0
        %1218 = vmatprep.mubr.f32.mxu0 0.0
        %1219 = vmatmul.mubr.f32.gmra.mrb[0].mxu0 %v911
        %v1220 = vpop.f32.mrb[0].mxu0
        %v1221 = vadd.f32 %v817, %v1220
        %v1222 = vpop.f32.mrb[0].mxu0
        %1223 = vmatprep.mubr.f32.mxu0 0.0
        %1224 = vmatmul.mubr.f32.gmra.mrb[0].mxu0 %v914
        %v1225 = vpop.f32.mrb[0].mxu0
        %v1226 = vadd.f32 %v817, %v1225
        %v1227 = vpop.f32.mrb[0].mxu0
        %1228 = vmatprep.mubr.f32.mxu0 0.0
        %1229 = vmatmul.mubr.f32.gmra.mrb[0].mxu0 %v917
        %v1230 = vpop.f32.mrb[0].mxu0
        %v1231 = vadd.f32 %v817, %v1230
        %v1232 = vpop.f32.mrb[0].mxu0
        %1233 = vmatprep.mubr.f32.mxu0 0.0
        %1234 = vmatmul.mubr.f32.gmra.mrb[0].mxu0 %v920
        %v1235 = vpop.f32.mrb[0].mxu0
        %v1236 = vadd.f32 %v817, %v1235
        %v1237 = vpop.f32.mrb[0].mxu0
        %1238 = vmatprep.mubr.f32.mxu0 0.0
        %1239 = vmatmul.mubr.f32.gmra.mrb[0].mxu0 %v923
        %v1240 = vpop.f32.mrb[0].mxu0
        %v1241 = vadd.f32 %v817, %v1240
        %v1242 = vpop.f32.mrb[0].mxu0
        %1243 = vmatprep.mubr.f32.mxu0 0.0
        %1244 = vmatmul.mubr.f32.gmra.mrb[0].mxu0 %v926
        %v1245 = vpop.f32.mrb[0].mxu0
        %v1246 = vadd.f32 %v817, %v1245
        %v1247 = vpop.f32.mrb[0].mxu0
        %1248 = vmatprep.mubr.f32.mxu0 0.0
        %1249 = vmatmul.mubr.f32.gmra.mrb[0].mxu0 %v929
        %v1250 = vpop.f32.mrb[0].mxu0
        %v1251 = vadd.f32 %v817, %v1250
        %v1252 = vpop.f32.mrb[0].mxu0
        %1253 = vmatprep.mubr.f32.mxu0 0.0
        %1254 = vmatmul.mubr.f32.gmra.mrb[0].mxu0 %v932
        %v1255 = vpop.f32.mrb[0].mxu0
        %v1256 = vadd.f32 %v817, %v1255
        %v1257 = vpop.f32.mrb[0].mxu0
        %1258 = vmatprep.mubr.f32.mxu0 0.0
        %1259 = vmatmul.mubr.f32.gmra.mrb[0].mxu0 %v935
        %v1260 = vpop.f32.mrb[0].mxu0
        %v1261 = vadd.f32 %v817, %v1260
        %v1262 = vpop.f32.mrb[0].mxu0
        %1263 = vmatprep.mubr.f32.mxu0 0.0
        %1264 = vmatmul.mubr.f32.gmra.mrb[0].mxu0 %v938
        %v1265 = vpop.f32.mrb[0].mxu0
        %v1266 = vadd.f32 %v817, %v1265
        %v1267 = vpop.f32.mrb[0].mxu0
        %1268 = vmatprep.mubr.f32.mxu0 0.0
        %1269 = vmatmul.mubr.f32.gmra.mrb[0].mxu0 %v941
        %v1270 = vpop.f32.mrb[0].mxu0
        %v1271 = vadd.f32 %v817, %v1270
        %v1272 = vpop.f32.mrb[0].mxu0
        %1273 = vmatprep.mubr.f32.mxu0 0.0
        %1274 = vmatmul.mubr.f32.gmra.mrb[0].mxu0 %v944
        %v1275 = vpop.f32.mrb[0].mxu0
        %v1276 = vadd.f32 %v817, %v1275
        %v1277 = vpop.f32.mrb[0].mxu0
        %1278 = vmatprep.mubr.f32.mxu0 0.0
        %1279 = vmatmul.mubr.f32.gmra.mrb[0].mxu0 %v947
        %v1280 = vpop.f32.mrb[0].mxu0
        %v1281 = vadd.f32 %v817, %v1280
        %v1282 = vpop.f32.mrb[0].mxu0
        %1283 = vmatprep.mubr.f32.mxu0 0.0
        %1284 = vmatmul.mubr.f32.gmra.mrb[0].mxu0 %v950
        %v1285 = vpop.f32.mrb[0].mxu0
        %v1286 = vadd.f32 %v817, %v1285
        %v1287 = vpop.f32.mrb[0].mxu0
        %1288 = vmatprep.mubr.f32.mxu0 0.0
        %1289 = vmatmul.mubr.f32.gmra.mrb[0].mxu0 %v953
        %v1290 = vpop.f32.mrb[0].mxu0
        %v1291 = vadd.f32 %v817, %v1290
        %v1292 = vpop.f32.mrb[0].mxu0
        %1293 = vmatprep.mubr.f32.mxu0 0.0
        %1294 = vmatmul.mubr.f32.gmra.mrb[0].mxu0 %v956
        %v1295 = vpop.f32.mrb[0].mxu0
        %v1296 = vadd.f32 %v817, %v1295
        %v1297 = vpop.f32.mrb[0].mxu0
        %1298 = vmatprep.mubr.f32.mxu0 0.0
        %1299 = vmatmul.mubr.f32.gmra.mrb[0].mxu0 %v959
        %v1300 = vpop.f32.mrb[0].mxu0
        %v1301 = vadd.f32 %v817, %v1300
        %v1302 = vpop.f32.mrb[0].mxu0
        %1303 = vmatprep.mubr.f32.mxu0 0.0
        %1304 = vmatmul.mubr.f32.gmra.mrb[0].mxu0 %v962
        %v1305 = vpop.f32.mrb[0].mxu0
        %v1306 = vadd.f32 %v817, %v1305
        %v1307 = vpop.f32.mrb[0].mxu0
        %1308 = vmatprep.mubr.f32.mxu0 0.0
        %1309 = vmatmul.mubr.f32.gmra.mrb[0].mxu0 %v965
        %v1310 = vpop.f32.mrb[0].mxu0
        %v1311 = vadd.f32 %v817, %v1310
        %v1312 = vpop.f32.mrb[0].mxu0
        %1313 = vmatprep.mubr.f32.mxu0 0.0
        %1314 = vmatmul.mubr.f32.gmra.mrb[0].mxu0 %v968
        %v1315 = vpop.f32.mrb[0].mxu0
        %v1316 = vadd.f32 %v817, %v1315
        %v1317 = vpop.f32.mrb[0].mxu0
        %1318 = vmatprep.mubr.f32.mxu0 0.0
        %1319 = vmatmul.mubr.f32.gmra.mrb[0].mxu0 %v971
        %v1320 = vpop.f32.mrb[0].mxu0
        %v1321 = vadd.f32 %v817, %v1320
        %v1322 = vpop.f32.mrb[0].mxu0
        %1323 = vmatprep.mubr.f32.mxu0 0.0
        %1324 = vmatmul.mubr.f32.gmra.mrb[0].mxu0 %v974
        %v1325 = vpop.f32.mrb[0].mxu0
        %v1326 = vadd.f32 %v817, %v1325
        %v1327 = vpop.f32.mrb[0].mxu0
        %1328 = vmatprep.mubr.f32.mxu0 0.0
        %1329 = vmatmul.mubr.f32.gmra.mrb[0].mxu0 %v977
        %v1330 = vpop.f32.mrb[0].mxu0
        %v1331 = vadd.f32 %v817, %v1330
        %v1332 = vpop.f32.mrb[0].mxu0
        %1333 = vmatprep.mubr.f32.mxu0 0.0
        %1334 = vmatmul.mubr.f32.gmra.mrb[0].mxu0 %v980
        %v1335 = vpop.f32.mrb[0].mxu0
        %v1336 = vadd.f32 %v817, %v1335
        %v1337 = vpop.f32.mrb[0].mxu0
        %1338 = vmatprep.mubr.f32.mxu0 0.0
        %1339 = vmatmul.mubr.f32.gmra.mrb[0].mxu0 %v983
        %v1340 = vpop.f32.mrb[0].mxu0
        %v1341 = vadd.f32 %v817, %v1340
        %v1342 = vpop.f32.mrb[0].mxu0
        %1343 = vmatprep.mubr.f32.mxu0 0.0
        %1344 = vmatmul.mubr.f32.gmra.mrb[0].mxu0 %v986
        %v1345 = vpop.f32.mrb[0].mxu0
        %v1346 = vadd.f32 %v817, %v1345
        %v1347 = vpop.f32.mrb[0].mxu0
        %1348 = vmatprep.mubr.f32.mxu0 0.0
        %1349 = vmatmul.mubr.f32.gmra.mrb[0].mxu0 %v989
        %v1350 = vpop.f32.mrb[0].mxu0
        %v1351 = vadd.f32 %v817, %v1350
        %v1352 = vpop.f32.mrb[0].mxu0
        %1353 = vmatprep.mubr.f32.mxu0 0.0
        %1354 = vmatmul.mubr.f32.gmra.mrb[0].mxu0 %v992
        %v1355 = vpop.f32.mrb[0].mxu0
        %v1356 = vadd.f32 %v817, %v1355
        %v1357 = vpop.f32.mrb[0].mxu0
        %1358 = vmatprep.mubr.f32.mxu0 0.0
        %1359 = vmatmul.mubr.f32.gmra.mrb[0].mxu0 %v995
        %v1360 = vpop.f32.mrb[0].mxu0
        %v1361 = vadd.f32 %v817, %v1360
        %v1362 = vpop.f32.mrb[0].mxu0
        %1363 = vmatprep.mubr.f32.mxu0 0.0
        %1364 = vmatmul.mubr.f32.gmra.mrb[0].mxu0 %v998
        %v1365 = vpop.f32.mrb[0].mxu0
        %v1366 = vadd.f32 %v817, %v1365
        %v1367 = vpop.f32.mrb[0].mxu0
        %1368 = vdwg.mxu0
        %v1369 = vmax.f32 %v1071, 0.0
        %v1370 = vmax.f32 %v1076, 0.0
        %v1371 = vmax.f32 %v1081, 0.0
        %v1372 = vmax.f32 %v1086, 0.0
        %v1373 = vmax.f32 %v1091, 0.0
        %v1374 = vmax.f32 %v1096, 0.0
        %v1375 = vmax.f32 %v1101, 0.0
        %v1376 = vmax.f32 %v1106, 0.0
        %v1377 = vmax.f32 %v1111, 0.0
        %v1378 = vmax.f32 %v1116, 0.0
        %v1379 = vmax.f32 %v1121, 0.0
        %v1380 = vmax.f32 %v1126, 0.0
        %v1381 = vmax.f32 %v1131, 0.0
        %v1382 = vmax.f32 %v1136, 0.0
        %v1383 = vmax.f32 %v1141, 0.0
        %v1384 = vmax.f32 %v1146, 0.0
        %v1385 = vmax.f32 %v1151, 0.0
        %v1386 = vmax.f32 %v1156, 0.0
        %v1387 = vmax.f32 %v1161, 0.0
        %v1388 = vmax.f32 %v1166, 0.0
        %v1389 = vmax.f32 %v1171, 0.0
        %v1390 = vmax.f32 %v1176, 0.0
        %v1391 = vmax.f32 %v1181, 0.0
        %v1392 = vmax.f32 %v1186, 0.0
        %v1393 = vmax.f32 %v1191, 0.0
        %v1394 = vmax.f32 %v1196, 0.0
        %v1395 = vmax.f32 %v1201, 0.0
        %v1396 = vmax.f32 %v1206, 0.0
        %v1397 = vmax.f32 %v1211, 0.0
        %v1398 = vmax.f32 %v1216, 0.0
        %v1399 = vmax.f32 %v1221, 0.0
        %v1400 = vmax.f32 %v1226, 0.0
        %v1401 = vmax.f32 %v1231, 0.0
        %v1402 = vmax.f32 %v1236, 0.0
        %v1403 = vmax.f32 %v1241, 0.0
        %v1404 = vmax.f32 %v1246, 0.0
        %v1405 = vmax.f32 %v1251, 0.0
        %v1406 = vmax.f32 %v1256, 0.0
        %v1407 = vmax.f32 %v1261, 0.0
        %v1408 = vmax.f32 %v1266, 0.0
        %v1409 = vmax.f32 %v1271, 0.0
        %v1410 = vmax.f32 %v1276, 0.0
        %v1411 = vmax.f32 %v1281, 0.0
        %v1412 = vmax.f32 %v1286, 0.0
        %v1413 = vmax.f32 %v1291, 0.0
        %v1414 = vmax.f32 %v1296, 0.0
        %v1415 = vmax.f32 %v1301, 0.0
        %v1416 = vmax.f32 %v1306, 0.0
        %v1417 = vmax.f32 %v1311, 0.0
        %v1418 = vmax.f32 %v1316, 0.0
        %v1419 = vmax.f32 %v1321, 0.0
        %v1420 = vmax.f32 %v1326, 0.0
        %v1421 = vmax.f32 %v1331, 0.0
        %v1422 = vmax.f32 %v1336, 0.0
        %v1423 = vmax.f32 %v1341, 0.0
        %v1424 = vmax.f32 %v1346, 0.0
        %v1425 = vmax.f32 %v1351, 0.0
        %v1426 = vmax.f32 %v1356, 0.0
        %v1427 = vmax.f32 %v1361, 0.0
        %v1428 = vmax.f32 %v1366, 0.0
        %vm1429 = vcmask 64512
        %1430 = vst.msk [vmem:[%s325] sm:$0xff] %vm1429, %v1369
        %1431 = vst.msk [vmem:[%s325 + $0x8] sm:$0xff] %vm1429, %v1370
        %1432 = vst.msk [vmem:[%s325 + $0x10] sm:$0xff] %vm1429, %v1371
        %1433 = vst.msk [vmem:[%s325 + $0x18] sm:$0xff] %vm1429, %v1372
        %1434 = vst.msk [vmem:[%s325 + $0x20] sm:$0xff] %vm1429, %v1373
        %1435 = vst.msk [vmem:[%s325 + $0x28] sm:$0xff] %vm1429, %v1374
        %1436 = vst.msk [vmem:[%s325 + $0x30] sm:$0xff] %vm1429, %v1375
        %1437 = vst.msk [vmem:[%s325 + $0x38] sm:$0xff] %vm1429, %v1376
        %1438 = vst.msk [vmem:[%s325 + $0x40] sm:$0xff] %vm1429, %v1377
        %1439 = vst.msk [vmem:[%s325 + $0x48] sm:$0xff] %vm1429, %v1378
        %1440 = vst.msk [vmem:[%s325 + $0x50] sm:$0xff] %vm1429, %v1379
        %1441 = vst.msk [vmem:[%s325 + $0x58] sm:$0xff] %vm1429, %v1380
        %1442 = vst.msk [vmem:[%s325 + $0x60] sm:$0xff] %vm1429, %v1381
        %1443 = vst.msk [vmem:[%s325 + $0x68] sm:$0xff] %vm1429, %v1382
        %1444 = vst.msk [vmem:[%s325 + $0x70] sm:$0xff] %vm1429, %v1383
        %1445 = vst.msk [vmem:[%s325 + $0x78] sm:$0xff] %vm1429, %v1384
        %1446 = vst.msk [vmem:[%s325 + $0x80] sm:$0xff] %vm1429, %v1385
        %1447 = vst.msk [vmem:[%s325 + $0x88] sm:$0xff] %vm1429, %v1386
        %1448 = vst.msk [vmem:[%s325 + $0x90] sm:$0xff] %vm1429, %v1387
        %1449 = vst.msk [vmem:[%s325 + $0x98] sm:$0xff] %vm1429, %v1388
        %1450 = vst.msk [vmem:[%s325 + $0xa0] sm:$0xff] %vm1429, %v1389
        %1451 = vst.msk [vmem:[%s325 + $0xa8] sm:$0xff] %vm1429, %v1390
        %1452 = vst.msk [vmem:[%s325 + $0xb0] sm:$0xff] %vm1429, %v1391
        %1453 = vst.msk [vmem:[%s325 + $0xb8] sm:$0xff] %vm1429, %v1392
        %1454 = vst.msk [vmem:[%s325 + $0xc0] sm:$0xff] %vm1429, %v1393
        %1455 = vst.msk [vmem:[%s325 + $0xc8] sm:$0xff] %vm1429, %v1394
        %1456 = vst.msk [vmem:[%s325 + $0xd0] sm:$0xff] %vm1429, %v1395
        %1457 = vst.msk [vmem:[%s325 + $0xd8] sm:$0xff] %vm1429, %v1396
        %1458 = vst.msk [vmem:[%s325 + $0xe0] sm:$0xff] %vm1429, %v1397
        %1459 = vst.msk [vmem:[%s325 + $0xe8] sm:$0xff] %vm1429, %v1398
        %1460 = vst.msk [vmem:[%s325 + $0xf0] sm:$0xff] %vm1429, %v1399
        %1461 = vst.msk [vmem:[%s325 + $0xf8] sm:$0xff] %vm1429, %v1400
        %1462 = vst.msk [vmem:[%s325 + $0x100] sm:$0xff] %vm1429, %v1401
        %1463 = vst.msk [vmem:[%s325 + $0x108] sm:$0xff] %vm1429, %v1402
        %1464 = vst.msk [vmem:[%s325 + $0x110] sm:$0xff] %vm1429, %v1403
        %1465 = vst.msk [vmem:[%s325 + $0x118] sm:$0xff] %vm1429, %v1404
        %1466 = vst.msk [vmem:[%s325 + $0x120] sm:$0xff] %vm1429, %v1405
        %1467 = vst.msk [vmem:[%s325 + $0x128] sm:$0xff] %vm1429, %v1406
        %1468 = vst.msk [vmem:[%s325 + $0x130] sm:$0xff] %vm1429, %v1407
        %1469 = vst.msk [vmem:[%s325 + $0x138] sm:$0xff] %vm1429, %v1408
        %1470 = vst.msk [vmem:[%s325 + $0x140] sm:$0xff] %vm1429, %v1409
        %1471 = vst.msk [vmem:[%s325 + $0x148] sm:$0xff] %vm1429, %v1410
        %1472 = vst.msk [vmem:[%s325 + $0x150] sm:$0xff] %vm1429, %v1411
        %1473 = vst.msk [vmem:[%s325 + $0x158] sm:$0xff] %vm1429, %v1412
        %1474 = vst.msk [vmem:[%s325 + $0x160] sm:$0xff] %vm1429, %v1413
        %1475 = vst.msk [vmem:[%s325 + $0x168] sm:$0xff] %vm1429, %v1414
        %1476 = vst.msk [vmem:[%s325 + $0x170] sm:$0xff] %vm1429, %v1415
        %1477 = vst.msk [vmem:[%s325 + $0x178] sm:$0xff] %vm1429, %v1416
        %1478 = vst.msk [vmem:[%s325 + $0x180] sm:$0xff] %vm1429, %v1417
        %1479 = vst.msk [vmem:[%s325 + $0x188] sm:$0xff] %vm1429, %v1418
        %1480 = vst.msk [vmem:[%s325 + $0x190] sm:$0xff] %vm1429, %v1419
        %1481 = vst.msk [vmem:[%s325 + $0x198] sm:$0xff] %vm1429, %v1420
        %1482 = vst.msk [vmem:[%s325 + $0x1a0] sm:$0xff] %vm1429, %v1421
        %1483 = vst.msk [vmem:[%s325 + $0x1a8] sm:$0xff] %vm1429, %v1422
        %1484 = vst.msk [vmem:[%s325 + $0x1b0] sm:$0xff] %vm1429, %v1423
        %1485 = vst.msk [vmem:[%s325 + $0x1b8] sm:$0xff] %vm1429, %v1424
        %1486 = vst.msk [vmem:[%s325 + $0x1c0] sm:$0xff] %vm1429, %v1425
        %1487 = vst.msk [vmem:[%s325 + $0x1c8] sm:$0xff] %vm1429, %v1426
        %1488 = vst.msk [vmem:[%s325 + $0x1d0] sm:$0xff] %vm1429, %v1427
        %1489 = vst.msk [vmem:[%s325 + $0x1d8] sm:$0xff] %vm1429, %v1428
        %v1490 = vsel %vm691, %v1369, 0.0
        %v1491 = vsel %vm692, %v1370, 0.0
        %v1492 = vsel %vm693, %v1371, 0.0
        %v1493 = vsel %vm694, %v1372, 0.0
        %v1494 = vsel %vm695, %v1373, 0.0
        %v1495 = vsel %vm696, %v1374, 0.0
        %v1496 = vsel %vm697, %v1375, 0.0
        %v1497 = vsel %vm698, %v1376, 0.0
        %v1498 = vsel %vm699, %v1377, 0.0
        %v1499 = vsel %vm700, %v1378, 0.0
        %v1500 = vsel %vm701, %v1379, 0.0
        %v1501 = vsel %vm702, %v1380, 0.0
        %v1502 = vsel %vm703, %v1381, 0.0
        %v1503 = vsel %vm704, %v1382, 0.0
        %v1504 = vsel %vm705, %v1383, 0.0
        %v1505 = vsel %vm706, %v1384, 0.0
        %v1506 = vsel %vm707, %v1385, 0.0
        %v1507 = vsel %vm708, %v1386, 0.0
        %v1508 = vsel %vm709, %v1387, 0.0
        %v1509 = vsel %vm710, %v1388, 0.0
        %v1510 = vsel %vm711, %v1389, 0.0
        %v1511 = vsel %vm712, %v1390, 0.0
        %v1512 = vsel %vm713, %v1391, 0.0
        %v1513 = vsel %vm714, %v1392, 0.0
        %v1514 = vsel %vm715, %v1393, 0.0
        %v1515 = vsel %vm716, %v1394, 0.0
        %v1516 = vsel %vm717, %v1395, 0.0
        %v1517 = vsel %vm718, %v1396, 0.0
        %v1518 = vsel %vm719, %v1397, 0.0
        %v1519 = vsel %vm720, %v1398, 0.0
        %v1520 = vsel %vm721, %v1399, 0.0
        %v1521 = vsel %vm722, %v1400, 0.0
        %v1522 = vsel %vm723, %v1401, 0.0
        %v1523 = vsel %vm724, %v1402, 0.0
        %v1524 = vsel %vm725, %v1403, 0.0
        %v1525 = vsel %vm726, %v1404, 0.0
        %v1526 = vsel %vm727, %v1405, 0.0
        %v1527 = vsel %vm728, %v1406, 0.0
        %v1528 = vsel %vm729, %v1407, 0.0
        %v1529 = vsel %vm730, %v1408, 0.0
        %v1530 = vsel %vm731, %v1409, 0.0
        %v1531 = vsel %vm732, %v1410, 0.0
        %v1532 = vsel %vm733, %v1411, 0.0
        %v1533 = vsel %vm734, %v1412, 0.0
        %v1534 = vsel %vm735, %v1413, 0.0
        %v1535 = vsel %vm736, %v1414, 0.0
        %v1536 = vsel %vm737, %v1415, 0.0
        %v1537 = vsel %vm738, %v1416, 0.0
        %v1538 = vsel %vm739, %v1417, 0.0
        %v1539 = vsel %vm740, %v1418, 0.0
        %v1540 = vsel %vm741, %v1419, 0.0
        %v1541 = vsel %vm742, %v1420, 0.0
        %v1542 = vsel %vm743, %v1421, 0.0
        %v1543 = vsel %vm744, %v1422, 0.0
        %v1544 = vsel %vm745, %v1423, 0.0
        %v1545 = vsel %vm746, %v1424, 0.0
        %v1546 = vsel %vm747, %v1425, 0.0
        %v1547 = vsel %vm748, %v1426, 0.0
        %v1548 = vsel %vm749, %v1427, 0.0
        %v1549 = vsel %vm750, %v1428, 0.0
        %vm1550 = vcmask 97280
        %1551 = vst.msk [vmem:[#allocation2] sm:$0xff] %vm1550, 0.0
        %1552 = vst.msk [vmem:[#allocation2 + $0x8] sm:$0xff] %vm1550, 0.0
        %1553 = vst.msk [vmem:[#allocation2 + $0x10] sm:$0xff] %vm1550, 0.0
        %vm1554 = vcmask 90112
        %1555 = vst.msk [vmem:[#allocation2 + $0x18] sm:$0x1] %vm1554, 0.0
        %1556 = vst.msk [vmem:[#allocation2 + $0x1f7] sm:$0xff] %vm1550, 0.0
        %1557 = vst.msk [vmem:[#allocation2 + $0x1ff] sm:$0xff] %vm1550, 0.0
        %1558 = vst.msk [vmem:[#allocation2 + $0x207] sm:$0xff] %vm1550, 0.0
        %1559 = vst.msk [vmem:[#allocation2 + $0x20f] sm:$0x1] %vm1554, 0.0
        %1620 = vrot.lane.b32.xlu0 %v1490, 120
        %v1621 = vpop.permute.xlu0 %1620
        %1622 = vrot.lane.b32.xlu0 %v1491, 120
        %v1623 = vpop.permute.xlu0 %1622
        %1624 = vrot.lane.b32.xlu0 %v1492, 120
        %v1625 = vpop.permute.xlu0 %1624
        %1626 = vrot.lane.b32.xlu0 %v1493, 120
        %v1627 = vpop.permute.xlu0 %1626
        %1628 = vrot.lane.b32.xlu0 %v1494, 120
        %v1629 = vpop.permute.xlu0 %1628
        %1630 = vrot.lane.b32.xlu0 %v1495, 120
        %v1631 = vpop.permute.xlu0 %1630
        %1632 = vrot.lane.b32.xlu0 %v1496, 120
        %v1633 = vpop.permute.xlu0 %1632
        %1634 = vrot.lane.b32.xlu0 %v1497, 120
        %v1635 = vpop.permute.xlu0 %1634
        %1636 = vrot.lane.b32.xlu0 %v1498, 120
        %v1637 = vpop.permute.xlu0 %1636
        %1638 = vrot.lane.b32.xlu0 %v1499, 120
        %v1639 = vpop.permute.xlu0 %1638
        %1640 = vrot.lane.b32.xlu0 %v1500, 120
        %v1641 = vpop.permute.xlu0 %1640
        %1642 = vrot.lane.b32.xlu0 %v1501, 120
        %v1643 = vpop.permute.xlu0 %1642
        %1644 = vrot.lane.b32.xlu0 %v1502, 120
        %v1645 = vpop.permute.xlu0 %1644
        %1646 = vrot.lane.b32.xlu0 %v1503, 120
        %v1647 = vpop.permute.xlu0 %1646
        %1648 = vrot.lane.b32.xlu0 %v1504, 120
        %v1649 = vpop.permute.xlu0 %1648
        %1650 = vrot.lane.b32.xlu0 %v1505, 120
        %v1651 = vpop.permute.xlu0 %1650
        %1652 = vrot.lane.b32.xlu0 %v1506, 120
        %v1653 = vpop.permute.xlu0 %1652
        %1654 = vrot.lane.b32.xlu0 %v1507, 120
        %v1655 = vpop.permute.xlu0 %1654
        %1656 = vrot.lane.b32.xlu0 %v1508, 120
        %v1657 = vpop.permute.xlu0 %1656
        %1658 = vrot.lane.b32.xlu0 %v1509, 120
        %v1659 = vpop.permute.xlu0 %1658
        %1660 = vrot.lane.b32.xlu0 %v1510, 120
        %v1661 = vpop.permute.xlu0 %1660
        %1662 = vrot.lane.b32.xlu0 %v1511, 120
        %v1663 = vpop.permute.xlu0 %1662
        %1664 = vrot.lane.b32.xlu0 %v1512, 120
        %v1665 = vpop.permute.xlu0 %1664
        %1666 = vrot.lane.b32.xlu0 %v1513, 120
        %v1667 = vpop.permute.xlu0 %1666
        %1668 = vrot.lane.b32.xlu0 %v1514, 120
        %v1669 = vpop.permute.xlu0 %1668
        %1670 = vrot.lane.b32.xlu0 %v1515, 120
        %v1671 = vpop.permute.xlu0 %1670
        %1672 = vrot.lane.b32.xlu0 %v1516, 120
        %v1673 = vpop.permute.xlu0 %1672
        %1674 = vrot.lane.b32.xlu0 %v1517, 120
        %v1675 = vpop.permute.xlu0 %1674
        %1676 = vrot.lane.b32.xlu0 %v1518, 120
        %v1677 = vpop.permute.xlu0 %1676
        %1678 = vrot.lane.b32.xlu0 %v1519, 120
        %v1679 = vpop.permute.xlu0 %1678
        %1680 = vrot.lane.b32.xlu0 %v1520, 120
        %v1681 = vpop.permute.xlu0 %1680
        %1682 = vrot.lane.b32.xlu0 %v1521, 120
        %v1683 = vpop.permute.xlu0 %1682
        %1684 = vrot.lane.b32.xlu0 %v1522, 120
        %v1685 = vpop.permute.xlu0 %1684
        %1686 = vrot.lane.b32.xlu0 %v1523, 120
        %v1687 = vpop.permute.xlu0 %1686
        %1688 = vrot.lane.b32.xlu0 %v1524, 120
        %v1689 = vpop.permute.xlu0 %1688
        %1690 = vrot.lane.b32.xlu0 %v1525, 120
        %v1691 = vpop.permute.xlu0 %1690
        %1692 = vrot.lane.b32.xlu0 %v1526, 120
        %v1693 = vpop.permute.xlu0 %1692
        %1694 = vrot.lane.b32.xlu0 %v1527, 120
        %v1695 = vpop.permute.xlu0 %1694
        %1696 = vrot.lane.b32.xlu0 %v1528, 120
        %v1697 = vpop.permute.xlu0 %1696
        %1698 = vrot.lane.b32.xlu0 %v1529, 120
        %v1699 = vpop.permute.xlu0 %1698
        %1700 = vrot.lane.b32.xlu0 %v1530, 120
        %v1701 = vpop.permute.xlu0 %1700
        %1702 = vrot.lane.b32.xlu0 %v1531, 120
        %v1703 = vpop.permute.xlu0 %1702
        %1704 = vrot.lane.b32.xlu0 %v1532, 120
        %v1705 = vpop.permute.xlu0 %1704
        %1706 = vrot.lane.b32.xlu0 %v1533, 120
        %v1707 = vpop.permute.xlu0 %1706
        %1708 = vrot.lane.b32.xlu0 %v1534, 120
        %v1709 = vpop.permute.xlu0 %1708
        %1710 = vrot.lane.b32.xlu0 %v1535, 120
        %v1711 = vpop.permute.xlu0 %1710
        %1712 = vrot.lane.b32.xlu0 %v1536, 120
        %v1713 = vpop.permute.xlu0 %1712
        %1714 = vrot.lane.b32.xlu0 %v1537, 120
        %v1715 = vpop.permute.xlu0 %1714
        %1716 = vrot.lane.b32.xlu0 %v1538, 120
        %v1717 = vpop.permute.xlu0 %1716
        %1718 = vrot.lane.b32.xlu0 %v1539, 120
        %v1719 = vpop.permute.xlu0 %1718
        %1720 = vrot.lane.b32.xlu0 %v1540, 120
        %v1721 = vpop.permute.xlu0 %1720
        %1722 = vrot.lane.b32.xlu0 %v1541, 120
        %v1723 = vpop.permute.xlu0 %1722
        %1724 = vrot.lane.b32.xlu0 %v1542, 120
        %v1725 = vpop.permute.xlu0 %1724
        %1726 = vrot.lane.b32.xlu0 %v1543, 120
        %v1727 = vpop.permute.xlu0 %1726
        %1728 = vrot.lane.b32.xlu0 %v1544, 120
        %v1729 = vpop.permute.xlu0 %1728
        %1730 = vrot.lane.b32.xlu0 %v1545, 120
        %v1731 = vpop.permute.xlu0 %1730
        %1732 = vrot.lane.b32.xlu0 %v1546, 120
        %v1733 = vpop.permute.xlu0 %1732
        %1734 = vrot.lane.b32.xlu0 %v1547, 120
        %v1735 = vpop.permute.xlu0 %1734
        %1736 = vrot.lane.b32.xlu0 %v1548, 120
        %v1737 = vpop.permute.xlu0 %1736
        %1738 = vrot.lane.b32.xlu0 %v1549, 120
        %v1739 = vpop.permute.xlu0 %1738
        %1800 = vst.msk [vmem:[#allocation2 + $0x19] sm:$0xff] %vm819, %v1621
        %1801 = vst.msk [vmem:[#allocation2 + $0x21] sm:$0xff] %vm819, %v1623
        %1802 = vst.msk [vmem:[#allocation2 + $0x29] sm:$0xff] %vm819, %v1625
        %1803 = vst.msk [vmem:[#allocation2 + $0x31] sm:$0xff] %vm819, %v1627
        %1804 = vst.msk [vmem:[#allocation2 + $0x39] sm:$0xff] %vm819, %v1629
        %1805 = vst.msk [vmem:[#allocation2 + $0x41] sm:$0xff] %vm819, %v1631
        %1806 = vst.msk [vmem:[#allocation2 + $0x49] sm:$0xff] %vm819, %v1633
        %1807 = vst.msk [vmem:[#allocation2 + $0x51] sm:$0xff] %vm819, %v1635
        %1808 = vst.msk [vmem:[#allocation2 + $0x59] sm:$0xff] %vm819, %v1637
        %1809 = vst.msk [vmem:[#allocation2 + $0x61] sm:$0xff] %vm819, %v1639
        %1810 = vst.msk [vmem:[#allocation2 + $0x69] sm:$0xff] %vm819, %v1641
        %1811 = vst.msk [vmem:[#allocation2 + $0x71] sm:$0xff] %vm819, %v1643
        %1812 = vst.msk [vmem:[#allocation2 + $0x79] sm:$0xff] %vm819, %v1645
        %1813 = vst.msk [vmem:[#allocation2 + $0x81] sm:$0xff] %vm819, %v1647
        %1814 = vst.msk [vmem:[#allocation2 + $0x89] sm:$0xff] %vm819, %v1649
        %1815 = vst.msk [vmem:[#allocation2 + $0x91] sm:$0xff] %vm819, %v1651
        %1816 = vst.msk [vmem:[#allocation2 + $0x99] sm:$0xff] %vm819, %v1653
        %1817 = vst.msk [vmem:[#allocation2 + $0xa1] sm:$0xff] %vm819, %v1655
        %1818 = vst.msk [vmem:[#allocation2 + $0xa9] sm:$0xff] %vm819, %v1657
        %1819 = vst.msk [vmem:[#allocation2 + $0xb1] sm:$0xff] %vm819, %v1659
        %1820 = vst.msk [vmem:[#allocation2 + $0xb9] sm:$0xff] %vm819, %v1661
        %1821 = vst.msk [vmem:[#allocation2 + $0xc1] sm:$0xff] %vm819, %v1663
        %1822 = vst.msk [vmem:[#allocation2 + $0xc9] sm:$0xff] %vm819, %v1665
        %1823 = vst.msk [vmem:[#allocation2 + $0xd1] sm:$0xff] %vm819, %v1667
        %1824 = vst.msk [vmem:[#allocation2 + $0xd9] sm:$0xff] %vm819, %v1669
        %1825 = vst.msk [vmem:[#allocation2 + $0xe1] sm:$0xff] %vm819, %v1671
        %1826 = vst.msk [vmem:[#allocation2 + $0xe9] sm:$0xff] %vm819, %v1673
        %1827 = vst.msk [vmem:[#allocation2 + $0xf1] sm:$0xff] %vm819, %v1675
        %1828 = vst.msk [vmem:[#allocation2 + $0xf9] sm:$0xff] %vm819, %v1677
        %1829 = vst.msk [vmem:[#allocation2 + $0x101] sm:$0xff] %vm819, %v1679
        %1830 = vst.msk [vmem:[#allocation2 + $0x109] sm:$0xff] %vm819, %v1681
        %1831 = vst.msk [vmem:[#allocation2 + $0x111] sm:$0xff] %vm819, %v1683
        %1832 = vst.msk [vmem:[#allocation2 + $0x119] sm:$0xff] %vm819, %v1685
        %1833 = vst.msk [vmem:[#allocation2 + $0x121] sm:$0xff] %vm819, %v1687
        %1834 = vst.msk [vmem:[#allocation2 + $0x129] sm:$0xff] %vm819, %v1689
        %1835 = vst.msk [vmem:[#allocation2 + $0x131] sm:$0xff] %vm819, %v1691
        %1836 = vst.msk [vmem:[#allocation2 + $0x139] sm:$0xff] %vm819, %v1693
        %1837 = vst.msk [vmem:[#allocation2 + $0x141] sm:$0xff] %vm819, %v1695
        %1838 = vst.msk [vmem:[#allocation2 + $0x149] sm:$0xff] %vm819, %v1697
        %1839 = vst.msk [vmem:[#allocation2 + $0x151] sm:$0xff] %vm819, %v1699
        %1840 = vst.msk [vmem:[#allocation2 + $0x159] sm:$0xff] %vm819, %v1701
        %1841 = vst.msk [vmem:[#allocation2 + $0x161] sm:$0xff] %vm819, %v1703
        %1842 = vst.msk [vmem:[#allocation2 + $0x169] sm:$0xff] %vm819, %v1705
        %1843 = vst.msk [vmem:[#allocation2 + $0x171] sm:$0xff] %vm819, %v1707
        %1844 = vst.msk [vmem:[#allocation2 + $0x179] sm:$0xff] %vm819, %v1709
        %1845 = vst.msk [vmem:[#allocation2 + $0x181] sm:$0xff] %vm819, %v1711
        %1846 = vst.msk [vmem:[#allocation2 + $0x189] sm:$0xff] %vm819, %v1713
        %1847 = vst.msk [vmem:[#allocation2 + $0x191] sm:$0xff] %vm819, %v1715
        %1848 = vst.msk [vmem:[#allocation2 + $0x199] sm:$0xff] %vm819, %v1717
        %1849 = vst.msk [vmem:[#allocation2 + $0x1a1] sm:$0xff] %vm819, %v1719
        %1850 = vst.msk [vmem:[#allocation2 + $0x1a9] sm:$0xff] %vm819, %v1721
        %1851 = vst.msk [vmem:[#allocation2 + $0x1b1] sm:$0xff] %vm819, %v1723
        %1852 = vst.msk [vmem:[#allocation2 + $0x1b9] sm:$0xff] %vm819, %v1725
        %1853 = vst.msk [vmem:[#allocation2 + $0x1c1] sm:$0xff] %vm819, %v1727
        %1854 = vst.msk [vmem:[#allocation2 + $0x1c9] sm:$0xff] %vm819, %v1729
        %1855 = vst.msk [vmem:[#allocation2 + $0x1d1] sm:$0xff] %vm819, %v1731
        %1856 = vst.msk [vmem:[#allocation2 + $0x1d9] sm:$0xff] %vm819, %v1733
        %1857 = vst.msk [vmem:[#allocation2 + $0x1e1] sm:$0xff] %vm819, %v1735
        %1858 = vst.msk [vmem:[#allocation2 + $0x1e9] sm:$0xff] %vm819, %v1737
        %1859 = vst.msk [vmem:[#allocation2 + $0x1f1] sm:$0xff] %vm819, %v1739
        %1860 = vrot.lane.b32.xlu0 %v1490, 124
        %v1861 = vpop.permute.xlu0 %1860
        %1862 = vrot.lane.b32.xlu0 %v1491, 124
        %v1863 = vpop.permute.xlu0 %1862
        %1864 = vrot.lane.b32.xlu0 %v1492, 124
        %v1865 = vpop.permute.xlu0 %1864
        %1866 = vrot.lane.b32.xlu0 %v1493, 124
        %v1867 = vpop.permute.xlu0 %1866
        %1868 = vrot.lane.b32.xlu0 %v1494, 124
        %v1869 = vpop.permute.xlu0 %1868
        %1870 = vrot.lane.b32.xlu0 %v1495, 124
        %v1871 = vpop.permute.xlu0 %1870
        %1872 = vrot.lane.b32.xlu0 %v1496, 124
        %v1873 = vpop.permute.xlu0 %1872
        %1874 = vrot.lane.b32.xlu0 %v1497, 124
        %v1875 = vpop.permute.xlu0 %1874
        %1876 = vrot.lane.b32.xlu0 %v1498, 124
        %v1877 = vpop.permute.xlu0 %1876
        %1878 = vrot.lane.b32.xlu0 %v1499, 124
        %v1879 = vpop.permute.xlu0 %1878
        %1880 = vrot.lane.b32.xlu0 %v1500, 124
        %v1881 = vpop.permute.xlu0 %1880
        %1882 = vrot.lane.b32.xlu0 %v1501, 124
        %v1883 = vpop.permute.xlu0 %1882
        %1884 = vrot.lane.b32.xlu0 %v1502, 124
        %v1885 = vpop.permute.xlu0 %1884
        %1886 = vrot.lane.b32.xlu0 %v1503, 124
        %v1887 = vpop.permute.xlu0 %1886
        %1888 = vrot.lane.b32.xlu0 %v1504, 124
        %v1889 = vpop.permute.xlu0 %1888
        %1890 = vrot.lane.b32.xlu0 %v1505, 124
        %v1891 = vpop.permute.xlu0 %1890
        %1892 = vrot.lane.b32.xlu0 %v1506, 124
        %v1893 = vpop.permute.xlu0 %1892
        %1894 = vrot.lane.b32.xlu0 %v1507, 124
        %v1895 = vpop.permute.xlu0 %1894
        %1896 = vrot.lane.b32.xlu0 %v1508, 124
        %v1897 = vpop.permute.xlu0 %1896
        %1898 = vrot.lane.b32.xlu0 %v1509, 124
        %v1899 = vpop.permute.xlu0 %1898
        %1900 = vrot.lane.b32.xlu0 %v1510, 124
        %v1901 = vpop.permute.xlu0 %1900
        %1902 = vrot.lane.b32.xlu0 %v1511, 124
        %v1903 = vpop.permute.xlu0 %1902
        %1904 = vrot.lane.b32.xlu0 %v1512, 124
        %v1905 = vpop.permute.xlu0 %1904
        %1906 = vrot.lane.b32.xlu0 %v1513, 124
        %v1907 = vpop.permute.xlu0 %1906
        %1908 = vrot.lane.b32.xlu0 %v1514, 124
        %v1909 = vpop.permute.xlu0 %1908
        %1910 = vrot.lane.b32.xlu0 %v1515, 124
        %v1911 = vpop.permute.xlu0 %1910
        %1912 = vrot.lane.b32.xlu0 %v1516, 124
        %v1913 = vpop.permute.xlu0 %1912
        %1914 = vrot.lane.b32.xlu0 %v1517, 124
        %v1915 = vpop.permute.xlu0 %1914
        %1916 = vrot.lane.b32.xlu0 %v1518, 124
        %v1917 = vpop.permute.xlu0 %1916
        %1918 = vrot.lane.b32.xlu0 %v1519, 124
        %v1919 = vpop.permute.xlu0 %1918
        %1920 = vrot.lane.b32.xlu0 %v1520, 124
        %v1921 = vpop.permute.xlu0 %1920
        %1922 = vrot.lane.b32.xlu0 %v1521, 124
        %v1923 = vpop.permute.xlu0 %1922
        %1924 = vrot.lane.b32.xlu0 %v1522, 124
        %v1925 = vpop.permute.xlu0 %1924
        %1926 = vrot.lane.b32.xlu0 %v1523, 124
        %v1927 = vpop.permute.xlu0 %1926
        %1928 = vrot.lane.b32.xlu0 %v1524, 124
        %v1929 = vpop.permute.xlu0 %1928
        %1930 = vrot.lane.b32.xlu0 %v1525, 124
        %v1931 = vpop.permute.xlu0 %1930
        %1932 = vrot.lane.b32.xlu0 %v1526, 124
        %v1933 = vpop.permute.xlu0 %1932
        %1934 = vrot.lane.b32.xlu0 %v1527, 124
        %v1935 = vpop.permute.xlu0 %1934
        %1936 = vrot.lane.b32.xlu0 %v1528, 124
        %v1937 = vpop.permute.xlu0 %1936
        %1938 = vrot.lane.b32.xlu0 %v1529, 124
        %v1939 = vpop.permute.xlu0 %1938
        %1940 = vrot.lane.b32.xlu0 %v1530, 124
        %v1941 = vpop.permute.xlu0 %1940
        %1942 = vrot.lane.b32.xlu0 %v1531, 124
        %v1943 = vpop.permute.xlu0 %1942
        %1944 = vrot.lane.b32.xlu0 %v1532, 124
        %v1945 = vpop.permute.xlu0 %1944
        %1946 = vrot.lane.b32.xlu0 %v1533, 124
        %v1947 = vpop.permute.xlu0 %1946
        %1948 = vrot.lane.b32.xlu0 %v1534, 124
        %v1949 = vpop.permute.xlu0 %1948
        %1950 = vrot.lane.b32.xlu0 %v1535, 124
        %v1951 = vpop.permute.xlu0 %1950
        %1952 = vrot.lane.b32.xlu0 %v1536, 124
        %v1953 = vpop.permute.xlu0 %1952
        %1954 = vrot.lane.b32.xlu0 %v1537, 124
        %v1955 = vpop.permute.xlu0 %1954
        %1956 = vrot.lane.b32.xlu0 %v1538, 124
        %v1957 = vpop.permute.xlu0 %1956
        %1958 = vrot.lane.b32.xlu0 %v1539, 124
        %v1959 = vpop.permute.xlu0 %1958
        %1960 = vrot.lane.b32.xlu0 %v1540, 124
        %v1961 = vpop.permute.xlu0 %1960
        %1962 = vrot.lane.b32.xlu0 %v1541, 124
        %v1963 = vpop.permute.xlu0 %1962
        %1964 = vrot.lane.b32.xlu0 %v1542, 124
        %v1965 = vpop.permute.xlu0 %1964
        %1966 = vrot.lane.b32.xlu0 %v1543, 124
        %v1967 = vpop.permute.xlu0 %1966
        %1968 = vrot.lane.b32.xlu0 %v1544, 124
        %v1969 = vpop.permute.xlu0 %1968
        %1970 = vrot.lane.b32.xlu0 %v1545, 124
        %v1971 = vpop.permute.xlu0 %1970
        %1972 = vrot.lane.b32.xlu0 %v1546, 124
        %v1973 = vpop.permute.xlu0 %1972
        %1974 = vrot.lane.b32.xlu0 %v1547, 124
        %v1975 = vpop.permute.xlu0 %1974
        %1976 = vrot.lane.b32.xlu0 %v1548, 124
        %v1977 = vpop.permute.xlu0 %1976
        %1978 = vrot.lane.b32.xlu0 %v1549, 124
        %v1979 = vpop.permute.xlu0 %1978
        %vm2040 = vcmask 64544
        %2041 = vst.msk [vmem:[#allocation2 + $0x18] sm:$0xff] %vm2040, %v1861
        %2042 = vst.msk [vmem:[#allocation2 + $0x20] sm:$0xff] %vm2040, %v1863
        %2043 = vst.msk [vmem:[#allocation2 + $0x28] sm:$0xff] %vm2040, %v1865
        %2044 = vst.msk [vmem:[#allocation2 + $0x30] sm:$0xff] %vm2040, %v1867
        %2045 = vst.msk [vmem:[#allocation2 + $0x38] sm:$0xff] %vm2040, %v1869
        %2046 = vst.msk [vmem:[#allocation2 + $0x40] sm:$0xff] %vm2040, %v1871
        %2047 = vst.msk [vmem:[#allocation2 + $0x48] sm:$0xff] %vm2040, %v1873
        %2048 = vst.msk [vmem:[#allocation2 + $0x50] sm:$0xff] %vm2040, %v1875
        %2049 = vst.msk [vmem:[#allocation2 + $0x58] sm:$0xff] %vm2040, %v1877
        %2050 = vst.msk [vmem:[#allocation2 + $0x60] sm:$0xff] %vm2040, %v1879
        %2051 = vst.msk [vmem:[#allocation2 + $0x68] sm:$0xff] %vm2040, %v1881
        %2052 = vst.msk [vmem:[#allocation2 + $0x70] sm:$0xff] %vm2040, %v1883
        %2053 = vst.msk [vmem:[#allocation2 + $0x78] sm:$0xff] %vm2040, %v1885
        %2054 = vst.msk [vmem:[#allocation2 + $0x80] sm:$0xff] %vm2040, %v1887
        %2055 = vst.msk [vmem:[#allocation2 + $0x88] sm:$0xff] %vm2040, %v1889
        %2056 = vst.msk [vmem:[#allocation2 + $0x90] sm:$0xff] %vm2040, %v1891
        %2057 = vst.msk [vmem:[#allocation2 + $0x98] sm:$0xff] %vm2040, %v1893
        %2058 = vst.msk [vmem:[#allocation2 + $0xa0] sm:$0xff] %vm2040, %v1895
        %2059 = vst.msk [vmem:[#allocation2 + $0xa8] sm:$0xff] %vm2040, %v1897
        %2060 = vst.msk [vmem:[#allocation2 + $0xb0] sm:$0xff] %vm2040, %v1899
        %2061 = vst.msk [vmem:[#allocation2 + $0xb8] sm:$0xff] %vm2040, %v1901
        %2062 = vst.msk [vmem:[#allocation2 + $0xc0] sm:$0xff] %vm2040, %v1903
        %2063 = vst.msk [vmem:[#allocation2 + $0xc8] sm:$0xff] %vm2040, %v1905
        %2064 = vst.msk [vmem:[#allocation2 + $0xd0] sm:$0xff] %vm2040, %v1907
        %2065 = vst.msk [vmem:[#allocation2 + $0xd8] sm:$0xff] %vm2040, %v1909
        %2066 = vst.msk [vmem:[#allocation2 + $0xe0] sm:$0xff] %vm2040, %v1911
        %2067 = vst.msk [vmem:[#allocation2 + $0xe8] sm:$0xff] %vm2040, %v1913
        %2068 = vst.msk [vmem:[#allocation2 + $0xf0] sm:$0xff] %vm2040, %v1915
        %2069 = vst.msk [vmem:[#allocation2 + $0xf8] sm:$0xff] %vm2040, %v1917
        %2070 = vst.msk [vmem:[#allocation2 + $0x100] sm:$0xff] %vm2040, %v1919
        %2071 = vst.msk [vmem:[#allocation2 + $0x108] sm:$0xff] %vm2040, %v1921
        %2072 = vst.msk [vmem:[#allocation2 + $0x110] sm:$0xff] %vm2040, %v1923
        %2073 = vst.msk [vmem:[#allocation2 + $0x118] sm:$0xff] %vm2040, %v1925
        %2074 = vst.msk [vmem:[#allocation2 + $0x120] sm:$0xff] %vm2040, %v1927
        %2075 = vst.msk [vmem:[#allocation2 + $0x128] sm:$0xff] %vm2040, %v1929
        %2076 = vst.msk [vmem:[#allocation2 + $0x130] sm:$0xff] %vm2040, %v1931
        %2077 = vst.msk [vmem:[#allocation2 + $0x138] sm:$0xff] %vm2040, %v1933
        %2078 = vst.msk [vmem:[#allocation2 + $0x140] sm:$0xff] %vm2040, %v1935
        %2079 = vst.msk [vmem:[#allocation2 + $0x148] sm:$0xff] %vm2040, %v1937
        %2080 = vst.msk [vmem:[#allocation2 + $0x150] sm:$0xff] %vm2040, %v1939
        %2081 = vst.msk [vmem:[#allocation2 + $0x158] sm:$0xff] %vm2040, %v1941
        %2082 = vst.msk [vmem:[#allocation2 + $0x160] sm:$0xff] %vm2040, %v1943
        %2083 = vst.msk [vmem:[#allocation2 + $0x168] sm:$0xff] %vm2040, %v1945
        %2084 = vst.msk [vmem:[#allocation2 + $0x170] sm:$0xff] %vm2040, %v1947
        %2085 = vst.msk [vmem:[#allocation2 + $0x178] sm:$0xff] %vm2040, %v1949
        %2086 = vst.msk [vmem:[#allocation2 + $0x180] sm:$0xff] %vm2040, %v1951
        %2087 = vst.msk [vmem:[#allocation2 + $0x188] sm:$0xff] %vm2040, %v1953
        %2088 = vst.msk [vmem:[#allocation2 + $0x190] sm:$0xff] %vm2040, %v1955
        %2089 = vst.msk [vmem:[#allocation2 + $0x198] sm:$0xff] %vm2040, %v1957
        %2090 = vst.msk [vmem:[#allocation2 + $0x1a0] sm:$0xff] %vm2040, %v1959
        %2091 = vst.msk [vmem:[#allocation2 + $0x1a8] sm:$0xff] %vm2040, %v1961
        %2092 = vst.msk [vmem:[#allocation2 + $0x1b0] sm:$0xff] %vm2040, %v1963
        %2093 = vst.msk [vmem:[#allocation2 + $0x1b8] sm:$0xff] %vm2040, %v1965
        %2094 = vst.msk [vmem:[#allocation2 + $0x1c0] sm:$0xff] %vm2040, %v1967
        %2095 = vst.msk [vmem:[#allocation2 + $0x1c8] sm:$0xff] %vm2040, %v1969
        %2096 = vst.msk [vmem:[#allocation2 + $0x1d0] sm:$0xff] %vm2040, %v1971
        %2097 = vst.msk [vmem:[#allocation2 + $0x1d8] sm:$0xff] %vm2040, %v1973
        %2098 = vst.msk [vmem:[#allocation2 + $0x1e0] sm:$0xff] %vm2040, %v1975
        %2099 = vst.msk [vmem:[#allocation2 + $0x1e8] sm:$0xff] %vm2040, %v1977
        %2100 = vst.msk [vmem:[#allocation2 + $0x1f0] sm:$0xff] %vm2040, %v1979
        %vm2101 = vcmask 97344
        %2102 = vst.msk [vmem:[#allocation2 + $0x17] sm:$0xff] %vm2101, %v1490
        %2103 = vst.msk [vmem:[#allocation2 + $0x1f] sm:$0xff] %vm2101, %v1491
        %2104 = vst.msk [vmem:[#allocation2 + $0x27] sm:$0xff] %vm2101, %v1492
        %2105 = vst.msk [vmem:[#allocation2 + $0x2f] sm:$0xff] %vm2101, %v1493
        %2106 = vst.msk [vmem:[#allocation2 + $0x37] sm:$0xff] %vm2101, %v1494
        %2107 = vst.msk [vmem:[#allocation2 + $0x3f] sm:$0xff] %vm2101, %v1495
        %2108 = vst.msk [vmem:[#allocation2 + $0x47] sm:$0xff] %vm2101, %v1496
        %2109 = vst.msk [vmem:[#allocation2 + $0x4f] sm:$0xff] %vm2101, %v1497
        %2110 = vst.msk [vmem:[#allocation2 + $0x57] sm:$0xff] %vm2101, %v1498
        %2111 = vst.msk [vmem:[#allocation2 + $0x5f] sm:$0xff] %vm2101, %v1499
        %2112 = vst.msk [vmem:[#allocation2 + $0x67] sm:$0xff] %vm2101, %v1500
        %2113 = vst.msk [vmem:[#allocation2 + $0x6f] sm:$0xff] %vm2101, %v1501
        %2114 = vst.msk [vmem:[#allocation2 + $0x77] sm:$0xff] %vm2101, %v1502
        %2115 = vst.msk [vmem:[#allocation2 + $0x7f] sm:$0xff] %vm2101, %v1503
        %2116 = vst.msk [vmem:[#allocation2 + $0x87] sm:$0xff] %vm2101, %v1504
        %2117 = vst.msk [vmem:[#allocation2 + $0x8f] sm:$0xff] %vm2101, %v1505
        %2118 = vst.msk [vmem:[#allocation2 + $0x97] sm:$0xff] %vm2101, %v1506
        %2119 = vst.msk [vmem:[#allocation2 + $0x9f] sm:$0xff] %vm2101, %v1507
        %2120 = vst.msk [vmem:[#allocation2 + $0xa7] sm:$0xff] %vm2101, %v1508
        %2121 = vst.msk [vmem:[#allocation2 + $0xaf] sm:$0xff] %vm2101, %v1509
        %2122 = vst.msk [vmem:[#allocation2 + $0xb7] sm:$0xff] %vm2101, %v1510
        %2123 = vst.msk [vmem:[#allocation2 + $0xbf] sm:$0xff] %vm2101, %v1511
        %2124 = vst.msk [vmem:[#allocation2 + $0xc7] sm:$0xff] %vm2101, %v1512
        %2125 = vst.msk [vmem:[#allocation2 + $0xcf] sm:$0xff] %vm2101, %v1513
        %2126 = vst.msk [vmem:[#allocation2 + $0xd7] sm:$0xff] %vm2101, %v1514
        %2127 = vst.msk [vmem:[#allocation2 + $0xdf] sm:$0xff] %vm2101, %v1515
        %2128 = vst.msk [vmem:[#allocation2 + $0xe7] sm:$0xff] %vm2101, %v1516
        %2129 = vst.msk [vmem:[#allocation2 + $0xef] sm:$0xff] %vm2101, %v1517
        %2130 = vst.msk [vmem:[#allocation2 + $0xf7] sm:$0xff] %vm2101, %v1518
        %2131 = vst.msk [vmem:[#allocation2 + $0xff] sm:$0xff] %vm2101, %v1519
        %2132 = vst.msk [vmem:[#allocation2 + $0x107] sm:$0xff] %vm2101, %v1520
        %2133 = vst.msk [vmem:[#allocation2 + $0x10f] sm:$0xff] %vm2101, %v1521
        %2134 = vst.msk [vmem:[#allocation2 + $0x117] sm:$0xff] %vm2101, %v1522
        %2135 = vst.msk [vmem:[#allocation2 + $0x11f] sm:$0xff] %vm2101, %v1523
        %2136 = vst.msk [vmem:[#allocation2 + $0x127] sm:$0xff] %vm2101, %v1524
        %2137 = vst.msk [vmem:[#allocation2 + $0x12f] sm:$0xff] %vm2101, %v1525
        %2138 = vst.msk [vmem:[#allocation2 + $0x137] sm:$0xff] %vm2101, %v1526
        %2139 = vst.msk [vmem:[#allocation2 + $0x13f] sm:$0xff] %vm2101, %v1527
        %2140 = vst.msk [vmem:[#allocation2 + $0x147] sm:$0xff] %vm2101, %v1528
        %2141 = vst.msk [vmem:[#allocation2 + $0x14f] sm:$0xff] %vm2101, %v1529
        %2142 = vst.msk [vmem:[#allocation2 + $0x157] sm:$0xff] %vm2101, %v1530
        %2143 = vst.msk [vmem:[#allocation2 + $0x15f] sm:$0xff] %vm2101, %v1531
        %2144 = vst.msk [vmem:[#allocation2 + $0x167] sm:$0xff] %vm2101, %v1532
        %2145 = vst.msk [vmem:[#allocation2 + $0x16f] sm:$0xff] %vm2101, %v1533
        %2146 = vst.msk [vmem:[#allocation2 + $0x177] sm:$0xff] %vm2101, %v1534
        %2147 = vst.msk [vmem:[#allocation2 + $0x17f] sm:$0xff] %vm2101, %v1535
        %2148 = vst.msk [vmem:[#allocation2 + $0x187] sm:$0xff] %vm2101, %v1536
        %2149 = vst.msk [vmem:[#allocation2 + $0x18f] sm:$0xff] %vm2101, %v1537
        %2150 = vst.msk [vmem:[#allocation2 + $0x197] sm:$0xff] %vm2101, %v1538
        %2151 = vst.msk [vmem:[#allocation2 + $0x19f] sm:$0xff] %vm2101, %v1539
        %2152 = vst.msk [vmem:[#allocation2 + $0x1a7] sm:$0xff] %vm2101, %v1540
        %2153 = vst.msk [vmem:[#allocation2 + $0x1af] sm:$0xff] %vm2101, %v1541
        %2154 = vst.msk [vmem:[#allocation2 + $0x1b7] sm:$0xff] %vm2101, %v1542
        %2155 = vst.msk [vmem:[#allocation2 + $0x1bf] sm:$0xff] %vm2101, %v1543
        %2156 = vst.msk [vmem:[#allocation2 + $0x1c7] sm:$0xff] %vm2101, %v1544
        %2157 = vst.msk [vmem:[#allocation2 + $0x1cf] sm:$0xff] %vm2101, %v1545
        %2158 = vst.msk [vmem:[#allocation2 + $0x1d7] sm:$0xff] %vm2101, %v1546
        %2159 = vst.msk [vmem:[#allocation2 + $0x1df] sm:$0xff] %vm2101, %v1547
        %2160 = vst.msk [vmem:[#allocation2 + $0x1e7] sm:$0xff] %vm2101, %v1548
        %2161 = vst.msk [vmem:[#allocation2 + $0x1ef] sm:$0xff] %vm2101, %v1549
        %vm2162 = vcmask 162816
        %2163 = vst.msk [vmem:[#allocation3] sm:$0xff] %vm2162, 0.0
        %2164 = vst.msk [vmem:[#allocation3 + $0x8] sm:$0xff] %vm2162, 0.0
        %2165 = vst.msk [vmem:[#allocation3 + $0x10] sm:$0xff] %vm2162, 0.0
        %2166 = vst.msk [vmem:[#allocation3 + $0x18] sm:$0xff] %vm2162, 0.0
        %2167 = vst.msk [vmem:[#allocation3 + $0x20] sm:$0xff] %vm2162, 0.0
        %2168 = vst.msk [vmem:[#allocation3 + $0x28] sm:$0xff] %vm2162, 0.0
        %vm2169 = vcmask 156672
        %2170 = vst.msk [vmem:[#allocation3 + $0x30] sm:$0x3] %vm2169, 0.0
        %2171 = vst.msk [vmem:[#allocation3 + $0x20e] sm:$0xff] %vm2162, 0.0
        %2172 = vst.msk [vmem:[#allocation3 + $0x216] sm:$0xff] %vm2162, 0.0
        %2173 = vst.msk [vmem:[#allocation3 + $0x21e] sm:$0xff] %vm2162, 0.0
        %2174 = vst.msk [vmem:[#allocation3 + $0x226] sm:$0xff] %vm2162, 0.0
        %2175 = vst.msk [vmem:[#allocation3 + $0x22e] sm:$0xff] %vm2162, 0.0
        %2176 = vst.msk [vmem:[#allocation3 + $0x236] sm:$0xff] %vm2162, 0.0
        %2177 = vst.msk [vmem:[#allocation3 + $0x23e] sm:$0x3] %vm2169, 0.0
        %2178 = vrot.lane.b32.xlu0 %v1490, 116
        %v2179 = vpop.permute.xlu0 %2178
        %2180 = vrot.lane.b32.xlu0 %v1491, 116
        %v2181 = vpop.permute.xlu0 %2180
        %2182 = vrot.lane.b32.xlu0 %v1492, 116
        %v2183 = vpop.permute.xlu0 %2182
        %2184 = vrot.lane.b32.xlu0 %v1493, 116
        %v2185 = vpop.permute.xlu0 %2184
        %2186 = vrot.lane.b32.xlu0 %v1494, 116
        %v2187 = vpop.permute.xlu0 %2186
        %2188 = vrot.lane.b32.xlu0 %v1495, 116
        %v2189 = vpop.permute.xlu0 %2188
        %2190 = vrot.lane.b32.xlu0 %v1496, 116
        %v2191 = vpop.permute.xlu0 %2190
        %2192 = vrot.lane.b32.xlu0 %v1497, 116
        %v2193 = vpop.permute.xlu0 %2192
        %2194 = vrot.lane.b32.xlu0 %v1498, 116
        %v2195 = vpop.permute.xlu0 %2194
        %2196 = vrot.lane.b32.xlu0 %v1499, 116
        %v2197 = vpop.permute.xlu0 %2196
        %2198 = vrot.lane.b32.xlu0 %v1500, 116
        %v2199 = vpop.permute.xlu0 %2198
        %2200 = vrot.lane.b32.xlu0 %v1501, 116
        %v2201 = vpop.permute.xlu0 %2200
        %2202 = vrot.lane.b32.xlu0 %v1502, 116
        %v2203 = vpop.permute.xlu0 %2202
        %2204 = vrot.lane.b32.xlu0 %v1503, 116
        %v2205 = vpop.permute.xlu0 %2204
        %2206 = vrot.lane.b32.xlu0 %v1504, 116
        %v2207 = vpop.permute.xlu0 %2206
        %2208 = vrot.lane.b32.xlu0 %v1505, 116
        %v2209 = vpop.permute.xlu0 %2208
        %2210 = vrot.lane.b32.xlu0 %v1506, 116
        %v2211 = vpop.permute.xlu0 %2210
        %2212 = vrot.lane.b32.xlu0 %v1507, 116
        %v2213 = vpop.permute.xlu0 %2212
        %2214 = vrot.lane.b32.xlu0 %v1508, 116
        %v2215 = vpop.permute.xlu0 %2214
        %2216 = vrot.lane.b32.xlu0 %v1509, 116
        %v2217 = vpop.permute.xlu0 %2216
        %2218 = vrot.lane.b32.xlu0 %v1510, 116
        %v2219 = vpop.permute.xlu0 %2218
        %2220 = vrot.lane.b32.xlu0 %v1511, 116
        %v2221 = vpop.permute.xlu0 %2220
        %2222 = vrot.lane.b32.xlu0 %v1512, 116
        %v2223 = vpop.permute.xlu0 %2222
        %2224 = vrot.lane.b32.xlu0 %v1513, 116
        %v2225 = vpop.permute.xlu0 %2224
        %2226 = vrot.lane.b32.xlu0 %v1514, 116
        %v2227 = vpop.permute.xlu0 %2226
        %2228 = vrot.lane.b32.xlu0 %v1515, 116
        %v2229 = vpop.permute.xlu0 %2228
        %2230 = vrot.lane.b32.xlu0 %v1516, 116
        %v2231 = vpop.permute.xlu0 %2230
        %2232 = vrot.lane.b32.xlu0 %v1517, 116
        %v2233 = vpop.permute.xlu0 %2232
        %2234 = vrot.lane.b32.xlu0 %v1518, 116
        %v2235 = vpop.permute.xlu0 %2234
        %2236 = vrot.lane.b32.xlu0 %v1519, 116
        %v2237 = vpop.permute.xlu0 %2236
        %2238 = vrot.lane.b32.xlu0 %v1520, 116
        %v2239 = vpop.permute.xlu0 %2238
        %2240 = vrot.lane.b32.xlu0 %v1521, 116
        %v2241 = vpop.permute.xlu0 %2240
        %2242 = vrot.lane.b32.xlu0 %v1522, 116
        %v2243 = vpop.permute.xlu0 %2242
        %2244 = vrot.lane.b32.xlu0 %v1523, 116
        %v2245 = vpop.permute.xlu0 %2244
        %2246 = vrot.lane.b32.xlu0 %v1524, 116
        %v2247 = vpop.permute.xlu0 %2246
        %2248 = vrot.lane.b32.xlu0 %v1525, 116
        %v2249 = vpop.permute.xlu0 %2248
        %2250 = vrot.lane.b32.xlu0 %v1526, 116
        %v2251 = vpop.permute.xlu0 %2250
        %2252 = vrot.lane.b32.xlu0 %v1527, 116
        %v2253 = vpop.permute.xlu0 %2252
        %2254 = vrot.lane.b32.xlu0 %v1528, 116
        %v2255 = vpop.permute.xlu0 %2254
        %2256 = vrot.lane.b32.xlu0 %v1529, 116
        %v2257 = vpop.permute.xlu0 %2256
        %2258 = vrot.lane.b32.xlu0 %v1530, 116
        %v2259 = vpop.permute.xlu0 %2258
        %2260 = vrot.lane.b32.xlu0 %v1531, 116
        %v2261 = vpop.permute.xlu0 %2260
        %2262 = vrot.lane.b32.xlu0 %v1532, 116
        %v2263 = vpop.permute.xlu0 %2262
        %2264 = vrot.lane.b32.xlu0 %v1533, 116
        %v2265 = vpop.permute.xlu0 %2264
        %2266 = vrot.lane.b32.xlu0 %v1534, 116
        %v2267 = vpop.permute.xlu0 %2266
        %2268 = vrot.lane.b32.xlu0 %v1535, 116
        %v2269 = vpop.permute.xlu0 %2268
        %2270 = vrot.lane.b32.xlu0 %v1536, 116
        %v2271 = vpop.permute.xlu0 %2270
        %2272 = vrot.lane.b32.xlu0 %v1537, 116
        %v2273 = vpop.permute.xlu0 %2272
        %2274 = vrot.lane.b32.xlu0 %v1538, 116
        %v2275 = vpop.permute.xlu0 %2274
        %2276 = vrot.lane.b32.xlu0 %v1539, 116
        %v2277 = vpop.permute.xlu0 %2276
        %2278 = vrot.lane.b32.xlu0 %v1540, 116
        %v2279 = vpop.permute.xlu0 %2278
        %2280 = vrot.lane.b32.xlu0 %v1541, 116
        %v2281 = vpop.permute.xlu0 %2280
        %2282 = vrot.lane.b32.xlu0 %v1542, 116
        %v2283 = vpop.permute.xlu0 %2282
        %2284 = vrot.lane.b32.xlu0 %v1543, 116
        %v2285 = vpop.permute.xlu0 %2284
        %2286 = vrot.lane.b32.xlu0 %v1544, 116
        %v2287 = vpop.permute.xlu0 %2286
        %2288 = vrot.lane.b32.xlu0 %v1545, 116
        %v2289 = vpop.permute.xlu0 %2288
        %2290 = vrot.lane.b32.xlu0 %v1546, 116
        %v2291 = vpop.permute.xlu0 %2290
        %2292 = vrot.lane.b32.xlu0 %v1547, 116
        %v2293 = vpop.permute.xlu0 %2292
        %2294 = vrot.lane.b32.xlu0 %v1548, 116
        %v2295 = vpop.permute.xlu0 %2294
        %2296 = vrot.lane.b32.xlu0 %v1549, 116
        %v2297 = vpop.permute.xlu0 %2296
        %2358 = vst.msk [vmem:[#allocation3 + $0x32] sm:$0xff] %vm819, %v2179
        %2359 = vst.msk [vmem:[#allocation3 + $0x3a] sm:$0xff] %vm819, %v2181
        %2360 = vst.msk [vmem:[#allocation3 + $0x42] sm:$0xff] %vm819, %v2183
        %2361 = vst.msk [vmem:[#allocation3 + $0x4a] sm:$0xff] %vm819, %v2185
        %2362 = vst.msk [vmem:[#allocation3 + $0x52] sm:$0xff] %vm819, %v2187
        %2363 = vst.msk [vmem:[#allocation3 + $0x5a] sm:$0xff] %vm819, %v2189
        %2364 = vst.msk [vmem:[#allocation3 + $0x62] sm:$0xff] %vm819, %v2191
        %2365 = vst.msk [vmem:[#allocation3 + $0x6a] sm:$0xff] %vm819, %v2193
        %2366 = vst.msk [vmem:[#allocation3 + $0x72] sm:$0xff] %vm819, %v2195
        %2367 = vst.msk [vmem:[#allocation3 + $0x7a] sm:$0xff] %vm819, %v2197
        %2368 = vst.msk [vmem:[#allocation3 + $0x82] sm:$0xff] %vm819, %v2199
        %2369 = vst.msk [vmem:[#allocation3 + $0x8a] sm:$0xff] %vm819, %v2201
        %2370 = vst.msk [vmem:[#allocation3 + $0x92] sm:$0xff] %vm819, %v2203
        %2371 = vst.msk [vmem:[#allocation3 + $0x9a] sm:$0xff] %vm819, %v2205
        %2372 = vst.msk [vmem:[#allocation3 + $0xa2] sm:$0xff] %vm819, %v2207
        %2373 = vst.msk [vmem:[#allocation3 + $0xaa] sm:$0xff] %vm819, %v2209
        %2374 = vst.msk [vmem:[#allocation3 + $0xb2] sm:$0xff] %vm819, %v2211
        %2375 = vst.msk [vmem:[#allocation3 + $0xba] sm:$0xff] %vm819, %v2213
        %2376 = vst.msk [vmem:[#allocation3 + $0xc2] sm:$0xff] %vm819, %v2215
        %2377 = vst.msk [vmem:[#allocation3 + $0xca] sm:$0xff] %vm819, %v2217
        %2378 = vst.msk [vmem:[#allocation3 + $0xd2] sm:$0xff] %vm819, %v2219
        %2379 = vst.msk [vmem:[#allocation3 + $0xda] sm:$0xff] %vm819, %v2221
        %2380 = vst.msk [vmem:[#allocation3 + $0xe2] sm:$0xff] %vm819, %v2223
        %2381 = vst.msk [vmem:[#allocation3 + $0xea] sm:$0xff] %vm819, %v2225
        %2382 = vst.msk [vmem:[#allocation3 + $0xf2] sm:$0xff] %vm819, %v2227
        %2383 = vst.msk [vmem:[#allocation3 + $0xfa] sm:$0xff] %vm819, %v2229
        %2384 = vst.msk [vmem:[#allocation3 + $0x102] sm:$0xff] %vm819, %v2231
        %2385 = vst.msk [vmem:[#allocation3 + $0x10a] sm:$0xff] %vm819, %v2233
        %2386 = vst.msk [vmem:[#allocation3 + $0x112] sm:$0xff] %vm819, %v2235
        %2387 = vst.msk [vmem:[#allocation3 + $0x11a] sm:$0xff] %vm819, %v2237
        %2388 = vst.msk [vmem:[#allocation3 + $0x122] sm:$0xff] %vm819, %v2239
        %2389 = vst.msk [vmem:[#allocation3 + $0x12a] sm:$0xff] %vm819, %v2241
        %2390 = vst.msk [vmem:[#allocation3 + $0x132] sm:$0xff] %vm819, %v2243
        %2391 = vst.msk [vmem:[#allocation3 + $0x13a] sm:$0xff] %vm819, %v2245
        %2392 = vst.msk [vmem:[#allocation3 + $0x142] sm:$0xff] %vm819, %v2247
        %2393 = vst.msk [vmem:[#allocation3 + $0x14a] sm:$0xff] %vm819, %v2249
        %2394 = vst.msk [vmem:[#allocation3 + $0x152] sm:$0xff] %vm819, %v2251
        %2395 = vst.msk [vmem:[#allocation3 + $0x15a] sm:$0xff] %vm819, %v2253
        %2396 = vst.msk [vmem:[#allocation3 + $0x162] sm:$0xff] %vm819, %v2255
        %2397 = vst.msk [vmem:[#allocation3 + $0x16a] sm:$0xff] %vm819, %v2257
        %2398 = vst.msk [vmem:[#allocation3 + $0x172] sm:$0xff] %vm819, %v2259
        %2399 = vst.msk [vmem:[#allocation3 + $0x17a] sm:$0xff] %vm819, %v2261
        %2400 = vst.msk [vmem:[#allocation3 + $0x182] sm:$0xff] %vm819, %v2263
        %2401 = vst.msk [vmem:[#allocation3 + $0x18a] sm:$0xff] %vm819, %v2265
        %2402 = vst.msk [vmem:[#allocation3 + $0x192] sm:$0xff] %vm819, %v2267
        %2403 = vst.msk [vmem:[#allocation3 + $0x19a] sm:$0xff] %vm819, %v2269
        %2404 = vst.msk [vmem:[#allocation3 + $0x1a2] sm:$0xff] %vm819, %v2271
        %2405 = vst.msk [vmem:[#allocation3 + $0x1aa] sm:$0xff] %vm819, %v2273
        %2406 = vst.msk [vmem:[#allocation3 + $0x1b2] sm:$0xff] %vm819, %v2275
        %2407 = vst.msk [vmem:[#allocation3 + $0x1ba] sm:$0xff] %vm819, %v2277
        %2408 = vst.msk [vmem:[#allocation3 + $0x1c2] sm:$0xff] %vm819, %v2279
        %2409 = vst.msk [vmem:[#allocation3 + $0x1ca] sm:$0xff] %vm819, %v2281
        %2410 = vst.msk [vmem:[#allocation3 + $0x1d2] sm:$0xff] %vm819, %v2283
        %2411 = vst.msk [vmem:[#allocation3 + $0x1da] sm:$0xff] %vm819, %v2285
        %2412 = vst.msk [vmem:[#allocation3 + $0x1e2] sm:$0xff] %vm819, %v2287
        %2413 = vst.msk [vmem:[#allocation3 + $0x1ea] sm:$0xff] %vm819, %v2289
        %2414 = vst.msk [vmem:[#allocation3 + $0x1f2] sm:$0xff] %vm819, %v2291
        %2415 = vst.msk [vmem:[#allocation3 + $0x1fa] sm:$0xff] %vm819, %v2293
        %2416 = vst.msk [vmem:[#allocation3 + $0x202] sm:$0xff] %vm819, %v2295
        %2417 = vst.msk [vmem:[#allocation3 + $0x20a] sm:$0xff] %vm819, %v2297
        %2418 = vst.msk [vmem:[#allocation3 + $0x31] sm:$0xff] %vm2040, %v1621
        %2419 = vst.msk [vmem:[#allocation3 + $0x39] sm:$0xff] %vm2040, %v1623
        %2420 = vst.msk [vmem:[#allocation3 + $0x41] sm:$0xff] %vm2040, %v1625
        %2421 = vst.msk [vmem:[#allocation3 + $0x49] sm:$0xff] %vm2040, %v1627
        %2422 = vst.msk [vmem:[#allocation3 + $0x51] sm:$0xff] %vm2040, %v1629
        %2423 = vst.msk [vmem:[#allocation3 + $0x59] sm:$0xff] %vm2040, %v1631
        %2424 = vst.msk [vmem:[#allocation3 + $0x61] sm:$0xff] %vm2040, %v1633
        %2425 = vst.msk [vmem:[#allocation3 + $0x69] sm:$0xff] %vm2040, %v1635
        %2426 = vst.msk [vmem:[#allocation3 + $0x71] sm:$0xff] %vm2040, %v1637
        %2427 = vst.msk [vmem:[#allocation3 + $0x79] sm:$0xff] %vm2040, %v1639
        %2428 = vst.msk [vmem:[#allocation3 + $0x81] sm:$0xff] %vm2040, %v1641
        %2429 = vst.msk [vmem:[#allocation3 + $0x89] sm:$0xff] %vm2040, %v1643
        %2430 = vst.msk [vmem:[#allocation3 + $0x91] sm:$0xff] %vm2040, %v1645
        %2431 = vst.msk [vmem:[#allocation3 + $0x99] sm:$0xff] %vm2040, %v1647
        %2432 = vst.msk [vmem:[#allocation3 + $0xa1] sm:$0xff] %vm2040, %v1649
        %2433 = vst.msk [vmem:[#allocation3 + $0xa9] sm:$0xff] %vm2040, %v1651
        %2434 = vst.msk [vmem:[#allocation3 + $0xb1] sm:$0xff] %vm2040, %v1653
        %2435 = vst.msk [vmem:[#allocation3 + $0xb9] sm:$0xff] %vm2040, %v1655
        %2436 = vst.msk [vmem:[#allocation3 + $0xc1] sm:$0xff] %vm2040, %v1657
        %2437 = vst.msk [vmem:[#allocation3 + $0xc9] sm:$0xff] %vm2040, %v1659
        %2438 = vst.msk [vmem:[#allocation3 + $0xd1] sm:$0xff] %vm2040, %v1661
        %2439 = vst.msk [vmem:[#allocation3 + $0xd9] sm:$0xff] %vm2040, %v1663
        %2440 = vst.msk [vmem:[#allocation3 + $0xe1] sm:$0xff] %vm2040, %v1665
        %2441 = vst.msk [vmem:[#allocation3 + $0xe9] sm:$0xff] %vm2040, %v1667
        %2442 = vst.msk [vmem:[#allocation3 + $0xf1] sm:$0xff] %vm2040, %v1669
        %2443 = vst.msk [vmem:[#allocation3 + $0xf9] sm:$0xff] %vm2040, %v1671
        %2444 = vst.msk [vmem:[#allocation3 + $0x101] sm:$0xff] %vm2040, %v1673
        %2445 = vst.msk [vmem:[#allocation3 + $0x109] sm:$0xff] %vm2040, %v1675
        %2446 = vst.msk [vmem:[#allocation3 + $0x111] sm:$0xff] %vm2040, %v1677
        %2447 = vst.msk [vmem:[#allocation3 + $0x119] sm:$0xff] %vm2040, %v1679
        %2448 = vst.msk [vmem:[#allocation3 + $0x121] sm:$0xff] %vm2040, %v1681
        %2449 = vst.msk [vmem:[#allocation3 + $0x129] sm:$0xff] %vm2040, %v1683
        %2450 = vst.msk [vmem:[#allocation3 + $0x131] sm:$0xff] %vm2040, %v1685
        %2451 = vst.msk [vmem:[#allocation3 + $0x139] sm:$0xff] %vm2040, %v1687
        %2452 = vst.msk [vmem:[#allocation3 + $0x141] sm:$0xff] %vm2040, %v1689
        %2453 = vst.msk [vmem:[#allocation3 + $0x149] sm:$0xff] %vm2040, %v1691
        %2454 = vst.msk [vmem:[#allocation3 + $0x151] sm:$0xff] %vm2040, %v1693
        %2455 = vst.msk [vmem:[#allocation3 + $0x159] sm:$0xff] %vm2040, %v1695
        %2456 = vst.msk [vmem:[#allocation3 + $0x161] sm:$0xff] %vm2040, %v1697
        %2457 = vst.msk [vmem:[#allocation3 + $0x169] sm:$0xff] %vm2040, %v1699
        %2458 = vst.msk [vmem:[#allocation3 + $0x171] sm:$0xff] %vm2040, %v1701
        %2459 = vst.msk [vmem:[#allocation3 + $0x179] sm:$0xff] %vm2040, %v1703
        %2460 = vst.msk [vmem:[#allocation3 + $0x181] sm:$0xff] %vm2040, %v1705
        %2461 = vst.msk [vmem:[#allocation3 + $0x189] sm:$0xff] %vm2040, %v1707
        %2462 = vst.msk [vmem:[#allocation3 + $0x191] sm:$0xff] %vm2040, %v1709
        %2463 = vst.msk [vmem:[#allocation3 + $0x199] sm:$0xff] %vm2040, %v1711
        %2464 = vst.msk [vmem:[#allocation3 + $0x1a1] sm:$0xff] %vm2040, %v1713
        %2465 = vst.msk [vmem:[#allocation3 + $0x1a9] sm:$0xff] %vm2040, %v1715
        %2466 = vst.msk [vmem:[#allocation3 + $0x1b1] sm:$0xff] %vm2040, %v1717
        %2467 = vst.msk [vmem:[#allocation3 + $0x1b9] sm:$0xff] %vm2040, %v1719
        %2468 = vst.msk [vmem:[#allocation3 + $0x1c1] sm:$0xff] %vm2040, %v1721
        %2469 = vst.msk [vmem:[#allocation3 + $0x1c9] sm:$0xff] %vm2040, %v1723
        %2470 = vst.msk [vmem:[#allocation3 + $0x1d1] sm:$0xff] %vm2040, %v1725
        %2471 = vst.msk [vmem:[#allocation3 + $0x1d9] sm:$0xff] %vm2040, %v1727
        %2472 = vst.msk [vmem:[#allocation3 + $0x1e1] sm:$0xff] %vm2040, %v1729
        %2473 = vst.msk [vmem:[#allocation3 + $0x1e9] sm:$0xff] %vm2040, %v1731
        %2474 = vst.msk [vmem:[#allocation3 + $0x1f1] sm:$0xff] %vm2040, %v1733
        %2475 = vst.msk [vmem:[#allocation3 + $0x1f9] sm:$0xff] %vm2040, %v1735
        %2476 = vst.msk [vmem:[#allocation3 + $0x201] sm:$0xff] %vm2040, %v1737
        %2477 = vst.msk [vmem:[#allocation3 + $0x209] sm:$0xff] %vm2040, %v1739
        %2478 = vst.msk [vmem:[#allocation3 + $0x30] sm:$0xff] %vm2101, %v1861
        %2479 = vst.msk [vmem:[#allocation3 + $0x38] sm:$0xff] %vm2101, %v1863
        %2480 = vst.msk [vmem:[#allocation3 + $0x40] sm:$0xff] %vm2101, %v1865
        %2481 = vst.msk [vmem:[#allocation3 + $0x48] sm:$0xff] %vm2101, %v1867
        %2482 = vst.msk [vmem:[#allocation3 + $0x50] sm:$0xff] %vm2101, %v1869
        %2483 = vst.msk [vmem:[#allocation3 + $0x58] sm:$0xff] %vm2101, %v1871
        %2484 = vst.msk [vmem:[#allocation3 + $0x60] sm:$0xff] %vm2101, %v1873
        %2485 = vst.msk [vmem:[#allocation3 + $0x68] sm:$0xff] %vm2101, %v1875
        %2486 = vst.msk [vmem:[#allocation3 + $0x70] sm:$0xff] %vm2101, %v1877
        %2487 = vst.msk [vmem:[#allocation3 + $0x78] sm:$0xff] %vm2101, %v1879
        %2488 = vst.msk [vmem:[#allocation3 + $0x80] sm:$0xff] %vm2101, %v1881
        %2489 = vst.msk [vmem:[#allocation3 + $0x88] sm:$0xff] %vm2101, %v1883
        %2490 = vst.msk [vmem:[#allocation3 + $0x90] sm:$0xff] %vm2101, %v1885
        %2491 = vst.msk [vmem:[#allocation3 + $0x98] sm:$0xff] %vm2101, %v1887
        %2492 = vst.msk [vmem:[#allocation3 + $0xa0] sm:$0xff] %vm2101, %v1889
        %2493 = vst.msk [vmem:[#allocation3 + $0xa8] sm:$0xff] %vm2101, %v1891
        %2494 = vst.msk [vmem:[#allocation3 + $0xb0] sm:$0xff] %vm2101, %v1893
        %2495 = vst.msk [vmem:[#allocation3 + $0xb8] sm:$0xff] %vm2101, %v1895
        %2496 = vst.msk [vmem:[#allocation3 + $0xc0] sm:$0xff] %vm2101, %v1897
        %2497 = vst.msk [vmem:[#allocation3 + $0xc8] sm:$0xff] %vm2101, %v1899
        %2498 = vst.msk [vmem:[#allocation3 + $0xd0] sm:$0xff] %vm2101, %v1901
        %2499 = vst.msk [vmem:[#allocation3 + $0xd8] sm:$0xff] %vm2101, %v1903
        %2500 = vst.msk [vmem:[#allocation3 + $0xe0] sm:$0xff] %vm2101, %v1905
        %2501 = vst.msk [vmem:[#allocation3 + $0xe8] sm:$0xff] %vm2101, %v1907
        %2502 = vst.msk [vmem:[#allocation3 + $0xf0] sm:$0xff] %vm2101, %v1909
        %2503 = vst.msk [vmem:[#allocation3 + $0xf8] sm:$0xff] %vm2101, %v1911
        %2504 = vst.msk [vmem:[#allocation3 + $0x100] sm:$0xff] %vm2101, %v1913
        %2505 = vst.msk [vmem:[#allocation3 + $0x108] sm:$0xff] %vm2101, %v1915
        %2506 = vst.msk [vmem:[#allocation3 + $0x110] sm:$0xff] %vm2101, %v1917
        %2507 = vst.msk [vmem:[#allocation3 + $0x118] sm:$0xff] %vm2101, %v1919
        %2508 = vst.msk [vmem:[#allocation3 + $0x120] sm:$0xff] %vm2101, %v1921
        %2509 = vst.msk [vmem:[#allocation3 + $0x128] sm:$0xff] %vm2101, %v1923
        %2510 = vst.msk [vmem:[#allocation3 + $0x130] sm:$0xff] %vm2101, %v1925
        %2511 = vst.msk [vmem:[#allocation3 + $0x138] sm:$0xff] %vm2101, %v1927
        %2512 = vst.msk [vmem:[#allocation3 + $0x140] sm:$0xff] %vm2101, %v1929
        %2513 = vst.msk [vmem:[#allocation3 + $0x148] sm:$0xff] %vm2101, %v1931
        %2514 = vst.msk [vmem:[#allocation3 + $0x150] sm:$0xff] %vm2101, %v1933
        %2515 = vst.msk [vmem:[#allocation3 + $0x158] sm:$0xff] %vm2101, %v1935
        %2516 = vst.msk [vmem:[#allocation3 + $0x160] sm:$0xff] %vm2101, %v1937
        %2517 = vst.msk [vmem:[#allocation3 + $0x168] sm:$0xff] %vm2101, %v1939
        %2518 = vst.msk [vmem:[#allocation3 + $0x170] sm:$0xff] %vm2101, %v1941
        %2519 = vst.msk [vmem:[#allocation3 + $0x178] sm:$0xff] %vm2101, %v1943
        %2520 = vst.msk [vmem:[#allocation3 + $0x180] sm:$0xff] %vm2101, %v1945
        %2521 = vst.msk [vmem:[#allocation3 + $0x188] sm:$0xff] %vm2101, %v1947
        %2522 = vst.msk [vmem:[#allocation3 + $0x190] sm:$0xff] %vm2101, %v1949
        %2523 = vst.msk [vmem:[#allocation3 + $0x198] sm:$0xff] %vm2101, %v1951
        %2524 = vst.msk [vmem:[#allocation3 + $0x1a0] sm:$0xff] %vm2101, %v1953
        %2525 = vst.msk [vmem:[#allocation3 + $0x1a8] sm:$0xff] %vm2101, %v1955
        %2526 = vst.msk [vmem:[#allocation3 + $0x1b0] sm:$0xff] %vm2101, %v1957
        %2527 = vst.msk [vmem:[#allocation3 + $0x1b8] sm:$0xff] %vm2101, %v1959
        %2528 = vst.msk [vmem:[#allocation3 + $0x1c0] sm:$0xff] %vm2101, %v1961
        %2529 = vst.msk [vmem:[#allocation3 + $0x1c8] sm:$0xff] %vm2101, %v1963
        %2530 = vst.msk [vmem:[#allocation3 + $0x1d0] sm:$0xff] %vm2101, %v1965
        %2531 = vst.msk [vmem:[#allocation3 + $0x1d8] sm:$0xff] %vm2101, %v1967
        %2532 = vst.msk [vmem:[#allocation3 + $0x1e0] sm:$0xff] %vm2101, %v1969
        %2533 = vst.msk [vmem:[#allocation3 + $0x1e8] sm:$0xff] %vm2101, %v1971
        %2534 = vst.msk [vmem:[#allocation3 + $0x1f0] sm:$0xff] %vm2101, %v1973
        %2535 = vst.msk [vmem:[#allocation3 + $0x1f8] sm:$0xff] %vm2101, %v1975
        %2536 = vst.msk [vmem:[#allocation3 + $0x200] sm:$0xff] %vm2101, %v1977
        %2537 = vst.msk [vmem:[#allocation3 + $0x208] sm:$0xff] %vm2101, %v1979
        %vm2538 = vcmask 130144
        %2539 = vst.msk [vmem:[#allocation3 + $0x2f] sm:$0xff] %vm2538, %v1490
        %2540 = vst.msk [vmem:[#allocation3 + $0x37] sm:$0xff] %vm2538, %v1491
        %2541 = vst.msk [vmem:[#allocation3 + $0x3f] sm:$0xff] %vm2538, %v1492
        %2542 = vst.msk [vmem:[#allocation3 + $0x47] sm:$0xff] %vm2538, %v1493
        %2543 = vst.msk [vmem:[#allocation3 + $0x4f] sm:$0xff] %vm2538, %v1494
        %2544 = vst.msk [vmem:[#allocation3 + $0x57] sm:$0xff] %vm2538, %v1495
        %2545 = vst.msk [vmem:[#allocation3 + $0x5f] sm:$0xff] %vm2538, %v1496
        %2546 = vst.msk [vmem:[#allocation3 + $0x67] sm:$0xff] %vm2538, %v1497
        %2547 = vst.msk [vmem:[#allocation3 + $0x6f] sm:$0xff] %vm2538, %v1498
        %2548 = vst.msk [vmem:[#allocation3 + $0x77] sm:$0xff] %vm2538, %v1499
        %2549 = vst.msk [vmem:[#allocation3 + $0x7f] sm:$0xff] %vm2538, %v1500
        %2550 = vst.msk [vmem:[#allocation3 + $0x87] sm:$0xff] %vm2538, %v1501
        %2551 = vst.msk [vmem:[#allocation3 + $0x8f] sm:$0xff] %vm2538, %v1502
        %2552 = vst.msk [vmem:[#allocation3 + $0x97] sm:$0xff] %vm2538, %v1503
        %2553 = vst.msk [vmem:[#allocation3 + $0x9f] sm:$0xff] %vm2538, %v1504
        %2554 = vst.msk [vmem:[#allocation3 + $0xa7] sm:$0xff] %vm2538, %v1505
        %2555 = vst.msk [vmem:[#allocation3 + $0xaf] sm:$0xff] %vm2538, %v1506
        %2556 = vst.msk [vmem:[#allocation3 + $0xb7] sm:$0xff] %vm2538, %v1507
        %2557 = vst.msk [vmem:[#allocation3 + $0xbf] sm:$0xff] %vm2538, %v1508
        %2558 = vst.msk [vmem:[#allocation3 + $0xc7] sm:$0xff] %vm2538, %v1509
        %2559 = vst.msk [vmem:[#allocation3 + $0xcf] sm:$0xff] %vm2538, %v1510
        %2560 = vst.msk [vmem:[#allocation3 + $0xd7] sm:$0xff] %vm2538, %v1511
        %2561 = vst.msk [vmem:[#allocation3 + $0xdf] sm:$0xff] %vm2538, %v1512
        %2562 = vst.msk [vmem:[#allocation3 + $0xe7] sm:$0xff] %vm2538, %v1513
        %2563 = vst.msk [vmem:[#allocation3 + $0xef] sm:$0xff] %vm2538, %v1514
        %2564 = vst.msk [vmem:[#allocation3 + $0xf7] sm:$0xff] %vm2538, %v1515
        %2565 = vst.msk [vmem:[#allocation3 + $0xff] sm:$0xff] %vm2538, %v1516
        %2566 = vst.msk [vmem:[#allocation3 + $0x107] sm:$0xff] %vm2538, %v1517
        %2567 = vst.msk [vmem:[#allocation3 + $0x10f] sm:$0xff] %vm2538, %v1518
        %2568 = vst.msk [vmem:[#allocation3 + $0x117] sm:$0xff] %vm2538, %v1519
        %2569 = vst.msk [vmem:[#allocation3 + $0x11f] sm:$0xff] %vm2538, %v1520
        %2570 = vst.msk [vmem:[#allocation3 + $0x127] sm:$0xff] %vm2538, %v1521
        %2571 = vst.msk [vmem:[#allocation3 + $0x12f] sm:$0xff] %vm2538, %v1522
        %2572 = vst.msk [vmem:[#allocation3 + $0x137] sm:$0xff] %vm2538, %v1523
        %2573 = vst.msk [vmem:[#allocation3 + $0x13f] sm:$0xff] %vm2538, %v1524
        %2574 = vst.msk [vmem:[#allocation3 + $0x147] sm:$0xff] %vm2538, %v1525
        %2575 = vst.msk [vmem:[#allocation3 + $0x14f] sm:$0xff] %vm2538, %v1526
        %2576 = vst.msk [vmem:[#allocation3 + $0x157] sm:$0xff] %vm2538, %v1527
        %2577 = vst.msk [vmem:[#allocation3 + $0x15f] sm:$0xff] %vm2538, %v1528
        %2578 = vst.msk [vmem:[#allocation3 + $0x167] sm:$0xff] %vm2538, %v1529
        %2579 = vst.msk [vmem:[#allocation3 + $0x16f] sm:$0xff] %vm2538, %v1530
        %2580 = vst.msk [vmem:[#allocation3 + $0x177] sm:$0xff] %vm2538, %v1531
        %2581 = vst.msk [vmem:[#allocation3 + $0x17f] sm:$0xff] %vm2538, %v1532
        %2582 = vst.msk [vmem:[#allocation3 + $0x187] sm:$0xff] %vm2538, %v1533
        %2583 = vst.msk [vmem:[#allocation3 + $0x18f] sm:$0xff] %vm2538, %v1534
        %2584 = vst.msk [vmem:[#allocation3 + $0x197] sm:$0xff] %vm2538, %v1535
        %2585 = vst.msk [vmem:[#allocation3 + $0x19f] sm:$0xff] %vm2538, %v1536
        %2586 = vst.msk [vmem:[#allocation3 + $0x1a7] sm:$0xff] %vm2538, %v1537
        %2587 = vst.msk [vmem:[#allocation3 + $0x1af] sm:$0xff] %vm2538, %v1538
        %2588 = vst.msk [vmem:[#allocation3 + $0x1b7] sm:$0xff] %vm2538, %v1539
        %2589 = vst.msk [vmem:[#allocation3 + $0x1bf] sm:$0xff] %vm2538, %v1540
        %2590 = vst.msk [vmem:[#allocation3 + $0x1c7] sm:$0xff] %vm2538, %v1541
        %2591 = vst.msk [vmem:[#allocation3 + $0x1cf] sm:$0xff] %vm2538, %v1542
        %2592 = vst.msk [vmem:[#allocation3 + $0x1d7] sm:$0xff] %vm2538, %v1543
        %2593 = vst.msk [vmem:[#allocation3 + $0x1df] sm:$0xff] %vm2538, %v1544
        %2594 = vst.msk [vmem:[#allocation3 + $0x1e7] sm:$0xff] %vm2538, %v1545
        %2595 = vst.msk [vmem:[#allocation3 + $0x1ef] sm:$0xff] %vm2538, %v1546
        %2596 = vst.msk [vmem:[#allocation3 + $0x1f7] sm:$0xff] %vm2538, %v1547
        %2597 = vst.msk [vmem:[#allocation3 + $0x1ff] sm:$0xff] %vm2538, %v1548
        %2598 = vst.msk [vmem:[#allocation3 + $0x207] sm:$0xff] %vm2538, %v1549
        %2599 = vrot.lane.b32.xlu0 %v1490, 4
        %v2600 = vpop.permute.xlu0 %2599
        %2601 = vrot.lane.b32.xlu0 %v1491, 4
        %v2602 = vpop.permute.xlu0 %2601
        %2603 = vrot.lane.b32.xlu0 %v1492, 4
        %v2604 = vpop.permute.xlu0 %2603
        %2605 = vrot.lane.b32.xlu0 %v1493, 4
        %v2606 = vpop.permute.xlu0 %2605
        %2607 = vrot.lane.b32.xlu0 %v1494, 4
        %v2608 = vpop.permute.xlu0 %2607
        %2609 = vrot.lane.b32.xlu0 %v1495, 4
        %v2610 = vpop.permute.xlu0 %2609
        %2611 = vrot.lane.b32.xlu0 %v1496, 4
        %v2612 = vpop.permute.xlu0 %2611
        %2613 = vrot.lane.b32.xlu0 %v1497, 4
        %v2614 = vpop.permute.xlu0 %2613
        %2615 = vrot.lane.b32.xlu0 %v1498, 4
        %v2616 = vpop.permute.xlu0 %2615
        %2617 = vrot.lane.b32.xlu0 %v1499, 4
        %v2618 = vpop.permute.xlu0 %2617
        %2619 = vrot.lane.b32.xlu0 %v1500, 4
        %v2620 = vpop.permute.xlu0 %2619
        %2621 = vrot.lane.b32.xlu0 %v1501, 4
        %v2622 = vpop.permute.xlu0 %2621
        %2623 = vrot.lane.b32.xlu0 %v1502, 4
        %v2624 = vpop.permute.xlu0 %2623
        %2625 = vrot.lane.b32.xlu0 %v1503, 4
        %v2626 = vpop.permute.xlu0 %2625
        %2627 = vrot.lane.b32.xlu0 %v1504, 4
        %v2628 = vpop.permute.xlu0 %2627
        %2629 = vrot.lane.b32.xlu0 %v1505, 4
        %v2630 = vpop.permute.xlu0 %2629
        %2631 = vrot.lane.b32.xlu0 %v1506, 4
        %v2632 = vpop.permute.xlu0 %2631
        %2633 = vrot.lane.b32.xlu0 %v1507, 4
        %v2634 = vpop.permute.xlu0 %2633
        %2635 = vrot.lane.b32.xlu0 %v1508, 4
        %v2636 = vpop.permute.xlu0 %2635
        %2637 = vrot.lane.b32.xlu0 %v1509, 4
        %v2638 = vpop.permute.xlu0 %2637
        %2639 = vrot.lane.b32.xlu0 %v1510, 4
        %v2640 = vpop.permute.xlu0 %2639
        %2641 = vrot.lane.b32.xlu0 %v1511, 4
        %v2642 = vpop.permute.xlu0 %2641
        %2643 = vrot.lane.b32.xlu0 %v1512, 4
        %v2644 = vpop.permute.xlu0 %2643
        %2645 = vrot.lane.b32.xlu0 %v1513, 4
        %v2646 = vpop.permute.xlu0 %2645
        %2647 = vrot.lane.b32.xlu0 %v1514, 4
        %v2648 = vpop.permute.xlu0 %2647
        %2649 = vrot.lane.b32.xlu0 %v1515, 4
        %v2650 = vpop.permute.xlu0 %2649
        %2651 = vrot.lane.b32.xlu0 %v1516, 4
        %v2652 = vpop.permute.xlu0 %2651
        %2653 = vrot.lane.b32.xlu0 %v1517, 4
        %v2654 = vpop.permute.xlu0 %2653
        %2655 = vrot.lane.b32.xlu0 %v1518, 4
        %v2656 = vpop.permute.xlu0 %2655
        %2657 = vrot.lane.b32.xlu0 %v1519, 4
        %v2658 = vpop.permute.xlu0 %2657
        %2659 = vrot.lane.b32.xlu0 %v1520, 4
        %v2660 = vpop.permute.xlu0 %2659
        %2661 = vrot.lane.b32.xlu0 %v1521, 4
        %v2662 = vpop.permute.xlu0 %2661
        %2663 = vrot.lane.b32.xlu0 %v1522, 4
        %v2664 = vpop.permute.xlu0 %2663
        %2665 = vrot.lane.b32.xlu0 %v1523, 4
        %v2666 = vpop.permute.xlu0 %2665
        %2667 = vrot.lane.b32.xlu0 %v1524, 4
        %v2668 = vpop.permute.xlu0 %2667
        %2669 = vrot.lane.b32.xlu0 %v1525, 4
        %v2670 = vpop.permute.xlu0 %2669
        %2671 = vrot.lane.b32.xlu0 %v1526, 4
        %v2672 = vpop.permute.xlu0 %2671
        %2673 = vrot.lane.b32.xlu0 %v1527, 4
        %v2674 = vpop.permute.xlu0 %2673
        %2675 = vrot.lane.b32.xlu0 %v1528, 4
        %v2676 = vpop.permute.xlu0 %2675
        %2677 = vrot.lane.b32.xlu0 %v1529, 4
        %v2678 = vpop.permute.xlu0 %2677
        %2679 = vrot.lane.b32.xlu0 %v1530, 4
        %v2680 = vpop.permute.xlu0 %2679
        %2681 = vrot.lane.b32.xlu0 %v1531, 4
        %v2682 = vpop.permute.xlu0 %2681
        %2683 = vrot.lane.b32.xlu0 %v1532, 4
        %v2684 = vpop.permute.xlu0 %2683
        %2685 = vrot.lane.b32.xlu0 %v1533, 4
        %v2686 = vpop.permute.xlu0 %2685
        %2687 = vrot.lane.b32.xlu0 %v1534, 4
        %v2688 = vpop.permute.xlu0 %2687
        %2689 = vrot.lane.b32.xlu0 %v1535, 4
        %v2690 = vpop.permute.xlu0 %2689
        %2691 = vrot.lane.b32.xlu0 %v1536, 4
        %v2692 = vpop.permute.xlu0 %2691
        %2693 = vrot.lane.b32.xlu0 %v1537, 4
        %v2694 = vpop.permute.xlu0 %2693
        %2695 = vrot.lane.b32.xlu0 %v1538, 4
        %v2696 = vpop.permute.xlu0 %2695
        %2697 = vrot.lane.b32.xlu0 %v1539, 4
        %v2698 = vpop.permute.xlu0 %2697
        %2699 = vrot.lane.b32.xlu0 %v1540, 4
        %v2700 = vpop.permute.xlu0 %2699
        %2701 = vrot.lane.b32.xlu0 %v1541, 4
        %v2702 = vpop.permute.xlu0 %2701
        %2703 = vrot.lane.b32.xlu0 %v1542, 4
        %v2704 = vpop.permute.xlu0 %2703
        %2705 = vrot.lane.b32.xlu0 %v1543, 4
        %v2706 = vpop.permute.xlu0 %2705
        %2707 = vrot.lane.b32.xlu0 %v1544, 4
        %v2708 = vpop.permute.xlu0 %2707
        %2709 = vrot.lane.b32.xlu0 %v1545, 4
        %v2710 = vpop.permute.xlu0 %2709
        %2711 = vrot.lane.b32.xlu0 %v1546, 4
        %v2712 = vpop.permute.xlu0 %2711
        %2713 = vrot.lane.b32.xlu0 %v1547, 4
        %v2714 = vpop.permute.xlu0 %2713
        %2715 = vrot.lane.b32.xlu0 %v1548, 4
        %v2716 = vpop.permute.xlu0 %2715
        %2717 = vrot.lane.b32.xlu0 %v1549, 4
        %v2718 = vpop.permute.xlu0 %2717
        %vm2779 = vcmask 162944
        %2780 = vst.msk [vmem:[#allocation3 + $0x2e] sm:$0xff] %vm2779, %v2600
        %2781 = vst.msk [vmem:[#allocation3 + $0x36] sm:$0xff] %vm2779, %v2602
        %2782 = vst.msk [vmem:[#allocation3 + $0x3e] sm:$0xff] %vm2779, %v2604
        %2783 = vst.msk [vmem:[#allocation3 + $0x46] sm:$0xff] %vm2779, %v2606
        %2784 = vst.msk [vmem:[#allocation3 + $0x4e] sm:$0xff] %vm2779, %v2608
        %2785 = vst.msk [vmem:[#allocation3 + $0x56] sm:$0xff] %vm2779, %v2610
        %2786 = vst.msk [vmem:[#allocation3 + $0x5e] sm:$0xff] %vm2779, %v2612
        %2787 = vst.msk [vmem:[#allocation3 + $0x66] sm:$0xff] %vm2779, %v2614
        %2788 = vst.msk [vmem:[#allocation3 + $0x6e] sm:$0xff] %vm2779, %v2616
        %2789 = vst.msk [vmem:[#allocation3 + $0x76] sm:$0xff] %vm2779, %v2618
        %2790 = vst.msk [vmem:[#allocation3 + $0x7e] sm:$0xff] %vm2779, %v2620
        %2791 = vst.msk [vmem:[#allocation3 + $0x86] sm:$0xff] %vm2779, %v2622
        %2792 = vst.msk [vmem:[#allocation3 + $0x8e] sm:$0xff] %vm2779, %v2624
        %2793 = vst.msk [vmem:[#allocation3 + $0x96] sm:$0xff] %vm2779, %v2626
        %2794 = vst.msk [vmem:[#allocation3 + $0x9e] sm:$0xff] %vm2779, %v2628
        %2795 = vst.msk [vmem:[#allocation3 + $0xa6] sm:$0xff] %vm2779, %v2630
        %2796 = vst.msk [vmem:[#allocation3 + $0xae] sm:$0xff] %vm2779, %v2632
        %2797 = vst.msk [vmem:[#allocation3 + $0xb6] sm:$0xff] %vm2779, %v2634
        %2798 = vst.msk [vmem:[#allocation3 + $0xbe] sm:$0xff] %vm2779, %v2636
        %2799 = vst.msk [vmem:[#allocation3 + $0xc6] sm:$0xff] %vm2779, %v2638
        %2800 = vst.msk [vmem:[#allocation3 + $0xce] sm:$0xff] %vm2779, %v2640
        %2801 = vst.msk [vmem:[#allocation3 + $0xd6] sm:$0xff] %vm2779, %v2642
        %2802 = vst.msk [vmem:[#allocation3 + $0xde] sm:$0xff] %vm2779, %v2644
        %2803 = vst.msk [vmem:[#allocation3 + $0xe6] sm:$0xff] %vm2779, %v2646
        %2804 = vst.msk [vmem:[#allocation3 + $0xee] sm:$0xff] %vm2779, %v2648
        %2805 = vst.msk [vmem:[#allocation3 + $0xf6] sm:$0xff] %vm2779, %v2650
        %2806 = vst.msk [vmem:[#allocation3 + $0xfe] sm:$0xff] %vm2779, %v2652
        %2807 = vst.msk [vmem:[#allocation3 + $0x106] sm:$0xff] %vm2779, %v2654
        %2808 = vst.msk [vmem:[#allocation3 + $0x10e] sm:$0xff] %vm2779, %v2656
        %2809 = vst.msk [vmem:[#allocation3 + $0x116] sm:$0xff] %vm2779, %v2658
        %2810 = vst.msk [vmem:[#allocation3 + $0x11e] sm:$0xff] %vm2779, %v2660
        %2811 = vst.msk [vmem:[#allocation3 + $0x126] sm:$0xff] %vm2779, %v2662
        %2812 = vst.msk [vmem:[#allocation3 + $0x12e] sm:$0xff] %vm2779, %v2664
        %2813 = vst.msk [vmem:[#allocation3 + $0x136] sm:$0xff] %vm2779, %v2666
        %2814 = vst.msk [vmem:[#allocation3 + $0x13e] sm:$0xff] %vm2779, %v2668
        %2815 = vst.msk [vmem:[#allocation3 + $0x146] sm:$0xff] %vm2779, %v2670
        %2816 = vst.msk [vmem:[#allocation3 + $0x14e] sm:$0xff] %vm2779, %v2672
        %2817 = vst.msk [vmem:[#allocation3 + $0x156] sm:$0xff] %vm2779, %v2674
        %2818 = vst.msk [vmem:[#allocation3 + $0x15e] sm:$0xff] %vm2779, %v2676
        %2819 = vst.msk [vmem:[#allocation3 + $0x166] sm:$0xff] %vm2779, %v2678
        %2820 = vst.msk [vmem:[#allocation3 + $0x16e] sm:$0xff] %vm2779, %v2680
        %2821 = vst.msk [vmem:[#allocation3 + $0x176] sm:$0xff] %vm2779, %v2682
        %2822 = vst.msk [vmem:[#allocation3 + $0x17e] sm:$0xff] %vm2779, %v2684
        %2823 = vst.msk [vmem:[#allocation3 + $0x186] sm:$0xff] %vm2779, %v2686
        %2824 = vst.msk [vmem:[#allocation3 + $0x18e] sm:$0xff] %vm2779, %v2688
        %2825 = vst.msk [vmem:[#allocation3 + $0x196] sm:$0xff] %vm2779, %v2690
        %2826 = vst.msk [vmem:[#allocation3 + $0x19e] sm:$0xff] %vm2779, %v2692
        %2827 = vst.msk [vmem:[#allocation3 + $0x1a6] sm:$0xff] %vm2779, %v2694
        %2828 = vst.msk [vmem:[#allocation3 + $0x1ae] sm:$0xff] %vm2779, %v2696
        %2829 = vst.msk [vmem:[#allocation3 + $0x1b6] sm:$0xff] %vm2779, %v2698
        %2830 = vst.msk [vmem:[#allocation3 + $0x1be] sm:$0xff] %vm2779, %v2700
        %2831 = vst.msk [vmem:[#allocation3 + $0x1c6] sm:$0xff] %vm2779, %v2702
        %2832 = vst.msk [vmem:[#allocation3 + $0x1ce] sm:$0xff] %vm2779, %v2704
        %2833 = vst.msk [vmem:[#allocation3 + $0x1d6] sm:$0xff] %vm2779, %v2706
        %2834 = vst.msk [vmem:[#allocation3 + $0x1de] sm:$0xff] %vm2779, %v2708
        %2835 = vst.msk [vmem:[#allocation3 + $0x1e6] sm:$0xff] %vm2779, %v2710
        %2836 = vst.msk [vmem:[#allocation3 + $0x1ee] sm:$0xff] %vm2779, %v2712
        %2837 = vst.msk [vmem:[#allocation3 + $0x1f6] sm:$0xff] %vm2779, %v2714
        %2838 = vst.msk [vmem:[#allocation3 + $0x1fe] sm:$0xff] %vm2779, %v2716
        %2839 = vst.msk [vmem:[#allocation3 + $0x206] sm:$0xff] %vm2779, %v2718
        %v2840 = vld [vmem:[#allocation2] sm:$0xff]
        %v2841 = vld [vmem:[#allocation2 + $0x8] sm:$0xff]
        %v2842 = vld [vmem:[#allocation2 + $0x10] sm:$0xff]
        %v2843 = vld [vmem:[#allocation2 + $0x18] sm:$0xff]
        %v2844 = vld [vmem:[#allocation2 + $0x20] sm:$0xff]
        %v2845 = vld [vmem:[#allocation2 + $0x28] sm:$0xff]
        %v2846 = vld [vmem:[#allocation2 + $0x30] sm:$0xff]
        %v2847 = vld [vmem:[#allocation2 + $0x38] sm:$0xff]
        %v2848 = vld [vmem:[#allocation2 + $0x40] sm:$0xff]
        %v2849 = vld [vmem:[#allocation2 + $0x48] sm:$0xff]
        %v2850 = vld [vmem:[#allocation2 + $0x50] sm:$0xff]
        %v2851 = vld [vmem:[#allocation2 + $0x58] sm:$0xff]
        %v2852 = vld [vmem:[#allocation2 + $0x60] sm:$0xff]
        %v2853 = vld [vmem:[#allocation2 + $0x68] sm:$0xff]
        %v2854 = vld [vmem:[#allocation2 + $0x70] sm:$0xff]
        %v2855 = vld [vmem:[#allocation2 + $0x78] sm:$0xff]
        %v2856 = vld [vmem:[#allocation2 + $0x80] sm:$0xff]
        %v2857 = vld [vmem:[#allocation2 + $0x88] sm:$0xff]
        %v2858 = vld [vmem:[#allocation2 + $0x90] sm:$0xff]
        %v2859 = vld [vmem:[#allocation2 + $0x98] sm:$0xff]
        %v2860 = vld [vmem:[#allocation2 + $0xa0] sm:$0xff]
        %v2861 = vld [vmem:[#allocation2 + $0xa8] sm:$0xff]
        %v2862 = vld [vmem:[#allocation2 + $0xb0] sm:$0xff]
        %v2863 = vld [vmem:[#allocation2 + $0xb8] sm:$0xff]
        %v2864 = vld [vmem:[#allocation2 + $0xc0] sm:$0xff]
        %v2865 = vld [vmem:[#allocation2 + $0xc8] sm:$0xff]
        %v2866 = vld [vmem:[#allocation2 + $0xd0] sm:$0xff]
        %v2867 = vld [vmem:[#allocation2 + $0xd8] sm:$0xff]
        %v2868 = vld [vmem:[#allocation2 + $0xe0] sm:$0xff]
        %v2869 = vld [vmem:[#allocation2 + $0xe8] sm:$0xff]
        %v2870 = vld [vmem:[#allocation2 + $0xf0] sm:$0xff]
        %v2871 = vld [vmem:[#allocation2 + $0xf8] sm:$0xff]
        %v2872 = vld [vmem:[#allocation2 + $0x100] sm:$0xff]
        %v2873 = vld [vmem:[#allocation2 + $0x108] sm:$0xff]
        %v2874 = vld [vmem:[#allocation2 + $0x110] sm:$0xff]
        %v2875 = vld [vmem:[#allocation2 + $0x118] sm:$0xff]
        %v2876 = vld [vmem:[#allocation2 + $0x120] sm:$0xff]
        %v2877 = vld [vmem:[#allocation2 + $0x128] sm:$0xff]
        %v2878 = vld [vmem:[#allocation2 + $0x130] sm:$0xff]
        %v2879 = vld [vmem:[#allocation2 + $0x138] sm:$0xff]
        %v2880 = vld [vmem:[#allocation2 + $0x140] sm:$0xff]
        %v2881 = vld [vmem:[#allocation2 + $0x148] sm:$0xff]
        %v2882 = vld [vmem:[#allocation2 + $0x150] sm:$0xff]
        %v2883 = vld [vmem:[#allocation2 + $0x158] sm:$0xff]
        %v2884 = vld [vmem:[#allocation2 + $0x160] sm:$0xff]
        %v2885 = vld [vmem:[#allocation2 + $0x168] sm:$0xff]
        %v2886 = vld [vmem:[#allocation2 + $0x170] sm:$0xff]
        %v2887 = vld [vmem:[#allocation2 + $0x178] sm:$0xff]
        %v2888 = vld [vmem:[#allocation2 + $0x180] sm:$0xff]
        %v2889 = vld [vmem:[#allocation2 + $0x188] sm:$0xff]
        %v2890 = vld [vmem:[#allocation2 + $0x190] sm:$0xff]
        %v2891 = vld [vmem:[#allocation2 + $0x198] sm:$0xff]
        %v2892 = vld [vmem:[#allocation2 + $0x1a0] sm:$0xff]
        %v2893 = vld [vmem:[#allocation2 + $0x1a8] sm:$0xff]
        %v2894 = vld [vmem:[#allocation2 + $0x1b0] sm:$0xff]
        %v2895 = vld [vmem:[#allocation2 + $0x1b8] sm:$0xff]
        %v2896 = vld [vmem:[#allocation2 + $0x1c0] sm:$0xff]
        %v2897 = vld [vmem:[#allocation2 + $0x1c8] sm:$0xff]
        %v2898 = vld [vmem:[#allocation2 + $0x1d0] sm:$0xff]
        %v2899 = vld [vmem:[#allocation2 + $0x1d8] sm:$0xff]
        %v2900 = vld [vmem:[%s3] sm:$0xff]
        %v2901 = vld [vmem:[%s3 + $0x8] sm:$0xf]
        %v2902 = vld [vmem:[#allocation2 + $0x1e0] sm:$0xff]
        %v2903 = vld [vmem:[#allocation2 + $0x1e8] sm:$0xff]
        %v2904 = vld [vmem:[#allocation2 + $0x1f0] sm:$0xff]
        %s2905 = scalar_lea.vmem %s3, 16
        %v2906 = vld [vmem:[%s2905] sm:$0xff]
        %v2907 = vld [vmem:[%s2905 + $0x8] sm:$0xf]
        %v2909 = vsel %vm1550, %v2843, 0
        %v2912 = vsel %vm1550, %v2844, 0
        %v2915 = vsel %vm1550, %v2845, 0
        %v2918 = vsel %vm1550, %v2846, 0
        %v2921 = vsel %vm1550, %v2847, 0
        %v2924 = vsel %vm1550, %v2848, 0
        %v2927 = vsel %vm1550, %v2849, 0
        %v2930 = vsel %vm1550, %v2850, 0
        %v2933 = vsel %vm1550, %v2851, 0
        %v2936 = vsel %vm1550, %v2852, 0
        %v2939 = vsel %vm1550, %v2853, 0
        %v2942 = vsel %vm1550, %v2854, 0
        %v2945 = vsel %vm1550, %v2855, 0
        %v2948 = vsel %vm1550, %v2856, 0
        %v2951 = vsel %vm1550, %v2857, 0
        %v2954 = vsel %vm1550, %v2858, 0
        %v2957 = vsel %vm1550, %v2859, 0
        %v2960 = vsel %vm1550, %v2860, 0
        %v2963 = vsel %vm1550, %v2861, 0
        %v2966 = vsel %vm1550, %v2862, 0
        %v2969 = vsel %vm1550, %v2863, 0
        %v2972 = vsel %vm1550, %v2864, 0
        %v2975 = vsel %vm1550, %v2865, 0
        %v2978 = vsel %vm1550, %v2866, 0
        %v2981 = vsel %vm1550, %v2867, 0
        %v2984 = vsel %vm1550, %v2868, 0
        %v2987 = vsel %vm1550, %v2869, 0
        %v2990 = vsel %vm1550, %v2870, 0
        %v2993 = vsel %vm1550, %v2871, 0
        %v2996 = vsel %vm1550, %v2872, 0
        %v2999 = vsel %vm1550, %v2873, 0
        %v3002 = vsel %vm1550, %v2874, 0
        %v3005 = vsel %vm1550, %v2875, 0
        %v3008 = vsel %vm1550, %v2876, 0
        %v3011 = vsel %vm1550, %v2877, 0
        %v3014 = vsel %vm1550, %v2878, 0
        %v3017 = vsel %vm1550, %v2879, 0
        %v3020 = vsel %vm1550, %v2880, 0
        %v3023 = vsel %vm1550, %v2881, 0
        %v3026 = vsel %vm1550, %v2882, 0
        %v3029 = vsel %vm1550, %v2883, 0
        %v3032 = vsel %vm1550, %v2884, 0
        %v3035 = vsel %vm1550, %v2885, 0
        %v3038 = vsel %vm1550, %v2886, 0
        %v3041 = vsel %vm1550, %v2887, 0
        %v3044 = vsel %vm1550, %v2888, 0
        %v3047 = vsel %vm1550, %v2889, 0
        %v3050 = vsel %vm1550, %v2890, 0
        %v3053 = vsel %vm1550, %v2891, 0
        %v3056 = vsel %vm1550, %v2892, 0
        %v3059 = vsel %vm1550, %v2893, 0
        %v3062 = vsel %vm1550, %v2894, 0
        %v3065 = vsel %vm1550, %v2895, 0
        %v3068 = vsel %vm1550, %v2896, 0
        %v3071 = vsel %vm1550, %v2897, 0
        %v3074 = vsel %vm1550, %v2898, 0
        %v3077 = vsel %vm1550, %v2899, 0
        %v3080 = vsel %vm1550, %v2902, 0
        %v3083 = vsel %vm1550, %v2903, 0
        %v3086 = vsel %vm1550, %v2904, 0
        %v3089 = vsel %vm1000, %v2907, 0
        %3091 = vmatprep.subr.mxu0 0.0
        %3092 = vmatpush1.msra.mxu0 %v2906
        %3093 = vmatprep.subr.mxu0 0.0
        %3094 = vmatpush1.msra.mxu0 %v3089
        %3095 = vmatprep.subr.mxu0 0.0
        %3096 = vmatpush1.msra.mxu0 0.0
        %3097 = vmatprep.subr.mxu0 0.0
        %3098 = vmatpush1.msra.mxu0 0.0
        %3099 = vmatprep.subr.mxu0 0.0
        %3100 = vmatpush1.msra.mxu0 0.0
        %3101 = vmatprep.subr.mxu0 0.0
        %3102 = vmatpush1.msra.mxu0 0.0
        %3103 = vmatprep.subr.mxu0 0.0
        %3104 = vmatpush1.msra.mxu0 0.0
        %3105 = vmatprep.subr.mxu0 0.0
        %3106 = vmatpush1.msra.mxu0 0.0
        %3107 = vmatprep.subr.mxu0 0.0
        %3108 = vmatpush1.msra.mxu0 0.0
        %3109 = vmatprep.subr.mxu0 0.0
        %3110 = vmatpush1.msra.mxu0 0.0
        %3111 = vmatprep.subr.mxu0 0.0
        %3112 = vmatpush1.msra.mxu0 0.0
        %3113 = vmatprep.subr.mxu0 0.0
        %3114 = vmatpush1.msra.mxu0 0.0
        %3115 = vmatprep.subr.mxu0 0.0
        %3116 = vmatpush1.msra.mxu0 0.0
        %3117 = vmatprep.subr.mxu0 0.0
        %3118 = vmatpush1.msra.mxu0 0.0
        %3119 = vmatprep.subr.mxu0 0.0
        %3120 = vmatpush1.msra.mxu0 0.0
        %3121 = vmatprep.subr.mxu0 0.0
        %3122 = vmatpush1.msra.mxu0 0.0
        %3123 = vmatprep.subr.mxu0 0.0
        %3124 = vmatpush1.msra.mxu0 0.0
        %3125 = vmatprep.subr.mxu0 0.0
        %3126 = vmatpush1.msra.mxu0 0.0
        %3127 = vmatprep.subr.mxu0 0.0
        %3128 = vmatpush1.msra.mxu0 0.0
        %3129 = vmatprep.subr.mxu0 0.0
        %3130 = vmatpush1.msra.mxu0 0.0
        %3131 = vmatprep.subr.mxu0 0.0
        %3132 = vmatpush1.msra.mxu0 0.0
        %3133 = vmatprep.subr.mxu0 0.0
        %3134 = vmatpush1.msra.mxu0 0.0
        %3135 = vmatprep.subr.mxu0 0.0
        %3136 = vmatpush1.msra.mxu0 0.0
        %3137 = vmatprep.subr.mxu0 0.0
        %3138 = vmatpush1.msra.mxu0 0.0
        %3139 = vmatprep.subr.mxu0 0.0
        %3140 = vmatpush1.msra.mxu0 0.0
        %3141 = vmatprep.subr.mxu0 0.0
        %3142 = vmatpush1.msra.mxu0 0.0
        %3143 = vmatprep.subr.mxu0 0.0
        %3144 = vmatpush1.msra.mxu0 0.0
        %3145 = vmatprep.subr.mxu0 0.0
        %3146 = vmatpush1.msra.mxu0 0.0
        %3147 = vmatprep.subr.mxu0 0.0
        %3148 = vmatpush1.msra.mxu0 0.0
        %3149 = vmatprep.subr.mxu0 0.0
        %3150 = vmatpush1.msra.mxu0 0.0
        %3151 = vmatprep.subr.mxu0 0.0
        %3152 = vmatpush1.msra.mxu0 0.0
        %3153 = vmatprep.subr.mxu0 0.0
        %3154 = vmatpush1.msra.mxu0 0.0
        %3155 = vmatprep.mubr.f32.mxu0 0.0
        %3156 = vmatmul.mubr.f32.gmra.mrb[0].mxu0 %v2909
        %v3157 = vpop.f32.mrb[0].mxu0
        %v3158 = vadd.f32 0.0, %v3157
        %v3159 = vpop.f32.mrb[0].mxu0
        %3160 = vmatprep.mubr.f32.mxu0 0.0
        %3161 = vmatmul.mubr.f32.gmra.mrb[0].mxu0 %v2912
        %v3162 = vpop.f32.mrb[0].mxu0
        %v3163 = vadd.f32 0.0, %v3162
        %v3164 = vpop.f32.mrb[0].mxu0
        %3165 = vmatprep.mubr.f32.mxu0 0.0
        %3166 = vmatmul.mubr.f32.gmra.mrb[0].mxu0 %v2915
        %v3167 = vpop.f32.mrb[0].mxu0
        %v3168 = vadd.f32 0.0, %v3167
        %v3169 = vpop.f32.mrb[0].mxu0
        %3170 = vmatprep.mubr.f32.mxu0 0.0
        %3171 = vmatmul.mubr.f32.gmra.mrb[0].mxu0 %v2918
        %v3172 = vpop.f32.mrb[0].mxu0
        %v3173 = vadd.f32 0.0, %v3172
        %v3174 = vpop.f32.mrb[0].mxu0
        %3175 = vmatprep.mubr.f32.mxu0 0.0
        %3176 = vmatmul.mubr.f32.gmra.mrb[0].mxu0 %v2921
        %v3177 = vpop.f32.mrb[0].mxu0
        %v3178 = vadd.f32 0.0, %v3177
        %v3179 = vpop.f32.mrb[0].mxu0
        %3180 = vmatprep.mubr.f32.mxu0 0.0
        %3181 = vmatmul.mubr.f32.gmra.mrb[0].mxu0 %v2924
        %v3182 = vpop.f32.mrb[0].mxu0
        %v3183 = vadd.f32 0.0, %v3182
        %v3184 = vpop.f32.mrb[0].mxu0
        %3185 = vmatprep.mubr.f32.mxu0 0.0
        %3186 = vmatmul.mubr.f32.gmra.mrb[0].mxu0 %v2927
        %v3187 = vpop.f32.mrb[0].mxu0
        %v3188 = vadd.f32 0.0, %v3187
        %v3189 = vpop.f32.mrb[0].mxu0
        %3190 = vmatprep.mubr.f32.mxu0 0.0
        %3191 = vmatmul.mubr.f32.gmra.mrb[0].mxu0 %v2930
        %v3192 = vpop.f32.mrb[0].mxu0
        %v3193 = vadd.f32 0.0, %v3192
        %v3194 = vpop.f32.mrb[0].mxu0
        %3195 = vmatprep.mubr.f32.mxu0 0.0
        %3196 = vmatmul.mubr.f32.gmra.mrb[0].mxu0 %v2933
        %v3197 = vpop.f32.mrb[0].mxu0
        %v3198 = vadd.f32 0.0, %v3197
        %v3199 = vpop.f32.mrb[0].mxu0
        %3200 = vmatprep.mubr.f32.mxu0 0.0
        %3201 = vmatmul.mubr.f32.gmra.mrb[0].mxu0 %v2936
        %v3202 = vpop.f32.mrb[0].mxu0
        %v3203 = vadd.f32 0.0, %v3202
        %v3204 = vpop.f32.mrb[0].mxu0
        %3205 = vmatprep.mubr.f32.mxu0 0.0
        %3206 = vmatmul.mubr.f32.gmra.mrb[0].mxu0 %v2939
        %v3207 = vpop.f32.mrb[0].mxu0
        %v3208 = vadd.f32 0.0, %v3207
        %v3209 = vpop.f32.mrb[0].mxu0
        %3210 = vmatprep.mubr.f32.mxu0 0.0
        %3211 = vmatmul.mubr.f32.gmra.mrb[0].mxu0 %v2942
        %v3212 = vpop.f32.mrb[0].mxu0
        %v3213 = vadd.f32 0.0, %v3212
        %v3214 = vpop.f32.mrb[0].mxu0
        %3215 = vmatprep.mubr.f32.mxu0 0.0
        %3216 = vmatmul.mubr.f32.gmra.mrb[0].mxu0 %v2945
        %v3217 = vpop.f32.mrb[0].mxu0
        %v3218 = vadd.f32 0.0, %v3217
        %v3219 = vpop.f32.mrb[0].mxu0
        %3220 = vmatprep.mubr.f32.mxu0 0.0
        %3221 = vmatmul.mubr.f32.gmra.mrb[0].mxu0 %v2948
        %v3222 = vpop.f32.mrb[0].mxu0
        %v3223 = vadd.f32 0.0, %v3222
        %v3224 = vpop.f32.mrb[0].mxu0
        %3225 = vmatprep.mubr.f32.mxu0 0.0
        %3226 = vmatmul.mubr.f32.gmra.mrb[0].mxu0 %v2951
        %v3227 = vpop.f32.mrb[0].mxu0
        %v3228 = vadd.f32 0.0, %v3227
        %v3229 = vpop.f32.mrb[0].mxu0
        %3230 = vmatprep.mubr.f32.mxu0 0.0
        %3231 = vmatmul.mubr.f32.gmra.mrb[0].mxu0 %v2954
        %v3232 = vpop.f32.mrb[0].mxu0
        %v3233 = vadd.f32 0.0, %v3232
        %v3234 = vpop.f32.mrb[0].mxu0
        %3235 = vmatprep.mubr.f32.mxu0 0.0
        %3236 = vmatmul.mubr.f32.gmra.mrb[0].mxu0 %v2957
        %v3237 = vpop.f32.mrb[0].mxu0
        %v3238 = vadd.f32 0.0, %v3237
        %v3239 = vpop.f32.mrb[0].mxu0
        %3240 = vmatprep.mubr.f32.mxu0 0.0
        %3241 = vmatmul.mubr.f32.gmra.mrb[0].mxu0 %v2960
        %v3242 = vpop.f32.mrb[0].mxu0
        %v3243 = vadd.f32 0.0, %v3242
        %v3244 = vpop.f32.mrb[0].mxu0
        %3245 = vmatprep.mubr.f32.mxu0 0.0
        %3246 = vmatmul.mubr.f32.gmra.mrb[0].mxu0 %v2963
        %v3247 = vpop.f32.mrb[0].mxu0
        %v3248 = vadd.f32 0.0, %v3247
        %v3249 = vpop.f32.mrb[0].mxu0
        %3250 = vmatprep.mubr.f32.mxu0 0.0
        %3251 = vmatmul.mubr.f32.gmra.mrb[0].mxu0 %v2966
        %v3252 = vpop.f32.mrb[0].mxu0
        %v3253 = vadd.f32 0.0, %v3252
        %v3254 = vpop.f32.mrb[0].mxu0
        %3255 = vmatprep.mubr.f32.mxu0 0.0
        %3256 = vmatmul.mubr.f32.gmra.mrb[0].mxu0 %v2969
        %v3257 = vpop.f32.mrb[0].mxu0
        %v3258 = vadd.f32 0.0, %v3257
        %v3259 = vpop.f32.mrb[0].mxu0
        %3260 = vmatprep.mubr.f32.mxu0 0.0
        %3261 = vmatmul.mubr.f32.gmra.mrb[0].mxu0 %v2972
        %v3262 = vpop.f32.mrb[0].mxu0
        %v3263 = vadd.f32 0.0, %v3262
        %v3264 = vpop.f32.mrb[0].mxu0
        %3265 = vmatprep.mubr.f32.mxu0 0.0
        %3266 = vmatmul.mubr.f32.gmra.mrb[0].mxu0 %v2975
        %v3267 = vpop.f32.mrb[0].mxu0
        %v3268 = vadd.f32 0.0, %v3267
        %v3269 = vpop.f32.mrb[0].mxu0
        %3270 = vmatprep.mubr.f32.mxu0 0.0
        %3271 = vmatmul.mubr.f32.gmra.mrb[0].mxu0 %v2978
        %v3272 = vpop.f32.mrb[0].mxu0
        %v3273 = vadd.f32 0.0, %v3272
        %v3274 = vpop.f32.mrb[0].mxu0
        %3275 = vmatprep.mubr.f32.mxu0 0.0
        %3276 = vmatmul.mubr.f32.gmra.mrb[0].mxu0 %v2981
        %v3277 = vpop.f32.mrb[0].mxu0
        %v3278 = vadd.f32 0.0, %v3277
        %v3279 = vpop.f32.mrb[0].mxu0
        %3280 = vmatprep.mubr.f32.mxu0 0.0
        %3281 = vmatmul.mubr.f32.gmra.mrb[0].mxu0 %v2984
        %v3282 = vpop.f32.mrb[0].mxu0
        %v3283 = vadd.f32 0.0, %v3282
        %v3284 = vpop.f32.mrb[0].mxu0
        %3285 = vmatprep.mubr.f32.mxu0 0.0
        %3286 = vmatmul.mubr.f32.gmra.mrb[0].mxu0 %v2987
        %v3287 = vpop.f32.mrb[0].mxu0
        %v3288 = vadd.f32 0.0, %v3287
        %v3289 = vpop.f32.mrb[0].mxu0
        %3290 = vmatprep.mubr.f32.mxu0 0.0
        %3291 = vmatmul.mubr.f32.gmra.mrb[0].mxu0 %v2990
        %v3292 = vpop.f32.mrb[0].mxu0
        %v3293 = vadd.f32 0.0, %v3292
        %v3294 = vpop.f32.mrb[0].mxu0
        %3295 = vmatprep.mubr.f32.mxu0 0.0
        %3296 = vmatmul.mubr.f32.gmra.mrb[0].mxu0 %v2993
        %v3297 = vpop.f32.mrb[0].mxu0
        %v3298 = vadd.f32 0.0, %v3297
        %v3299 = vpop.f32.mrb[0].mxu0
        %3300 = vmatprep.mubr.f32.mxu0 0.0
        %3301 = vmatmul.mubr.f32.gmra.mrb[0].mxu0 %v2996
        %v3302 = vpop.f32.mrb[0].mxu0
        %v3303 = vadd.f32 0.0, %v3302
        %v3304 = vpop.f32.mrb[0].mxu0
        %3305 = vmatprep.mubr.f32.mxu0 0.0
        %3306 = vmatmul.mubr.f32.gmra.mrb[0].mxu0 %v2999
        %v3307 = vpop.f32.mrb[0].mxu0
        %v3308 = vadd.f32 0.0, %v3307
        %v3309 = vpop.f32.mrb[0].mxu0
        %3310 = vmatprep.mubr.f32.mxu0 0.0
        %3311 = vmatmul.mubr.f32.gmra.mrb[0].mxu0 %v3002
        %v3312 = vpop.f32.mrb[0].mxu0
        %v3313 = vadd.f32 0.0, %v3312
        %v3314 = vpop.f32.mrb[0].mxu0
        %3315 = vmatprep.mubr.f32.mxu0 0.0
        %3316 = vmatmul.mubr.f32.gmra.mrb[0].mxu0 %v3005
        %v3317 = vpop.f32.mrb[0].mxu0
        %v3318 = vadd.f32 0.0, %v3317
        %v3319 = vpop.f32.mrb[0].mxu0
        %3320 = vmatprep.mubr.f32.mxu0 0.0
        %3321 = vmatmul.mubr.f32.gmra.mrb[0].mxu0 %v3008
        %v3322 = vpop.f32.mrb[0].mxu0
        %v3323 = vadd.f32 0.0, %v3322
        %v3324 = vpop.f32.mrb[0].mxu0
        %3325 = vmatprep.mubr.f32.mxu0 0.0
        %3326 = vmatmul.mubr.f32.gmra.mrb[0].mxu0 %v3011
        %v3327 = vpop.f32.mrb[0].mxu0
        %v3328 = vadd.f32 0.0, %v3327
        %v3329 = vpop.f32.mrb[0].mxu0
        %3330 = vmatprep.mubr.f32.mxu0 0.0
        %3331 = vmatmul.mubr.f32.gmra.mrb[0].mxu0 %v3014
        %v3332 = vpop.f32.mrb[0].mxu0
        %v3333 = vadd.f32 0.0, %v3332
        %v3334 = vpop.f32.mrb[0].mxu0
        %3335 = vmatprep.mubr.f32.mxu0 0.0
        %3336 = vmatmul.mubr.f32.gmra.mrb[0].mxu0 %v3017
        %v3337 = vpop.f32.mrb[0].mxu0
        %v3338 = vadd.f32 0.0, %v3337
        %v3339 = vpop.f32.mrb[0].mxu0
        %3340 = vmatprep.mubr.f32.mxu0 0.0
        %3341 = vmatmul.mubr.f32.gmra.mrb[0].mxu0 %v3020
        %v3342 = vpop.f32.mrb[0].mxu0
        %v3343 = vadd.f32 0.0, %v3342
        %v3344 = vpop.f32.mrb[0].mxu0
        %3345 = vmatprep.mubr.f32.mxu0 0.0
        %3346 = vmatmul.mubr.f32.gmra.mrb[0].mxu0 %v3023
        %v3347 = vpop.f32.mrb[0].mxu0
        %v3348 = vadd.f32 0.0, %v3347
        %v3349 = vpop.f32.mrb[0].mxu0
        %3350 = vmatprep.mubr.f32.mxu0 0.0
        %3351 = vmatmul.mubr.f32.gmra.mrb[0].mxu0 %v3026
        %v3352 = vpop.f32.mrb[0].mxu0
        %v3353 = vadd.f32 0.0, %v3352
        %v3354 = vpop.f32.mrb[0].mxu0
        %3355 = vmatprep.mubr.f32.mxu0 0.0
        %3356 = vmatmul.mubr.f32.gmra.mrb[0].mxu0 %v3029
        %v3357 = vpop.f32.mrb[0].mxu0
        %v3358 = vadd.f32 0.0, %v3357
        %v3359 = vpop.f32.mrb[0].mxu0
        %3360 = vmatprep.mubr.f32.mxu0 0.0
        %3361 = vmatmul.mubr.f32.gmra.mrb[0].mxu0 %v3032
        %v3362 = vpop.f32.mrb[0].mxu0
        %v3363 = vadd.f32 0.0, %v3362
        %v3364 = vpop.f32.mrb[0].mxu0
        %3365 = vmatprep.mubr.f32.mxu0 0.0
        %3366 = vmatmul.mubr.f32.gmra.mrb[0].mxu0 %v3035
        %v3367 = vpop.f32.mrb[0].mxu0
        %v3368 = vadd.f32 0.0, %v3367
        %v3369 = vpop.f32.mrb[0].mxu0
        %3370 = vmatprep.mubr.f32.mxu0 0.0
        %3371 = vmatmul.mubr.f32.gmra.mrb[0].mxu0 %v3038
        %v3372 = vpop.f32.mrb[0].mxu0
        %v3373 = vadd.f32 0.0, %v3372
        %v3374 = vpop.f32.mrb[0].mxu0
        %3375 = vmatprep.mubr.f32.mxu0 0.0
        %3376 = vmatmul.mubr.f32.gmra.mrb[0].mxu0 %v3041
        %v3377 = vpop.f32.mrb[0].mxu0
        %v3378 = vadd.f32 0.0, %v3377
        %v3379 = vpop.f32.mrb[0].mxu0
        %3380 = vmatprep.mubr.f32.mxu0 0.0
        %3381 = vmatmul.mubr.f32.gmra.mrb[0].mxu0 %v3044
        %v3382 = vpop.f32.mrb[0].mxu0
        %v3383 = vadd.f32 0.0, %v3382
        %v3384 = vpop.f32.mrb[0].mxu0
        %3385 = vmatprep.mubr.f32.mxu0 0.0
        %3386 = vmatmul.mubr.f32.gmra.mrb[0].mxu0 %v3047
        %v3387 = vpop.f32.mrb[0].mxu0
        %v3388 = vadd.f32 0.0, %v3387
        %v3389 = vpop.f32.mrb[0].mxu0
        %3390 = vmatprep.mubr.f32.mxu0 0.0
        %3391 = vmatmul.mubr.f32.gmra.mrb[0].mxu0 %v3050
        %v3392 = vpop.f32.mrb[0].mxu0
        %v3393 = vadd.f32 0.0, %v3392
        %v3394 = vpop.f32.mrb[0].mxu0
        %3395 = vmatprep.mubr.f32.mxu0 0.0
        %3396 = vmatmul.mubr.f32.gmra.mrb[0].mxu0 %v3053
        %v3397 = vpop.f32.mrb[0].mxu0
        %v3398 = vadd.f32 0.0, %v3397
        %v3399 = vpop.f32.mrb[0].mxu0
        %3400 = vmatprep.mubr.f32.mxu0 0.0
        %3401 = vmatmul.mubr.f32.gmra.mrb[0].mxu0 %v3056
        %v3402 = vpop.f32.mrb[0].mxu0
        %v3403 = vadd.f32 0.0, %v3402
        %v3404 = vpop.f32.mrb[0].mxu0
        %3405 = vmatprep.mubr.f32.mxu0 0.0
        %3406 = vmatmul.mubr.f32.gmra.mrb[0].mxu0 %v3059
        %v3407 = vpop.f32.mrb[0].mxu0
        %v3408 = vadd.f32 0.0, %v3407
        %v3409 = vpop.f32.mrb[0].mxu0
        %3410 = vmatprep.mubr.f32.mxu0 0.0
        %3411 = vmatmul.mubr.f32.gmra.mrb[0].mxu0 %v3062
        %v3412 = vpop.f32.mrb[0].mxu0
        %v3413 = vadd.f32 0.0, %v3412
        %v3414 = vpop.f32.mrb[0].mxu0
        %3415 = vmatprep.mubr.f32.mxu0 0.0
        %3416 = vmatmul.mubr.f32.gmra.mrb[0].mxu0 %v3065
        %v3417 = vpop.f32.mrb[0].mxu0
        %v3418 = vadd.f32 0.0, %v3417
        %v3419 = vpop.f32.mrb[0].mxu0
        %3420 = vmatprep.mubr.f32.mxu0 0.0
        %3421 = vmatmul.mubr.f32.gmra.mrb[0].mxu0 %v3068
        %v3422 = vpop.f32.mrb[0].mxu0
        %v3423 = vadd.f32 0.0, %v3422
        %v3424 = vpop.f32.mrb[0].mxu0
        %3425 = vmatprep.mubr.f32.mxu0 0.0
        %3426 = vmatmul.mubr.f32.gmra.mrb[0].mxu0 %v3071
        %v3427 = vpop.f32.mrb[0].mxu0
        %v3428 = vadd.f32 0.0, %v3427
        %v3429 = vpop.f32.mrb[0].mxu0
        %3430 = vmatprep.mubr.f32.mxu0 0.0
        %3431 = vmatmul.mubr.f32.gmra.mrb[0].mxu0 %v3074
        %v3432 = vpop.f32.mrb[0].mxu0
        %v3433 = vadd.f32 0.0, %v3432
        %v3434 = vpop.f32.mrb[0].mxu0
        %3435 = vmatprep.mubr.f32.mxu0 0.0
        %3436 = vmatmul.mubr.f32.gmra.mrb[0].mxu0 %v3077
        %v3437 = vpop.f32.mrb[0].mxu0
        %v3438 = vadd.f32 0.0, %v3437
        %v3439 = vpop.f32.mrb[0].mxu0
        %3440 = vmatprep.mubr.f32.mxu0 0.0
        %3441 = vmatmul.mubr.f32.gmra.mrb[0].mxu0 %v3080
        %v3442 = vpop.f32.mrb[0].mxu0
        %v3443 = vadd.f32 0.0, %v3442
        %v3444 = vpop.f32.mrb[0].mxu0
        %3445 = vmatprep.mubr.f32.mxu0 0.0
        %3446 = vmatmul.mubr.f32.gmra.mrb[0].mxu0 %v3083
        %v3447 = vpop.f32.mrb[0].mxu0
        %v3448 = vadd.f32 0.0, %v3447
        %v3449 = vpop.f32.mrb[0].mxu0
        %3450 = vmatprep.mubr.f32.mxu0 0.0
        %3451 = vmatmul.mubr.f32.gmra.mrb[0].mxu0 %v3086
        %v3452 = vpop.f32.mrb[0].mxu0
        %v3453 = vadd.f32 0.0, %v3452
        %v3454 = vpop.f32.mrb[0].mxu0
        %3455 = vdwg.mxu0
        %v3457 = vsel %vm1550, %v2840, 0
        %v3460 = vsel %vm1550, %v2841, 0
        %v3463 = vsel %vm1550, %v2842, 0
        %v3466 = vsel %vm1000, %v2901, 0
        %3468 = vmatprep.subr.mxu0 0.0
        %3469 = vmatpush1.msra.mxu0 %v2900
        %3470 = vmatprep.subr.mxu0 0.0
        %3471 = vmatpush1.msra.mxu0 %v3466
        %3472 = vmatprep.subr.mxu0 0.0
        %3473 = vmatpush1.msra.mxu0 0.0
        %3474 = vmatprep.subr.mxu0 0.0
        %3475 = vmatpush1.msra.mxu0 0.0
        %3476 = vmatprep.subr.mxu0 0.0
        %3477 = vmatpush1.msra.mxu0 0.0
        %3478 = vmatprep.subr.mxu0 0.0
        %3479 = vmatpush1.msra.mxu0 0.0
        %3480 = vmatprep.subr.mxu0 0.0
        %3481 = vmatpush1.msra.mxu0 0.0
        %3482 = vmatprep.subr.mxu0 0.0
        %3483 = vmatpush1.msra.mxu0 0.0
        %3484 = vmatprep.subr.mxu0 0.0
        %3485 = vmatpush1.msra.mxu0 0.0
        %3486 = vmatprep.subr.mxu0 0.0
        %3487 = vmatpush1.msra.mxu0 0.0
        %3488 = vmatprep.subr.mxu0 0.0
        %3489 = vmatpush1.msra.mxu0 0.0
        %3490 = vmatprep.subr.mxu0 0.0
        %3491 = vmatpush1.msra.mxu0 0.0
        %3492 = vmatprep.subr.mxu0 0.0
        %3493 = vmatpush1.msra.mxu0 0.0
        %3494 = vmatprep.subr.mxu0 0.0
        %3495 = vmatpush1.msra.mxu0 0.0
        %3496 = vmatprep.subr.mxu0 0.0
        %3497 = vmatpush1.msra.mxu0 0.0
        %3498 = vmatprep.subr.mxu0 0.0
        %3499 = vmatpush1.msra.mxu0 0.0
        %3500 = vmatprep.subr.mxu0 0.0
        %3501 = vmatpush1.msra.mxu0 0.0
        %3502 = vmatprep.subr.mxu0 0.0
        %3503 = vmatpush1.msra.mxu0 0.0
        %3504 = vmatprep.subr.mxu0 0.0
        %3505 = vmatpush1.msra.mxu0 0.0
        %3506 = vmatprep.subr.mxu0 0.0
        %3507 = vmatpush1.msra.mxu0 0.0
        %3508 = vmatprep.subr.mxu0 0.0
        %3509 = vmatpush1.msra.mxu0 0.0
        %3510 = vmatprep.subr.mxu0 0.0
        %3511 = vmatpush1.msra.mxu0 0.0
        %3512 = vmatprep.subr.mxu0 0.0
        %3513 = vmatpush1.msra.mxu0 0.0
        %3514 = vmatprep.subr.mxu0 0.0
        %3515 = vmatpush1.msra.mxu0 0.0
        %3516 = vmatprep.subr.mxu0 0.0
        %3517 = vmatpush1.msra.mxu0 0.0
        %3518 = vmatprep.subr.mxu0 0.0
        %3519 = vmatpush1.msra.mxu0 0.0
        %3520 = vmatprep.subr.mxu0 0.0
        %3521 = vmatpush1.msra.mxu0 0.0
        %3522 = vmatprep.subr.mxu0 0.0
        %3523 = vmatpush1.msra.mxu0 0.0
        %3524 = vmatprep.subr.mxu0 0.0
        %3525 = vmatpush1.msra.mxu0 0.0
        %3526 = vmatprep.subr.mxu0 0.0
        %3527 = vmatpush1.msra.mxu0 0.0
        %3528 = vmatprep.subr.mxu0 0.0
        %3529 = vmatpush1.msra.mxu0 0.0
        %3530 = vmatprep.subr.mxu0 0.0
        %3531 = vmatpush1.msra.mxu0 0.0
        %3532 = vmatprep.mubr.f32.mxu0 0.0
        %3533 = vmatmul.mubr.f32.gmra.mrb[0].mxu0 %v3457
        %v3534 = vpop.f32.mrb[0].mxu0
        %v3535 = vadd.f32 %v3158, %v3534
        %v3536 = vpop.f32.mrb[0].mxu0
        %3537 = vmatprep.mubr.f32.mxu0 0.0
        %3538 = vmatmul.mubr.f32.gmra.mrb[0].mxu0 %v3460
        %v3539 = vpop.f32.mrb[0].mxu0
        %v3540 = vadd.f32 %v3163, %v3539
        %v3541 = vpop.f32.mrb[0].mxu0
        %3542 = vmatprep.mubr.f32.mxu0 0.0
        %3543 = vmatmul.mubr.f32.gmra.mrb[0].mxu0 %v3463
        %v3544 = vpop.f32.mrb[0].mxu0
        %v3545 = vadd.f32 %v3168, %v3544
        %v3546 = vpop.f32.mrb[0].mxu0
        %3547 = vmatprep.mubr.f32.mxu0 0.0
        %3548 = vmatmul.mubr.f32.gmra.mrb[0].mxu0 %v2909
        %v3549 = vpop.f32.mrb[0].mxu0
        %v3550 = vadd.f32 %v3173, %v3549
        %v3551 = vpop.f32.mrb[0].mxu0
        %3552 = vmatprep.mubr.f32.mxu0 0.0
        %3553 = vmatmul.mubr.f32.gmra.mrb[0].mxu0 %v2912
        %v3554 = vpop.f32.mrb[0].mxu0
        %v3555 = vadd.f32 %v3178, %v3554
        %v3556 = vpop.f32.mrb[0].mxu0
        %3557 = vmatprep.mubr.f32.mxu0 0.0
        %3558 = vmatmul.mubr.f32.gmra.mrb[0].mxu0 %v2915
        %v3559 = vpop.f32.mrb[0].mxu0
        %v3560 = vadd.f32 %v3183, %v3559
        %v3561 = vpop.f32.mrb[0].mxu0
        %3562 = vmatprep.mubr.f32.mxu0 0.0
        %3563 = vmatmul.mubr.f32.gmra.mrb[0].mxu0 %v2918
        %v3564 = vpop.f32.mrb[0].mxu0
        %v3565 = vadd.f32 %v3188, %v3564
        %v3566 = vpop.f32.mrb[0].mxu0
        %3567 = vmatprep.mubr.f32.mxu0 0.0
        %3568 = vmatmul.mubr.f32.gmra.mrb[0].mxu0 %v2921
        %v3569 = vpop.f32.mrb[0].mxu0
        %v3570 = vadd.f32 %v3193, %v3569
        %v3571 = vpop.f32.mrb[0].mxu0
        %3572 = vmatprep.mubr.f32.mxu0 0.0
        %3573 = vmatmul.mubr.f32.gmra.mrb[0].mxu0 %v2924
        %v3574 = vpop.f32.mrb[0].mxu0
        %v3575 = vadd.f32 %v3198, %v3574
        %v3576 = vpop.f32.mrb[0].mxu0
        %3577 = vmatprep.mubr.f32.mxu0 0.0
        %3578 = vmatmul.mubr.f32.gmra.mrb[0].mxu0 %v2927
        %v3579 = vpop.f32.mrb[0].mxu0
        %v3580 = vadd.f32 %v3203, %v3579
        %v3581 = vpop.f32.mrb[0].mxu0
        %3582 = vmatprep.mubr.f32.mxu0 0.0
        %3583 = vmatmul.mubr.f32.gmra.mrb[0].mxu0 %v2930
        %v3584 = vpop.f32.mrb[0].mxu0
        %v3585 = vadd.f32 %v3208, %v3584
        %v3586 = vpop.f32.mrb[0].mxu0
        %3587 = vmatprep.mubr.f32.mxu0 0.0
        %3588 = vmatmul.mubr.f32.gmra.mrb[0].mxu0 %v2933
        %v3589 = vpop.f32.mrb[0].mxu0
        %v3590 = vadd.f32 %v3213, %v3589
        %v3591 = vpop.f32.mrb[0].mxu0
        %3592 = vmatprep.mubr.f32.mxu0 0.0
        %3593 = vmatmul.mubr.f32.gmra.mrb[0].mxu0 %v2936
        %v3594 = vpop.f32.mrb[0].mxu0
        %v3595 = vadd.f32 %v3218, %v3594
        %v3596 = vpop.f32.mrb[0].mxu0
        %3597 = vmatprep.mubr.f32.mxu0 0.0
        %3598 = vmatmul.mubr.f32.gmra.mrb[0].mxu0 %v2939
        %v3599 = vpop.f32.mrb[0].mxu0
        %v3600 = vadd.f32 %v3223, %v3599
        %v3601 = vpop.f32.mrb[0].mxu0
        %3602 = vmatprep.mubr.f32.mxu0 0.0
        %3603 = vmatmul.mubr.f32.gmra.mrb[0].mxu0 %v2942
        %v3604 = vpop.f32.mrb[0].mxu0
        %v3605 = vadd.f32 %v3228, %v3604
        %v3606 = vpop.f32.mrb[0].mxu0
        %3607 = vmatprep.mubr.f32.mxu0 0.0
        %3608 = vmatmul.mubr.f32.gmra.mrb[0].mxu0 %v2945
        %v3609 = vpop.f32.mrb[0].mxu0
        %v3610 = vadd.f32 %v3233, %v3609
        %v3611 = vpop.f32.mrb[0].mxu0
        %3612 = vmatprep.mubr.f32.mxu0 0.0
        %3613 = vmatmul.mubr.f32.gmra.mrb[0].mxu0 %v2948
        %v3614 = vpop.f32.mrb[0].mxu0
        %v3615 = vadd.f32 %v3238, %v3614
        %v3616 = vpop.f32.mrb[0].mxu0
        %3617 = vmatprep.mubr.f32.mxu0 0.0
        %3618 = vmatmul.mubr.f32.gmra.mrb[0].mxu0 %v2951
        %v3619 = vpop.f32.mrb[0].mxu0
        %v3620 = vadd.f32 %v3243, %v3619
        %v3621 = vpop.f32.mrb[0].mxu0
        %3622 = vmatprep.mubr.f32.mxu0 0.0
        %3623 = vmatmul.mubr.f32.gmra.mrb[0].mxu0 %v2954
        %v3624 = vpop.f32.mrb[0].mxu0
        %v3625 = vadd.f32 %v3248, %v3624
        %v3626 = vpop.f32.mrb[0].mxu0
        %3627 = vmatprep.mubr.f32.mxu0 0.0
        %3628 = vmatmul.mubr.f32.gmra.mrb[0].mxu0 %v2957
        %v3629 = vpop.f32.mrb[0].mxu0
        %v3630 = vadd.f32 %v3253, %v3629
        %v3631 = vpop.f32.mrb[0].mxu0
        %3632 = vmatprep.mubr.f32.mxu0 0.0
        %3633 = vmatmul.mubr.f32.gmra.mrb[0].mxu0 %v2960
        %v3634 = vpop.f32.mrb[0].mxu0
        %v3635 = vadd.f32 %v3258, %v3634
        %v3636 = vpop.f32.mrb[0].mxu0
        %3637 = vmatprep.mubr.f32.mxu0 0.0
        %3638 = vmatmul.mubr.f32.gmra.mrb[0].mxu0 %v2963
        %v3639 = vpop.f32.mrb[0].mxu0
        %v3640 = vadd.f32 %v3263, %v3639
        %v3641 = vpop.f32.mrb[0].mxu0
        %3642 = vmatprep.mubr.f32.mxu0 0.0
        %3643 = vmatmul.mubr.f32.gmra.mrb[0].mxu0 %v2966
        %v3644 = vpop.f32.mrb[0].mxu0
        %v3645 = vadd.f32 %v3268, %v3644
        %v3646 = vpop.f32.mrb[0].mxu0
        %3647 = vmatprep.mubr.f32.mxu0 0.0
        %3648 = vmatmul.mubr.f32.gmra.mrb[0].mxu0 %v2969
        %v3649 = vpop.f32.mrb[0].mxu0
        %v3650 = vadd.f32 %v3273, %v3649
        %v3651 = vpop.f32.mrb[0].mxu0
        %3652 = vmatprep.mubr.f32.mxu0 0.0
        %3653 = vmatmul.mubr.f32.gmra.mrb[0].mxu0 %v2972
        %v3654 = vpop.f32.mrb[0].mxu0
        %v3655 = vadd.f32 %v3278, %v3654
        %v3656 = vpop.f32.mrb[0].mxu0
        %3657 = vmatprep.mubr.f32.mxu0 0.0
        %3658 = vmatmul.mubr.f32.gmra.mrb[0].mxu0 %v2975
        %v3659 = vpop.f32.mrb[0].mxu0
        %v3660 = vadd.f32 %v3283, %v3659
        %v3661 = vpop.f32.mrb[0].mxu0
        %3662 = vmatprep.mubr.f32.mxu0 0.0
        %3663 = vmatmul.mubr.f32.gmra.mrb[0].mxu0 %v2978
        %v3664 = vpop.f32.mrb[0].mxu0
        %v3665 = vadd.f32 %v3288, %v3664
        %v3666 = vpop.f32.mrb[0].mxu0
        %3667 = vmatprep.mubr.f32.mxu0 0.0
        %3668 = vmatmul.mubr.f32.gmra.mrb[0].mxu0 %v2981
        %v3669 = vpop.f32.mrb[0].mxu0
        %v3670 = vadd.f32 %v3293, %v3669
        %v3671 = vpop.f32.mrb[0].mxu0
        %3672 = vmatprep.mubr.f32.mxu0 0.0
        %3673 = vmatmul.mubr.f32.gmra.mrb[0].mxu0 %v2984
        %v3674 = vpop.f32.mrb[0].mxu0
        %v3675 = vadd.f32 %v3298, %v3674
        %v3676 = vpop.f32.mrb[0].mxu0
        %3677 = vmatprep.mubr.f32.mxu0 0.0
        %3678 = vmatmul.mubr.f32.gmra.mrb[0].mxu0 %v2987
        %v3679 = vpop.f32.mrb[0].mxu0
        %v3680 = vadd.f32 %v3303, %v3679
        %v3681 = vpop.f32.mrb[0].mxu0
        %3682 = vmatprep.mubr.f32.mxu0 0.0
        %3683 = vmatmul.mubr.f32.gmra.mrb[0].mxu0 %v2990
        %v3684 = vpop.f32.mrb[0].mxu0
        %v3685 = vadd.f32 %v3308, %v3684
        %v3686 = vpop.f32.mrb[0].mxu0
        %3687 = vmatprep.mubr.f32.mxu0 0.0
        %3688 = vmatmul.mubr.f32.gmra.mrb[0].mxu0 %v2993
        %v3689 = vpop.f32.mrb[0].mxu0
        %v3690 = vadd.f32 %v3313, %v3689
        %v3691 = vpop.f32.mrb[0].mxu0
        %3692 = vmatprep.mubr.f32.mxu0 0.0
        %3693 = vmatmul.mubr.f32.gmra.mrb[0].mxu0 %v2996
        %v3694 = vpop.f32.mrb[0].mxu0
        %v3695 = vadd.f32 %v3318, %v3694
        %v3696 = vpop.f32.mrb[0].mxu0
        %3697 = vmatprep.mubr.f32.mxu0 0.0
        %3698 = vmatmul.mubr.f32.gmra.mrb[0].mxu0 %v2999
        %v3699 = vpop.f32.mrb[0].mxu0
        %v3700 = vadd.f32 %v3323, %v3699
        %v3701 = vpop.f32.mrb[0].mxu0
        %3702 = vmatprep.mubr.f32.mxu0 0.0
        %3703 = vmatmul.mubr.f32.gmra.mrb[0].mxu0 %v3002
        %v3704 = vpop.f32.mrb[0].mxu0
        %v3705 = vadd.f32 %v3328, %v3704
        %v3706 = vpop.f32.mrb[0].mxu0
        %3707 = vmatprep.mubr.f32.mxu0 0.0
        %3708 = vmatmul.mubr.f32.gmra.mrb[0].mxu0 %v3005
        %v3709 = vpop.f32.mrb[0].mxu0
        %v3710 = vadd.f32 %v3333, %v3709
        %v3711 = vpop.f32.mrb[0].mxu0
        %3712 = vmatprep.mubr.f32.mxu0 0.0
        %3713 = vmatmul.mubr.f32.gmra.mrb[0].mxu0 %v3008
        %v3714 = vpop.f32.mrb[0].mxu0
        %v3715 = vadd.f32 %v3338, %v3714
        %v3716 = vpop.f32.mrb[0].mxu0
        %3717 = vmatprep.mubr.f32.mxu0 0.0
        %3718 = vmatmul.mubr.f32.gmra.mrb[0].mxu0 %v3011
        %v3719 = vpop.f32.mrb[0].mxu0
        %v3720 = vadd.f32 %v3343, %v3719
        %v3721 = vpop.f32.mrb[0].mxu0
        %3722 = vmatprep.mubr.f32.mxu0 0.0
        %3723 = vmatmul.mubr.f32.gmra.mrb[0].mxu0 %v3014
        %v3724 = vpop.f32.mrb[0].mxu0
        %v3725 = vadd.f32 %v3348, %v3724
        %v3726 = vpop.f32.mrb[0].mxu0
        %3727 = vmatprep.mubr.f32.mxu0 0.0
        %3728 = vmatmul.mubr.f32.gmra.mrb[0].mxu0 %v3017
        %v3729 = vpop.f32.mrb[0].mxu0
        %v3730 = vadd.f32 %v3353, %v3729
        %v3731 = vpop.f32.mrb[0].mxu0
        %3732 = vmatprep.mubr.f32.mxu0 0.0
        %3733 = vmatmul.mubr.f32.gmra.mrb[0].mxu0 %v3020
        %v3734 = vpop.f32.mrb[0].mxu0
        %v3735 = vadd.f32 %v3358, %v3734
        %v3736 = vpop.f32.mrb[0].mxu0
        %3737 = vmatprep.mubr.f32.mxu0 0.0
        %3738 = vmatmul.mubr.f32.gmra.mrb[0].mxu0 %v3023
        %v3739 = vpop.f32.mrb[0].mxu0
        %v3740 = vadd.f32 %v3363, %v3739
        %v3741 = vpop.f32.mrb[0].mxu0
        %3742 = vmatprep.mubr.f32.mxu0 0.0
        %3743 = vmatmul.mubr.f32.gmra.mrb[0].mxu0 %v3026
        %v3744 = vpop.f32.mrb[0].mxu0
        %v3745 = vadd.f32 %v3368, %v3744
        %v3746 = vpop.f32.mrb[0].mxu0
        %3747 = vmatprep.mubr.f32.mxu0 0.0
        %3748 = vmatmul.mubr.f32.gmra.mrb[0].mxu0 %v3029
        %v3749 = vpop.f32.mrb[0].mxu0
        %v3750 = vadd.f32 %v3373, %v3749
        %v3751 = vpop.f32.mrb[0].mxu0
        %3752 = vmatprep.mubr.f32.mxu0 0.0
        %3753 = vmatmul.mubr.f32.gmra.mrb[0].mxu0 %v3032
        %v3754 = vpop.f32.mrb[0].mxu0
        %v3755 = vadd.f32 %v3378, %v3754
        %v3756 = vpop.f32.mrb[0].mxu0
        %3757 = vmatprep.mubr.f32.mxu0 0.0
        %3758 = vmatmul.mubr.f32.gmra.mrb[0].mxu0 %v3035
        %v3759 = vpop.f32.mrb[0].mxu0
        %v3760 = vadd.f32 %v3383, %v3759
        %v3761 = vpop.f32.mrb[0].mxu0
        %3762 = vmatprep.mubr.f32.mxu0 0.0
        %3763 = vmatmul.mubr.f32.gmra.mrb[0].mxu0 %v3038
        %v3764 = vpop.f32.mrb[0].mxu0
        %v3765 = vadd.f32 %v3388, %v3764
        %v3766 = vpop.f32.mrb[0].mxu0
        %3767 = vmatprep.mubr.f32.mxu0 0.0
        %3768 = vmatmul.mubr.f32.gmra.mrb[0].mxu0 %v3041
        %v3769 = vpop.f32.mrb[0].mxu0
        %v3770 = vadd.f32 %v3393, %v3769
        %v3771 = vpop.f32.mrb[0].mxu0
        %3772 = vmatprep.mubr.f32.mxu0 0.0
        %3773 = vmatmul.mubr.f32.gmra.mrb[0].mxu0 %v3044
        %v3774 = vpop.f32.mrb[0].mxu0
        %v3775 = vadd.f32 %v3398, %v3774
        %v3776 = vpop.f32.mrb[0].mxu0
        %3777 = vmatprep.mubr.f32.mxu0 0.0
        %3778 = vmatmul.mubr.f32.gmra.mrb[0].mxu0 %v3047
        %v3779 = vpop.f32.mrb[0].mxu0
        %v3780 = vadd.f32 %v3403, %v3779
        %v3781 = vpop.f32.mrb[0].mxu0
        %3782 = vmatprep.mubr.f32.mxu0 0.0
        %3783 = vmatmul.mubr.f32.gmra.mrb[0].mxu0 %v3050
        %v3784 = vpop.f32.mrb[0].mxu0
        %v3785 = vadd.f32 %v3408, %v3784
        %v3786 = vpop.f32.mrb[0].mxu0
        %3787 = vmatprep.mubr.f32.mxu0 0.0
        %3788 = vmatmul.mubr.f32.gmra.mrb[0].mxu0 %v3053
        %v3789 = vpop.f32.mrb[0].mxu0
        %v3790 = vadd.f32 %v3413, %v3789
        %v3791 = vpop.f32.mrb[0].mxu0
        %3792 = vmatprep.mubr.f32.mxu0 0.0
        %3793 = vmatmul.mubr.f32.gmra.mrb[0].mxu0 %v3056
        %v3794 = vpop.f32.mrb[0].mxu0
        %v3795 = vadd.f32 %v3418, %v3794
        %v3796 = vpop.f32.mrb[0].mxu0
        %3797 = vmatprep.mubr.f32.mxu0 0.0
        %3798 = vmatmul.mubr.f32.gmra.mrb[0].mxu0 %v3059
        %v3799 = vpop.f32.mrb[0].mxu0
        %v3800 = vadd.f32 %v3423, %v3799
        %v3801 = vpop.f32.mrb[0].mxu0
        %3802 = vmatprep.mubr.f32.mxu0 0.0
        %3803 = vmatmul.mubr.f32.gmra.mrb[0].mxu0 %v3062
        %v3804 = vpop.f32.mrb[0].mxu0
        %v3805 = vadd.f32 %v3428, %v3804
        %v3806 = vpop.f32.mrb[0].mxu0
        %3807 = vmatprep.mubr.f32.mxu0 0.0
        %3808 = vmatmul.mubr.f32.gmra.mrb[0].mxu0 %v3065
        %v3809 = vpop.f32.mrb[0].mxu0
        %v3810 = vadd.f32 %v3433, %v3809
        %v3811 = vpop.f32.mrb[0].mxu0
        %3812 = vmatprep.mubr.f32.mxu0 0.0
        %3813 = vmatmul.mubr.f32.gmra.mrb[0].mxu0 %v3068
        %v3814 = vpop.f32.mrb[0].mxu0
        %v3815 = vadd.f32 %v3438, %v3814
        %v3816 = vpop.f32.mrb[0].mxu0
        %3817 = vmatprep.mubr.f32.mxu0 0.0
        %3818 = vmatmul.mubr.f32.gmra.mrb[0].mxu0 %v3071
        %v3819 = vpop.f32.mrb[0].mxu0
        %v3820 = vadd.f32 %v3443, %v3819
        %v3821 = vpop.f32.mrb[0].mxu0
        %3822 = vmatprep.mubr.f32.mxu0 0.0
        %3823 = vmatmul.mubr.f32.gmra.mrb[0].mxu0 %v3074
        %v3824 = vpop.f32.mrb[0].mxu0
        %v3825 = vadd.f32 %v3448, %v3824
        %v3826 = vpop.f32.mrb[0].mxu0
        %3827 = vmatprep.mubr.f32.mxu0 0.0
        %3828 = vmatmul.mubr.f32.gmra.mrb[0].mxu0 %v3077
        %v3829 = vpop.f32.mrb[0].mxu0
        %v3830 = vadd.f32 %v3453, %v3829
        %v3831 = vpop.f32.mrb[0].mxu0
        %3832 = vdwg.mxu0
        %v3833 = vld [vmem:[#allocation2 + $0x30] sm:$0xff]
        %v3834 = vld [vmem:[#allocation2 + $0x38] sm:$0xff]
        %v3835 = vld [vmem:[#allocation2 + $0x40] sm:$0xff]
        %v3836 = vld [vmem:[#allocation2 + $0x48] sm:$0xff]
        %v3837 = vld [vmem:[#allocation2 + $0x50] sm:$0xff]
        %v3838 = vld [vmem:[#allocation2 + $0x58] sm:$0xff]
        %v3839 = vld [vmem:[#allocation2 + $0x60] sm:$0xff]
        %v3840 = vld [vmem:[#allocation2 + $0x68] sm:$0xff]
        %v3841 = vld [vmem:[#allocation2 + $0x70] sm:$0xff]
        %v3842 = vld [vmem:[#allocation2 + $0x78] sm:$0xff]
        %v3843 = vld [vmem:[#allocation2 + $0x80] sm:$0xff]
        %v3844 = vld [vmem:[#allocation2 + $0x88] sm:$0xff]
        %v3845 = vld [vmem:[#allocation2 + $0x90] sm:$0xff]
        %v3846 = vld [vmem:[#allocation2 + $0x98] sm:$0xff]
        %v3847 = vld [vmem:[#allocation2 + $0xa0] sm:$0xff]
        %v3848 = vld [vmem:[#allocation2 + $0xa8] sm:$0xff]
        %v3849 = vld [vmem:[#allocation2 + $0xb0] sm:$0xff]
        %v3850 = vld [vmem:[#allocation2 + $0xb8] sm:$0xff]
        %v3851 = vld [vmem:[#allocation2 + $0xc0] sm:$0xff]
        %v3852 = vld [vmem:[#allocation2 + $0xc8] sm:$0xff]
        %v3853 = vld [vmem:[#allocation2 + $0xd0] sm:$0xff]
        %v3854 = vld [vmem:[#allocation2 + $0xd8] sm:$0xff]
        %v3855 = vld [vmem:[#allocation2 + $0xe0] sm:$0xff]
        %v3856 = vld [vmem:[#allocation2 + $0xe8] sm:$0xff]
        %v3857 = vld [vmem:[#allocation2 + $0xf0] sm:$0xff]
        %v3858 = vld [vmem:[#allocation2 + $0xf8] sm:$0xff]
        %v3859 = vld [vmem:[#allocation2 + $0x100] sm:$0xff]
        %v3860 = vld [vmem:[#allocation2 + $0x108] sm:$0xff]
        %v3861 = vld [vmem:[#allocation2 + $0x110] sm:$0xff]
        %v3862 = vld [vmem:[#allocation2 + $0x118] sm:$0xff]
        %v3863 = vld [vmem:[#allocation2 + $0x120] sm:$0xff]
        %v3864 = vld [vmem:[#allocation2 + $0x128] sm:$0xff]
        %v3865 = vld [vmem:[#allocation2 + $0x130] sm:$0xff]
        %v3866 = vld [vmem:[#allocation2 + $0x138] sm:$0xff]
        %v3867 = vld [vmem:[#allocation2 + $0x140] sm:$0xff]
        %v3868 = vld [vmem:[#allocation2 + $0x148] sm:$0xff]
        %v3869 = vld [vmem:[#allocation2 + $0x150] sm:$0xff]
        %v3870 = vld [vmem:[#allocation2 + $0x158] sm:$0xff]
        %v3871 = vld [vmem:[#allocation2 + $0x160] sm:$0xff]
        %v3872 = vld [vmem:[#allocation2 + $0x168] sm:$0xff]
        %v3873 = vld [vmem:[#allocation2 + $0x170] sm:$0xff]
        %v3874 = vld [vmem:[#allocation2 + $0x178] sm:$0xff]
        %v3875 = vld [vmem:[#allocation2 + $0x180] sm:$0xff]
        %v3876 = vld [vmem:[#allocation2 + $0x188] sm:$0xff]
        %v3877 = vld [vmem:[#allocation2 + $0x190] sm:$0xff]
        %v3878 = vld [vmem:[#allocation2 + $0x198] sm:$0xff]
        %v3879 = vld [vmem:[#allocation2 + $0x1a0] sm:$0xff]
        %v3880 = vld [vmem:[#allocation2 + $0x1a8] sm:$0xff]
        %v3881 = vld [vmem:[#allocation2 + $0x1b0] sm:$0xff]
        %v3882 = vld [vmem:[#allocation2 + $0x1b8] sm:$0xff]
        %v3883 = vld [vmem:[#allocation2 + $0x1c0] sm:$0xff]
        %v3884 = vld [vmem:[#allocation2 + $0x1c8] sm:$0xff]
        %v3885 = vld [vmem:[#allocation2 + $0x1d0] sm:$0xff]
        %v3886 = vld [vmem:[#allocation2 + $0x1d8] sm:$0xff]
        %v3887 = vld [vmem:[#allocation2 + $0x1e0] sm:$0xff]
        %v3888 = vld [vmem:[#allocation2 + $0x1e8] sm:$0xff]
        %v3889 = vld [vmem:[#allocation2 + $0x1f0] sm:$0xff]
        %v3890 = vld [vmem:[#allocation2 + $0x1f8] sm:$0xff]
        %v3891 = vld [vmem:[#allocation2 + $0x200] sm:$0xff]
        %v3892 = vld [vmem:[#allocation2 + $0x208] sm:$0xff]
        %s3893 = scalar_lea.vmem %s3, 32
        %v3894 = vld [vmem:[%s3893] sm:$0xff]
        %v3895 = vld [vmem:[%s3893 + $0x8] sm:$0xf]
        %v3897 = vsel %vm1550, %v3833, 0
        %v3900 = vsel %vm1550, %v3834, 0
        %v3903 = vsel %vm1550, %v3835, 0
        %v3906 = vsel %vm1550, %v3836, 0
        %v3909 = vsel %vm1550, %v3837, 0
        %v3912 = vsel %vm1550, %v3838, 0
        %v3915 = vsel %vm1550, %v3839, 0
        %v3918 = vsel %vm1550, %v3840, 0
        %v3921 = vsel %vm1550, %v3841, 0
        %v3924 = vsel %vm1550, %v3842, 0
        %v3927 = vsel %vm1550, %v3843, 0
        %v3930 = vsel %vm1550, %v3844, 0
        %v3933 = vsel %vm1550, %v3845, 0
        %v3936 = vsel %vm1550, %v3846, 0
        %v3939 = vsel %vm1550, %v3847, 0
        %v3942 = vsel %vm1550, %v3848, 0
        %v3945 = vsel %vm1550, %v3849, 0
        %v3948 = vsel %vm1550, %v3850, 0
        %v3951 = vsel %vm1550, %v3851, 0
        %v3954 = vsel %vm1550, %v3852, 0
        %v3957 = vsel %vm1550, %v3853, 0
        %v3960 = vsel %vm1550, %v3854, 0
        %v3963 = vsel %vm1550, %v3855, 0
        %v3966 = vsel %vm1550, %v3856, 0
        %v3969 = vsel %vm1550, %v3857, 0
        %v3972 = vsel %vm1550, %v3858, 0
        %v3975 = vsel %vm1550, %v3859, 0
        %v3978 = vsel %vm1550, %v3860, 0
        %v3981 = vsel %vm1550, %v3861, 0
        %v3984 = vsel %vm1550, %v3862, 0
        %v3987 = vsel %vm1550, %v3863, 0
        %v3990 = vsel %vm1550, %v3864, 0
        %v3993 = vsel %vm1550, %v3865, 0
        %v3996 = vsel %vm1550, %v3866, 0
        %v3999 = vsel %vm1550, %v3867, 0
        %v4002 = vsel %vm1550, %v3868, 0
        %v4005 = vsel %vm1550, %v3869, 0
        %v4008 = vsel %vm1550, %v3870, 0
        %v4011 = vsel %vm1550, %v3871, 0
        %v4014 = vsel %vm1550, %v3872, 0
        %v4017 = vsel %vm1550, %v3873, 0
        %v4020 = vsel %vm1550, %v3874, 0
        %v4023 = vsel %vm1550, %v3875, 0
        %v4026 = vsel %vm1550, %v3876, 0
        %v4029 = vsel %vm1550, %v3877, 0
        %v4032 = vsel %vm1550, %v3878, 0
        %v4035 = vsel %vm1550, %v3879, 0
        %v4038 = vsel %vm1550, %v3880, 0
        %v4041 = vsel %vm1550, %v3881, 0
        %v4044 = vsel %vm1550, %v3882, 0
        %v4047 = vsel %vm1550, %v3883, 0
        %v4050 = vsel %vm1550, %v3884, 0
        %v4053 = vsel %vm1550, %v3885, 0
        %v4056 = vsel %vm1550, %v3886, 0
        %v4059 = vsel %vm1550, %v3887, 0
        %v4062 = vsel %vm1550, %v3888, 0
        %v4065 = vsel %vm1550, %v3889, 0
        %v4068 = vsel %vm1550, %v3890, 0
        %v4071 = vsel %vm1550, %v3891, 0
        %v4074 = vsel %vm1550, %v3892, 0
        %v4077 = vsel %vm1000, %v3895, 0
        %4079 = vmatprep.subr.mxu0 0.0
        %4080 = vmatpush1.msra.mxu0 %v3894
        %4081 = vmatprep.subr.mxu0 0.0
        %4082 = vmatpush1.msra.mxu0 %v4077
        %4083 = vmatprep.subr.mxu0 0.0
        %4084 = vmatpush1.msra.mxu0 0.0
        %4085 = vmatprep.subr.mxu0 0.0
        %4086 = vmatpush1.msra.mxu0 0.0
        %4087 = vmatprep.subr.mxu0 0.0
        %4088 = vmatpush1.msra.mxu0 0.0
        %4089 = vmatprep.subr.mxu0 0.0
        %4090 = vmatpush1.msra.mxu0 0.0
        %4091 = vmatprep.subr.mxu0 0.0
        %4092 = vmatpush1.msra.mxu0 0.0
        %4093 = vmatprep.subr.mxu0 0.0
        %4094 = vmatpush1.msra.mxu0 0.0
        %4095 = vmatprep.subr.mxu0 0.0
        %4096 = vmatpush1.msra.mxu0 0.0
        %4097 = vmatprep.subr.mxu0 0.0
        %4098 = vmatpush1.msra.mxu0 0.0
        %4099 = vmatprep.subr.mxu0 0.0
        %4100 = vmatpush1.msra.mxu0 0.0
        %4101 = vmatprep.subr.mxu0 0.0
        %4102 = vmatpush1.msra.mxu0 0.0
        %4103 = vmatprep.subr.mxu0 0.0
        %4104 = vmatpush1.msra.mxu0 0.0
        %4105 = vmatprep.subr.mxu0 0.0
        %4106 = vmatpush1.msra.mxu0 0.0
        %4107 = vmatprep.subr.mxu0 0.0
        %4108 = vmatpush1.msra.mxu0 0.0
        %4109 = vmatprep.subr.mxu0 0.0
        %4110 = vmatpush1.msra.mxu0 0.0
        %4111 = vmatprep.subr.mxu0 0.0
        %4112 = vmatpush1.msra.mxu0 0.0
        %4113 = vmatprep.subr.mxu0 0.0
        %4114 = vmatpush1.msra.mxu0 0.0
        %4115 = vmatprep.subr.mxu0 0.0
        %4116 = vmatpush1.msra.mxu0 0.0
        %4117 = vmatprep.subr.mxu0 0.0
        %4118 = vmatpush1.msra.mxu0 0.0
        %4119 = vmatprep.subr.mxu0 0.0
        %4120 = vmatpush1.msra.mxu0 0.0
        %4121 = vmatprep.subr.mxu0 0.0
        %4122 = vmatpush1.msra.mxu0 0.0
        %4123 = vmatprep.subr.mxu0 0.0
        %4124 = vmatpush1.msra.mxu0 0.0
        %4125 = vmatprep.subr.mxu0 0.0
        %4126 = vmatpush1.msra.mxu0 0.0
        %4127 = vmatprep.subr.mxu0 0.0
        %4128 = vmatpush1.msra.mxu0 0.0
        %4129 = vmatprep.subr.mxu0 0.0
        %4130 = vmatpush1.msra.mxu0 0.0
        %4131 = vmatprep.subr.mxu0 0.0
        %4132 = vmatpush1.msra.mxu0 0.0
        %4133 = vmatprep.subr.mxu0 0.0
        %4134 = vmatpush1.msra.mxu0 0.0
        %4135 = vmatprep.subr.mxu0 0.0
        %4136 = vmatpush1.msra.mxu0 0.0
        %4137 = vmatprep.subr.mxu0 0.0
        %4138 = vmatpush1.msra.mxu0 0.0
        %4139 = vmatprep.subr.mxu0 0.0
        %4140 = vmatpush1.msra.mxu0 0.0
        %4141 = vmatprep.subr.mxu0 0.0
        %4142 = vmatpush1.msra.mxu0 0.0
        %4143 = vmatprep.mubr.f32.mxu0 0.0
        %4144 = vmatmul.mubr.f32.gmra.mrb[0].mxu0 %v3897
        %v4145 = vpop.f32.mrb[0].mxu0
        %v4146 = vadd.f32 0.0, %v4145
        %v4147 = vpop.f32.mrb[0].mxu0
        %4148 = vmatprep.mubr.f32.mxu0 0.0
        %4149 = vmatmul.mubr.f32.gmra.mrb[0].mxu0 %v3900
        %v4150 = vpop.f32.mrb[0].mxu0
        %v4151 = vadd.f32 0.0, %v4150
        %v4152 = vpop.f32.mrb[0].mxu0
        %4153 = vmatprep.mubr.f32.mxu0 0.0
        %4154 = vmatmul.mubr.f32.gmra.mrb[0].mxu0 %v3903
        %v4155 = vpop.f32.mrb[0].mxu0
        %v4156 = vadd.f32 0.0, %v4155
        %v4157 = vpop.f32.mrb[0].mxu0
        %4158 = vmatprep.mubr.f32.mxu0 0.0
        %4159 = vmatmul.mubr.f32.gmra.mrb[0].mxu0 %v3906
        %v4160 = vpop.f32.mrb[0].mxu0
        %v4161 = vadd.f32 0.0, %v4160
        %v4162 = vpop.f32.mrb[0].mxu0
        %4163 = vmatprep.mubr.f32.mxu0 0.0
        %4164 = vmatmul.mubr.f32.gmra.mrb[0].mxu0 %v3909
        %v4165 = vpop.f32.mrb[0].mxu0
        %v4166 = vadd.f32 0.0, %v4165
        %v4167 = vpop.f32.mrb[0].mxu0
        %4168 = vmatprep.mubr.f32.mxu0 0.0
        %4169 = vmatmul.mubr.f32.gmra.mrb[0].mxu0 %v3912
        %v4170 = vpop.f32.mrb[0].mxu0
        %v4171 = vadd.f32 0.0, %v4170
        %v4172 = vpop.f32.mrb[0].mxu0
        %4173 = vmatprep.mubr.f32.mxu0 0.0
        %4174 = vmatmul.mubr.f32.gmra.mrb[0].mxu0 %v3915
        %v4175 = vpop.f32.mrb[0].mxu0
        %v4176 = vadd.f32 0.0, %v4175
        %v4177 = vpop.f32.mrb[0].mxu0
        %4178 = vmatprep.mubr.f32.mxu0 0.0
        %4179 = vmatmul.mubr.f32.gmra.mrb[0].mxu0 %v3918
        %v4180 = vpop.f32.mrb[0].mxu0
        %v4181 = vadd.f32 0.0, %v4180
        %v4182 = vpop.f32.mrb[0].mxu0
        %4183 = vmatprep.mubr.f32.mxu0 0.0
        %4184 = vmatmul.mubr.f32.gmra.mrb[0].mxu0 %v3921
        %v4185 = vpop.f32.mrb[0].mxu0
        %v4186 = vadd.f32 0.0, %v4185
        %v4187 = vpop.f32.mrb[0].mxu0
        %4188 = vmatprep.mubr.f32.mxu0 0.0
        %4189 = vmatmul.mubr.f32.gmra.mrb[0].mxu0 %v3924
        %v4190 = vpop.f32.mrb[0].mxu0
        %v4191 = vadd.f32 0.0, %v4190
        %v4192 = vpop.f32.mrb[0].mxu0
        %4193 = vmatprep.mubr.f32.mxu0 0.0
        %4194 = vmatmul.mubr.f32.gmra.mrb[0].mxu0 %v3927
        %v4195 = vpop.f32.mrb[0].mxu0
        %v4196 = vadd.f32 0.0, %v4195
        %v4197 = vpop.f32.mrb[0].mxu0
        %4198 = vmatprep.mubr.f32.mxu0 0.0
        %4199 = vmatmul.mubr.f32.gmra.mrb[0].mxu0 %v3930
        %v4200 = vpop.f32.mrb[0].mxu0
        %v4201 = vadd.f32 0.0, %v4200
        %v4202 = vpop.f32.mrb[0].mxu0
        %4203 = vmatprep.mubr.f32.mxu0 0.0
        %4204 = vmatmul.mubr.f32.gmra.mrb[0].mxu0 %v3933
        %v4205 = vpop.f32.mrb[0].mxu0
        %v4206 = vadd.f32 0.0, %v4205
        %v4207 = vpop.f32.mrb[0].mxu0
        %4208 = vmatprep.mubr.f32.mxu0 0.0
        %4209 = vmatmul.mubr.f32.gmra.mrb[0].mxu0 %v3936
        %v4210 = vpop.f32.mrb[0].mxu0
        %v4211 = vadd.f32 0.0, %v4210
        %v4212 = vpop.f32.mrb[0].mxu0
        %4213 = vmatprep.mubr.f32.mxu0 0.0
        %4214 = vmatmul.mubr.f32.gmra.mrb[0].mxu0 %v3939
        %v4215 = vpop.f32.mrb[0].mxu0
        %v4216 = vadd.f32 0.0, %v4215
        %v4217 = vpop.f32.mrb[0].mxu0
        %4218 = vmatprep.mubr.f32.mxu0 0.0
        %4219 = vmatmul.mubr.f32.gmra.mrb[0].mxu0 %v3942
        %v4220 = vpop.f32.mrb[0].mxu0
        %v4221 = vadd.f32 0.0, %v4220
        %v4222 = vpop.f32.mrb[0].mxu0
        %4223 = vmatprep.mubr.f32.mxu0 0.0
        %4224 = vmatmul.mubr.f32.gmra.mrb[0].mxu0 %v3945
        %v4225 = vpop.f32.mrb[0].mxu0
        %v4226 = vadd.f32 0.0, %v4225
        %v4227 = vpop.f32.mrb[0].mxu0
        %4228 = vmatprep.mubr.f32.mxu0 0.0
        %4229 = vmatmul.mubr.f32.gmra.mrb[0].mxu0 %v3948
        %v4230 = vpop.f32.mrb[0].mxu0
        %v4231 = vadd.f32 0.0, %v4230
        %v4232 = vpop.f32.mrb[0].mxu0
        %4233 = vmatprep.mubr.f32.mxu0 0.0
        %4234 = vmatmul.mubr.f32.gmra.mrb[0].mxu0 %v3951
        %v4235 = vpop.f32.mrb[0].mxu0
        %v4236 = vadd.f32 0.0, %v4235
        %v4237 = vpop.f32.mrb[0].mxu0
        %4238 = vmatprep.mubr.f32.mxu0 0.0
        %4239 = vmatmul.mubr.f32.gmra.mrb[0].mxu0 %v3954
        %v4240 = vpop.f32.mrb[0].mxu0
        %v4241 = vadd.f32 0.0, %v4240
        %v4242 = vpop.f32.mrb[0].mxu0
        %4243 = vmatprep.mubr.f32.mxu0 0.0
        %4244 = vmatmul.mubr.f32.gmra.mrb[0].mxu0 %v3957
        %v4245 = vpop.f32.mrb[0].mxu0
        %v4246 = vadd.f32 0.0, %v4245
        %v4247 = vpop.f32.mrb[0].mxu0
        %4248 = vmatprep.mubr.f32.mxu0 0.0
        %4249 = vmatmul.mubr.f32.gmra.mrb[0].mxu0 %v3960
        %v4250 = vpop.f32.mrb[0].mxu0
        %v4251 = vadd.f32 0.0, %v4250
        %v4252 = vpop.f32.mrb[0].mxu0
        %4253 = vmatprep.mubr.f32.mxu0 0.0
        %4254 = vmatmul.mubr.f32.gmra.mrb[0].mxu0 %v3963
        %v4255 = vpop.f32.mrb[0].mxu0
        %v4256 = vadd.f32 0.0, %v4255
        %v4257 = vpop.f32.mrb[0].mxu0
        %4258 = vmatprep.mubr.f32.mxu0 0.0
        %4259 = vmatmul.mubr.f32.gmra.mrb[0].mxu0 %v3966
        %v4260 = vpop.f32.mrb[0].mxu0
        %v4261 = vadd.f32 0.0, %v4260
        %v4262 = vpop.f32.mrb[0].mxu0
        %4263 = vmatprep.mubr.f32.mxu0 0.0
        %4264 = vmatmul.mubr.f32.gmra.mrb[0].mxu0 %v3969
        %v4265 = vpop.f32.mrb[0].mxu0
        %v4266 = vadd.f32 0.0, %v4265
        %v4267 = vpop.f32.mrb[0].mxu0
        %4268 = vmatprep.mubr.f32.mxu0 0.0
        %4269 = vmatmul.mubr.f32.gmra.mrb[0].mxu0 %v3972
        %v4270 = vpop.f32.mrb[0].mxu0
        %v4271 = vadd.f32 0.0, %v4270
        %v4272 = vpop.f32.mrb[0].mxu0
        %4273 = vmatprep.mubr.f32.mxu0 0.0
        %4274 = vmatmul.mubr.f32.gmra.mrb[0].mxu0 %v3975
        %v4275 = vpop.f32.mrb[0].mxu0
        %v4276 = vadd.f32 0.0, %v4275
        %v4277 = vpop.f32.mrb[0].mxu0
        %4278 = vmatprep.mubr.f32.mxu0 0.0
        %4279 = vmatmul.mubr.f32.gmra.mrb[0].mxu0 %v3978
        %v4280 = vpop.f32.mrb[0].mxu0
        %v4281 = vadd.f32 0.0, %v4280
        %v4282 = vpop.f32.mrb[0].mxu0
        %4283 = vmatprep.mubr.f32.mxu0 0.0
        %4284 = vmatmul.mubr.f32.gmra.mrb[0].mxu0 %v3981
        %v4285 = vpop.f32.mrb[0].mxu0
        %v4286 = vadd.f32 0.0, %v4285
        %v4287 = vpop.f32.mrb[0].mxu0
        %4288 = vmatprep.mubr.f32.mxu0 0.0
        %4289 = vmatmul.mubr.f32.gmra.mrb[0].mxu0 %v3984
        %v4290 = vpop.f32.mrb[0].mxu0
        %v4291 = vadd.f32 0.0, %v4290
        %v4292 = vpop.f32.mrb[0].mxu0
        %4293 = vmatprep.mubr.f32.mxu0 0.0
        %4294 = vmatmul.mubr.f32.gmra.mrb[0].mxu0 %v3987
        %v4295 = vpop.f32.mrb[0].mxu0
        %v4296 = vadd.f32 0.0, %v4295
        %v4297 = vpop.f32.mrb[0].mxu0
        %4298 = vmatprep.mubr.f32.mxu0 0.0
        %4299 = vmatmul.mubr.f32.gmra.mrb[0].mxu0 %v3990
        %v4300 = vpop.f32.mrb[0].mxu0
        %v4301 = vadd.f32 0.0, %v4300
        %v4302 = vpop.f32.mrb[0].mxu0
        %4303 = vmatprep.mubr.f32.mxu0 0.0
        %4304 = vmatmul.mubr.f32.gmra.mrb[0].mxu0 %v3993
        %v4305 = vpop.f32.mrb[0].mxu0
        %v4306 = vadd.f32 0.0, %v4305
        %v4307 = vpop.f32.mrb[0].mxu0
        %4308 = vmatprep.mubr.f32.mxu0 0.0
        %4309 = vmatmul.mubr.f32.gmra.mrb[0].mxu0 %v3996
        %v4310 = vpop.f32.mrb[0].mxu0
        %v4311 = vadd.f32 0.0, %v4310
        %v4312 = vpop.f32.mrb[0].mxu0
        %4313 = vmatprep.mubr.f32.mxu0 0.0
        %4314 = vmatmul.mubr.f32.gmra.mrb[0].mxu0 %v3999
        %v4315 = vpop.f32.mrb[0].mxu0
        %v4316 = vadd.f32 0.0, %v4315
        %v4317 = vpop.f32.mrb[0].mxu0
        %4318 = vmatprep.mubr.f32.mxu0 0.0
        %4319 = vmatmul.mubr.f32.gmra.mrb[0].mxu0 %v4002
        %v4320 = vpop.f32.mrb[0].mxu0
        %v4321 = vadd.f32 0.0, %v4320
        %v4322 = vpop.f32.mrb[0].mxu0
        %4323 = vmatprep.mubr.f32.mxu0 0.0
        %4324 = vmatmul.mubr.f32.gmra.mrb[0].mxu0 %v4005
        %v4325 = vpop.f32.mrb[0].mxu0
        %v4326 = vadd.f32 0.0, %v4325
        %v4327 = vpop.f32.mrb[0].mxu0
        %4328 = vmatprep.mubr.f32.mxu0 0.0
        %4329 = vmatmul.mubr.f32.gmra.mrb[0].mxu0 %v4008
        %v4330 = vpop.f32.mrb[0].mxu0
        %v4331 = vadd.f32 0.0, %v4330
        %v4332 = vpop.f32.mrb[0].mxu0
        %4333 = vmatprep.mubr.f32.mxu0 0.0
        %4334 = vmatmul.mubr.f32.gmra.mrb[0].mxu0 %v4011
        %v4335 = vpop.f32.mrb[0].mxu0
        %v4336 = vadd.f32 0.0, %v4335
        %v4337 = vpop.f32.mrb[0].mxu0
        %4338 = vmatprep.mubr.f32.mxu0 0.0
        %4339 = vmatmul.mubr.f32.gmra.mrb[0].mxu0 %v4014
        %v4340 = vpop.f32.mrb[0].mxu0
        %v4341 = vadd.f32 0.0, %v4340
        %v4342 = vpop.f32.mrb[0].mxu0
        %4343 = vmatprep.mubr.f32.mxu0 0.0
        %4344 = vmatmul.mubr.f32.gmra.mrb[0].mxu0 %v4017
        %v4345 = vpop.f32.mrb[0].mxu0
        %v4346 = vadd.f32 0.0, %v4345
        %v4347 = vpop.f32.mrb[0].mxu0
        %4348 = vmatprep.mubr.f32.mxu0 0.0
        %4349 = vmatmul.mubr.f32.gmra.mrb[0].mxu0 %v4020
        %v4350 = vpop.f32.mrb[0].mxu0
        %v4351 = vadd.f32 0.0, %v4350
        %v4352 = vpop.f32.mrb[0].mxu0
        %4353 = vmatprep.mubr.f32.mxu0 0.0
        %4354 = vmatmul.mubr.f32.gmra.mrb[0].mxu0 %v4023
        %v4355 = vpop.f32.mrb[0].mxu0
        %v4356 = vadd.f32 0.0, %v4355
        %v4357 = vpop.f32.mrb[0].mxu0
        %4358 = vmatprep.mubr.f32.mxu0 0.0
        %4359 = vmatmul.mubr.f32.gmra.mrb[0].mxu0 %v4026
        %v4360 = vpop.f32.mrb[0].mxu0
        %v4361 = vadd.f32 0.0, %v4360
        %v4362 = vpop.f32.mrb[0].mxu0
        %4363 = vmatprep.mubr.f32.mxu0 0.0
        %4364 = vmatmul.mubr.f32.gmra.mrb[0].mxu0 %v4029
        %v4365 = vpop.f32.mrb[0].mxu0
        %v4366 = vadd.f32 0.0, %v4365
        %v4367 = vpop.f32.mrb[0].mxu0
        %4368 = vmatprep.mubr.f32.mxu0 0.0
        %4369 = vmatmul.mubr.f32.gmra.mrb[0].mxu0 %v4032
        %v4370 = vpop.f32.mrb[0].mxu0
        %v4371 = vadd.f32 0.0, %v4370
        %v4372 = vpop.f32.mrb[0].mxu0
        %4373 = vmatprep.mubr.f32.mxu0 0.0
        %4374 = vmatmul.mubr.f32.gmra.mrb[0].mxu0 %v4035
        %v4375 = vpop.f32.mrb[0].mxu0
        %v4376 = vadd.f32 0.0, %v4375
        %v4377 = vpop.f32.mrb[0].mxu0
        %4378 = vmatprep.mubr.f32.mxu0 0.0
        %4379 = vmatmul.mubr.f32.gmra.mrb[0].mxu0 %v4038
        %v4380 = vpop.f32.mrb[0].mxu0
        %v4381 = vadd.f32 0.0, %v4380
        %v4382 = vpop.f32.mrb[0].mxu0
        %4383 = vmatprep.mubr.f32.mxu0 0.0
        %4384 = vmatmul.mubr.f32.gmra.mrb[0].mxu0 %v4041
        %v4385 = vpop.f32.mrb[0].mxu0
        %v4386 = vadd.f32 0.0, %v4385
        %v4387 = vpop.f32.mrb[0].mxu0
        %4388 = vmatprep.mubr.f32.mxu0 0.0
        %4389 = vmatmul.mubr.f32.gmra.mrb[0].mxu0 %v4044
        %v4390 = vpop.f32.mrb[0].mxu0
        %v4391 = vadd.f32 0.0, %v4390
        %v4392 = vpop.f32.mrb[0].mxu0
        %4393 = vmatprep.mubr.f32.mxu0 0.0
        %4394 = vmatmul.mubr.f32.gmra.mrb[0].mxu0 %v4047
        %v4395 = vpop.f32.mrb[0].mxu0
        %v4396 = vadd.f32 0.0, %v4395
        %v4397 = vpop.f32.mrb[0].mxu0
        %4398 = vmatprep.mubr.f32.mxu0 0.0
        %4399 = vmatmul.mubr.f32.gmra.mrb[0].mxu0 %v4050
        %v4400 = vpop.f32.mrb[0].mxu0
        %v4401 = vadd.f32 0.0, %v4400
        %v4402 = vpop.f32.mrb[0].mxu0
        %4403 = vmatprep.mubr.f32.mxu0 0.0
        %4404 = vmatmul.mubr.f32.gmra.mrb[0].mxu0 %v4053
        %v4405 = vpop.f32.mrb[0].mxu0
        %v4406 = vadd.f32 0.0, %v4405
        %v4407 = vpop.f32.mrb[0].mxu0
        %4408 = vmatprep.mubr.f32.mxu0 0.0
        %4409 = vmatmul.mubr.f32.gmra.mrb[0].mxu0 %v4056
        %v4410 = vpop.f32.mrb[0].mxu0
        %v4411 = vadd.f32 0.0, %v4410
        %v4412 = vpop.f32.mrb[0].mxu0
        %4413 = vmatprep.mubr.f32.mxu0 0.0
        %4414 = vmatmul.mubr.f32.gmra.mrb[0].mxu0 %v4059
        %v4415 = vpop.f32.mrb[0].mxu0
        %v4416 = vadd.f32 0.0, %v4415
        %v4417 = vpop.f32.mrb[0].mxu0
        %4418 = vmatprep.mubr.f32.mxu0 0.0
        %4419 = vmatmul.mubr.f32.gmra.mrb[0].mxu0 %v4062
        %v4420 = vpop.f32.mrb[0].mxu0
        %v4421 = vadd.f32 0.0, %v4420
        %v4422 = vpop.f32.mrb[0].mxu0
        %4423 = vmatprep.mubr.f32.mxu0 0.0
        %4424 = vmatmul.mubr.f32.gmra.mrb[0].mxu0 %v4065
        %v4425 = vpop.f32.mrb[0].mxu0
        %v4426 = vadd.f32 0.0, %v4425
        %v4427 = vpop.f32.mrb[0].mxu0
        %4428 = vmatprep.mubr.f32.mxu0 0.0
        %4429 = vmatmul.mubr.f32.gmra.mrb[0].mxu0 %v4068
        %v4430 = vpop.f32.mrb[0].mxu0
        %v4431 = vadd.f32 0.0, %v4430
        %v4432 = vpop.f32.mrb[0].mxu0
        %4433 = vmatprep.mubr.f32.mxu0 0.0
        %4434 = vmatmul.mubr.f32.gmra.mrb[0].mxu0 %v4071
        %v4435 = vpop.f32.mrb[0].mxu0
        %v4436 = vadd.f32 0.0, %v4435
        %v4437 = vpop.f32.mrb[0].mxu0
        %4438 = vmatprep.mubr.f32.mxu0 0.0
        %4439 = vmatmul.mubr.f32.gmra.mrb[0].mxu0 %v4074
        %v4440 = vpop.f32.mrb[0].mxu0
        %v4441 = vadd.f32 0.0, %v4440
        %v4442 = vpop.f32.mrb[0].mxu0
        %4443 = vdwg.mxu0
        %v4444 = vadd.f32 %v3535, %v4146
        %v4445 = vadd.f32 %v3540, %v4151
        %v4446 = vadd.f32 %v3545, %v4156
        %v4447 = vadd.f32 %v3550, %v4161
        %v4448 = vadd.f32 %v3555, %v4166
        %v4449 = vadd.f32 %v3560, %v4171
        %v4450 = vadd.f32 %v3565, %v4176
        %v4451 = vadd.f32 %v3570, %v4181
        %v4452 = vadd.f32 %v3575, %v4186
        %v4453 = vadd.f32 %v3580, %v4191
        %v4454 = vadd.f32 %v3585, %v4196
        %v4455 = vadd.f32 %v3590, %v4201
        %v4456 = vadd.f32 %v3595, %v4206
        %v4457 = vadd.f32 %v3600, %v4211
        %v4458 = vadd.f32 %v3605, %v4216
        %v4459 = vadd.f32 %v3610, %v4221
        %v4460 = vadd.f32 %v3615, %v4226
        %v4461 = vadd.f32 %v3620, %v4231
        %v4462 = vadd.f32 %v3625, %v4236
        %v4463 = vadd.f32 %v3630, %v4241
        %v4464 = vadd.f32 %v3635, %v4246
        %v4465 = vadd.f32 %v3640, %v4251
        %v4466 = vadd.f32 %v3645, %v4256
        %v4467 = vadd.f32 %v3650, %v4261
        %v4468 = vadd.f32 %v3655, %v4266
        %v4469 = vadd.f32 %v3660, %v4271
        %v4470 = vadd.f32 %v3665, %v4276
        %v4471 = vadd.f32 %v3670, %v4281
        %v4472 = vadd.f32 %v3675, %v4286
        %v4473 = vadd.f32 %v3680, %v4291
        %v4474 = vadd.f32 %v3685, %v4296
        %v4475 = vadd.f32 %v3690, %v4301
        %v4476 = vadd.f32 %v3695, %v4306
        %v4477 = vadd.f32 %v3700, %v4311
        %v4478 = vadd.f32 %v3705, %v4316
        %v4479 = vadd.f32 %v3710, %v4321
        %v4480 = vadd.f32 %v3715, %v4326
        %v4481 = vadd.f32 %v3720, %v4331
        %v4482 = vadd.f32 %v3725, %v4336
        %v4483 = vadd.f32 %v3730, %v4341
        %v4484 = vadd.f32 %v3735, %v4346
        %v4485 = vadd.f32 %v3740, %v4351
        %v4486 = vadd.f32 %v3745, %v4356
        %v4487 = vadd.f32 %v3750, %v4361
        %v4488 = vadd.f32 %v3755, %v4366
        %v4489 = vadd.f32 %v3760, %v4371
        %v4490 = vadd.f32 %v3765, %v4376
        %v4491 = vadd.f32 %v3770, %v4381
        %v4492 = vadd.f32 %v3775, %v4386
        %v4493 = vadd.f32 %v3780, %v4391
        %v4494 = vadd.f32 %v3785, %v4396
        %v4495 = vadd.f32 %v3790, %v4401
        %v4496 = vadd.f32 %v3795, %v4406
        %v4497 = vadd.f32 %v3800, %v4411
        %v4498 = vadd.f32 %v3805, %v4416
        %v4499 = vadd.f32 %v3810, %v4421
        %v4500 = vadd.f32 %v3815, %v4426
        %v4501 = vadd.f32 %v3820, %v4431
        %v4502 = vadd.f32 %v3825, %v4436
        %v4503 = vadd.f32 %v3830, %v4441
        %v4504 = vld [vmem:[%s4] sm:$0x1]
        %v4506 = vlaneseq
        %v4507 = vshrl.u32 %v4506, 7
        %v4508 = vsub.s32 0, %v4507
        %v4509 = vrot.slane %v4504, %v4508
        %v4511 = vadd.f32 %v4444, %v4509
        %v4512 = vadd.f32 %v4445, %v4509
        %v4513 = vadd.f32 %v4446, %v4509
        %v4514 = vadd.f32 %v4447, %v4509
        %v4515 = vadd.f32 %v4448, %v4509
        %v4516 = vadd.f32 %v4449, %v4509
        %v4517 = vadd.f32 %v4450, %v4509
        %v4518 = vadd.f32 %v4451, %v4509
        %v4519 = vadd.f32 %v4452, %v4509
        %v4520 = vadd.f32 %v4453, %v4509
        %v4521 = vadd.f32 %v4454, %v4509
        %v4522 = vadd.f32 %v4455, %v4509
        %v4523 = vadd.f32 %v4456, %v4509
        %v4524 = vadd.f32 %v4457, %v4509
        %v4525 = vadd.f32 %v4458, %v4509
        %v4526 = vadd.f32 %v4459, %v4509
        %v4527 = vadd.f32 %v4460, %v4509
        %v4528 = vadd.f32 %v4461, %v4509
        %v4529 = vadd.f32 %v4462, %v4509
        %v4530 = vadd.f32 %v4463, %v4509
        %v4531 = vadd.f32 %v4464, %v4509
        %v4532 = vadd.f32 %v4465, %v4509
        %v4533 = vadd.f32 %v4466, %v4509
        %v4534 = vadd.f32 %v4467, %v4509
        %v4535 = vadd.f32 %v4468, %v4509
        %v4536 = vadd.f32 %v4469, %v4509
        %v4537 = vadd.f32 %v4470, %v4509
        %v4538 = vadd.f32 %v4471, %v4509
        %v4539 = vadd.f32 %v4472, %v4509
        %v4540 = vadd.f32 %v4473, %v4509
        %v4541 = vadd.f32 %v4474, %v4509
        %v4542 = vadd.f32 %v4475, %v4509
        %v4543 = vadd.f32 %v4476, %v4509
        %v4544 = vadd.f32 %v4477, %v4509
        %v4545 = vadd.f32 %v4478, %v4509
        %v4546 = vadd.f32 %v4479, %v4509
        %v4547 = vadd.f32 %v4480, %v4509
        %v4548 = vadd.f32 %v4481, %v4509
        %v4549 = vadd.f32 %v4482, %v4509
        %v4550 = vadd.f32 %v4483, %v4509
        %v4551 = vadd.f32 %v4484, %v4509
        %v4552 = vadd.f32 %v4485, %v4509
        %v4553 = vadd.f32 %v4486, %v4509
        %v4554 = vadd.f32 %v4487, %v4509
        %v4555 = vadd.f32 %v4488, %v4509
        %v4556 = vadd.f32 %v4489, %v4509
        %v4557 = vadd.f32 %v4490, %v4509
        %v4558 = vadd.f32 %v4491, %v4509
        %v4559 = vadd.f32 %v4492, %v4509
        %v4560 = vadd.f32 %v4493, %v4509
        %v4561 = vadd.f32 %v4494, %v4509
        %v4562 = vadd.f32 %v4495, %v4509
        %v4563 = vadd.f32 %v4496, %v4509
        %v4564 = vadd.f32 %v4497, %v4509
        %v4565 = vadd.f32 %v4498, %v4509
        %v4566 = vadd.f32 %v4499, %v4509
        %v4567 = vadd.f32 %v4500, %v4509
        %v4568 = vadd.f32 %v4501, %v4509
        %v4569 = vadd.f32 %v4502, %v4509
        %v4570 = vadd.f32 %v4503, %v4509
        %v4571 = vmax.f32 %v4511, 0.0
        %v4572 = vmax.f32 %v4512, 0.0
        %v4573 = vmax.f32 %v4513, 0.0
        %v4574 = vmax.f32 %v4514, 0.0
        %v4575 = vmax.f32 %v4515, 0.0
        %v4576 = vmax.f32 %v4516, 0.0
        %v4577 = vmax.f32 %v4517, 0.0
        %v4578 = vmax.f32 %v4518, 0.0
        %v4579 = vmax.f32 %v4519, 0.0
        %v4580 = vmax.f32 %v4520, 0.0
        %v4581 = vmax.f32 %v4521, 0.0
        %v4582 = vmax.f32 %v4522, 0.0
        %v4583 = vmax.f32 %v4523, 0.0
        %v4584 = vmax.f32 %v4524, 0.0
        %v4585 = vmax.f32 %v4525, 0.0
        %v4586 = vmax.f32 %v4526, 0.0
        %v4587 = vmax.f32 %v4527, 0.0
        %v4588 = vmax.f32 %v4528, 0.0
        %v4589 = vmax.f32 %v4529, 0.0
        %v4590 = vmax.f32 %v4530, 0.0
        %v4591 = vmax.f32 %v4531, 0.0
        %v4592 = vmax.f32 %v4532, 0.0
        %v4593 = vmax.f32 %v4533, 0.0
        %v4594 = vmax.f32 %v4534, 0.0
        %v4595 = vmax.f32 %v4535, 0.0
        %v4596 = vmax.f32 %v4536, 0.0
        %v4597 = vmax.f32 %v4537, 0.0
        %v4598 = vmax.f32 %v4538, 0.0
        %v4599 = vmax.f32 %v4539, 0.0
        %v4600 = vmax.f32 %v4540, 0.0
        %v4601 = vmax.f32 %v4541, 0.0
        %v4602 = vmax.f32 %v4542, 0.0
        %v4603 = vmax.f32 %v4543, 0.0
        %v4604 = vmax.f32 %v4544, 0.0
        %v4605 = vmax.f32 %v4545, 0.0
        %v4606 = vmax.f32 %v4546, 0.0
        %v4607 = vmax.f32 %v4547, 0.0
        %v4608 = vmax.f32 %v4548, 0.0
        %v4609 = vmax.f32 %v4549, 0.0
        %v4610 = vmax.f32 %v4550, 0.0
        %v4611 = vmax.f32 %v4551, 0.0
        %v4612 = vmax.f32 %v4552, 0.0
        %v4613 = vmax.f32 %v4553, 0.0
        %v4614 = vmax.f32 %v4554, 0.0
        %v4615 = vmax.f32 %v4555, 0.0
        %v4616 = vmax.f32 %v4556, 0.0
        %v4617 = vmax.f32 %v4557, 0.0
        %v4618 = vmax.f32 %v4558, 0.0
        %v4619 = vmax.f32 %v4559, 0.0
        %v4620 = vmax.f32 %v4560, 0.0
        %v4621 = vmax.f32 %v4561, 0.0
        %v4622 = vmax.f32 %v4562, 0.0
        %v4623 = vmax.f32 %v4563, 0.0
        %v4624 = vmax.f32 %v4564, 0.0
        %v4625 = vmax.f32 %v4565, 0.0
        %v4626 = vmax.f32 %v4566, 0.0
        %v4627 = vmax.f32 %v4567, 0.0
        %v4628 = vmax.f32 %v4568, 0.0
        %v4629 = vmax.f32 %v4569, 0.0
        %v4630 = vmax.f32 %v4570, 0.0
        %4691 = vrot.lane.b32.xlu0 %v4571, 8
        %v4692 = vpop.permute.xlu0 %4691
        %4693 = vrot.lane.b32.xlu0 %v4572, 8
        %v4694 = vpop.permute.xlu0 %4693
        %4695 = vrot.lane.b32.xlu0 %v4573, 8
        %v4696 = vpop.permute.xlu0 %4695
        %4697 = vrot.lane.b32.xlu0 %v4574, 8
        %v4698 = vpop.permute.xlu0 %4697
        %4699 = vrot.lane.b32.xlu0 %v4575, 8
        %v4700 = vpop.permute.xlu0 %4699
        %4701 = vrot.lane.b32.xlu0 %v4576, 8
        %v4702 = vpop.permute.xlu0 %4701
        %4703 = vrot.lane.b32.xlu0 %v4577, 8
        %v4704 = vpop.permute.xlu0 %4703
        %4705 = vrot.lane.b32.xlu0 %v4578, 8
        %v4706 = vpop.permute.xlu0 %4705
        %4707 = vrot.lane.b32.xlu0 %v4579, 8
        %v4708 = vpop.permute.xlu0 %4707
        %4709 = vrot.lane.b32.xlu0 %v4580, 8
        %v4710 = vpop.permute.xlu0 %4709
        %4711 = vrot.lane.b32.xlu0 %v4581, 8
        %v4712 = vpop.permute.xlu0 %4711
        %4713 = vrot.lane.b32.xlu0 %v4582, 8
        %v4714 = vpop.permute.xlu0 %4713
        %4715 = vrot.lane.b32.xlu0 %v4583, 8
        %v4716 = vpop.permute.xlu0 %4715
        %4717 = vrot.lane.b32.xlu0 %v4584, 8
        %v4718 = vpop.permute.xlu0 %4717
        %4719 = vrot.lane.b32.xlu0 %v4585, 8
        %v4720 = vpop.permute.xlu0 %4719
        %4721 = vrot.lane.b32.xlu0 %v4586, 8
        %v4722 = vpop.permute.xlu0 %4721
        %4723 = vrot.lane.b32.xlu0 %v4587, 8
        %v4724 = vpop.permute.xlu0 %4723
        %4725 = vrot.lane.b32.xlu0 %v4588, 8
        %v4726 = vpop.permute.xlu0 %4725
        %4727 = vrot.lane.b32.xlu0 %v4589, 8
        %v4728 = vpop.permute.xlu0 %4727
        %4729 = vrot.lane.b32.xlu0 %v4590, 8
        %v4730 = vpop.permute.xlu0 %4729
        %4731 = vrot.lane.b32.xlu0 %v4591, 8
        %v4732 = vpop.permute.xlu0 %4731
        %4733 = vrot.lane.b32.xlu0 %v4592, 8
        %v4734 = vpop.permute.xlu0 %4733
        %4735 = vrot.lane.b32.xlu0 %v4593, 8
        %v4736 = vpop.permute.xlu0 %4735
        %4737 = vrot.lane.b32.xlu0 %v4594, 8
        %v4738 = vpop.permute.xlu0 %4737
        %4739 = vrot.lane.b32.xlu0 %v4595, 8
        %v4740 = vpop.permute.xlu0 %4739
        %4741 = vrot.lane.b32.xlu0 %v4596, 8
        %v4742 = vpop.permute.xlu0 %4741
        %4743 = vrot.lane.b32.xlu0 %v4597, 8
        %v4744 = vpop.permute.xlu0 %4743
        %4745 = vrot.lane.b32.xlu0 %v4598, 8
        %v4746 = vpop.permute.xlu0 %4745
        %4747 = vrot.lane.b32.xlu0 %v4599, 8
        %v4748 = vpop.permute.xlu0 %4747
        %4749 = vrot.lane.b32.xlu0 %v4600, 8
        %v4750 = vpop.permute.xlu0 %4749
        %4751 = vrot.lane.b32.xlu0 %v4601, 8
        %v4752 = vpop.permute.xlu0 %4751
        %4753 = vrot.lane.b32.xlu0 %v4602, 8
        %v4754 = vpop.permute.xlu0 %4753
        %4755 = vrot.lane.b32.xlu0 %v4603, 8
        %v4756 = vpop.permute.xlu0 %4755
        %4757 = vrot.lane.b32.xlu0 %v4604, 8
        %v4758 = vpop.permute.xlu0 %4757
        %4759 = vrot.lane.b32.xlu0 %v4605, 8
        %v4760 = vpop.permute.xlu0 %4759
        %4761 = vrot.lane.b32.xlu0 %v4606, 8
        %v4762 = vpop.permute.xlu0 %4761
        %4763 = vrot.lane.b32.xlu0 %v4607, 8
        %v4764 = vpop.permute.xlu0 %4763
        %4765 = vrot.lane.b32.xlu0 %v4608, 8
        %v4766 = vpop.permute.xlu0 %4765
        %4767 = vrot.lane.b32.xlu0 %v4609, 8
        %v4768 = vpop.permute.xlu0 %4767
        %4769 = vrot.lane.b32.xlu0 %v4610, 8
        %v4770 = vpop.permute.xlu0 %4769
        %4771 = vrot.lane.b32.xlu0 %v4611, 8
        %v4772 = vpop.permute.xlu0 %4771
        %4773 = vrot.lane.b32.xlu0 %v4612, 8
        %v4774 = vpop.permute.xlu0 %4773
        %4775 = vrot.lane.b32.xlu0 %v4613, 8
        %v4776 = vpop.permute.xlu0 %4775
        %4777 = vrot.lane.b32.xlu0 %v4614, 8
        %v4778 = vpop.permute.xlu0 %4777
        %4779 = vrot.lane.b32.xlu0 %v4615, 8
        %v4780 = vpop.permute.xlu0 %4779
        %4781 = vrot.lane.b32.xlu0 %v4616, 8
        %v4782 = vpop.permute.xlu0 %4781
        %4783 = vrot.lane.b32.xlu0 %v4617, 8
        %v4784 = vpop.permute.xlu0 %4783
        %4785 = vrot.lane.b32.xlu0 %v4618, 8
        %v4786 = vpop.permute.xlu0 %4785
        %4787 = vrot.lane.b32.xlu0 %v4619, 8
        %v4788 = vpop.permute.xlu0 %4787
        %4789 = vrot.lane.b32.xlu0 %v4620, 8
        %v4790 = vpop.permute.xlu0 %4789
        %4791 = vrot.lane.b32.xlu0 %v4621, 8
        %v4792 = vpop.permute.xlu0 %4791
        %4793 = vrot.lane.b32.xlu0 %v4622, 8
        %v4794 = vpop.permute.xlu0 %4793
        %4795 = vrot.lane.b32.xlu0 %v4623, 8
        %v4796 = vpop.permute.xlu0 %4795
        %4797 = vrot.lane.b32.xlu0 %v4624, 8
        %v4798 = vpop.permute.xlu0 %4797
        %4799 = vrot.lane.b32.xlu0 %v4625, 8
        %v4800 = vpop.permute.xlu0 %4799
        %4801 = vrot.lane.b32.xlu0 %v4626, 8
        %v4802 = vpop.permute.xlu0 %4801
        %4803 = vrot.lane.b32.xlu0 %v4627, 8
        %v4804 = vpop.permute.xlu0 %4803
        %4805 = vrot.lane.b32.xlu0 %v4628, 8
        %v4806 = vpop.permute.xlu0 %4805
        %4807 = vrot.lane.b32.xlu0 %v4629, 8
        %v4808 = vpop.permute.xlu0 %4807
        %4809 = vrot.lane.b32.xlu0 %v4630, 8
        %v4810 = vpop.permute.xlu0 %4809
        %vm4871 = vcmask 130112
        %4872 = vst.msk [vmem:[%s325] sm:$0xff] %vm4871, %v4692
        %4873 = vst.msk [vmem:[%s325 + $0x8] sm:$0xff] %vm4871, %v4694
        %4874 = vst.msk [vmem:[%s325 + $0x10] sm:$0xff] %vm4871, %v4696
        %4875 = vst.msk [vmem:[%s325 + $0x18] sm:$0xff] %vm4871, %v4698
        %4876 = vst.msk [vmem:[%s325 + $0x20] sm:$0xff] %vm4871, %v4700
        %4877 = vst.msk [vmem:[%s325 + $0x28] sm:$0xff] %vm4871, %v4702
        %4878 = vst.msk [vmem:[%s325 + $0x30] sm:$0xff] %vm4871, %v4704
        %4879 = vst.msk [vmem:[%s325 + $0x38] sm:$0xff] %vm4871, %v4706
        %4880 = vst.msk [vmem:[%s325 + $0x40] sm:$0xff] %vm4871, %v4708
        %4881 = vst.msk [vmem:[%s325 + $0x48] sm:$0xff] %vm4871, %v4710
        %4882 = vst.msk [vmem:[%s325 + $0x50] sm:$0xff] %vm4871, %v4712
        %4883 = vst.msk [vmem:[%s325 + $0x58] sm:$0xff] %vm4871, %v4714
        %4884 = vst.msk [vmem:[%s325 + $0x60] sm:$0xff] %vm4871, %v4716
        %4885 = vst.msk [vmem:[%s325 + $0x68] sm:$0xff] %vm4871, %v4718
        %4886 = vst.msk [vmem:[%s325 + $0x70] sm:$0xff] %vm4871, %v4720
        %4887 = vst.msk [vmem:[%s325 + $0x78] sm:$0xff] %vm4871, %v4722
        %4888 = vst.msk [vmem:[%s325 + $0x80] sm:$0xff] %vm4871, %v4724
        %4889 = vst.msk [vmem:[%s325 + $0x88] sm:$0xff] %vm4871, %v4726
        %4890 = vst.msk [vmem:[%s325 + $0x90] sm:$0xff] %vm4871, %v4728
        %4891 = vst.msk [vmem:[%s325 + $0x98] sm:$0xff] %vm4871, %v4730
        %4892 = vst.msk [vmem:[%s325 + $0xa0] sm:$0xff] %vm4871, %v4732
        %4893 = vst.msk [vmem:[%s325 + $0xa8] sm:$0xff] %vm4871, %v4734
        %4894 = vst.msk [vmem:[%s325 + $0xb0] sm:$0xff] %vm4871, %v4736
        %4895 = vst.msk [vmem:[%s325 + $0xb8] sm:$0xff] %vm4871, %v4738
        %4896 = vst.msk [vmem:[%s325 + $0xc0] sm:$0xff] %vm4871, %v4740
        %4897 = vst.msk [vmem:[%s325 + $0xc8] sm:$0xff] %vm4871, %v4742
        %4898 = vst.msk [vmem:[%s325 + $0xd0] sm:$0xff] %vm4871, %v4744
        %4899 = vst.msk [vmem:[%s325 + $0xd8] sm:$0xff] %vm4871, %v4746
        %4900 = vst.msk [vmem:[%s325 + $0xe0] sm:$0xff] %vm4871, %v4748
        %4901 = vst.msk [vmem:[%s325 + $0xe8] sm:$0xff] %vm4871, %v4750
        %4902 = vst.msk [vmem:[%s325 + $0xf0] sm:$0xff] %vm4871, %v4752
        %4903 = vst.msk [vmem:[%s325 + $0xf8] sm:$0xff] %vm4871, %v4754
        %4904 = vst.msk [vmem:[%s325 + $0x100] sm:$0xff] %vm4871, %v4756
        %4905 = vst.msk [vmem:[%s325 + $0x108] sm:$0xff] %vm4871, %v4758
        %4906 = vst.msk [vmem:[%s325 + $0x110] sm:$0xff] %vm4871, %v4760
        %4907 = vst.msk [vmem:[%s325 + $0x118] sm:$0xff] %vm4871, %v4762
        %4908 = vst.msk [vmem:[%s325 + $0x120] sm:$0xff] %vm4871, %v4764
        %4909 = vst.msk [vmem:[%s325 + $0x128] sm:$0xff] %vm4871, %v4766
        %4910 = vst.msk [vmem:[%s325 + $0x130] sm:$0xff] %vm4871, %v4768
        %4911 = vst.msk [vmem:[%s325 + $0x138] sm:$0xff] %vm4871, %v4770
        %4912 = vst.msk [vmem:[%s325 + $0x140] sm:$0xff] %vm4871, %v4772
        %4913 = vst.msk [vmem:[%s325 + $0x148] sm:$0xff] %vm4871, %v4774
        %4914 = vst.msk [vmem:[%s325 + $0x150] sm:$0xff] %vm4871, %v4776
        %4915 = vst.msk [vmem:[%s325 + $0x158] sm:$0xff] %vm4871, %v4778
        %4916 = vst.msk [vmem:[%s325 + $0x160] sm:$0xff] %vm4871, %v4780
        %4917 = vst.msk [vmem:[%s325 + $0x168] sm:$0xff] %vm4871, %v4782
        %4918 = vst.msk [vmem:[%s325 + $0x170] sm:$0xff] %vm4871, %v4784
        %4919 = vst.msk [vmem:[%s325 + $0x178] sm:$0xff] %vm4871, %v4786
        %4920 = vst.msk [vmem:[%s325 + $0x180] sm:$0xff] %vm4871, %v4788
        %4921 = vst.msk [vmem:[%s325 + $0x188] sm:$0xff] %vm4871, %v4790
        %4922 = vst.msk [vmem:[%s325 + $0x190] sm:$0xff] %vm4871, %v4792
        %4923 = vst.msk [vmem:[%s325 + $0x198] sm:$0xff] %vm4871, %v4794
        %4924 = vst.msk [vmem:[%s325 + $0x1a0] sm:$0xff] %vm4871, %v4796
        %4925 = vst.msk [vmem:[%s325 + $0x1a8] sm:$0xff] %vm4871, %v4798
        %4926 = vst.msk [vmem:[%s325 + $0x1b0] sm:$0xff] %vm4871, %v4800
        %4927 = vst.msk [vmem:[%s325 + $0x1b8] sm:$0xff] %vm4871, %v4802
        %4928 = vst.msk [vmem:[%s325 + $0x1c0] sm:$0xff] %vm4871, %v4804
        %4929 = vst.msk [vmem:[%s325 + $0x1c8] sm:$0xff] %vm4871, %v4806
        %4930 = vst.msk [vmem:[%s325 + $0x1d0] sm:$0xff] %vm4871, %v4808
        %4931 = vst.msk [vmem:[%s325 + $0x1d8] sm:$0xff] %vm4871, %v4810
        %v4932 = vld [vmem:[#allocation3] sm:$0xff]
        %v4933 = vld [vmem:[#allocation3 + $0x8] sm:$0xff]
        %v4934 = vld [vmem:[#allocation3 + $0x10] sm:$0xff]
        %v4935 = vld [vmem:[#allocation3 + $0x18] sm:$0xff]
        %v4936 = vld [vmem:[#allocation3 + $0x20] sm:$0xff]
        %v4937 = vld [vmem:[#allocation3 + $0x28] sm:$0xff]
        %v4938 = vld [vmem:[#allocation3 + $0x30] sm:$0xff]
        %v4939 = vld [vmem:[#allocation3 + $0x38] sm:$0xff]
        %v4940 = vld [vmem:[#allocation3 + $0x40] sm:$0xff]
        %v4941 = vld [vmem:[#allocation3 + $0x48] sm:$0xff]
        %v4942 = vld [vmem:[#allocation3 + $0x50] sm:$0xff]
        %v4943 = vld [vmem:[#allocation3 + $0x58] sm:$0xff]
        %v4944 = vld [vmem:[#allocation3 + $0x60] sm:$0xff]
        %v4945 = vld [vmem:[#allocation3 + $0x68] sm:$0xff]
        %v4946 = vld [vmem:[#allocation3 + $0x70] sm:$0xff]
        %v4947 = vld [vmem:[#allocation3 + $0x78] sm:$0xff]
        %v4948 = vld [vmem:[#allocation3 + $0x80] sm:$0xff]
        %v4949 = vld [vmem:[#allocation3 + $0x88] sm:$0xff]
        %v4950 = vld [vmem:[#allocation3 + $0x90] sm:$0xff]
        %v4951 = vld [vmem:[#allocation3 + $0x98] sm:$0xff]
        %v4952 = vld [vmem:[#allocation3 + $0xa0] sm:$0xff]
        %v4953 = vld [vmem:[#allocation3 + $0xa8] sm:$0xff]
        %v4954 = vld [vmem:[#allocation3 + $0xb0] sm:$0xff]
        %v4955 = vld [vmem:[#allocation3 + $0xb8] sm:$0xff]
        %v4956 = vld [vmem:[#allocation3 + $0xc0] sm:$0xff]
        %v4957 = vld [vmem:[#allocation3 + $0xc8] sm:$0xff]
        %v4958 = vld [vmem:[#allocation3 + $0xd0] sm:$0xff]
        %v4959 = vld [vmem:[#allocation3 + $0xd8] sm:$0xff]
        %v4960 = vld [vmem:[#allocation3 + $0xe0] sm:$0xff]
        %v4961 = vld [vmem:[#allocation3 + $0xe8] sm:$0xff]
        %v4962 = vld [vmem:[#allocation3 + $0xf0] sm:$0xff]
        %v4963 = vld [vmem:[#allocation3 + $0xf8] sm:$0xff]
        %v4964 = vld [vmem:[#allocation3 + $0x100] sm:$0xff]
        %v4965 = vld [vmem:[#allocation3 + $0x108] sm:$0xff]
        %v4966 = vld [vmem:[#allocation3 + $0x110] sm:$0xff]
        %v4967 = vld [vmem:[#allocation3 + $0x118] sm:$0xff]
        %v4968 = vld [vmem:[#allocation3 + $0x120] sm:$0xff]
        %v4969 = vld [vmem:[#allocation3 + $0x128] sm:$0xff]
        %v4970 = vld [vmem:[#allocation3 + $0x130] sm:$0xff]
        %v4971 = vld [vmem:[#allocation3 + $0x138] sm:$0xff]
        %v4972 = vld [vmem:[#allocation3 + $0x140] sm:$0xff]
        %v4973 = vld [vmem:[#allocation3 + $0x148] sm:$0xff]
        %v4974 = vld [vmem:[#allocation3 + $0x150] sm:$0xff]
        %v4975 = vld [vmem:[#allocation3 + $0x158] sm:$0xff]
        %v4976 = vld [vmem:[#allocation3 + $0x160] sm:$0xff]
        %v4977 = vld [vmem:[#allocation3 + $0x168] sm:$0xff]
        %v4978 = vld [vmem:[#allocation3 + $0x170] sm:$0xff]
        %v4979 = vld [vmem:[#allocation3 + $0x178] sm:$0xff]
        %v4980 = vld [vmem:[#allocation3 + $0x180] sm:$0xff]
        %v4981 = vld [vmem:[#allocation3 + $0x188] sm:$0xff]
        %v4982 = vld [vmem:[#allocation3 + $0x190] sm:$0xff]
        %v4983 = vld [vmem:[#allocation3 + $0x198] sm:$0xff]
        %v4984 = vld [vmem:[#allocation3 + $0x1a0] sm:$0xff]
        %v4985 = vld [vmem:[#allocation3 + $0x1a8] sm:$0xff]
        %v4986 = vld [vmem:[#allocation3 + $0x1b0] sm:$0xff]
        %v4987 = vld [vmem:[#allocation3 + $0x1b8] sm:$0xff]
        %v4988 = vld [vmem:[#allocation3 + $0x1c0] sm:$0xff]
        %v4989 = vld [vmem:[#allocation3 + $0x1c8] sm:$0xff]
        %v4990 = vld [vmem:[#allocation3 + $0x1d0] sm:$0xff]
        %v4991 = vld [vmem:[#allocation3 + $0x1d8] sm:$0xff]
        %v4992 = vld [vmem:[%s5] sm:$0xff]
        %v4993 = vld [vmem:[%s5 + $0x8] sm:$0xff]
        %v4994 = vld [vmem:[%s5 + $0x10] sm:$0xf]
        %v4995 = vld [vmem:[#allocation3 + $0x1e0] sm:$0xff]
        %v4996 = vld [vmem:[#allocation3 + $0x1e8] sm:$0xff]
        %v4997 = vld [vmem:[#allocation3 + $0x1f0] sm:$0xff]
        %s4998 = scalar_lea.vmem %s5, 24
        %v4999 = vld [vmem:[%s4998] sm:$0xff]
        %v5000 = vld [vmem:[%s4998 + $0x8] sm:$0xff]
        %v5001 = vld [vmem:[%s4998 + $0x10] sm:$0xf]
        %v5003 = vsel %vm2162, %v4935, 0
        %v5006 = vsel %vm2162, %v4936, 0
        %v5009 = vsel %vm2162, %v4937, 0
        %v5012 = vsel %vm2162, %v4938, 0
        %v5015 = vsel %vm2162, %v4939, 0
        %v5018 = vsel %vm2162, %v4940, 0
        %v5021 = vsel %vm2162, %v4941, 0
        %v5024 = vsel %vm2162, %v4942, 0
        %v5027 = vsel %vm2162, %v4943, 0
        %v5030 = vsel %vm2162, %v4944, 0
        %v5033 = vsel %vm2162, %v4945, 0
        %v5036 = vsel %vm2162, %v4946, 0
        %v5039 = vsel %vm2162, %v4947, 0
        %v5042 = vsel %vm2162, %v4948, 0
        %v5045 = vsel %vm2162, %v4949, 0
        %v5048 = vsel %vm2162, %v4950, 0
        %v5051 = vsel %vm2162, %v4951, 0
        %v5054 = vsel %vm2162, %v4952, 0
        %v5057 = vsel %vm2162, %v4953, 0
        %v5060 = vsel %vm2162, %v4954, 0
        %v5063 = vsel %vm2162, %v4955, 0
        %v5066 = vsel %vm2162, %v4956, 0
        %v5069 = vsel %vm2162, %v4957, 0
        %v5072 = vsel %vm2162, %v4958, 0
        %v5075 = vsel %vm2162, %v4959, 0
        %v5078 = vsel %vm2162, %v4960, 0
        %v5081 = vsel %vm2162, %v4961, 0
        %v5084 = vsel %vm2162, %v4962, 0
        %v5087 = vsel %vm2162, %v4963, 0
        %v5090 = vsel %vm2162, %v4964, 0
        %v5093 = vsel %vm2162, %v4965, 0
        %v5096 = vsel %vm2162, %v4966, 0
        %v5099 = vsel %vm2162, %v4967, 0
        %v5102 = vsel %vm2162, %v4968, 0
        %v5105 = vsel %vm2162, %v4969, 0
        %v5108 = vsel %vm2162, %v4970, 0
        %v5111 = vsel %vm2162, %v4971, 0
        %v5114 = vsel %vm2162, %v4972, 0
        %v5117 = vsel %vm2162, %v4973, 0
        %v5120 = vsel %vm2162, %v4974, 0
        %v5123 = vsel %vm2162, %v4975, 0
        %v5126 = vsel %vm2162, %v4976, 0
        %v5129 = vsel %vm2162, %v4977, 0
        %v5132 = vsel %vm2162, %v4978, 0
        %v5135 = vsel %vm2162, %v4979, 0
        %v5138 = vsel %vm2162, %v4980, 0
        %v5141 = vsel %vm2162, %v4981, 0
        %v5144 = vsel %vm2162, %v4982, 0
        %v5147 = vsel %vm2162, %v4983, 0
        %v5150 = vsel %vm2162, %v4984, 0
        %v5153 = vsel %vm2162, %v4985, 0
        %v5156 = vsel %vm2162, %v4986, 0
        %v5159 = vsel %vm2162, %v4987, 0
        %v5162 = vsel %vm2162, %v4988, 0
        %v5165 = vsel %vm2162, %v4989, 0
        %v5168 = vsel %vm2162, %v4990, 0
        %v5171 = vsel %vm2162, %v4991, 0
        %v5174 = vsel %vm2162, %v4995, 0
        %v5177 = vsel %vm2162, %v4996, 0
        %v5180 = vsel %vm2162, %v4997, 0
        %v5183 = vsel %vm1000, %v5001, 0
        %5185 = vmatprep.subr.mxu0 0.0
        %5186 = vmatpush1.msra.mxu0 %v4999
        %5187 = vmatprep.subr.mxu0 0.0
        %5188 = vmatpush1.msra.mxu0 %v5000
        %5189 = vmatprep.subr.mxu0 0.0
        %5190 = vmatpush1.msra.mxu0 %v5183
        %5191 = vmatprep.subr.mxu0 0.0
        %5192 = vmatpush1.msra.mxu0 0.0
        %5193 = vmatprep.subr.mxu0 0.0
        %5194 = vmatpush1.msra.mxu0 0.0
        %5195 = vmatprep.subr.mxu0 0.0
        %5196 = vmatpush1.msra.mxu0 0.0
        %5197 = vmatprep.subr.mxu0 0.0
        %5198 = vmatpush1.msra.mxu0 0.0
        %5199 = vmatprep.subr.mxu0 0.0
        %5200 = vmatpush1.msra.mxu0 0.0
        %5201 = vmatprep.subr.mxu0 0.0
        %5202 = vmatpush1.msra.mxu0 0.0
        %5203 = vmatprep.subr.mxu0 0.0
        %5204 = vmatpush1.msra.mxu0 0.0
        %5205 = vmatprep.subr.mxu0 0.0
        %5206 = vmatpush1.msra.mxu0 0.0
        %5207 = vmatprep.subr.mxu0 0.0
        %5208 = vmatpush1.msra.mxu0 0.0
        %5209 = vmatprep.subr.mxu0 0.0
        %5210 = vmatpush1.msra.mxu0 0.0
        %5211 = vmatprep.subr.mxu0 0.0
        %5212 = vmatpush1.msra.mxu0 0.0
        %5213 = vmatprep.subr.mxu0 0.0
        %5214 = vmatpush1.msra.mxu0 0.0
        %5215 = vmatprep.subr.mxu0 0.0
        %5216 = vmatpush1.msra.mxu0 0.0
        %5217 = vmatprep.subr.mxu0 0.0
        %5218 = vmatpush1.msra.mxu0 0.0
        %5219 = vmatprep.subr.mxu0 0.0
        %5220 = vmatpush1.msra.mxu0 0.0
        %5221 = vmatprep.subr.mxu0 0.0
        %5222 = vmatpush1.msra.mxu0 0.0
        %5223 = vmatprep.subr.mxu0 0.0
        %5224 = vmatpush1.msra.mxu0 0.0
        %5225 = vmatprep.subr.mxu0 0.0
        %5226 = vmatpush1.msra.mxu0 0.0
        %5227 = vmatprep.subr.mxu0 0.0
        %5228 = vmatpush1.msra.mxu0 0.0
        %5229 = vmatprep.subr.mxu0 0.0
        %5230 = vmatpush1.msra.mxu0 0.0
        %5231 = vmatprep.subr.mxu0 0.0
        %5232 = vmatpush1.msra.mxu0 0.0
        %5233 = vmatprep.subr.mxu0 0.0
        %5234 = vmatpush1.msra.mxu0 0.0
        %5235 = vmatprep.subr.mxu0 0.0
        %5236 = vmatpush1.msra.mxu0 0.0
        %5237 = vmatprep.subr.mxu0 0.0
        %5238 = vmatpush1.msra.mxu0 0.0
        %5239 = vmatprep.subr.mxu0 0.0
        %5240 = vmatpush1.msra.mxu0 0.0
        %5241 = vmatprep.subr.mxu0 0.0
        %5242 = vmatpush1.msra.mxu0 0.0
        %5243 = vmatprep.subr.mxu0 0.0
        %5244 = vmatpush1.msra.mxu0 0.0
        %5245 = vmatprep.subr.mxu0 0.0
        %5246 = vmatpush1.msra.mxu0 0.0
        %5247 = vmatprep.subr.mxu0 0.0
        %5248 = vmatpush1.msra.mxu0 0.0
        %5249 = vmatprep.mubr.f32.mxu0 0.0
        %5250 = vmatmul.mubr.f32.gmra.mrb[0].mxu0 %v5003
        %v5251 = vpop.f32.mrb[0].mxu0
        %v5252 = vadd.f32 0.0, %v5251
        %v5253 = vpop.f32.mrb[0].mxu0
        %5254 = vmatprep.mubr.f32.mxu0 0.0
        %5255 = vmatmul.mubr.f32.gmra.mrb[0].mxu0 %v5006
        %v5256 = vpop.f32.mrb[0].mxu0
        %v5257 = vadd.f32 0.0, %v5256
        %v5258 = vpop.f32.mrb[0].mxu0
        %5259 = vmatprep.mubr.f32.mxu0 0.0
        %5260 = vmatmul.mubr.f32.gmra.mrb[0].mxu0 %v5009
        %v5261 = vpop.f32.mrb[0].mxu0
        %v5262 = vadd.f32 0.0, %v5261
        %v5263 = vpop.f32.mrb[0].mxu0
        %5264 = vmatprep.mubr.f32.mxu0 0.0
        %5265 = vmatmul.mubr.f32.gmra.mrb[0].mxu0 %v5012
        %v5266 = vpop.f32.mrb[0].mxu0
        %v5267 = vadd.f32 0.0, %v5266
        %v5268 = vpop.f32.mrb[0].mxu0
        %5269 = vmatprep.mubr.f32.mxu0 0.0
        %5270 = vmatmul.mubr.f32.gmra.mrb[0].mxu0 %v5015
        %v5271 = vpop.f32.mrb[0].mxu0
        %v5272 = vadd.f32 0.0, %v5271
        %v5273 = vpop.f32.mrb[0].mxu0
        %5274 = vmatprep.mubr.f32.mxu0 0.0
        %5275 = vmatmul.mubr.f32.gmra.mrb[0].mxu0 %v5018
        %v5276 = vpop.f32.mrb[0].mxu0
        %v5277 = vadd.f32 0.0, %v5276
        %v5278 = vpop.f32.mrb[0].mxu0
        %5279 = vmatprep.mubr.f32.mxu0 0.0
        %5280 = vmatmul.mubr.f32.gmra.mrb[0].mxu0 %v5021
        %v5281 = vpop.f32.mrb[0].mxu0
        %v5282 = vadd.f32 0.0, %v5281
        %v5283 = vpop.f32.mrb[0].mxu0
        %5284 = vmatprep.mubr.f32.mxu0 0.0
        %5285 = vmatmul.mubr.f32.gmra.mrb[0].mxu0 %v5024
        %v5286 = vpop.f32.mrb[0].mxu0
        %v5287 = vadd.f32 0.0, %v5286
        %v5288 = vpop.f32.mrb[0].mxu0
        %5289 = vmatprep.mubr.f32.mxu0 0.0
        %5290 = vmatmul.mubr.f32.gmra.mrb[0].mxu0 %v5027
        %v5291 = vpop.f32.mrb[0].mxu0
        %v5292 = vadd.f32 0.0, %v5291
        %v5293 = vpop.f32.mrb[0].mxu0
        %5294 = vmatprep.mubr.f32.mxu0 0.0
        %5295 = vmatmul.mubr.f32.gmra.mrb[0].mxu0 %v5030
        %v5296 = vpop.f32.mrb[0].mxu0
        %v5297 = vadd.f32 0.0, %v5296
        %v5298 = vpop.f32.mrb[0].mxu0
        %5299 = vmatprep.mubr.f32.mxu0 0.0
        %5300 = vmatmul.mubr.f32.gmra.mrb[0].mxu0 %v5033
        %v5301 = vpop.f32.mrb[0].mxu0
        %v5302 = vadd.f32 0.0, %v5301
        %v5303 = vpop.f32.mrb[0].mxu0
        %5304 = vmatprep.mubr.f32.mxu0 0.0
        %5305 = vmatmul.mubr.f32.gmra.mrb[0].mxu0 %v5036
        %v5306 = vpop.f32.mrb[0].mxu0
        %v5307 = vadd.f32 0.0, %v5306
        %v5308 = vpop.f32.mrb[0].mxu0
        %5309 = vmatprep.mubr.f32.mxu0 0.0
        %5310 = vmatmul.mubr.f32.gmra.mrb[0].mxu0 %v5039
        %v5311 = vpop.f32.mrb[0].mxu0
        %v5312 = vadd.f32 0.0, %v5311
        %v5313 = vpop.f32.mrb[0].mxu0
        %5314 = vmatprep.mubr.f32.mxu0 0.0
        %5315 = vmatmul.mubr.f32.gmra.mrb[0].mxu0 %v5042
        %v5316 = vpop.f32.mrb[0].mxu0
        %v5317 = vadd.f32 0.0, %v5316
        %v5318 = vpop.f32.mrb[0].mxu0
        %5319 = vmatprep.mubr.f32.mxu0 0.0
        %5320 = vmatmul.mubr.f32.gmra.mrb[0].mxu0 %v5045
        %v5321 = vpop.f32.mrb[0].mxu0
        %v5322 = vadd.f32 0.0, %v5321
        %v5323 = vpop.f32.mrb[0].mxu0
        %5324 = vmatprep.mubr.f32.mxu0 0.0
        %5325 = vmatmul.mubr.f32.gmra.mrb[0].mxu0 %v5048
        %v5326 = vpop.f32.mrb[0].mxu0
        %v5327 = vadd.f32 0.0, %v5326
        %v5328 = vpop.f32.mrb[0].mxu0
        %5329 = vmatprep.mubr.f32.mxu0 0.0
        %5330 = vmatmul.mubr.f32.gmra.mrb[0].mxu0 %v5051
        %v5331 = vpop.f32.mrb[0].mxu0
        %v5332 = vadd.f32 0.0, %v5331
        %v5333 = vpop.f32.mrb[0].mxu0
        %5334 = vmatprep.mubr.f32.mxu0 0.0
        %5335 = vmatmul.mubr.f32.gmra.mrb[0].mxu0 %v5054
        %v5336 = vpop.f32.mrb[0].mxu0
        %v5337 = vadd.f32 0.0, %v5336
        %v5338 = vpop.f32.mrb[0].mxu0
        %5339 = vmatprep.mubr.f32.mxu0 0.0
        %5340 = vmatmul.mubr.f32.gmra.mrb[0].mxu0 %v5057
        %v5341 = vpop.f32.mrb[0].mxu0
        %v5342 = vadd.f32 0.0, %v5341
        %v5343 = vpop.f32.mrb[0].mxu0
        %5344 = vmatprep.mubr.f32.mxu0 0.0
        %5345 = vmatmul.mubr.f32.gmra.mrb[0].mxu0 %v5060
        %v5346 = vpop.f32.mrb[0].mxu0
        %v5347 = vadd.f32 0.0, %v5346
        %v5348 = vpop.f32.mrb[0].mxu0
        %5349 = vmatprep.mubr.f32.mxu0 0.0
        %5350 = vmatmul.mubr.f32.gmra.mrb[0].mxu0 %v5063
        %v5351 = vpop.f32.mrb[0].mxu0
        %v5352 = vadd.f32 0.0, %v5351
        %v5353 = vpop.f32.mrb[0].mxu0
        %5354 = vmatprep.mubr.f32.mxu0 0.0
        %5355 = vmatmul.mubr.f32.gmra.mrb[0].mxu0 %v5066
        %v5356 = vpop.f32.mrb[0].mxu0
        %v5357 = vadd.f32 0.0, %v5356
        %v5358 = vpop.f32.mrb[0].mxu0
        %5359 = vmatprep.mubr.f32.mxu0 0.0
        %5360 = vmatmul.mubr.f32.gmra.mrb[0].mxu0 %v5069
        %v5361 = vpop.f32.mrb[0].mxu0
        %v5362 = vadd.f32 0.0, %v5361
        %v5363 = vpop.f32.mrb[0].mxu0
        %5364 = vmatprep.mubr.f32.mxu0 0.0
        %5365 = vmatmul.mubr.f32.gmra.mrb[0].mxu0 %v5072
        %v5366 = vpop.f32.mrb[0].mxu0
        %v5367 = vadd.f32 0.0, %v5366
        %v5368 = vpop.f32.mrb[0].mxu0
        %5369 = vmatprep.mubr.f32.mxu0 0.0
        %5370 = vmatmul.mubr.f32.gmra.mrb[0].mxu0 %v5075
        %v5371 = vpop.f32.mrb[0].mxu0
        %v5372 = vadd.f32 0.0, %v5371
        %v5373 = vpop.f32.mrb[0].mxu0
        %5374 = vmatprep.mubr.f32.mxu0 0.0
        %5375 = vmatmul.mubr.f32.gmra.mrb[0].mxu0 %v5078
        %v5376 = vpop.f32.mrb[0].mxu0
        %v5377 = vadd.f32 0.0, %v5376
        %v5378 = vpop.f32.mrb[0].mxu0
        %5379 = vmatprep.mubr.f32.mxu0 0.0
        %5380 = vmatmul.mubr.f32.gmra.mrb[0].mxu0 %v5081
        %v5381 = vpop.f32.mrb[0].mxu0
        %v5382 = vadd.f32 0.0, %v5381
        %v5383 = vpop.f32.mrb[0].mxu0
        %5384 = vmatprep.mubr.f32.mxu0 0.0
        %5385 = vmatmul.mubr.f32.gmra.mrb[0].mxu0 %v5084
        %v5386 = vpop.f32.mrb[0].mxu0
        %v5387 = vadd.f32 0.0, %v5386
        %v5388 = vpop.f32.mrb[0].mxu0
        %5389 = vmatprep.mubr.f32.mxu0 0.0
        %5390 = vmatmul.mubr.f32.gmra.mrb[0].mxu0 %v5087
        %v5391 = vpop.f32.mrb[0].mxu0
        %v5392 = vadd.f32 0.0, %v5391
        %v5393 = vpop.f32.mrb[0].mxu0
        %5394 = vmatprep.mubr.f32.mxu0 0.0
        %5395 = vmatmul.mubr.f32.gmra.mrb[0].mxu0 %v5090
        %v5396 = vpop.f32.mrb[0].mxu0
        %v5397 = vadd.f32 0.0, %v5396
        %v5398 = vpop.f32.mrb[0].mxu0
        %5399 = vmatprep.mubr.f32.mxu0 0.0
        %5400 = vmatmul.mubr.f32.gmra.mrb[0].mxu0 %v5093
        %v5401 = vpop.f32.mrb[0].mxu0
        %v5402 = vadd.f32 0.0, %v5401
        %v5403 = vpop.f32.mrb[0].mxu0
        %5404 = vmatprep.mubr.f32.mxu0 0.0
        %5405 = vmatmul.mubr.f32.gmra.mrb[0].mxu0 %v5096
        %v5406 = vpop.f32.mrb[0].mxu0
        %v5407 = vadd.f32 0.0, %v5406
        %v5408 = vpop.f32.mrb[0].mxu0
        %5409 = vmatprep.mubr.f32.mxu0 0.0
        %5410 = vmatmul.mubr.f32.gmra.mrb[0].mxu0 %v5099
        %v5411 = vpop.f32.mrb[0].mxu0
        %v5412 = vadd.f32 0.0, %v5411
        %v5413 = vpop.f32.mrb[0].mxu0
        %5414 = vmatprep.mubr.f32.mxu0 0.0
        %5415 = vmatmul.mubr.f32.gmra.mrb[0].mxu0 %v5102
        %v5416 = vpop.f32.mrb[0].mxu0
        %v5417 = vadd.f32 0.0, %v5416
        %v5418 = vpop.f32.mrb[0].mxu0
        %5419 = vmatprep.mubr.f32.mxu0 0.0
        %5420 = vmatmul.mubr.f32.gmra.mrb[0].mxu0 %v5105
        %v5421 = vpop.f32.mrb[0].mxu0
        %v5422 = vadd.f32 0.0, %v5421
        %v5423 = vpop.f32.mrb[0].mxu0
        %5424 = vmatprep.mubr.f32.mxu0 0.0
        %5425 = vmatmul.mubr.f32.gmra.mrb[0].mxu0 %v5108
        %v5426 = vpop.f32.mrb[0].mxu0
        %v5427 = vadd.f32 0.0, %v5426
        %v5428 = vpop.f32.mrb[0].mxu0
        %5429 = vmatprep.mubr.f32.mxu0 0.0
        %5430 = vmatmul.mubr.f32.gmra.mrb[0].mxu0 %v5111
        %v5431 = vpop.f32.mrb[0].mxu0
        %v5432 = vadd.f32 0.0, %v5431
        %v5433 = vpop.f32.mrb[0].mxu0
        %5434 = vmatprep.mubr.f32.mxu0 0.0
        %5435 = vmatmul.mubr.f32.gmra.mrb[0].mxu0 %v5114
        %v5436 = vpop.f32.mrb[0].mxu0
        %v5437 = vadd.f32 0.0, %v5436
        %v5438 = vpop.f32.mrb[0].mxu0
        %5439 = vmatprep.mubr.f32.mxu0 0.0
        %5440 = vmatmul.mubr.f32.gmra.mrb[0].mxu0 %v5117
        %v5441 = vpop.f32.mrb[0].mxu0
        %v5442 = vadd.f32 0.0, %v5441
        %v5443 = vpop.f32.mrb[0].mxu0
        %5444 = vmatprep.mubr.f32.mxu0 0.0
        %5445 = vmatmul.mubr.f32.gmra.mrb[0].mxu0 %v5120
        %v5446 = vpop.f32.mrb[0].mxu0
        %v5447 = vadd.f32 0.0, %v5446
        %v5448 = vpop.f32.mrb[0].mxu0
        %5449 = vmatprep.mubr.f32.mxu0 0.0
        %5450 = vmatmul.mubr.f32.gmra.mrb[0].mxu0 %v5123
        %v5451 = vpop.f32.mrb[0].mxu0
        %v5452 = vadd.f32 0.0, %v5451
        %v5453 = vpop.f32.mrb[0].mxu0
        %5454 = vmatprep.mubr.f32.mxu0 0.0
        %5455 = vmatmul.mubr.f32.gmra.mrb[0].mxu0 %v5126
        %v5456 = vpop.f32.mrb[0].mxu0
        %v5457 = vadd.f32 0.0, %v5456
        %v5458 = vpop.f32.mrb[0].mxu0
        %5459 = vmatprep.mubr.f32.mxu0 0.0
        %5460 = vmatmul.mubr.f32.gmra.mrb[0].mxu0 %v5129
        %v5461 = vpop.f32.mrb[0].mxu0
        %v5462 = vadd.f32 0.0, %v5461
        %v5463 = vpop.f32.mrb[0].mxu0
        %5464 = vmatprep.mubr.f32.mxu0 0.0
        %5465 = vmatmul.mubr.f32.gmra.mrb[0].mxu0 %v5132
        %v5466 = vpop.f32.mrb[0].mxu0
        %v5467 = vadd.f32 0.0, %v5466
        %v5468 = vpop.f32.mrb[0].mxu0
        %5469 = vmatprep.mubr.f32.mxu0 0.0
        %5470 = vmatmul.mubr.f32.gmra.mrb[0].mxu0 %v5135
        %v5471 = vpop.f32.mrb[0].mxu0
        %v5472 = vadd.f32 0.0, %v5471
        %v5473 = vpop.f32.mrb[0].mxu0
        %5474 = vmatprep.mubr.f32.mxu0 0.0
        %5475 = vmatmul.mubr.f32.gmra.mrb[0].mxu0 %v5138
        %v5476 = vpop.f32.mrb[0].mxu0
        %v5477 = vadd.f32 0.0, %v5476
        %v5478 = vpop.f32.mrb[0].mxu0
        %5479 = vmatprep.mubr.f32.mxu0 0.0
        %5480 = vmatmul.mubr.f32.gmra.mrb[0].mxu0 %v5141
        %v5481 = vpop.f32.mrb[0].mxu0
        %v5482 = vadd.f32 0.0, %v5481
        %v5483 = vpop.f32.mrb[0].mxu0
        %5484 = vmatprep.mubr.f32.mxu0 0.0
        %5485 = vmatmul.mubr.f32.gmra.mrb[0].mxu0 %v5144
        %v5486 = vpop.f32.mrb[0].mxu0
        %v5487 = vadd.f32 0.0, %v5486
        %v5488 = vpop.f32.mrb[0].mxu0
        %5489 = vmatprep.mubr.f32.mxu0 0.0
        %5490 = vmatmul.mubr.f32.gmra.mrb[0].mxu0 %v5147
        %v5491 = vpop.f32.mrb[0].mxu0
        %v5492 = vadd.f32 0.0, %v5491
        %v5493 = vpop.f32.mrb[0].mxu0
        %5494 = vmatprep.mubr.f32.mxu0 0.0
        %5495 = vmatmul.mubr.f32.gmra.mrb[0].mxu0 %v5150
        %v5496 = vpop.f32.mrb[0].mxu0
        %v5497 = vadd.f32 0.0, %v5496
        %v5498 = vpop.f32.mrb[0].mxu0
        %5499 = vmatprep.mubr.f32.mxu0 0.0
        %5500 = vmatmul.mubr.f32.gmra.mrb[0].mxu0 %v5153
        %v5501 = vpop.f32.mrb[0].mxu0
        %v5502 = vadd.f32 0.0, %v5501
        %v5503 = vpop.f32.mrb[0].mxu0
        %5504 = vmatprep.mubr.f32.mxu0 0.0
        %5505 = vmatmul.mubr.f32.gmra.mrb[0].mxu0 %v5156
        %v5506 = vpop.f32.mrb[0].mxu0
        %v5507 = vadd.f32 0.0, %v5506
        %v5508 = vpop.f32.mrb[0].mxu0
        %5509 = vmatprep.mubr.f32.mxu0 0.0
        %5510 = vmatmul.mubr.f32.gmra.mrb[0].mxu0 %v5159
        %v5511 = vpop.f32.mrb[0].mxu0
        %v5512 = vadd.f32 0.0, %v5511
        %v5513 = vpop.f32.mrb[0].mxu0
        %5514 = vmatprep.mubr.f32.mxu0 0.0
        %5515 = vmatmul.mubr.f32.gmra.mrb[0].mxu0 %v5162
        %v5516 = vpop.f32.mrb[0].mxu0
        %v5517 = vadd.f32 0.0, %v5516
        %v5518 = vpop.f32.mrb[0].mxu0
        %5519 = vmatprep.mubr.f32.mxu0 0.0
        %5520 = vmatmul.mubr.f32.gmra.mrb[0].mxu0 %v5165
        %v5521 = vpop.f32.mrb[0].mxu0
        %v5522 = vadd.f32 0.0, %v5521
        %v5523 = vpop.f32.mrb[0].mxu0
        %5524 = vmatprep.mubr.f32.mxu0 0.0
        %5525 = vmatmul.mubr.f32.gmra.mrb[0].mxu0 %v5168
        %v5526 = vpop.f32.mrb[0].mxu0
        %v5527 = vadd.f32 0.0, %v5526
        %v5528 = vpop.f32.mrb[0].mxu0
        %5529 = vmatprep.mubr.f32.mxu0 0.0
        %5530 = vmatmul.mubr.f32.gmra.mrb[0].mxu0 %v5171
        %v5531 = vpop.f32.mrb[0].mxu0
        %v5532 = vadd.f32 0.0, %v5531
        %v5533 = vpop.f32.mrb[0].mxu0
        %5534 = vmatprep.mubr.f32.mxu0 0.0
        %5535 = vmatmul.mubr.f32.gmra.mrb[0].mxu0 %v5174
        %v5536 = vpop.f32.mrb[0].mxu0
        %v5537 = vadd.f32 0.0, %v5536
        %v5538 = vpop.f32.mrb[0].mxu0
        %5539 = vmatprep.mubr.f32.mxu0 0.0
        %5540 = vmatmul.mubr.f32.gmra.mrb[0].mxu0 %v5177
        %v5541 = vpop.f32.mrb[0].mxu0
        %v5542 = vadd.f32 0.0, %v5541
        %v5543 = vpop.f32.mrb[0].mxu0
        %5544 = vmatprep.mubr.f32.mxu0 0.0
        %5545 = vmatmul.mubr.f32.gmra.mrb[0].mxu0 %v5180
        %v5546 = vpop.f32.mrb[0].mxu0
        %v5547 = vadd.f32 0.0, %v5546
        %v5548 = vpop.f32.mrb[0].mxu0
        %5549 = vdwg.mxu0
        %v5551 = vsel %vm2162, %v4932, 0
        %v5554 = vsel %vm2162, %v4933, 0
        %v5557 = vsel %vm2162, %v4934, 0
        %v5560 = vsel %vm1000, %v4994, 0
        %5562 = vmatprep.subr.mxu0 0.0
        %5563 = vmatpush1.msra.mxu0 %v4992
        %5564 = vmatprep.subr.mxu0 0.0
        %5565 = vmatpush1.msra.mxu0 %v4993
        %5566 = vmatprep.subr.mxu0 0.0
        %5567 = vmatpush1.msra.mxu0 %v5560
        %5568 = vmatprep.subr.mxu0 0.0
        %5569 = vmatpush1.msra.mxu0 0.0
        %5570 = vmatprep.subr.mxu0 0.0
        %5571 = vmatpush1.msra.mxu0 0.0
        %5572 = vmatprep.subr.mxu0 0.0
        %5573 = vmatpush1.msra.mxu0 0.0
        %5574 = vmatprep.subr.mxu0 0.0
        %5575 = vmatpush1.msra.mxu0 0.0
        %5576 = vmatprep.subr.mxu0 0.0
        %5577 = vmatpush1.msra.mxu0 0.0
        %5578 = vmatprep.subr.mxu0 0.0
        %5579 = vmatpush1.msra.mxu0 0.0
        %5580 = vmatprep.subr.mxu0 0.0
        %5581 = vmatpush1.msra.mxu0 0.0
        %5582 = vmatprep.subr.mxu0 0.0
        %5583 = vmatpush1.msra.mxu0 0.0
        %5584 = vmatprep.subr.mxu0 0.0
        %5585 = vmatpush1.msra.mxu0 0.0
        %5586 = vmatprep.subr.mxu0 0.0
        %5587 = vmatpush1.msra.mxu0 0.0
        %5588 = vmatprep.subr.mxu0 0.0
        %5589 = vmatpush1.msra.mxu0 0.0
        %5590 = vmatprep.subr.mxu0 0.0
        %5591 = vmatpush1.msra.mxu0 0.0
        %5592 = vmatprep.subr.mxu0 0.0
        %5593 = vmatpush1.msra.mxu0 0.0
        %5594 = vmatprep.subr.mxu0 0.0
        %5595 = vmatpush1.msra.mxu0 0.0
        %5596 = vmatprep.subr.mxu0 0.0
        %5597 = vmatpush1.msra.mxu0 0.0
        %5598 = vmatprep.subr.mxu0 0.0
        %5599 = vmatpush1.msra.mxu0 0.0
        %5600 = vmatprep.subr.mxu0 0.0
        %5601 = vmatpush1.msra.mxu0 0.0
        %5602 = vmatprep.subr.mxu0 0.0
        %5603 = vmatpush1.msra.mxu0 0.0
        %5604 = vmatprep.subr.mxu0 0.0
        %5605 = vmatpush1.msra.mxu0 0.0
        %5606 = vmatprep.subr.mxu0 0.0
        %5607 = vmatpush1.msra.mxu0 0.0
        %5608 = vmatprep.subr.mxu0 0.0
        %5609 = vmatpush1.msra.mxu0 0.0
        %5610 = vmatprep.subr.mxu0 0.0
        %5611 = vmatpush1.msra.mxu0 0.0
        %5612 = vmatprep.subr.mxu0 0.0
        %5613 = vmatpush1.msra.mxu0 0.0
        %5614 = vmatprep.subr.mxu0 0.0
        %5615 = vmatpush1.msra.mxu0 0.0
        %5616 = vmatprep.subr.mxu0 0.0
        %5617 = vmatpush1.msra.mxu0 0.0
        %5618 = vmatprep.subr.mxu0 0.0
        %5619 = vmatpush1.msra.mxu0 0.0
        %5620 = vmatprep.subr.mxu0 0.0
        %5621 = vmatpush1.msra.mxu0 0.0
        %5622 = vmatprep.subr.mxu0 0.0
        %5623 = vmatpush1.msra.mxu0 0.0
        %5624 = vmatprep.subr.mxu0 0.0
        %5625 = vmatpush1.msra.mxu0 0.0
        %5626 = vmatprep.mubr.f32.mxu0 0.0
        %5627 = vmatmul.mubr.f32.gmra.mrb[0].mxu0 %v5551
        %v5628 = vpop.f32.mrb[0].mxu0
        %v5629 = vadd.f32 %v5252, %v5628
        %v5630 = vpop.f32.mrb[0].mxu0
        %5631 = vmatprep.mubr.f32.mxu0 0.0
        %5632 = vmatmul.mubr.f32.gmra.mrb[0].mxu0 %v5554
        %v5633 = vpop.f32.mrb[0].mxu0
        %v5634 = vadd.f32 %v5257, %v5633
        %v5635 = vpop.f32.mrb[0].mxu0
        %5636 = vmatprep.mubr.f32.mxu0 0.0
        %5637 = vmatmul.mubr.f32.gmra.mrb[0].mxu0 %v5557
        %v5638 = vpop.f32.mrb[0].mxu0
        %v5639 = vadd.f32 %v5262, %v5638
        %v5640 = vpop.f32.mrb[0].mxu0
        %5641 = vmatprep.mubr.f32.mxu0 0.0
        %5642 = vmatmul.mubr.f32.gmra.mrb[0].mxu0 %v5003
        %v5643 = vpop.f32.mrb[0].mxu0
        %v5644 = vadd.f32 %v5267, %v5643
        %v5645 = vpop.f32.mrb[0].mxu0
        %5646 = vmatprep.mubr.f32.mxu0 0.0
        %5647 = vmatmul.mubr.f32.gmra.mrb[0].mxu0 %v5006
        %v5648 = vpop.f32.mrb[0].mxu0
        %v5649 = vadd.f32 %v5272, %v5648
        %v5650 = vpop.f32.mrb[0].mxu0
        %5651 = vmatprep.mubr.f32.mxu0 0.0
        %5652 = vmatmul.mubr.f32.gmra.mrb[0].mxu0 %v5009
        %v5653 = vpop.f32.mrb[0].mxu0
        %v5654 = vadd.f32 %v5277, %v5653
        %v5655 = vpop.f32.mrb[0].mxu0
        %5656 = vmatprep.mubr.f32.mxu0 0.0
        %5657 = vmatmul.mubr.f32.gmra.mrb[0].mxu0 %v5012
        %v5658 = vpop.f32.mrb[0].mxu0
        %v5659 = vadd.f32 %v5282, %v5658
        %v5660 = vpop.f32.mrb[0].mxu0
        %5661 = vmatprep.mubr.f32.mxu0 0.0
        %5662 = vmatmul.mubr.f32.gmra.mrb[0].mxu0 %v5015
        %v5663 = vpop.f32.mrb[0].mxu0
        %v5664 = vadd.f32 %v5287, %v5663
        %v5665 = vpop.f32.mrb[0].mxu0
        %5666 = vmatprep.mubr.f32.mxu0 0.0
        %5667 = vmatmul.mubr.f32.gmra.mrb[0].mxu0 %v5018
        %v5668 = vpop.f32.mrb[0].mxu0
        %v5669 = vadd.f32 %v5292, %v5668
        %v5670 = vpop.f32.mrb[0].mxu0
        %5671 = vmatprep.mubr.f32.mxu0 0.0
        %5672 = vmatmul.mubr.f32.gmra.mrb[0].mxu0 %v5021
        %v5673 = vpop.f32.mrb[0].mxu0
        %v5674 = vadd.f32 %v5297, %v5673
        %v5675 = vpop.f32.mrb[0].mxu0
        %5676 = vmatprep.mubr.f32.mxu0 0.0
        %5677 = vmatmul.mubr.f32.gmra.mrb[0].mxu0 %v5024
        %v5678 = vpop.f32.mrb[0].mxu0
        %v5679 = vadd.f32 %v5302, %v5678
        %v5680 = vpop.f32.mrb[0].mxu0
        %5681 = vmatprep.mubr.f32.mxu0 0.0
        %5682 = vmatmul.mubr.f32.gmra.mrb[0].mxu0 %v5027
        %v5683 = vpop.f32.mrb[0].mxu0
        %v5684 = vadd.f32 %v5307, %v5683
        %v5685 = vpop.f32.mrb[0].mxu0
        %5686 = vmatprep.mubr.f32.mxu0 0.0
        %5687 = vmatmul.mubr.f32.gmra.mrb[0].mxu0 %v5030
        %v5688 = vpop.f32.mrb[0].mxu0
        %v5689 = vadd.f32 %v5312, %v5688
        %v5690 = vpop.f32.mrb[0].mxu0
        %5691 = vmatprep.mubr.f32.mxu0 0.0
        %5692 = vmatmul.mubr.f32.gmra.mrb[0].mxu0 %v5033
        %v5693 = vpop.f32.mrb[0].mxu0
        %v5694 = vadd.f32 %v5317, %v5693
        %v5695 = vpop.f32.mrb[0].mxu0
        %5696 = vmatprep.mubr.f32.mxu0 0.0
        %5697 = vmatmul.mubr.f32.gmra.mrb[0].mxu0 %v5036
        %v5698 = vpop.f32.mrb[0].mxu0
        %v5699 = vadd.f32 %v5322, %v5698
        %v5700 = vpop.f32.mrb[0].mxu0
        %5701 = vmatprep.mubr.f32.mxu0 0.0
        %5702 = vmatmul.mubr.f32.gmra.mrb[0].mxu0 %v5039
        %v5703 = vpop.f32.mrb[0].mxu0
        %v5704 = vadd.f32 %v5327, %v5703
        %v5705 = vpop.f32.mrb[0].mxu0
        %5706 = vmatprep.mubr.f32.mxu0 0.0
        %5707 = vmatmul.mubr.f32.gmra.mrb[0].mxu0 %v5042
        %v5708 = vpop.f32.mrb[0].mxu0
        %v5709 = vadd.f32 %v5332, %v5708
        %v5710 = vpop.f32.mrb[0].mxu0
        %5711 = vmatprep.mubr.f32.mxu0 0.0
        %5712 = vmatmul.mubr.f32.gmra.mrb[0].mxu0 %v5045
        %v5713 = vpop.f32.mrb[0].mxu0
        %v5714 = vadd.f32 %v5337, %v5713
        %v5715 = vpop.f32.mrb[0].mxu0
        %5716 = vmatprep.mubr.f32.mxu0 0.0
        %5717 = vmatmul.mubr.f32.gmra.mrb[0].mxu0 %v5048
        %v5718 = vpop.f32.mrb[0].mxu0
        %v5719 = vadd.f32 %v5342, %v5718
        %v5720 = vpop.f32.mrb[0].mxu0
        %5721 = vmatprep.mubr.f32.mxu0 0.0
        %5722 = vmatmul.mubr.f32.gmra.mrb[0].mxu0 %v5051
        %v5723 = vpop.f32.mrb[0].mxu0
        %v5724 = vadd.f32 %v5347, %v5723
        %v5725 = vpop.f32.mrb[0].mxu0
        %5726 = vmatprep.mubr.f32.mxu0 0.0
        %5727 = vmatmul.mubr.f32.gmra.mrb[0].mxu0 %v5054
        %v5728 = vpop.f32.mrb[0].mxu0
        %v5729 = vadd.f32 %v5352, %v5728
        %v5730 = vpop.f32.mrb[0].mxu0
        %5731 = vmatprep.mubr.f32.mxu0 0.0
        %5732 = vmatmul.mubr.f32.gmra.mrb[0].mxu0 %v5057
        %v5733 = vpop.f32.mrb[0].mxu0
        %v5734 = vadd.f32 %v5357, %v5733
        %v5735 = vpop.f32.mrb[0].mxu0
        %5736 = vmatprep.mubr.f32.mxu0 0.0
        %5737 = vmatmul.mubr.f32.gmra.mrb[0].mxu0 %v5060
        %v5738 = vpop.f32.mrb[0].mxu0
        %v5739 = vadd.f32 %v5362, %v5738
        %v5740 = vpop.f32.mrb[0].mxu0
        %5741 = vmatprep.mubr.f32.mxu0 0.0
        %5742 = vmatmul.mubr.f32.gmra.mrb[0].mxu0 %v5063
        %v5743 = vpop.f32.mrb[0].mxu0
        %v5744 = vadd.f32 %v5367, %v5743
        %v5745 = vpop.f32.mrb[0].mxu0
        %5746 = vmatprep.mubr.f32.mxu0 0.0
        %5747 = vmatmul.mubr.f32.gmra.mrb[0].mxu0 %v5066
        %v5748 = vpop.f32.mrb[0].mxu0
        %v5749 = vadd.f32 %v5372, %v5748
        %v5750 = vpop.f32.mrb[0].mxu0
        %5751 = vmatprep.mubr.f32.mxu0 0.0
        %5752 = vmatmul.mubr.f32.gmra.mrb[0].mxu0 %v5069
        %v5753 = vpop.f32.mrb[0].mxu0
        %v5754 = vadd.f32 %v5377, %v5753
        %v5755 = vpop.f32.mrb[0].mxu0
        %5756 = vmatprep.mubr.f32.mxu0 0.0
        %5757 = vmatmul.mubr.f32.gmra.mrb[0].mxu0 %v5072
        %v5758 = vpop.f32.mrb[0].mxu0
        %v5759 = vadd.f32 %v5382, %v5758
        %v5760 = vpop.f32.mrb[0].mxu0
        %5761 = vmatprep.mubr.f32.mxu0 0.0
        %5762 = vmatmul.mubr.f32.gmra.mrb[0].mxu0 %v5075
        %v5763 = vpop.f32.mrb[0].mxu0
        %v5764 = vadd.f32 %v5387, %v5763
        %v5765 = vpop.f32.mrb[0].mxu0
        %5766 = vmatprep.mubr.f32.mxu0 0.0
        %5767 = vmatmul.mubr.f32.gmra.mrb[0].mxu0 %v5078
        %v5768 = vpop.f32.mrb[0].mxu0
        %v5769 = vadd.f32 %v5392, %v5768
        %v5770 = vpop.f32.mrb[0].mxu0
        %5771 = vmatprep.mubr.f32.mxu0 0.0
        %5772 = vmatmul.mubr.f32.gmra.mrb[0].mxu0 %v5081
        %v5773 = vpop.f32.mrb[0].mxu0
        %v5774 = vadd.f32 %v5397, %v5773
        %v5775 = vpop.f32.mrb[0].mxu0
        %5776 = vmatprep.mubr.f32.mxu0 0.0
        %5777 = vmatmul.mubr.f32.gmra.mrb[0].mxu0 %v5084
        %v5778 = vpop.f32.mrb[0].mxu0
        %v5779 = vadd.f32 %v5402, %v5778
        %v5780 = vpop.f32.mrb[0].mxu0
        %5781 = vmatprep.mubr.f32.mxu0 0.0
        %5782 = vmatmul.mubr.f32.gmra.mrb[0].mxu0 %v5087
        %v5783 = vpop.f32.mrb[0].mxu0
        %v5784 = vadd.f32 %v5407, %v5783
        %v5785 = vpop.f32.mrb[0].mxu0
        %5786 = vmatprep.mubr.f32.mxu0 0.0
        %5787 = vmatmul.mubr.f32.gmra.mrb[0].mxu0 %v5090
        %v5788 = vpop.f32.mrb[0].mxu0
        %v5789 = vadd.f32 %v5412, %v5788
        %v5790 = vpop.f32.mrb[0].mxu0
        %5791 = vmatprep.mubr.f32.mxu0 0.0
        %5792 = vmatmul.mubr.f32.gmra.mrb[0].mxu0 %v5093
        %v5793 = vpop.f32.mrb[0].mxu0
        %v5794 = vadd.f32 %v5417, %v5793
        %v5795 = vpop.f32.mrb[0].mxu0
        %5796 = vmatprep.mubr.f32.mxu0 0.0
        %5797 = vmatmul.mubr.f32.gmra.mrb[0].mxu0 %v5096
        %v5798 = vpop.f32.mrb[0].mxu0
        %v5799 = vadd.f32 %v5422, %v5798
        %v5800 = vpop.f32.mrb[0].mxu0
        %5801 = vmatprep.mubr.f32.mxu0 0.0
        %5802 = vmatmul.mubr.f32.gmra.mrb[0].mxu0 %v5099
        %v5803 = vpop.f32.mrb[0].mxu0
        %v5804 = vadd.f32 %v5427, %v5803
        %v5805 = vpop.f32.mrb[0].mxu0
        %5806 = vmatprep.mubr.f32.mxu0 0.0
        %5807 = vmatmul.mubr.f32.gmra.mrb[0].mxu0 %v5102
        %v5808 = vpop.f32.mrb[0].mxu0
        %v5809 = vadd.f32 %v5432, %v5808
        %v5810 = vpop.f32.mrb[0].mxu0
        %5811 = vmatprep.mubr.f32.mxu0 0.0
        %5812 = vmatmul.mubr.f32.gmra.mrb[0].mxu0 %v5105
        %v5813 = vpop.f32.mrb[0].mxu0
        %v5814 = vadd.f32 %v5437, %v5813
        %v5815 = vpop.f32.mrb[0].mxu0
        %5816 = vmatprep.mubr.f32.mxu0 0.0
        %5817 = vmatmul.mubr.f32.gmra.mrb[0].mxu0 %v5108
        %v5818 = vpop.f32.mrb[0].mxu0
        %v5819 = vadd.f32 %v5442, %v5818
        %v5820 = vpop.f32.mrb[0].mxu0
        %5821 = vmatprep.mubr.f32.mxu0 0.0
        %5822 = vmatmul.mubr.f32.gmra.mrb[0].mxu0 %v5111
        %v5823 = vpop.f32.mrb[0].mxu0
        %v5824 = vadd.f32 %v5447, %v5823
        %v5825 = vpop.f32.mrb[0].mxu0
        %5826 = vmatprep.mubr.f32.mxu0 0.0
        %5827 = vmatmul.mubr.f32.gmra.mrb[0].mxu0 %v5114
        %v5828 = vpop.f32.mrb[0].mxu0
        %v5829 = vadd.f32 %v5452, %v5828
        %v5830 = vpop.f32.mrb[0].mxu0
        %5831 = vmatprep.mubr.f32.mxu0 0.0
        %5832 = vmatmul.mubr.f32.gmra.mrb[0].mxu0 %v5117
        %v5833 = vpop.f32.mrb[0].mxu0
        %v5834 = vadd.f32 %v5457, %v5833
        %v5835 = vpop.f32.mrb[0].mxu0
        %5836 = vmatprep.mubr.f32.mxu0 0.0
        %5837 = vmatmul.mubr.f32.gmra.mrb[0].mxu0 %v5120
        %v5838 = vpop.f32.mrb[0].mxu0
        %v5839 = vadd.f32 %v5462, %v5838
        %v5840 = vpop.f32.mrb[0].mxu0
        %5841 = vmatprep.mubr.f32.mxu0 0.0
        %5842 = vmatmul.mubr.f32.gmra.mrb[0].mxu0 %v5123
        %v5843 = vpop.f32.mrb[0].mxu0
        %v5844 = vadd.f32 %v5467, %v5843
        %v5845 = vpop.f32.mrb[0].mxu0
        %5846 = vmatprep.mubr.f32.mxu0 0.0
        %5847 = vmatmul.mubr.f32.gmra.mrb[0].mxu0 %v5126
        %v5848 = vpop.f32.mrb[0].mxu0
        %v5849 = vadd.f32 %v5472, %v5848
        %v5850 = vpop.f32.mrb[0].mxu0
        %5851 = vmatprep.mubr.f32.mxu0 0.0
        %5852 = vmatmul.mubr.f32.gmra.mrb[0].mxu0 %v5129
        %v5853 = vpop.f32.mrb[0].mxu0
        %v5854 = vadd.f32 %v5477, %v5853
        %v5855 = vpop.f32.mrb[0].mxu0
        %5856 = vmatprep.mubr.f32.mxu0 0.0
        %5857 = vmatmul.mubr.f32.gmra.mrb[0].mxu0 %v5132
        %v5858 = vpop.f32.mrb[0].mxu0
        %v5859 = vadd.f32 %v5482, %v5858
        %v5860 = vpop.f32.mrb[0].mxu0
        %5861 = vmatprep.mubr.f32.mxu0 0.0
        %5862 = vmatmul.mubr.f32.gmra.mrb[0].mxu0 %v5135
        %v5863 = vpop.f32.mrb[0].mxu0
        %v5864 = vadd.f32 %v5487, %v5863
        %v5865 = vpop.f32.mrb[0].mxu0
        %5866 = vmatprep.mubr.f32.mxu0 0.0
        %5867 = vmatmul.mubr.f32.gmra.mrb[0].mxu0 %v5138
        %v5868 = vpop.f32.mrb[0].mxu0
        %v5869 = vadd.f32 %v5492, %v5868
        %v5870 = vpop.f32.mrb[0].mxu0
        %5871 = vmatprep.mubr.f32.mxu0 0.0
        %5872 = vmatmul.mubr.f32.gmra.mrb[0].mxu0 %v5141
        %v5873 = vpop.f32.mrb[0].mxu0
        %v5874 = vadd.f32 %v5497, %v5873
        %v5875 = vpop.f32.mrb[0].mxu0
        %5876 = vmatprep.mubr.f32.mxu0 0.0
        %5877 = vmatmul.mubr.f32.gmra.mrb[0].mxu0 %v5144
        %v5878 = vpop.f32.mrb[0].mxu0
        %v5879 = vadd.f32 %v5502, %v5878
        %v5880 = vpop.f32.mrb[0].mxu0
        %5881 = vmatprep.mubr.f32.mxu0 0.0
        %5882 = vmatmul.mubr.f32.gmra.mrb[0].mxu0 %v5147
        %v5883 = vpop.f32.mrb[0].mxu0
        %v5884 = vadd.f32 %v5507, %v5883
        %v5885 = vpop.f32.mrb[0].mxu0
        %5886 = vmatprep.mubr.f32.mxu0 0.0
        %5887 = vmatmul.mubr.f32.gmra.mrb[0].mxu0 %v5150
        %v5888 = vpop.f32.mrb[0].mxu0
        %v5889 = vadd.f32 %v5512, %v5888
        %v5890 = vpop.f32.mrb[0].mxu0
        %5891 = vmatprep.mubr.f32.mxu0 0.0
        %5892 = vmatmul.mubr.f32.gmra.mrb[0].mxu0 %v5153
        %v5893 = vpop.f32.mrb[0].mxu0
        %v5894 = vadd.f32 %v5517, %v5893
        %v5895 = vpop.f32.mrb[0].mxu0
        %5896 = vmatprep.mubr.f32.mxu0 0.0
        %5897 = vmatmul.mubr.f32.gmra.mrb[0].mxu0 %v5156
        %v5898 = vpop.f32.mrb[0].mxu0
        %v5899 = vadd.f32 %v5522, %v5898
        %v5900 = vpop.f32.mrb[0].mxu0
        %5901 = vmatprep.mubr.f32.mxu0 0.0
        %5902 = vmatmul.mubr.f32.gmra.mrb[0].mxu0 %v5159
        %v5903 = vpop.f32.mrb[0].mxu0
        %v5904 = vadd.f32 %v5527, %v5903
        %v5905 = vpop.f32.mrb[0].mxu0
        %5906 = vmatprep.mubr.f32.mxu0 0.0
        %5907 = vmatmul.mubr.f32.gmra.mrb[0].mxu0 %v5162
        %v5908 = vpop.f32.mrb[0].mxu0
        %v5909 = vadd.f32 %v5532, %v5908
        %v5910 = vpop.f32.mrb[0].mxu0
        %5911 = vmatprep.mubr.f32.mxu0 0.0
        %5912 = vmatmul.mubr.f32.gmra.mrb[0].mxu0 %v5165
        %v5913 = vpop.f32.mrb[0].mxu0
        %v5914 = vadd.f32 %v5537, %v5913
        %v5915 = vpop.f32.mrb[0].mxu0
        %5916 = vmatprep.mubr.f32.mxu0 0.0
        %5917 = vmatmul.mubr.f32.gmra.mrb[0].mxu0 %v5168
        %v5918 = vpop.f32.mrb[0].mxu0
        %v5919 = vadd.f32 %v5542, %v5918
        %v5920 = vpop.f32.mrb[0].mxu0
        %5921 = vmatprep.mubr.f32.mxu0 0.0
        %5922 = vmatmul.mubr.f32.gmra.mrb[0].mxu0 %v5171
        %v5923 = vpop.f32.mrb[0].mxu0
        %v5924 = vadd.f32 %v5547, %v5923
        %v5925 = vpop.f32.mrb[0].mxu0
        %5926 = vdwg.mxu0
        %v5927 = vld [vmem:[#allocation3 + $0x30] sm:$0xff]
        %v5928 = vld [vmem:[#allocation3 + $0x38] sm:$0xff]
        %v5929 = vld [vmem:[#allocation3 + $0x40] sm:$0xff]
        %v5930 = vld [vmem:[#allocation3 + $0x48] sm:$0xff]
        %v5931 = vld [vmem:[#allocation3 + $0x50] sm:$0xff]
        %v5932 = vld [vmem:[#allocation3 + $0x58] sm:$0xff]
        %v5933 = vld [vmem:[#allocation3 + $0x60] sm:$0xff]
        %v5934 = vld [vmem:[#allocation3 + $0x68] sm:$0xff]
        %v5935 = vld [vmem:[#allocation3 + $0x70] sm:$0xff]
        %v5936 = vld [vmem:[#allocation3 + $0x78] sm:$0xff]
        %v5937 = vld [vmem:[#allocation3 + $0x80] sm:$0xff]
        %v5938 = vld [vmem:[#allocation3 + $0x88] sm:$0xff]
        %v5939 = vld [vmem:[#allocation3 + $0x90] sm:$0xff]
        %v5940 = vld [vmem:[#allocation3 + $0x98] sm:$0xff]
        %v5941 = vld [vmem:[#allocation3 + $0xa0] sm:$0xff]
        %v5942 = vld [vmem:[#allocation3 + $0xa8] sm:$0xff]
        %v5943 = vld [vmem:[#allocation3 + $0xb0] sm:$0xff]
        %v5944 = vld [vmem:[#allocation3 + $0xb8] sm:$0xff]
        %v5945 = vld [vmem:[#allocation3 + $0xc0] sm:$0xff]
        %v5946 = vld [vmem:[#allocation3 + $0xc8] sm:$0xff]
        %v5947 = vld [vmem:[#allocation3 + $0xd0] sm:$0xff]
        %v5948 = vld [vmem:[#allocation3 + $0xd8] sm:$0xff]
        %v5949 = vld [vmem:[#allocation3 + $0xe0] sm:$0xff]
        %v5950 = vld [vmem:[#allocation3 + $0xe8] sm:$0xff]
        %v5951 = vld [vmem:[#allocation3 + $0xf0] sm:$0xff]
        %v5952 = vld [vmem:[#allocation3 + $0xf8] sm:$0xff]
        %v5953 = vld [vmem:[#allocation3 + $0x100] sm:$0xff]
        %v5954 = vld [vmem:[#allocation3 + $0x108] sm:$0xff]
        %v5955 = vld [vmem:[#allocation3 + $0x110] sm:$0xff]
        %v5956 = vld [vmem:[#allocation3 + $0x118] sm:$0xff]
        %v5957 = vld [vmem:[#allocation3 + $0x120] sm:$0xff]
        %v5958 = vld [vmem:[#allocation3 + $0x128] sm:$0xff]
        %v5959 = vld [vmem:[#allocation3 + $0x130] sm:$0xff]
        %v5960 = vld [vmem:[#allocation3 + $0x138] sm:$0xff]
        %v5961 = vld [vmem:[#allocation3 + $0x140] sm:$0xff]
        %v5962 = vld [vmem:[#allocation3 + $0x148] sm:$0xff]
        %v5963 = vld [vmem:[#allocation3 + $0x150] sm:$0xff]
        %v5964 = vld [vmem:[#allocation3 + $0x158] sm:$0xff]
        %v5965 = vld [vmem:[#allocation3 + $0x160] sm:$0xff]
        %v5966 = vld [vmem:[#allocation3 + $0x168] sm:$0xff]
        %v5967 = vld [vmem:[#allocation3 + $0x170] sm:$0xff]
        %v5968 = vld [vmem:[#allocation3 + $0x178] sm:$0xff]
        %v5969 = vld [vmem:[#allocation3 + $0x180] sm:$0xff]
        %v5970 = vld [vmem:[#allocation3 + $0x188] sm:$0xff]
        %v5971 = vld [vmem:[#allocation3 + $0x190] sm:$0xff]
        %v5972 = vld [vmem:[#allocation3 + $0x198] sm:$0xff]
        %v5973 = vld [vmem:[#allocation3 + $0x1a0] sm:$0xff]
        %v5974 = vld [vmem:[#allocation3 + $0x1a8] sm:$0xff]
        %v5975 = vld [vmem:[#allocation3 + $0x1b0] sm:$0xff]
        %v5976 = vld [vmem:[#allocation3 + $0x1b8] sm:$0xff]
        %v5977 = vld [vmem:[#allocation3 + $0x1c0] sm:$0xff]
        %v5978 = vld [vmem:[#allocation3 + $0x1c8] sm:$0xff]
        %v5979 = vld [vmem:[#allocation3 + $0x1d0] sm:$0xff]
        %v5980 = vld [vmem:[#allocation3 + $0x1d8] sm:$0xff]
        %v5981 = vld [vmem:[#allocation3 + $0x1e0] sm:$0xff]
        %v5982 = vld [vmem:[#allocation3 + $0x1e8] sm:$0xff]
        %v5983 = vld [vmem:[#allocation3 + $0x1f0] sm:$0xff]
        %v5984 = vld [vmem:[#allocation3 + $0x1f8] sm:$0xff]
        %v5985 = vld [vmem:[#allocation3 + $0x200] sm:$0xff]
        %v5986 = vld [vmem:[#allocation3 + $0x208] sm:$0xff]
        %s5987 = scalar_lea.vmem %s5, 48
        %v5988 = vld [vmem:[%s5987] sm:$0xff]
        %v5989 = vld [vmem:[%s5987 + $0x8] sm:$0xff]
        %v5990 = vld [vmem:[%s5987 + $0x10] sm:$0xf]
        %v5992 = vsel %vm2162, %v5927, 0
        %v5995 = vsel %vm2162, %v5928, 0
        %v5998 = vsel %vm2162, %v5929, 0
        %v6001 = vsel %vm2162, %v5930, 0
        %v6004 = vsel %vm2162, %v5931, 0
        %v6007 = vsel %vm2162, %v5932, 0
        %v6010 = vsel %vm2162, %v5933, 0
        %v6013 = vsel %vm2162, %v5934, 0
        %v6016 = vsel %vm2162, %v5935, 0
        %v6019 = vsel %vm2162, %v5936, 0
        %v6022 = vsel %vm2162, %v5937, 0
        %v6025 = vsel %vm2162, %v5938, 0
        %v6028 = vsel %vm2162, %v5939, 0
        %v6031 = vsel %vm2162, %v5940, 0
        %v6034 = vsel %vm2162, %v5941, 0
        %v6037 = vsel %vm2162, %v5942, 0
        %v6040 = vsel %vm2162, %v5943, 0
        %v6043 = vsel %vm2162, %v5944, 0
        %v6046 = vsel %vm2162, %v5945, 0
        %v6049 = vsel %vm2162, %v5946, 0
        %v6052 = vsel %vm2162, %v5947, 0
        %v6055 = vsel %vm2162, %v5948, 0
        %v6058 = vsel %vm2162, %v5949, 0
        %v6061 = vsel %vm2162, %v5950, 0
        %v6064 = vsel %vm2162, %v5951, 0
        %v6067 = vsel %vm2162, %v5952, 0
        %v6070 = vsel %vm2162, %v5953, 0
        %v6073 = vsel %vm2162, %v5954, 0
        %v6076 = vsel %vm2162, %v5955, 0
        %v6079 = vsel %vm2162, %v5956, 0
        %v6082 = vsel %vm2162, %v5957, 0
        %v6085 = vsel %vm2162, %v5958, 0
        %v6088 = vsel %vm2162, %v5959, 0
        %v6091 = vsel %vm2162, %v5960, 0
        %v6094 = vsel %vm2162, %v5961, 0
        %v6097 = vsel %vm2162, %v5962, 0
        %v6100 = vsel %vm2162, %v5963, 0
        %v6103 = vsel %vm2162, %v5964, 0
        %v6106 = vsel %vm2162, %v5965, 0
        %v6109 = vsel %vm2162, %v5966, 0
        %v6112 = vsel %vm2162, %v5967, 0
        %v6115 = vsel %vm2162, %v5968, 0
        %v6118 = vsel %vm2162, %v5969, 0
        %v6121 = vsel %vm2162, %v5970, 0
        %v6124 = vsel %vm2162, %v5971, 0
        %v6127 = vsel %vm2162, %v5972, 0
        %v6130 = vsel %vm2162, %v5973, 0
        %v6133 = vsel %vm2162, %v5974, 0
        %v6136 = vsel %vm2162, %v5975, 0
        %v6139 = vsel %vm2162, %v5976, 0
        %v6142 = vsel %vm2162, %v5977, 0
        %v6145 = vsel %vm2162, %v5978, 0
        %v6148 = vsel %vm2162, %v5979, 0
        %v6151 = vsel %vm2162, %v5980, 0
        %v6154 = vsel %vm2162, %v5981, 0
        %v6157 = vsel %vm2162, %v5982, 0
        %v6160 = vsel %vm2162, %v5983, 0
        %v6163 = vsel %vm2162, %v5984, 0
        %v6166 = vsel %vm2162, %v5985, 0
        %v6169 = vsel %vm2162, %v5986, 0
        %v6172 = vsel %vm1000, %v5990, 0
        %6174 = vmatprep.subr.mxu0 0.0
        %6175 = vmatpush1.msra.mxu0 %v5988
        %6176 = vmatprep.subr.mxu0 0.0
        %6177 = vmatpush1.msra.mxu0 %v5989
        %6178 = vmatprep.subr.mxu0 0.0
        %6179 = vmatpush1.msra.mxu0 %v6172
        %6180 = vmatprep.subr.mxu0 0.0
        %6181 = vmatpush1.msra.mxu0 0.0
        %6182 = vmatprep.subr.mxu0 0.0
        %6183 = vmatpush1.msra.mxu0 0.0
        %6184 = vmatprep.subr.mxu0 0.0
        %6185 = vmatpush1.msra.mxu0 0.0
        %6186 = vmatprep.subr.mxu0 0.0
        %6187 = vmatpush1.msra.mxu0 0.0
        %6188 = vmatprep.subr.mxu0 0.0
        %6189 = vmatpush1.msra.mxu0 0.0
        %6190 = vmatprep.subr.mxu0 0.0
        %6191 = vmatpush1.msra.mxu0 0.0
        %6192 = vmatprep.subr.mxu0 0.0
        %6193 = vmatpush1.msra.mxu0 0.0
        %6194 = vmatprep.subr.mxu0 0.0
        %6195 = vmatpush1.msra.mxu0 0.0
        %6196 = vmatprep.subr.mxu0 0.0
        %6197 = vmatpush1.msra.mxu0 0.0
        %6198 = vmatprep.subr.mxu0 0.0
        %6199 = vmatpush1.msra.mxu0 0.0
        %6200 = vmatprep.subr.mxu0 0.0
        %6201 = vmatpush1.msra.mxu0 0.0
        %6202 = vmatprep.subr.mxu0 0.0
        %6203 = vmatpush1.msra.mxu0 0.0
        %6204 = vmatprep.subr.mxu0 0.0
        %6205 = vmatpush1.msra.mxu0 0.0
        %6206 = vmatprep.subr.mxu0 0.0
        %6207 = vmatpush1.msra.mxu0 0.0
        %6208 = vmatprep.subr.mxu0 0.0
        %6209 = vmatpush1.msra.mxu0 0.0
        %6210 = vmatprep.subr.mxu0 0.0
        %6211 = vmatpush1.msra.mxu0 0.0
        %6212 = vmatprep.subr.mxu0 0.0
        %6213 = vmatpush1.msra.mxu0 0.0
        %6214 = vmatprep.subr.mxu0 0.0
        %6215 = vmatpush1.msra.mxu0 0.0
        %6216 = vmatprep.subr.mxu0 0.0
        %6217 = vmatpush1.msra.mxu0 0.0
        %6218 = vmatprep.subr.mxu0 0.0
        %6219 = vmatpush1.msra.mxu0 0.0
        %6220 = vmatprep.subr.mxu0 0.0
        %6221 = vmatpush1.msra.mxu0 0.0
        %6222 = vmatprep.subr.mxu0 0.0
        %6223 = vmatpush1.msra.mxu0 0.0
        %6224 = vmatprep.subr.mxu0 0.0
        %6225 = vmatpush1.msra.mxu0 0.0
        %6226 = vmatprep.subr.mxu0 0.0
        %6227 = vmatpush1.msra.mxu0 0.0
        %6228 = vmatprep.subr.mxu0 0.0
        %6229 = vmatpush1.msra.mxu0 0.0
        %6230 = vmatprep.subr.mxu0 0.0
        %6231 = vmatpush1.msra.mxu0 0.0
        %6232 = vmatprep.subr.mxu0 0.0
        %6233 = vmatpush1.msra.mxu0 0.0
        %6234 = vmatprep.subr.mxu0 0.0
        %6235 = vmatpush1.msra.mxu0 0.0
        %6236 = vmatprep.subr.mxu0 0.0
        %6237 = vmatpush1.msra.mxu0 0.0
        %6238 = vmatprep.mubr.f32.mxu0 0.0
        %6239 = vmatmul.mubr.f32.gmra.mrb[0].mxu0 %v5992
        %v6240 = vpop.f32.mrb[0].mxu0
        %v6241 = vadd.f32 0.0, %v6240
        %v6242 = vpop.f32.mrb[0].mxu0
        %6243 = vmatprep.mubr.f32.mxu0 0.0
        %6244 = vmatmul.mubr.f32.gmra.mrb[0].mxu0 %v5995
        %v6245 = vpop.f32.mrb[0].mxu0
        %v6246 = vadd.f32 0.0, %v6245
        %v6247 = vpop.f32.mrb[0].mxu0
        %6248 = vmatprep.mubr.f32.mxu0 0.0
        %6249 = vmatmul.mubr.f32.gmra.mrb[0].mxu0 %v5998
        %v6250 = vpop.f32.mrb[0].mxu0
        %v6251 = vadd.f32 0.0, %v6250
        %v6252 = vpop.f32.mrb[0].mxu0
        %6253 = vmatprep.mubr.f32.mxu0 0.0
        %6254 = vmatmul.mubr.f32.gmra.mrb[0].mxu0 %v6001
        %v6255 = vpop.f32.mrb[0].mxu0
        %v6256 = vadd.f32 0.0, %v6255
        %v6257 = vpop.f32.mrb[0].mxu0
        %6258 = vmatprep.mubr.f32.mxu0 0.0
        %6259 = vmatmul.mubr.f32.gmra.mrb[0].mxu0 %v6004
        %v6260 = vpop.f32.mrb[0].mxu0
        %v6261 = vadd.f32 0.0, %v6260
        %v6262 = vpop.f32.mrb[0].mxu0
        %6263 = vmatprep.mubr.f32.mxu0 0.0
        %6264 = vmatmul.mubr.f32.gmra.mrb[0].mxu0 %v6007
        %v6265 = vpop.f32.mrb[0].mxu0
        %v6266 = vadd.f32 0.0, %v6265
        %v6267 = vpop.f32.mrb[0].mxu0
        %6268 = vmatprep.mubr.f32.mxu0 0.0
        %6269 = vmatmul.mubr.f32.gmra.mrb[0].mxu0 %v6010
        %v6270 = vpop.f32.mrb[0].mxu0
        %v6271 = vadd.f32 0.0, %v6270
        %v6272 = vpop.f32.mrb[0].mxu0
        %6273 = vmatprep.mubr.f32.mxu0 0.0
        %6274 = vmatmul.mubr.f32.gmra.mrb[0].mxu0 %v6013
        %v6275 = vpop.f32.mrb[0].mxu0
        %v6276 = vadd.f32 0.0, %v6275
        %v6277 = vpop.f32.mrb[0].mxu0
        %6278 = vmatprep.mubr.f32.mxu0 0.0
        %6279 = vmatmul.mubr.f32.gmra.mrb[0].mxu0 %v6016
        %v6280 = vpop.f32.mrb[0].mxu0
        %v6281 = vadd.f32 0.0, %v6280
        %v6282 = vpop.f32.mrb[0].mxu0
        %6283 = vmatprep.mubr.f32.mxu0 0.0
        %6284 = vmatmul.mubr.f32.gmra.mrb[0].mxu0 %v6019
        %v6285 = vpop.f32.mrb[0].mxu0
        %v6286 = vadd.f32 0.0, %v6285
        %v6287 = vpop.f32.mrb[0].mxu0
        %6288 = vmatprep.mubr.f32.mxu0 0.0
        %6289 = vmatmul.mubr.f32.gmra.mrb[0].mxu0 %v6022
        %v6290 = vpop.f32.mrb[0].mxu0
        %v6291 = vadd.f32 0.0, %v6290
        %v6292 = vpop.f32.mrb[0].mxu0
        %6293 = vmatprep.mubr.f32.mxu0 0.0
        %6294 = vmatmul.mubr.f32.gmra.mrb[0].mxu0 %v6025
        %v6295 = vpop.f32.mrb[0].mxu0
        %v6296 = vadd.f32 0.0, %v6295
        %v6297 = vpop.f32.mrb[0].mxu0
        %6298 = vmatprep.mubr.f32.mxu0 0.0
        %6299 = vmatmul.mubr.f32.gmra.mrb[0].mxu0 %v6028
        %v6300 = vpop.f32.mrb[0].mxu0
        %v6301 = vadd.f32 0.0, %v6300
        %v6302 = vpop.f32.mrb[0].mxu0
        %6303 = vmatprep.mubr.f32.mxu0 0.0
        %6304 = vmatmul.mubr.f32.gmra.mrb[0].mxu0 %v6031
        %v6305 = vpop.f32.mrb[0].mxu0
        %v6306 = vadd.f32 0.0, %v6305
        %v6307 = vpop.f32.mrb[0].mxu0
        %6308 = vmatprep.mubr.f32.mxu0 0.0
        %6309 = vmatmul.mubr.f32.gmra.mrb[0].mxu0 %v6034
        %v6310 = vpop.f32.mrb[0].mxu0
        %v6311 = vadd.f32 0.0, %v6310
        %v6312 = vpop.f32.mrb[0].mxu0
        %6313 = vmatprep.mubr.f32.mxu0 0.0
        %6314 = vmatmul.mubr.f32.gmra.mrb[0].mxu0 %v6037
        %v6315 = vpop.f32.mrb[0].mxu0
        %v6316 = vadd.f32 0.0, %v6315
        %v6317 = vpop.f32.mrb[0].mxu0
        %6318 = vmatprep.mubr.f32.mxu0 0.0
        %6319 = vmatmul.mubr.f32.gmra.mrb[0].mxu0 %v6040
        %v6320 = vpop.f32.mrb[0].mxu0
        %v6321 = vadd.f32 0.0, %v6320
        %v6322 = vpop.f32.mrb[0].mxu0
        %6323 = vmatprep.mubr.f32.mxu0 0.0
        %6324 = vmatmul.mubr.f32.gmra.mrb[0].mxu0 %v6043
        %v6325 = vpop.f32.mrb[0].mxu0
        %v6326 = vadd.f32 0.0, %v6325
        %v6327 = vpop.f32.mrb[0].mxu0
        %6328 = vmatprep.mubr.f32.mxu0 0.0
        %6329 = vmatmul.mubr.f32.gmra.mrb[0].mxu0 %v6046
        %v6330 = vpop.f32.mrb[0].mxu0
        %v6331 = vadd.f32 0.0, %v6330
        %v6332 = vpop.f32.mrb[0].mxu0
        %6333 = vmatprep.mubr.f32.mxu0 0.0
        %6334 = vmatmul.mubr.f32.gmra.mrb[0].mxu0 %v6049
        %v6335 = vpop.f32.mrb[0].mxu0
        %v6336 = vadd.f32 0.0, %v6335
        %v6337 = vpop.f32.mrb[0].mxu0
        %6338 = vmatprep.mubr.f32.mxu0 0.0
        %6339 = vmatmul.mubr.f32.gmra.mrb[0].mxu0 %v6052
        %v6340 = vpop.f32.mrb[0].mxu0
        %v6341 = vadd.f32 0.0, %v6340
        %v6342 = vpop.f32.mrb[0].mxu0
        %6343 = vmatprep.mubr.f32.mxu0 0.0
        %6344 = vmatmul.mubr.f32.gmra.mrb[0].mxu0 %v6055
        %v6345 = vpop.f32.mrb[0].mxu0
        %v6346 = vadd.f32 0.0, %v6345
        %v6347 = vpop.f32.mrb[0].mxu0
        %6348 = vmatprep.mubr.f32.mxu0 0.0
        %6349 = vmatmul.mubr.f32.gmra.mrb[0].mxu0 %v6058
        %v6350 = vpop.f32.mrb[0].mxu0
        %v6351 = vadd.f32 0.0, %v6350
        %v6352 = vpop.f32.mrb[0].mxu0
        %6353 = vmatprep.mubr.f32.mxu0 0.0
        %6354 = vmatmul.mubr.f32.gmra.mrb[0].mxu0 %v6061
        %v6355 = vpop.f32.mrb[0].mxu0
        %v6356 = vadd.f32 0.0, %v6355
        %v6357 = vpop.f32.mrb[0].mxu0
        %6358 = vmatprep.mubr.f32.mxu0 0.0
        %6359 = vmatmul.mubr.f32.gmra.mrb[0].mxu0 %v6064
        %v6360 = vpop.f32.mrb[0].mxu0
        %v6361 = vadd.f32 0.0, %v6360
        %v6362 = vpop.f32.mrb[0].mxu0
        %6363 = vmatprep.mubr.f32.mxu0 0.0
        %6364 = vmatmul.mubr.f32.gmra.mrb[0].mxu0 %v6067
        %v6365 = vpop.f32.mrb[0].mxu0
        %v6366 = vadd.f32 0.0, %v6365
        %v6367 = vpop.f32.mrb[0].mxu0
        %6368 = vmatprep.mubr.f32.mxu0 0.0
        %6369 = vmatmul.mubr.f32.gmra.mrb[0].mxu0 %v6070
        %v6370 = vpop.f32.mrb[0].mxu0
        %v6371 = vadd.f32 0.0, %v6370
        %v6372 = vpop.f32.mrb[0].mxu0
        %6373 = vmatprep.mubr.f32.mxu0 0.0
        %6374 = vmatmul.mubr.f32.gmra.mrb[0].mxu0 %v6073
        %v6375 = vpop.f32.mrb[0].mxu0
        %v6376 = vadd.f32 0.0, %v6375
        %v6377 = vpop.f32.mrb[0].mxu0
        %6378 = vmatprep.mubr.f32.mxu0 0.0
        %6379 = vmatmul.mubr.f32.gmra.mrb[0].mxu0 %v6076
        %v6380 = vpop.f32.mrb[0].mxu0
        %v6381 = vadd.f32 0.0, %v6380
        %v6382 = vpop.f32.mrb[0].mxu0
        %6383 = vmatprep.mubr.f32.mxu0 0.0
        %6384 = vmatmul.mubr.f32.gmra.mrb[0].mxu0 %v6079
        %v6385 = vpop.f32.mrb[0].mxu0
        %v6386 = vadd.f32 0.0, %v6385
        %v6387 = vpop.f32.mrb[0].mxu0
        %6388 = vmatprep.mubr.f32.mxu0 0.0
        %6389 = vmatmul.mubr.f32.gmra.mrb[0].mxu0 %v6082
        %v6390 = vpop.f32.mrb[0].mxu0
        %v6391 = vadd.f32 0.0, %v6390
        %v6392 = vpop.f32.mrb[0].mxu0
        %6393 = vmatprep.mubr.f32.mxu0 0.0
        %6394 = vmatmul.mubr.f32.gmra.mrb[0].mxu0 %v6085
        %v6395 = vpop.f32.mrb[0].mxu0
        %v6396 = vadd.f32 0.0, %v6395
        %v6397 = vpop.f32.mrb[0].mxu0
        %6398 = vmatprep.mubr.f32.mxu0 0.0
        %6399 = vmatmul.mubr.f32.gmra.mrb[0].mxu0 %v6088
        %v6400 = vpop.f32.mrb[0].mxu0
        %v6401 = vadd.f32 0.0, %v6400
        %v6402 = vpop.f32.mrb[0].mxu0
        %6403 = vmatprep.mubr.f32.mxu0 0.0
        %6404 = vmatmul.mubr.f32.gmra.mrb[0].mxu0 %v6091
        %v6405 = vpop.f32.mrb[0].mxu0
        %v6406 = vadd.f32 0.0, %v6405
        %v6407 = vpop.f32.mrb[0].mxu0
        %6408 = vmatprep.mubr.f32.mxu0 0.0
        %6409 = vmatmul.mubr.f32.gmra.mrb[0].mxu0 %v6094
        %v6410 = vpop.f32.mrb[0].mxu0
        %v6411 = vadd.f32 0.0, %v6410
        %v6412 = vpop.f32.mrb[0].mxu0
        %6413 = vmatprep.mubr.f32.mxu0 0.0
        %6414 = vmatmul.mubr.f32.gmra.mrb[0].mxu0 %v6097
        %v6415 = vpop.f32.mrb[0].mxu0
        %v6416 = vadd.f32 0.0, %v6415
        %v6417 = vpop.f32.mrb[0].mxu0
        %6418 = vmatprep.mubr.f32.mxu0 0.0
        %6419 = vmatmul.mubr.f32.gmra.mrb[0].mxu0 %v6100
        %v6420 = vpop.f32.mrb[0].mxu0
        %v6421 = vadd.f32 0.0, %v6420
        %v6422 = vpop.f32.mrb[0].mxu0
        %6423 = vmatprep.mubr.f32.mxu0 0.0
        %6424 = vmatmul.mubr.f32.gmra.mrb[0].mxu0 %v6103
        %v6425 = vpop.f32.mrb[0].mxu0
        %v6426 = vadd.f32 0.0, %v6425
        %v6427 = vpop.f32.mrb[0].mxu0
        %6428 = vmatprep.mubr.f32.mxu0 0.0
        %6429 = vmatmul.mubr.f32.gmra.mrb[0].mxu0 %v6106
        %v6430 = vpop.f32.mrb[0].mxu0
        %v6431 = vadd.f32 0.0, %v6430
        %v6432 = vpop.f32.mrb[0].mxu0
        %6433 = vmatprep.mubr.f32.mxu0 0.0
        %6434 = vmatmul.mubr.f32.gmra.mrb[0].mxu0 %v6109
        %v6435 = vpop.f32.mrb[0].mxu0
        %v6436 = vadd.f32 0.0, %v6435
        %v6437 = vpop.f32.mrb[0].mxu0
        %6438 = vmatprep.mubr.f32.mxu0 0.0
        %6439 = vmatmul.mubr.f32.gmra.mrb[0].mxu0 %v6112
        %v6440 = vpop.f32.mrb[0].mxu0
        %v6441 = vadd.f32 0.0, %v6440
        %v6442 = vpop.f32.mrb[0].mxu0
        %6443 = vmatprep.mubr.f32.mxu0 0.0
        %6444 = vmatmul.mubr.f32.gmra.mrb[0].mxu0 %v6115
        %v6445 = vpop.f32.mrb[0].mxu0
        %v6446 = vadd.f32 0.0, %v6445
        %v6447 = vpop.f32.mrb[0].mxu0
        %6448 = vmatprep.mubr.f32.mxu0 0.0
        %6449 = vmatmul.mubr.f32.gmra.mrb[0].mxu0 %v6118
        %v6450 = vpop.f32.mrb[0].mxu0
        %v6451 = vadd.f32 0.0, %v6450
        %v6452 = vpop.f32.mrb[0].mxu0
        %6453 = vmatprep.mubr.f32.mxu0 0.0
        %6454 = vmatmul.mubr.f32.gmra.mrb[0].mxu0 %v6121
        %v6455 = vpop.f32.mrb[0].mxu0
        %v6456 = vadd.f32 0.0, %v6455
        %v6457 = vpop.f32.mrb[0].mxu0
        %6458 = vmatprep.mubr.f32.mxu0 0.0
        %6459 = vmatmul.mubr.f32.gmra.mrb[0].mxu0 %v6124
        %v6460 = vpop.f32.mrb[0].mxu0
        %v6461 = vadd.f32 0.0, %v6460
        %v6462 = vpop.f32.mrb[0].mxu0
        %6463 = vmatprep.mubr.f32.mxu0 0.0
        %6464 = vmatmul.mubr.f32.gmra.mrb[0].mxu0 %v6127
        %v6465 = vpop.f32.mrb[0].mxu0
        %v6466 = vadd.f32 0.0, %v6465
        %v6467 = vpop.f32.mrb[0].mxu0
        %6468 = vmatprep.mubr.f32.mxu0 0.0
        %6469 = vmatmul.mubr.f32.gmra.mrb[0].mxu0 %v6130
        %v6470 = vpop.f32.mrb[0].mxu0
        %v6471 = vadd.f32 0.0, %v6470
        %v6472 = vpop.f32.mrb[0].mxu0
        %6473 = vmatprep.mubr.f32.mxu0 0.0
        %6474 = vmatmul.mubr.f32.gmra.mrb[0].mxu0 %v6133
        %v6475 = vpop.f32.mrb[0].mxu0
        %v6476 = vadd.f32 0.0, %v6475
        %v6477 = vpop.f32.mrb[0].mxu0
        %6478 = vmatprep.mubr.f32.mxu0 0.0
        %6479 = vmatmul.mubr.f32.gmra.mrb[0].mxu0 %v6136
        %v6480 = vpop.f32.mrb[0].mxu0
        %v6481 = vadd.f32 0.0, %v6480
        %v6482 = vpop.f32.mrb[0].mxu0
        %6483 = vmatprep.mubr.f32.mxu0 0.0
        %6484 = vmatmul.mubr.f32.gmra.mrb[0].mxu0 %v6139
        %v6485 = vpop.f32.mrb[0].mxu0
        %v6486 = vadd.f32 0.0, %v6485
        %v6487 = vpop.f32.mrb[0].mxu0
        %6488 = vmatprep.mubr.f32.mxu0 0.0
        %6489 = vmatmul.mubr.f32.gmra.mrb[0].mxu0 %v6142
        %v6490 = vpop.f32.mrb[0].mxu0
        %v6491 = vadd.f32 0.0, %v6490
        %v6492 = vpop.f32.mrb[0].mxu0
        %6493 = vmatprep.mubr.f32.mxu0 0.0
        %6494 = vmatmul.mubr.f32.gmra.mrb[0].mxu0 %v6145
        %v6495 = vpop.f32.mrb[0].mxu0
        %v6496 = vadd.f32 0.0, %v6495
        %v6497 = vpop.f32.mrb[0].mxu0
        %6498 = vmatprep.mubr.f32.mxu0 0.0
        %6499 = vmatmul.mubr.f32.gmra.mrb[0].mxu0 %v6148
        %v6500 = vpop.f32.mrb[0].mxu0
        %v6501 = vadd.f32 0.0, %v6500
        %v6502 = vpop.f32.mrb[0].mxu0
        %6503 = vmatprep.mubr.f32.mxu0 0.0
        %6504 = vmatmul.mubr.f32.gmra.mrb[0].mxu0 %v6151
        %v6505 = vpop.f32.mrb[0].mxu0
        %v6506 = vadd.f32 0.0, %v6505
        %v6507 = vpop.f32.mrb[0].mxu0
        %6508 = vmatprep.mubr.f32.mxu0 0.0
        %6509 = vmatmul.mubr.f32.gmra.mrb[0].mxu0 %v6154
        %v6510 = vpop.f32.mrb[0].mxu0
        %v6511 = vadd.f32 0.0, %v6510
        %v6512 = vpop.f32.mrb[0].mxu0
        %6513 = vmatprep.mubr.f32.mxu0 0.0
        %6514 = vmatmul.mubr.f32.gmra.mrb[0].mxu0 %v6157
        %v6515 = vpop.f32.mrb[0].mxu0
        %v6516 = vadd.f32 0.0, %v6515
        %v6517 = vpop.f32.mrb[0].mxu0
        %6518 = vmatprep.mubr.f32.mxu0 0.0
        %6519 = vmatmul.mubr.f32.gmra.mrb[0].mxu0 %v6160
        %v6520 = vpop.f32.mrb[0].mxu0
        %v6521 = vadd.f32 0.0, %v6520
        %v6522 = vpop.f32.mrb[0].mxu0
        %6523 = vmatprep.mubr.f32.mxu0 0.0
        %6524 = vmatmul.mubr.f32.gmra.mrb[0].mxu0 %v6163
        %v6525 = vpop.f32.mrb[0].mxu0
        %v6526 = vadd.f32 0.0, %v6525
        %v6527 = vpop.f32.mrb[0].mxu0
        %6528 = vmatprep.mubr.f32.mxu0 0.0
        %6529 = vmatmul.mubr.f32.gmra.mrb[0].mxu0 %v6166
        %v6530 = vpop.f32.mrb[0].mxu0
        %v6531 = vadd.f32 0.0, %v6530
        %v6532 = vpop.f32.mrb[0].mxu0
        %6533 = vmatprep.mubr.f32.mxu0 0.0
        %6534 = vmatmul.mubr.f32.gmra.mrb[0].mxu0 %v6169
        %v6535 = vpop.f32.mrb[0].mxu0
        %v6536 = vadd.f32 0.0, %v6535
        %v6537 = vpop.f32.mrb[0].mxu0
        %6538 = vdwg.mxu0
        %v6539 = vadd.f32 %v5629, %v6241
        %v6540 = vadd.f32 %v5634, %v6246
        %v6541 = vadd.f32 %v5639, %v6251
        %v6542 = vadd.f32 %v5644, %v6256
        %v6543 = vadd.f32 %v5649, %v6261
        %v6544 = vadd.f32 %v5654, %v6266
        %v6545 = vadd.f32 %v5659, %v6271
        %v6546 = vadd.f32 %v5664, %v6276
        %v6547 = vadd.f32 %v5669, %v6281
        %v6548 = vadd.f32 %v5674, %v6286
        %v6549 = vadd.f32 %v5679, %v6291
        %v6550 = vadd.f32 %v5684, %v6296
        %v6551 = vadd.f32 %v5689, %v6301
        %v6552 = vadd.f32 %v5694, %v6306
        %v6553 = vadd.f32 %v5699, %v6311
        %v6554 = vadd.f32 %v5704, %v6316
        %v6555 = vadd.f32 %v5709, %v6321
        %v6556 = vadd.f32 %v5714, %v6326
        %v6557 = vadd.f32 %v5719, %v6331
        %v6558 = vadd.f32 %v5724, %v6336
        %v6559 = vadd.f32 %v5729, %v6341
        %v6560 = vadd.f32 %v5734, %v6346
        %v6561 = vadd.f32 %v5739, %v6351
        %v6562 = vadd.f32 %v5744, %v6356
        %v6563 = vadd.f32 %v5749, %v6361
        %v6564 = vadd.f32 %v5754, %v6366
        %v6565 = vadd.f32 %v5759, %v6371
        %v6566 = vadd.f32 %v5764, %v6376
        %v6567 = vadd.f32 %v5769, %v6381
        %v6568 = vadd.f32 %v5774, %v6386
        %v6569 = vadd.f32 %v5779, %v6391
        %v6570 = vadd.f32 %v5784, %v6396
        %v6571 = vadd.f32 %v5789, %v6401
        %v6572 = vadd.f32 %v5794, %v6406
        %v6573 = vadd.f32 %v5799, %v6411
        %v6574 = vadd.f32 %v5804, %v6416
        %v6575 = vadd.f32 %v5809, %v6421
        %v6576 = vadd.f32 %v5814, %v6426
        %v6577 = vadd.f32 %v5819, %v6431
        %v6578 = vadd.f32 %v5824, %v6436
        %v6579 = vadd.f32 %v5829, %v6441
        %v6580 = vadd.f32 %v5834, %v6446
        %v6581 = vadd.f32 %v5839, %v6451
        %v6582 = vadd.f32 %v5844, %v6456
        %v6583 = vadd.f32 %v5849, %v6461
        %v6584 = vadd.f32 %v5854, %v6466
        %v6585 = vadd.f32 %v5859, %v6471
        %v6586 = vadd.f32 %v5864, %v6476
        %v6587 = vadd.f32 %v5869, %v6481
        %v6588 = vadd.f32 %v5874, %v6486
        %v6589 = vadd.f32 %v5879, %v6491
        %v6590 = vadd.f32 %v5884, %v6496
        %v6591 = vadd.f32 %v5889, %v6501
        %v6592 = vadd.f32 %v5894, %v6506
        %v6593 = vadd.f32 %v5899, %v6511
        %v6594 = vadd.f32 %v5904, %v6516
        %v6595 = vadd.f32 %v5909, %v6521
        %v6596 = vadd.f32 %v5914, %v6526
        %v6597 = vadd.f32 %v5919, %v6531
        %v6598 = vadd.f32 %v5924, %v6536
        %v6599 = vld [vmem:[#allocation3 + $0x48] sm:$0xff]
        %v6600 = vld [vmem:[#allocation3 + $0x50] sm:$0xff]
        %v6601 = vld [vmem:[#allocation3 + $0x58] sm:$0xff]
        %v6602 = vld [vmem:[#allocation3 + $0x60] sm:$0xff]
        %v6603 = vld [vmem:[#allocation3 + $0x68] sm:$0xff]
        %v6604 = vld [vmem:[#allocation3 + $0x70] sm:$0xff]
        %v6605 = vld [vmem:[#allocation3 + $0x78] sm:$0xff]
        %v6606 = vld [vmem:[#allocation3 + $0x80] sm:$0xff]
        %v6607 = vld [vmem:[#allocation3 + $0x88] sm:$0xff]
        %v6608 = vld [vmem:[#allocation3 + $0x90] sm:$0xff]
        %v6609 = vld [vmem:[#allocation3 + $0x98] sm:$0xff]
        %v6610 = vld [vmem:[#allocation3 + $0xa0] sm:$0xff]
        %v6611 = vld [vmem:[#allocation3 + $0xa8] sm:$0xff]
        %v6612 = vld [vmem:[#allocation3 + $0xb0] sm:$0xff]
        %v6613 = vld [vmem:[#allocation3 + $0xb8] sm:$0xff]
        %v6614 = vld [vmem:[#allocation3 + $0xc0] sm:$0xff]
        %v6615 = vld [vmem:[#allocation3 + $0xc8] sm:$0xff]
        %v6616 = vld [vmem:[#allocation3 + $0xd0] sm:$0xff]
        %v6617 = vld [vmem:[#allocation3 + $0xd8] sm:$0xff]
        %v6618 = vld [vmem:[#allocation3 + $0xe0] sm:$0xff]
        %v6619 = vld [vmem:[#allocation3 + $0xe8] sm:$0xff]
        %v6620 = vld [vmem:[#allocation3 + $0xf0] sm:$0xff]
        %v6621 = vld [vmem:[#allocation3 + $0xf8] sm:$0xff]
        %v6622 = vld [vmem:[#allocation3 + $0x100] sm:$0xff]
        %v6623 = vld [vmem:[#allocation3 + $0x108] sm:$0xff]
        %v6624 = vld [vmem:[#allocation3 + $0x110] sm:$0xff]
        %v6625 = vld [vmem:[#allocation3 + $0x118] sm:$0xff]
        %v6626 = vld [vmem:[#allocation3 + $0x120] sm:$0xff]
        %v6627 = vld [vmem:[#allocation3 + $0x128] sm:$0xff]
        %v6628 = vld [vmem:[#allocation3 + $0x130] sm:$0xff]
        %v6629 = vld [vmem:[#allocation3 + $0x138] sm:$0xff]
        %v6630 = vld [vmem:[#allocation3 + $0x140] sm:$0xff]
        %v6631 = vld [vmem:[#allocation3 + $0x148] sm:$0xff]
        %v6632 = vld [vmem:[#allocation3 + $0x150] sm:$0xff]
        %v6633 = vld [vmem:[#allocation3 + $0x158] sm:$0xff]
        %v6634 = vld [vmem:[#allocation3 + $0x160] sm:$0xff]
        %v6635 = vld [vmem:[#allocation3 + $0x168] sm:$0xff]
        %v6636 = vld [vmem:[#allocation3 + $0x170] sm:$0xff]
        %v6637 = vld [vmem:[#allocation3 + $0x178] sm:$0xff]
        %v6638 = vld [vmem:[#allocation3 + $0x180] sm:$0xff]
        %v6639 = vld [vmem:[#allocation3 + $0x188] sm:$0xff]
        %v6640 = vld [vmem:[#allocation3 + $0x190] sm:$0xff]
        %v6641 = vld [vmem:[#allocation3 + $0x198] sm:$0xff]
        %v6642 = vld [vmem:[#allocation3 + $0x1a0] sm:$0xff]
        %v6643 = vld [vmem:[#allocation3 + $0x1a8] sm:$0xff]
        %v6644 = vld [vmem:[#allocation3 + $0x1b0] sm:$0xff]
        %v6645 = vld [vmem:[#allocation3 + $0x1b8] sm:$0xff]
        %v6646 = vld [vmem:[#allocation3 + $0x1c0] sm:$0xff]
        %v6647 = vld [vmem:[#allocation3 + $0x1c8] sm:$0xff]
        %v6648 = vld [vmem:[#allocation3 + $0x1d0] sm:$0xff]
        %v6649 = vld [vmem:[#allocation3 + $0x1d8] sm:$0xff]
        %v6650 = vld [vmem:[#allocation3 + $0x1e0] sm:$0xff]
        %v6651 = vld [vmem:[#allocation3 + $0x1e8] sm:$0xff]
        %v6652 = vld [vmem:[#allocation3 + $0x1f0] sm:$0xff]
        %v6653 = vld [vmem:[#allocation3 + $0x1f8] sm:$0xff]
        %v6654 = vld [vmem:[#allocation3 + $0x200] sm:$0xff]
        %v6655 = vld [vmem:[#allocation3 + $0x208] sm:$0xff]
        %v6656 = vld [vmem:[#allocation3 + $0x210] sm:$0xff]
        %v6657 = vld [vmem:[#allocation3 + $0x218] sm:$0xff]
        %v6658 = vld [vmem:[#allocation3 + $0x220] sm:$0xff]
        %s6659 = scalar_lea.vmem %s5, 72
        %v6660 = vld [vmem:[%s6659] sm:$0xff]
        %v6661 = vld [vmem:[%s6659 + $0x8] sm:$0xff]
        %v6662 = vld [vmem:[%s6659 + $0x10] sm:$0xf]
        %v6664 = vsel %vm2162, %v6599, 0
        %v6667 = vsel %vm2162, %v6600, 0
        %v6670 = vsel %vm2162, %v6601, 0
        %v6673 = vsel %vm2162, %v6602, 0
        %v6676 = vsel %vm2162, %v6603, 0
        %v6679 = vsel %vm2162, %v6604, 0
        %v6682 = vsel %vm2162, %v6605, 0
        %v6685 = vsel %vm2162, %v6606, 0
        %v6688 = vsel %vm2162, %v6607, 0
        %v6691 = vsel %vm2162, %v6608, 0
        %v6694 = vsel %vm2162, %v6609, 0
        %v6697 = vsel %vm2162, %v6610, 0
        %v6700 = vsel %vm2162, %v6611, 0
        %v6703 = vsel %vm2162, %v6612, 0
        %v6706 = vsel %vm2162, %v6613, 0
        %v6709 = vsel %vm2162, %v6614, 0
        %v6712 = vsel %vm2162, %v6615, 0
        %v6715 = vsel %vm2162, %v6616, 0
        %v6718 = vsel %vm2162, %v6617, 0
        %v6721 = vsel %vm2162, %v6618, 0
        %v6724 = vsel %vm2162, %v6619, 0
        %v6727 = vsel %vm2162, %v6620, 0
        %v6730 = vsel %vm2162, %v6621, 0
        %v6733 = vsel %vm2162, %v6622, 0
        %v6736 = vsel %vm2162, %v6623, 0
        %v6739 = vsel %vm2162, %v6624, 0
        %v6742 = vsel %vm2162, %v6625, 0
        %v6745 = vsel %vm2162, %v6626, 0
        %v6748 = vsel %vm2162, %v6627, 0
        %v6751 = vsel %vm2162, %v6628, 0
        %v6754 = vsel %vm2162, %v6629, 0
        %v6757 = vsel %vm2162, %v6630, 0
        %v6760 = vsel %vm2162, %v6631, 0
        %v6763 = vsel %vm2162, %v6632, 0
        %v6766 = vsel %vm2162, %v6633, 0
        %v6769 = vsel %vm2162, %v6634, 0
        %v6772 = vsel %vm2162, %v6635, 0
        %v6775 = vsel %vm2162, %v6636, 0
        %v6778 = vsel %vm2162, %v6637, 0
        %v6781 = vsel %vm2162, %v6638, 0
        %v6784 = vsel %vm2162, %v6639, 0
        %v6787 = vsel %vm2162, %v6640, 0
        %v6790 = vsel %vm2162, %v6641, 0
        %v6793 = vsel %vm2162, %v6642, 0
        %v6796 = vsel %vm2162, %v6643, 0
        %v6799 = vsel %vm2162, %v6644, 0
        %v6802 = vsel %vm2162, %v6645, 0
        %v6805 = vsel %vm2162, %v6646, 0
        %v6808 = vsel %vm2162, %v6647, 0
        %v6811 = vsel %vm2162, %v6648, 0
        %v6814 = vsel %vm2162, %v6649, 0
        %v6817 = vsel %vm2162, %v6650, 0
        %v6820 = vsel %vm2162, %v6651, 0
        %v6823 = vsel %vm2162, %v6652, 0
        %v6826 = vsel %vm2162, %v6653, 0
        %v6829 = vsel %vm2162, %v6654, 0
        %v6832 = vsel %vm2162, %v6655, 0
        %v6835 = vsel %vm2162, %v6656, 0
        %v6838 = vsel %vm2162, %v6657, 0
        %v6841 = vsel %vm2162, %v6658, 0
        %v6844 = vsel %vm1000, %v6662, 0
        %6846 = vmatprep.subr.mxu0 0.0
        %6847 = vmatpush1.msra.mxu0 %v6660
        %6848 = vmatprep.subr.mxu0 0.0
        %6849 = vmatpush1.msra.mxu0 %v6661
        %6850 = vmatprep.subr.mxu0 0.0
        %6851 = vmatpush1.msra.mxu0 %v6844
        %6852 = vmatprep.subr.mxu0 0.0
        %6853 = vmatpush1.msra.mxu0 0.0
        %6854 = vmatprep.subr.mxu0 0.0
        %6855 = vmatpush1.msra.mxu0 0.0
        %6856 = vmatprep.subr.mxu0 0.0
        %6857 = vmatpush1.msra.mxu0 0.0
        %6858 = vmatprep.subr.mxu0 0.0
        %6859 = vmatpush1.msra.mxu0 0.0
        %6860 = vmatprep.subr.mxu0 0.0
        %6861 = vmatpush1.msra.mxu0 0.0
        %6862 = vmatprep.subr.mxu0 0.0
        %6863 = vmatpush1.msra.mxu0 0.0
        %6864 = vmatprep.subr.mxu0 0.0
        %6865 = vmatpush1.msra.mxu0 0.0
        %6866 = vmatprep.subr.mxu0 0.0
        %6867 = vmatpush1.msra.mxu0 0.0
        %6868 = vmatprep.subr.mxu0 0.0
        %6869 = vmatpush1.msra.mxu0 0.0
        %6870 = vmatprep.subr.mxu0 0.0
        %6871 = vmatpush1.msra.mxu0 0.0
        %6872 = vmatprep.subr.mxu0 0.0
        %6873 = vmatpush1.msra.mxu0 0.0
        %6874 = vmatprep.subr.mxu0 0.0
        %6875 = vmatpush1.msra.mxu0 0.0
        %6876 = vmatprep.subr.mxu0 0.0
        %6877 = vmatpush1.msra.mxu0 0.0
        %6878 = vmatprep.subr.mxu0 0.0
        %6879 = vmatpush1.msra.mxu0 0.0
        %6880 = vmatprep.subr.mxu0 0.0
        %6881 = vmatpush1.msra.mxu0 0.0
        %6882 = vmatprep.subr.mxu0 0.0
        %6883 = vmatpush1.msra.mxu0 0.0
        %6884 = vmatprep.subr.mxu0 0.0
        %6885 = vmatpush1.msra.mxu0 0.0
        %6886 = vmatprep.subr.mxu0 0.0
        %6887 = vmatpush1.msra.mxu0 0.0
        %6888 = vmatprep.subr.mxu0 0.0
        %6889 = vmatpush1.msra.mxu0 0.0
        %6890 = vmatprep.subr.mxu0 0.0
        %6891 = vmatpush1.msra.mxu0 0.0
        %6892 = vmatprep.subr.mxu0 0.0
        %6893 = vmatpush1.msra.mxu0 0.0
        %6894 = vmatprep.subr.mxu0 0.0
        %6895 = vmatpush1.msra.mxu0 0.0
        %6896 = vmatprep.subr.mxu0 0.0
        %6897 = vmatpush1.msra.mxu0 0.0
        %6898 = vmatprep.subr.mxu0 0.0
        %6899 = vmatpush1.msra.mxu0 0.0
        %6900 = vmatprep.subr.mxu0 0.0
        %6901 = vmatpush1.msra.mxu0 0.0
        %6902 = vmatprep.subr.mxu0 0.0
        %6903 = vmatpush1.msra.mxu0 0.0
        %6904 = vmatprep.subr.mxu0 0.0
        %6905 = vmatpush1.msra.mxu0 0.0
        %6906 = vmatprep.subr.mxu0 0.0
        %6907 = vmatpush1.msra.mxu0 0.0
        %6908 = vmatprep.subr.mxu0 0.0
        %6909 = vmatpush1.msra.mxu0 0.0
        %6910 = vmatprep.mubr.f32.mxu0 0.0
        %6911 = vmatmul.mubr.f32.gmra.mrb[0].mxu0 %v6664
        %v6912 = vpop.f32.mrb[0].mxu0
        %v6913 = vadd.f32 0.0, %v6912
        %v6914 = vpop.f32.mrb[0].mxu0
        %6915 = vmatprep.mubr.f32.mxu0 0.0
        %6916 = vmatmul.mubr.f32.gmra.mrb[0].mxu0 %v6667
        %v6917 = vpop.f32.mrb[0].mxu0
        %v6918 = vadd.f32 0.0, %v6917
        %v6919 = vpop.f32.mrb[0].mxu0
        %6920 = vmatprep.mubr.f32.mxu0 0.0
        %6921 = vmatmul.mubr.f32.gmra.mrb[0].mxu0 %v6670
        %v6922 = vpop.f32.mrb[0].mxu0
        %v6923 = vadd.f32 0.0, %v6922
        %v6924 = vpop.f32.mrb[0].mxu0
        %6925 = vmatprep.mubr.f32.mxu0 0.0
        %6926 = vmatmul.mubr.f32.gmra.mrb[0].mxu0 %v6673
        %v6927 = vpop.f32.mrb[0].mxu0
        %v6928 = vadd.f32 0.0, %v6927
        %v6929 = vpop.f32.mrb[0].mxu0
        %6930 = vmatprep.mubr.f32.mxu0 0.0
        %6931 = vmatmul.mubr.f32.gmra.mrb[0].mxu0 %v6676
        %v6932 = vpop.f32.mrb[0].mxu0
        %v6933 = vadd.f32 0.0, %v6932
        %v6934 = vpop.f32.mrb[0].mxu0
        %6935 = vmatprep.mubr.f32.mxu0 0.0
        %6936 = vmatmul.mubr.f32.gmra.mrb[0].mxu0 %v6679
        %v6937 = vpop.f32.mrb[0].mxu0
        %v6938 = vadd.f32 0.0, %v6937
        %v6939 = vpop.f32.mrb[0].mxu0
        %6940 = vmatprep.mubr.f32.mxu0 0.0
        %6941 = vmatmul.mubr.f32.gmra.mrb[0].mxu0 %v6682
        %v6942 = vpop.f32.mrb[0].mxu0
        %v6943 = vadd.f32 0.0, %v6942
        %v6944 = vpop.f32.mrb[0].mxu0
        %6945 = vmatprep.mubr.f32.mxu0 0.0
        %6946 = vmatmul.mubr.f32.gmra.mrb[0].mxu0 %v6685
        %v6947 = vpop.f32.mrb[0].mxu0
        %v6948 = vadd.f32 0.0, %v6947
        %v6949 = vpop.f32.mrb[0].mxu0
        %6950 = vmatprep.mubr.f32.mxu0 0.0
        %6951 = vmatmul.mubr.f32.gmra.mrb[0].mxu0 %v6688
        %v6952 = vpop.f32.mrb[0].mxu0
        %v6953 = vadd.f32 0.0, %v6952
        %v6954 = vpop.f32.mrb[0].mxu0
        %6955 = vmatprep.mubr.f32.mxu0 0.0
        %6956 = vmatmul.mubr.f32.gmra.mrb[0].mxu0 %v6691
        %v6957 = vpop.f32.mrb[0].mxu0
        %v6958 = vadd.f32 0.0, %v6957
        %v6959 = vpop.f32.mrb[0].mxu0
        %6960 = vmatprep.mubr.f32.mxu0 0.0
        %6961 = vmatmul.mubr.f32.gmra.mrb[0].mxu0 %v6694
        %v6962 = vpop.f32.mrb[0].mxu0
        %v6963 = vadd.f32 0.0, %v6962
        %v6964 = vpop.f32.mrb[0].mxu0
        %6965 = vmatprep.mubr.f32.mxu0 0.0
        %6966 = vmatmul.mubr.f32.gmra.mrb[0].mxu0 %v6697
        %v6967 = vpop.f32.mrb[0].mxu0
        %v6968 = vadd.f32 0.0, %v6967
        %v6969 = vpop.f32.mrb[0].mxu0
        %6970 = vmatprep.mubr.f32.mxu0 0.0
        %6971 = vmatmul.mubr.f32.gmra.mrb[0].mxu0 %v6700
        %v6972 = vpop.f32.mrb[0].mxu0
        %v6973 = vadd.f32 0.0, %v6972
        %v6974 = vpop.f32.mrb[0].mxu0
        %6975 = vmatprep.mubr.f32.mxu0 0.0
        %6976 = vmatmul.mubr.f32.gmra.mrb[0].mxu0 %v6703
        %v6977 = vpop.f32.mrb[0].mxu0
        %v6978 = vadd.f32 0.0, %v6977
        %v6979 = vpop.f32.mrb[0].mxu0
        %6980 = vmatprep.mubr.f32.mxu0 0.0
        %6981 = vmatmul.mubr.f32.gmra.mrb[0].mxu0 %v6706
        %v6982 = vpop.f32.mrb[0].mxu0
        %v6983 = vadd.f32 0.0, %v6982
        %v6984 = vpop.f32.mrb[0].mxu0
        %6985 = vmatprep.mubr.f32.mxu0 0.0
        %6986 = vmatmul.mubr.f32.gmra.mrb[0].mxu0 %v6709
        %v6987 = vpop.f32.mrb[0].mxu0
        %v6988 = vadd.f32 0.0, %v6987
        %v6989 = vpop.f32.mrb[0].mxu0
        %6990 = vmatprep.mubr.f32.mxu0 0.0
        %6991 = vmatmul.mubr.f32.gmra.mrb[0].mxu0 %v6712
        %v6992 = vpop.f32.mrb[0].mxu0
        %v6993 = vadd.f32 0.0, %v6992
        %v6994 = vpop.f32.mrb[0].mxu0
        %6995 = vmatprep.mubr.f32.mxu0 0.0
        %6996 = vmatmul.mubr.f32.gmra.mrb[0].mxu0 %v6715
        %v6997 = vpop.f32.mrb[0].mxu0
        %v6998 = vadd.f32 0.0, %v6997
        %v6999 = vpop.f32.mrb[0].mxu0
        %7000 = vmatprep.mubr.f32.mxu0 0.0
        %7001 = vmatmul.mubr.f32.gmra.mrb[0].mxu0 %v6718
        %v7002 = vpop.f32.mrb[0].mxu0
        %v7003 = vadd.f32 0.0, %v7002
        %v7004 = vpop.f32.mrb[0].mxu0
        %7005 = vmatprep.mubr.f32.mxu0 0.0
        %7006 = vmatmul.mubr.f32.gmra.mrb[0].mxu0 %v6721
        %v7007 = vpop.f32.mrb[0].mxu0
        %v7008 = vadd.f32 0.0, %v7007
        %v7009 = vpop.f32.mrb[0].mxu0
        %7010 = vmatprep.mubr.f32.mxu0 0.0
        %7011 = vmatmul.mubr.f32.gmra.mrb[0].mxu0 %v6724
        %v7012 = vpop.f32.mrb[0].mxu0
        %v7013 = vadd.f32 0.0, %v7012
        %v7014 = vpop.f32.mrb[0].mxu0
        %7015 = vmatprep.mubr.f32.mxu0 0.0
        %7016 = vmatmul.mubr.f32.gmra.mrb[0].mxu0 %v6727
        %v7017 = vpop.f32.mrb[0].mxu0
        %v7018 = vadd.f32 0.0, %v7017
        %v7019 = vpop.f32.mrb[0].mxu0
        %7020 = vmatprep.mubr.f32.mxu0 0.0
        %7021 = vmatmul.mubr.f32.gmra.mrb[0].mxu0 %v6730
        %v7022 = vpop.f32.mrb[0].mxu0
        %v7023 = vadd.f32 0.0, %v7022
        %v7024 = vpop.f32.mrb[0].mxu0
        %7025 = vmatprep.mubr.f32.mxu0 0.0
        %7026 = vmatmul.mubr.f32.gmra.mrb[0].mxu0 %v6733
        %v7027 = vpop.f32.mrb[0].mxu0
        %v7028 = vadd.f32 0.0, %v7027
        %v7029 = vpop.f32.mrb[0].mxu0
        %7030 = vmatprep.mubr.f32.mxu0 0.0
        %7031 = vmatmul.mubr.f32.gmra.mrb[0].mxu0 %v6736
        %v7032 = vpop.f32.mrb[0].mxu0
        %v7033 = vadd.f32 0.0, %v7032
        %v7034 = vpop.f32.mrb[0].mxu0
        %7035 = vmatprep.mubr.f32.mxu0 0.0
        %7036 = vmatmul.mubr.f32.gmra.mrb[0].mxu0 %v6739
        %v7037 = vpop.f32.mrb[0].mxu0
        %v7038 = vadd.f32 0.0, %v7037
        %v7039 = vpop.f32.mrb[0].mxu0
        %7040 = vmatprep.mubr.f32.mxu0 0.0
        %7041 = vmatmul.mubr.f32.gmra.mrb[0].mxu0 %v6742
        %v7042 = vpop.f32.mrb[0].mxu0
        %v7043 = vadd.f32 0.0, %v7042
        %v7044 = vpop.f32.mrb[0].mxu0
        %7045 = vmatprep.mubr.f32.mxu0 0.0
        %7046 = vmatmul.mubr.f32.gmra.mrb[0].mxu0 %v6745
        %v7047 = vpop.f32.mrb[0].mxu0
        %v7048 = vadd.f32 0.0, %v7047
        %v7049 = vpop.f32.mrb[0].mxu0
        %7050 = vmatprep.mubr.f32.mxu0 0.0
        %7051 = vmatmul.mubr.f32.gmra.mrb[0].mxu0 %v6748
        %v7052 = vpop.f32.mrb[0].mxu0
        %v7053 = vadd.f32 0.0, %v7052
        %v7054 = vpop.f32.mrb[0].mxu0
        %7055 = vmatprep.mubr.f32.mxu0 0.0
        %7056 = vmatmul.mubr.f32.gmra.mrb[0].mxu0 %v6751
        %v7057 = vpop.f32.mrb[0].mxu0
        %v7058 = vadd.f32 0.0, %v7057
        %v7059 = vpop.f32.mrb[0].mxu0
        %7060 = vmatprep.mubr.f32.mxu0 0.0
        %7061 = vmatmul.mubr.f32.gmra.mrb[0].mxu0 %v6754
        %v7062 = vpop.f32.mrb[0].mxu0
        %v7063 = vadd.f32 0.0, %v7062
        %v7064 = vpop.f32.mrb[0].mxu0
        %7065 = vmatprep.mubr.f32.mxu0 0.0
        %7066 = vmatmul.mubr.f32.gmra.mrb[0].mxu0 %v6757
        %v7067 = vpop.f32.mrb[0].mxu0
        %v7068 = vadd.f32 0.0, %v7067
        %v7069 = vpop.f32.mrb[0].mxu0
        %7070 = vmatprep.mubr.f32.mxu0 0.0
        %7071 = vmatmul.mubr.f32.gmra.mrb[0].mxu0 %v6760
        %v7072 = vpop.f32.mrb[0].mxu0
        %v7073 = vadd.f32 0.0, %v7072
        %v7074 = vpop.f32.mrb[0].mxu0
        %7075 = vmatprep.mubr.f32.mxu0 0.0
        %7076 = vmatmul.mubr.f32.gmra.mrb[0].mxu0 %v6763
        %v7077 = vpop.f32.mrb[0].mxu0
        %v7078 = vadd.f32 0.0, %v7077
        %v7079 = vpop.f32.mrb[0].mxu0
        %7080 = vmatprep.mubr.f32.mxu0 0.0
        %7081 = vmatmul.mubr.f32.gmra.mrb[0].mxu0 %v6766
        %v7082 = vpop.f32.mrb[0].mxu0
        %v7083 = vadd.f32 0.0, %v7082
        %v7084 = vpop.f32.mrb[0].mxu0
        %7085 = vmatprep.mubr.f32.mxu0 0.0
        %7086 = vmatmul.mubr.f32.gmra.mrb[0].mxu0 %v6769
        %v7087 = vpop.f32.mrb[0].mxu0
        %v7088 = vadd.f32 0.0, %v7087
        %v7089 = vpop.f32.mrb[0].mxu0
        %7090 = vmatprep.mubr.f32.mxu0 0.0
        %7091 = vmatmul.mubr.f32.gmra.mrb[0].mxu0 %v6772
        %v7092 = vpop.f32.mrb[0].mxu0
        %v7093 = vadd.f32 0.0, %v7092
        %v7094 = vpop.f32.mrb[0].mxu0
        %7095 = vmatprep.mubr.f32.mxu0 0.0
        %7096 = vmatmul.mubr.f32.gmra.mrb[0].mxu0 %v6775
        %v7097 = vpop.f32.mrb[0].mxu0
        %v7098 = vadd.f32 0.0, %v7097
        %v7099 = vpop.f32.mrb[0].mxu0
        %7100 = vmatprep.mubr.f32.mxu0 0.0
        %7101 = vmatmul.mubr.f32.gmra.mrb[0].mxu0 %v6778
        %v7102 = vpop.f32.mrb[0].mxu0
        %v7103 = vadd.f32 0.0, %v7102
        %v7104 = vpop.f32.mrb[0].mxu0
        %7105 = vmatprep.mubr.f32.mxu0 0.0
        %7106 = vmatmul.mubr.f32.gmra.mrb[0].mxu0 %v6781
        %v7107 = vpop.f32.mrb[0].mxu0
        %v7108 = vadd.f32 0.0, %v7107
        %v7109 = vpop.f32.mrb[0].mxu0
        %7110 = vmatprep.mubr.f32.mxu0 0.0
        %7111 = vmatmul.mubr.f32.gmra.mrb[0].mxu0 %v6784
        %v7112 = vpop.f32.mrb[0].mxu0
        %v7113 = vadd.f32 0.0, %v7112
        %v7114 = vpop.f32.mrb[0].mxu0
        %7115 = vmatprep.mubr.f32.mxu0 0.0
        %7116 = vmatmul.mubr.f32.gmra.mrb[0].mxu0 %v6787
        %v7117 = vpop.f32.mrb[0].mxu0
        %v7118 = vadd.f32 0.0, %v7117
        %v7119 = vpop.f32.mrb[0].mxu0
        %7120 = vmatprep.mubr.f32.mxu0 0.0
        %7121 = vmatmul.mubr.f32.gmra.mrb[0].mxu0 %v6790
        %v7122 = vpop.f32.mrb[0].mxu0
        %v7123 = vadd.f32 0.0, %v7122
        %v7124 = vpop.f32.mrb[0].mxu0
        %7125 = vmatprep.mubr.f32.mxu0 0.0
        %7126 = vmatmul.mubr.f32.gmra.mrb[0].mxu0 %v6793
        %v7127 = vpop.f32.mrb[0].mxu0
        %v7128 = vadd.f32 0.0, %v7127
        %v7129 = vpop.f32.mrb[0].mxu0
        %7130 = vmatprep.mubr.f32.mxu0 0.0
        %7131 = vmatmul.mubr.f32.gmra.mrb[0].mxu0 %v6796
        %v7132 = vpop.f32.mrb[0].mxu0
        %v7133 = vadd.f32 0.0, %v7132
        %v7134 = vpop.f32.mrb[0].mxu0
        %7135 = vmatprep.mubr.f32.mxu0 0.0
        %7136 = vmatmul.mubr.f32.gmra.mrb[0].mxu0 %v6799
        %v7137 = vpop.f32.mrb[0].mxu0
        %v7138 = vadd.f32 0.0, %v7137
        %v7139 = vpop.f32.mrb[0].mxu0
        %7140 = vmatprep.mubr.f32.mxu0 0.0
        %7141 = vmatmul.mubr.f32.gmra.mrb[0].mxu0 %v6802
        %v7142 = vpop.f32.mrb[0].mxu0
        %v7143 = vadd.f32 0.0, %v7142
        %v7144 = vpop.f32.mrb[0].mxu0
        %7145 = vmatprep.mubr.f32.mxu0 0.0
        %7146 = vmatmul.mubr.f32.gmra.mrb[0].mxu0 %v6805
        %v7147 = vpop.f32.mrb[0].mxu0
        %v7148 = vadd.f32 0.0, %v7147
        %v7149 = vpop.f32.mrb[0].mxu0
        %7150 = vmatprep.mubr.f32.mxu0 0.0
        %7151 = vmatmul.mubr.f32.gmra.mrb[0].mxu0 %v6808
        %v7152 = vpop.f32.mrb[0].mxu0
        %v7153 = vadd.f32 0.0, %v7152
        %v7154 = vpop.f32.mrb[0].mxu0
        %7155 = vmatprep.mubr.f32.mxu0 0.0
        %7156 = vmatmul.mubr.f32.gmra.mrb[0].mxu0 %v6811
        %v7157 = vpop.f32.mrb[0].mxu0
        %v7158 = vadd.f32 0.0, %v7157
        %v7159 = vpop.f32.mrb[0].mxu0
        %7160 = vmatprep.mubr.f32.mxu0 0.0
        %7161 = vmatmul.mubr.f32.gmra.mrb[0].mxu0 %v6814
        %v7162 = vpop.f32.mrb[0].mxu0
        %v7163 = vadd.f32 0.0, %v7162
        %v7164 = vpop.f32.mrb[0].mxu0
        %7165 = vmatprep.mubr.f32.mxu0 0.0
        %7166 = vmatmul.mubr.f32.gmra.mrb[0].mxu0 %v6817
        %v7167 = vpop.f32.mrb[0].mxu0
        %v7168 = vadd.f32 0.0, %v7167
        %v7169 = vpop.f32.mrb[0].mxu0
        %7170 = vmatprep.mubr.f32.mxu0 0.0
        %7171 = vmatmul.mubr.f32.gmra.mrb[0].mxu0 %v6820
        %v7172 = vpop.f32.mrb[0].mxu0
        %v7173 = vadd.f32 0.0, %v7172
        %v7174 = vpop.f32.mrb[0].mxu0
        %7175 = vmatprep.mubr.f32.mxu0 0.0
        %7176 = vmatmul.mubr.f32.gmra.mrb[0].mxu0 %v6823
        %v7177 = vpop.f32.mrb[0].mxu0
        %v7178 = vadd.f32 0.0, %v7177
        %v7179 = vpop.f32.mrb[0].mxu0
        %7180 = vmatprep.mubr.f32.mxu0 0.0
        %7181 = vmatmul.mubr.f32.gmra.mrb[0].mxu0 %v6826
        %v7182 = vpop.f32.mrb[0].mxu0
        %v7183 = vadd.f32 0.0, %v7182
        %v7184 = vpop.f32.mrb[0].mxu0
        %7185 = vmatprep.mubr.f32.mxu0 0.0
        %7186 = vmatmul.mubr.f32.gmra.mrb[0].mxu0 %v6829
        %v7187 = vpop.f32.mrb[0].mxu0
        %v7188 = vadd.f32 0.0, %v7187
        %v7189 = vpop.f32.mrb[0].mxu0
        %7190 = vmatprep.mubr.f32.mxu0 0.0
        %7191 = vmatmul.mubr.f32.gmra.mrb[0].mxu0 %v6832
        %v7192 = vpop.f32.mrb[0].mxu0
        %v7193 = vadd.f32 0.0, %v7192
        %v7194 = vpop.f32.mrb[0].mxu0
        %7195 = vmatprep.mubr.f32.mxu0 0.0
        %7196 = vmatmul.mubr.f32.gmra.mrb[0].mxu0 %v6835
        %v7197 = vpop.f32.mrb[0].mxu0
        %v7198 = vadd.f32 0.0, %v7197
        %v7199 = vpop.f32.mrb[0].mxu0
        %7200 = vmatprep.mubr.f32.mxu0 0.0
        %7201 = vmatmul.mubr.f32.gmra.mrb[0].mxu0 %v6838
        %v7202 = vpop.f32.mrb[0].mxu0
        %v7203 = vadd.f32 0.0, %v7202
        %v7204 = vpop.f32.mrb[0].mxu0
        %7205 = vmatprep.mubr.f32.mxu0 0.0
        %7206 = vmatmul.mubr.f32.gmra.mrb[0].mxu0 %v6841
        %v7207 = vpop.f32.mrb[0].mxu0
        %v7208 = vadd.f32 0.0, %v7207
        %v7209 = vpop.f32.mrb[0].mxu0
        %7210 = vdwg.mxu0
        %v7211 = vadd.f32 %v6539, %v6913
        %v7212 = vadd.f32 %v6540, %v6918
        %v7213 = vadd.f32 %v6541, %v6923
        %v7214 = vadd.f32 %v6542, %v6928
        %v7215 = vadd.f32 %v6543, %v6933
        %v7216 = vadd.f32 %v6544, %v6938
        %v7217 = vadd.f32 %v6545, %v6943
        %v7218 = vadd.f32 %v6546, %v6948
        %v7219 = vadd.f32 %v6547, %v6953
        %v7220 = vadd.f32 %v6548, %v6958
        %v7221 = vadd.f32 %v6549, %v6963
        %v7222 = vadd.f32 %v6550, %v6968
        %v7223 = vadd.f32 %v6551, %v6973
        %v7224 = vadd.f32 %v6552, %v6978
        %v7225 = vadd.f32 %v6553, %v6983
        %v7226 = vadd.f32 %v6554, %v6988
        %v7227 = vadd.f32 %v6555, %v6993
        %v7228 = vadd.f32 %v6556, %v6998
        %v7229 = vadd.f32 %v6557, %v7003
        %v7230 = vadd.f32 %v6558, %v7008
        %v7231 = vadd.f32 %v6559, %v7013
        %v7232 = vadd.f32 %v6560, %v7018
        %v7233 = vadd.f32 %v6561, %v7023
        %v7234 = vadd.f32 %v6562, %v7028
        %v7235 = vadd.f32 %v6563, %v7033
        %v7236 = vadd.f32 %v6564, %v7038
        %v7237 = vadd.f32 %v6565, %v7043
        %v7238 = vadd.f32 %v6566, %v7048
        %v7239 = vadd.f32 %v6567, %v7053
        %v7240 = vadd.f32 %v6568, %v7058
        %v7241 = vadd.f32 %v6569, %v7063
        %v7242 = vadd.f32 %v6570, %v7068
        %v7243 = vadd.f32 %v6571, %v7073
        %v7244 = vadd.f32 %v6572, %v7078
        %v7245 = vadd.f32 %v6573, %v7083
        %v7246 = vadd.f32 %v6574, %v7088
        %v7247 = vadd.f32 %v6575, %v7093
        %v7248 = vadd.f32 %v6576, %v7098
        %v7249 = vadd.f32 %v6577, %v7103
        %v7250 = vadd.f32 %v6578, %v7108
        %v7251 = vadd.f32 %v6579, %v7113
        %v7252 = vadd.f32 %v6580, %v7118
        %v7253 = vadd.f32 %v6581, %v7123
        %v7254 = vadd.f32 %v6582, %v7128
        %v7255 = vadd.f32 %v6583, %v7133
        %v7256 = vadd.f32 %v6584, %v7138
        %v7257 = vadd.f32 %v6585, %v7143
        %v7258 = vadd.f32 %v6586, %v7148
        %v7259 = vadd.f32 %v6587, %v7153
        %v7260 = vadd.f32 %v6588, %v7158
        %v7261 = vadd.f32 %v6589, %v7163
        %v7262 = vadd.f32 %v6590, %v7168
        %v7263 = vadd.f32 %v6591, %v7173
        %v7264 = vadd.f32 %v6592, %v7178
        %v7265 = vadd.f32 %v6593, %v7183
        %v7266 = vadd.f32 %v6594, %v7188
        %v7267 = vadd.f32 %v6595, %v7193
        %v7268 = vadd.f32 %v6596, %v7198
        %v7269 = vadd.f32 %v6597, %v7203
        %v7270 = vadd.f32 %v6598, %v7208
        %v7271 = vld [vmem:[#allocation3 + $0x60] sm:$0xff]
        %v7272 = vld [vmem:[#allocation3 + $0x68] sm:$0xff]
        %v7273 = vld [vmem:[#allocation3 + $0x70] sm:$0xff]
        %v7274 = vld [vmem:[#allocation3 + $0x78] sm:$0xff]
        %v7275 = vld [vmem:[#allocation3 + $0x80] sm:$0xff]
        %v7276 = vld [vmem:[#allocation3 + $0x88] sm:$0xff]
        %v7277 = vld [vmem:[#allocation3 + $0x90] sm:$0xff]
        %v7278 = vld [vmem:[#allocation3 + $0x98] sm:$0xff]
        %v7279 = vld [vmem:[#allocation3 + $0xa0] sm:$0xff]
        %v7280 = vld [vmem:[#allocation3 + $0xa8] sm:$0xff]
        %v7281 = vld [vmem:[#allocation3 + $0xb0] sm:$0xff]
        %v7282 = vld [vmem:[#allocation3 + $0xb8] sm:$0xff]
        %v7283 = vld [vmem:[#allocation3 + $0xc0] sm:$0xff]
        %v7284 = vld [vmem:[#allocation3 + $0xc8] sm:$0xff]
        %v7285 = vld [vmem:[#allocation3 + $0xd0] sm:$0xff]
        %v7286 = vld [vmem:[#allocation3 + $0xd8] sm:$0xff]
        %v7287 = vld [vmem:[#allocation3 + $0xe0] sm:$0xff]
        %v7288 = vld [vmem:[#allocation3 + $0xe8] sm:$0xff]
        %v7289 = vld [vmem:[#allocation3 + $0xf0] sm:$0xff]
        %v7290 = vld [vmem:[#allocation3 + $0xf8] sm:$0xff]
        %v7291 = vld [vmem:[#allocation3 + $0x100] sm:$0xff]
        %v7292 = vld [vmem:[#allocation3 + $0x108] sm:$0xff]
        %v7293 = vld [vmem:[#allocation3 + $0x110] sm:$0xff]
        %v7294 = vld [vmem:[#allocation3 + $0x118] sm:$0xff]
        %v7295 = vld [vmem:[#allocation3 + $0x120] sm:$0xff]
        %v7296 = vld [vmem:[#allocation3 + $0x128] sm:$0xff]
        %v7297 = vld [vmem:[#allocation3 + $0x130] sm:$0xff]
        %v7298 = vld [vmem:[#allocation3 + $0x138] sm:$0xff]
        %v7299 = vld [vmem:[#allocation3 + $0x140] sm:$0xff]
        %v7300 = vld [vmem:[#allocation3 + $0x148] sm:$0xff]
        %v7301 = vld [vmem:[#allocation3 + $0x150] sm:$0xff]
        %v7302 = vld [vmem:[#allocation3 + $0x158] sm:$0xff]
        %v7303 = vld [vmem:[#allocation3 + $0x160] sm:$0xff]
        %v7304 = vld [vmem:[#allocation3 + $0x168] sm:$0xff]
        %v7305 = vld [vmem:[#allocation3 + $0x170] sm:$0xff]
        %v7306 = vld [vmem:[#allocation3 + $0x178] sm:$0xff]
        %v7307 = vld [vmem:[#allocation3 + $0x180] sm:$0xff]
        %v7308 = vld [vmem:[#allocation3 + $0x188] sm:$0xff]
        %v7309 = vld [vmem:[#allocation3 + $0x190] sm:$0xff]
        %v7310 = vld [vmem:[#allocation3 + $0x198] sm:$0xff]
        %v7311 = vld [vmem:[#allocation3 + $0x1a0] sm:$0xff]
        %v7312 = vld [vmem:[#allocation3 + $0x1a8] sm:$0xff]
        %v7313 = vld [vmem:[#allocation3 + $0x1b0] sm:$0xff]
        %v7314 = vld [vmem:[#allocation3 + $0x1b8] sm:$0xff]
        %v7315 = vld [vmem:[#allocation3 + $0x1c0] sm:$0xff]
        %v7316 = vld [vmem:[#allocation3 + $0x1c8] sm:$0xff]
        %v7317 = vld [vmem:[#allocation3 + $0x1d0] sm:$0xff]
        %v7318 = vld [vmem:[#allocation3 + $0x1d8] sm:$0xff]
        %v7319 = vld [vmem:[#allocation3 + $0x1e0] sm:$0xff]
        %v7320 = vld [vmem:[#allocation3 + $0x1e8] sm:$0xff]
        %v7321 = vld [vmem:[#allocation3 + $0x1f0] sm:$0xff]
        %v7322 = vld [vmem:[#allocation3 + $0x1f8] sm:$0xff]
        %v7323 = vld [vmem:[#allocation3 + $0x200] sm:$0xff]
        %v7324 = vld [vmem:[#allocation3 + $0x208] sm:$0xff]
        %v7325 = vld [vmem:[#allocation3 + $0x210] sm:$0xff]
        %v7326 = vld [vmem:[#allocation3 + $0x218] sm:$0xff]
        %v7327 = vld [vmem:[#allocation3 + $0x220] sm:$0xff]
        %v7328 = vld [vmem:[#allocation3 + $0x228] sm:$0xff]
        %v7329 = vld [vmem:[#allocation3 + $0x230] sm:$0xff]
        %v7330 = vld [vmem:[#allocation3 + $0x238] sm:$0xff]
        %s7331 = scalar_lea.vmem %s5, 96
        %v7332 = vld [vmem:[%s7331] sm:$0xff]
        %v7333 = vld [vmem:[%s7331 + $0x8] sm:$0xff]
        %v7334 = vld [vmem:[%s7331 + $0x10] sm:$0xf]
        %v7336 = vsel %vm2162, %v7271, 0
        %v7339 = vsel %vm2162, %v7272, 0
        %v7342 = vsel %vm2162, %v7273, 0
        %v7345 = vsel %vm2162, %v7274, 0
        %v7348 = vsel %vm2162, %v7275, 0
        %v7351 = vsel %vm2162, %v7276, 0
        %v7354 = vsel %vm2162, %v7277, 0
        %v7357 = vsel %vm2162, %v7278, 0
        %v7360 = vsel %vm2162, %v7279, 0
        %v7363 = vsel %vm2162, %v7280, 0
        %v7366 = vsel %vm2162, %v7281, 0
        %v7369 = vsel %vm2162, %v7282, 0
        %v7372 = vsel %vm2162, %v7283, 0
        %v7375 = vsel %vm2162, %v7284, 0
        %v7378 = vsel %vm2162, %v7285, 0
        %v7381 = vsel %vm2162, %v7286, 0
        %v7384 = vsel %vm2162, %v7287, 0
        %v7387 = vsel %vm2162, %v7288, 0
        %v7390 = vsel %vm2162, %v7289, 0
        %v7393 = vsel %vm2162, %v7290, 0
        %v7396 = vsel %vm2162, %v7291, 0
        %v7399 = vsel %vm2162, %v7292, 0
        %v7402 = vsel %vm2162, %v7293, 0
        %v7405 = vsel %vm2162, %v7294, 0
        %v7408 = vsel %vm2162, %v7295, 0
        %v7411 = vsel %vm2162, %v7296, 0
        %v7414 = vsel %vm2162, %v7297, 0
        %v7417 = vsel %vm2162, %v7298, 0
        %v7420 = vsel %vm2162, %v7299, 0
        %v7423 = vsel %vm2162, %v7300, 0
        %v7426 = vsel %vm2162, %v7301, 0
        %v7429 = vsel %vm2162, %v7302, 0
        %v7432 = vsel %vm2162, %v7303, 0
        %v7435 = vsel %vm2162, %v7304, 0
        %v7438 = vsel %vm2162, %v7305, 0
        %v7441 = vsel %vm2162, %v7306, 0
        %v7444 = vsel %vm2162, %v7307, 0
        %v7447 = vsel %vm2162, %v7308, 0
        %v7450 = vsel %vm2162, %v7309, 0
        %v7453 = vsel %vm2162, %v7310, 0
        %v7456 = vsel %vm2162, %v7311, 0
        %v7459 = vsel %vm2162, %v7312, 0
        %v7462 = vsel %vm2162, %v7313, 0
        %v7465 = vsel %vm2162, %v7314, 0
        %v7468 = vsel %vm2162, %v7315, 0
        %v7471 = vsel %vm2162, %v7316, 0
        %v7474 = vsel %vm2162, %v7317, 0
        %v7477 = vsel %vm2162, %v7318, 0
        %v7480 = vsel %vm2162, %v7319, 0
        %v7483 = vsel %vm2162, %v7320, 0
        %v7486 = vsel %vm2162, %v7321, 0
        %v7489 = vsel %vm2162, %v7322, 0
        %v7492 = vsel %vm2162, %v7323, 0
        %v7495 = vsel %vm2162, %v7324, 0
        %v7498 = vsel %vm2162, %v7325, 0
        %v7501 = vsel %vm2162, %v7326, 0
        %v7504 = vsel %vm2162, %v7327, 0
        %v7507 = vsel %vm2162, %v7328, 0
        %v7510 = vsel %vm2162, %v7329, 0
        %v7513 = vsel %vm2162, %v7330, 0
        %v7516 = vsel %vm1000, %v7334, 0
        %7518 = vmatprep.subr.mxu0 0.0
        %7519 = vmatpush1.msra.mxu0 %v7332
        %7520 = vmatprep.subr.mxu0 0.0
        %7521 = vmatpush1.msra.mxu0 %v7333
        %7522 = vmatprep.subr.mxu0 0.0
        %7523 = vmatpush1.msra.mxu0 %v7516
        %7524 = vmatprep.subr.mxu0 0.0
        %7525 = vmatpush1.msra.mxu0 0.0
        %7526 = vmatprep.subr.mxu0 0.0
        %7527 = vmatpush1.msra.mxu0 0.0
        %7528 = vmatprep.subr.mxu0 0.0
        %7529 = vmatpush1.msra.mxu0 0.0
        %7530 = vmatprep.subr.mxu0 0.0
        %7531 = vmatpush1.msra.mxu0 0.0
        %7532 = vmatprep.subr.mxu0 0.0
        %7533 = vmatpush1.msra.mxu0 0.0
        %7534 = vmatprep.subr.mxu0 0.0
        %7535 = vmatpush1.msra.mxu0 0.0
        %7536 = vmatprep.subr.mxu0 0.0
        %7537 = vmatpush1.msra.mxu0 0.0
        %7538 = vmatprep.subr.mxu0 0.0
        %7539 = vmatpush1.msra.mxu0 0.0
        %7540 = vmatprep.subr.mxu0 0.0
        %7541 = vmatpush1.msra.mxu0 0.0
        %7542 = vmatprep.subr.mxu0 0.0
        %7543 = vmatpush1.msra.mxu0 0.0
        %7544 = vmatprep.subr.mxu0 0.0
        %7545 = vmatpush1.msra.mxu0 0.0
        %7546 = vmatprep.subr.mxu0 0.0
        %7547 = vmatpush1.msra.mxu0 0.0
        %7548 = vmatprep.subr.mxu0 0.0
        %7549 = vmatpush1.msra.mxu0 0.0
        %7550 = vmatprep.subr.mxu0 0.0
        %7551 = vmatpush1.msra.mxu0 0.0
        %7552 = vmatprep.subr.mxu0 0.0
        %7553 = vmatpush1.msra.mxu0 0.0
        %7554 = vmatprep.subr.mxu0 0.0
        %7555 = vmatpush1.msra.mxu0 0.0
        %7556 = vmatprep.subr.mxu0 0.0
        %7557 = vmatpush1.msra.mxu0 0.0
        %7558 = vmatprep.subr.mxu0 0.0
        %7559 = vmatpush1.msra.mxu0 0.0
        %7560 = vmatprep.subr.mxu0 0.0
        %7561 = vmatpush1.msra.mxu0 0.0
        %7562 = vmatprep.subr.mxu0 0.0
        %7563 = vmatpush1.msra.mxu0 0.0
        %7564 = vmatprep.subr.mxu0 0.0
        %7565 = vmatpush1.msra.mxu0 0.0
        %7566 = vmatprep.subr.mxu0 0.0
        %7567 = vmatpush1.msra.mxu0 0.0
        %7568 = vmatprep.subr.mxu0 0.0
        %7569 = vmatpush1.msra.mxu0 0.0
        %7570 = vmatprep.subr.mxu0 0.0
        %7571 = vmatpush1.msra.mxu0 0.0
        %7572 = vmatprep.subr.mxu0 0.0
        %7573 = vmatpush1.msra.mxu0 0.0
        %7574 = vmatprep.subr.mxu0 0.0
        %7575 = vmatpush1.msra.mxu0 0.0
        %7576 = vmatprep.subr.mxu0 0.0
        %7577 = vmatpush1.msra.mxu0 0.0
        %7578 = vmatprep.subr.mxu0 0.0
        %7579 = vmatpush1.msra.mxu0 0.0
        %7580 = vmatprep.subr.mxu0 0.0
        %7581 = vmatpush1.msra.mxu0 0.0
        %7582 = vmatprep.mubr.f32.mxu0 0.0
        %7583 = vmatmul.mubr.f32.gmra.mrb[0].mxu0 %v7336
        %v7584 = vpop.f32.mrb[0].mxu0
        %v7585 = vadd.f32 0.0, %v7584
        %v7586 = vpop.f32.mrb[0].mxu0
        %7587 = vmatprep.mubr.f32.mxu0 0.0
        %7588 = vmatmul.mubr.f32.gmra.mrb[0].mxu0 %v7339
        %v7589 = vpop.f32.mrb[0].mxu0
        %v7590 = vadd.f32 0.0, %v7589
        %v7591 = vpop.f32.mrb[0].mxu0
        %7592 = vmatprep.mubr.f32.mxu0 0.0
        %7593 = vmatmul.mubr.f32.gmra.mrb[0].mxu0 %v7342
        %v7594 = vpop.f32.mrb[0].mxu0
        %v7595 = vadd.f32 0.0, %v7594
        %v7596 = vpop.f32.mrb[0].mxu0
        %7597 = vmatprep.mubr.f32.mxu0 0.0
        %7598 = vmatmul.mubr.f32.gmra.mrb[0].mxu0 %v7345
        %v7599 = vpop.f32.mrb[0].mxu0
        %v7600 = vadd.f32 0.0, %v7599
        %v7601 = vpop.f32.mrb[0].mxu0
        %7602 = vmatprep.mubr.f32.mxu0 0.0
        %7603 = vmatmul.mubr.f32.gmra.mrb[0].mxu0 %v7348
        %v7604 = vpop.f32.mrb[0].mxu0
        %v7605 = vadd.f32 0.0, %v7604
        %v7606 = vpop.f32.mrb[0].mxu0
        %7607 = vmatprep.mubr.f32.mxu0 0.0
        %7608 = vmatmul.mubr.f32.gmra.mrb[0].mxu0 %v7351
        %v7609 = vpop.f32.mrb[0].mxu0
        %v7610 = vadd.f32 0.0, %v7609
        %v7611 = vpop.f32.mrb[0].mxu0
        %7612 = vmatprep.mubr.f32.mxu0 0.0
        %7613 = vmatmul.mubr.f32.gmra.mrb[0].mxu0 %v7354
        %v7614 = vpop.f32.mrb[0].mxu0
        %v7615 = vadd.f32 0.0, %v7614
        %v7616 = vpop.f32.mrb[0].mxu0
        %7617 = vmatprep.mubr.f32.mxu0 0.0
        %7618 = vmatmul.mubr.f32.gmra.mrb[0].mxu0 %v7357
        %v7619 = vpop.f32.mrb[0].mxu0
        %v7620 = vadd.f32 0.0, %v7619
        %v7621 = vpop.f32.mrb[0].mxu0
        %7622 = vmatprep.mubr.f32.mxu0 0.0
        %7623 = vmatmul.mubr.f32.gmra.mrb[0].mxu0 %v7360
        %v7624 = vpop.f32.mrb[0].mxu0
        %v7625 = vadd.f32 0.0, %v7624
        %v7626 = vpop.f32.mrb[0].mxu0
        %7627 = vmatprep.mubr.f32.mxu0 0.0
        %7628 = vmatmul.mubr.f32.gmra.mrb[0].mxu0 %v7363
        %v7629 = vpop.f32.mrb[0].mxu0
        %v7630 = vadd.f32 0.0, %v7629
        %v7631 = vpop.f32.mrb[0].mxu0
        %7632 = vmatprep.mubr.f32.mxu0 0.0
        %7633 = vmatmul.mubr.f32.gmra.mrb[0].mxu0 %v7366
        %v7634 = vpop.f32.mrb[0].mxu0
        %v7635 = vadd.f32 0.0, %v7634
        %v7636 = vpop.f32.mrb[0].mxu0
        %7637 = vmatprep.mubr.f32.mxu0 0.0
        %7638 = vmatmul.mubr.f32.gmra.mrb[0].mxu0 %v7369
        %v7639 = vpop.f32.mrb[0].mxu0
        %v7640 = vadd.f32 0.0, %v7639
        %v7641 = vpop.f32.mrb[0].mxu0
        %7642 = vmatprep.mubr.f32.mxu0 0.0
        %7643 = vmatmul.mubr.f32.gmra.mrb[0].mxu0 %v7372
        %v7644 = vpop.f32.mrb[0].mxu0
        %v7645 = vadd.f32 0.0, %v7644
        %v7646 = vpop.f32.mrb[0].mxu0
        %7647 = vmatprep.mubr.f32.mxu0 0.0
        %7648 = vmatmul.mubr.f32.gmra.mrb[0].mxu0 %v7375
        %v7649 = vpop.f32.mrb[0].mxu0
        %v7650 = vadd.f32 0.0, %v7649
        %v7651 = vpop.f32.mrb[0].mxu0
        %7652 = vmatprep.mubr.f32.mxu0 0.0
        %7653 = vmatmul.mubr.f32.gmra.mrb[0].mxu0 %v7378
        %v7654 = vpop.f32.mrb[0].mxu0
        %v7655 = vadd.f32 0.0, %v7654
        %v7656 = vpop.f32.mrb[0].mxu0
        %7657 = vmatprep.mubr.f32.mxu0 0.0
        %7658 = vmatmul.mubr.f32.gmra.mrb[0].mxu0 %v7381
        %v7659 = vpop.f32.mrb[0].mxu0
        %v7660 = vadd.f32 0.0, %v7659
        %v7661 = vpop.f32.mrb[0].mxu0
        %7662 = vmatprep.mubr.f32.mxu0 0.0
        %7663 = vmatmul.mubr.f32.gmra.mrb[0].mxu0 %v7384
        %v7664 = vpop.f32.mrb[0].mxu0
        %v7665 = vadd.f32 0.0, %v7664
        %v7666 = vpop.f32.mrb[0].mxu0
        %7667 = vmatprep.mubr.f32.mxu0 0.0
        %7668 = vmatmul.mubr.f32.gmra.mrb[0].mxu0 %v7387
        %v7669 = vpop.f32.mrb[0].mxu0
        %v7670 = vadd.f32 0.0, %v7669
        %v7671 = vpop.f32.mrb[0].mxu0
        %7672 = vmatprep.mubr.f32.mxu0 0.0
        %7673 = vmatmul.mubr.f32.gmra.mrb[0].mxu0 %v7390
        %v7674 = vpop.f32.mrb[0].mxu0
        %v7675 = vadd.f32 0.0, %v7674
        %v7676 = vpop.f32.mrb[0].mxu0
        %7677 = vmatprep.mubr.f32.mxu0 0.0
        %7678 = vmatmul.mubr.f32.gmra.mrb[0].mxu0 %v7393
        %v7679 = vpop.f32.mrb[0].mxu0
        %v7680 = vadd.f32 0.0, %v7679
        %v7681 = vpop.f32.mrb[0].mxu0
        %7682 = vmatprep.mubr.f32.mxu0 0.0
        %7683 = vmatmul.mubr.f32.gmra.mrb[0].mxu0 %v7396
        %v7684 = vpop.f32.mrb[0].mxu0
        %v7685 = vadd.f32 0.0, %v7684
        %v7686 = vpop.f32.mrb[0].mxu0
        %7687 = vmatprep.mubr.f32.mxu0 0.0
        %7688 = vmatmul.mubr.f32.gmra.mrb[0].mxu0 %v7399
        %v7689 = vpop.f32.mrb[0].mxu0
        %v7690 = vadd.f32 0.0, %v7689
        %v7691 = vpop.f32.mrb[0].mxu0
        %7692 = vmatprep.mubr.f32.mxu0 0.0
        %7693 = vmatmul.mubr.f32.gmra.mrb[0].mxu0 %v7402
        %v7694 = vpop.f32.mrb[0].mxu0
        %v7695 = vadd.f32 0.0, %v7694
        %v7696 = vpop.f32.mrb[0].mxu0
        %7697 = vmatprep.mubr.f32.mxu0 0.0
        %7698 = vmatmul.mubr.f32.gmra.mrb[0].mxu0 %v7405
        %v7699 = vpop.f32.mrb[0].mxu0
        %v7700 = vadd.f32 0.0, %v7699
        %v7701 = vpop.f32.mrb[0].mxu0
        %7702 = vmatprep.mubr.f32.mxu0 0.0
        %7703 = vmatmul.mubr.f32.gmra.mrb[0].mxu0 %v7408
        %v7704 = vpop.f32.mrb[0].mxu0
        %v7705 = vadd.f32 0.0, %v7704
        %v7706 = vpop.f32.mrb[0].mxu0
        %7707 = vmatprep.mubr.f32.mxu0 0.0
        %7708 = vmatmul.mubr.f32.gmra.mrb[0].mxu0 %v7411
        %v7709 = vpop.f32.mrb[0].mxu0
        %v7710 = vadd.f32 0.0, %v7709
        %v7711 = vpop.f32.mrb[0].mxu0
        %7712 = vmatprep.mubr.f32.mxu0 0.0
        %7713 = vmatmul.mubr.f32.gmra.mrb[0].mxu0 %v7414
        %v7714 = vpop.f32.mrb[0].mxu0
        %v7715 = vadd.f32 0.0, %v7714
        %v7716 = vpop.f32.mrb[0].mxu0
        %7717 = vmatprep.mubr.f32.mxu0 0.0
        %7718 = vmatmul.mubr.f32.gmra.mrb[0].mxu0 %v7417
        %v7719 = vpop.f32.mrb[0].mxu0
        %v7720 = vadd.f32 0.0, %v7719
        %v7721 = vpop.f32.mrb[0].mxu0
        %7722 = vmatprep.mubr.f32.mxu0 0.0
        %7723 = vmatmul.mubr.f32.gmra.mrb[0].mxu0 %v7420
        %v7724 = vpop.f32.mrb[0].mxu0
        %v7725 = vadd.f32 0.0, %v7724
        %v7726 = vpop.f32.mrb[0].mxu0
        %7727 = vmatprep.mubr.f32.mxu0 0.0
        %7728 = vmatmul.mubr.f32.gmra.mrb[0].mxu0 %v7423
        %v7729 = vpop.f32.mrb[0].mxu0
        %v7730 = vadd.f32 0.0, %v7729
        %v7731 = vpop.f32.mrb[0].mxu0
        %7732 = vmatprep.mubr.f32.mxu0 0.0
        %7733 = vmatmul.mubr.f32.gmra.mrb[0].mxu0 %v7426
        %v7734 = vpop.f32.mrb[0].mxu0
        %v7735 = vadd.f32 0.0, %v7734
        %v7736 = vpop.f32.mrb[0].mxu0
        %7737 = vmatprep.mubr.f32.mxu0 0.0
        %7738 = vmatmul.mubr.f32.gmra.mrb[0].mxu0 %v7429
        %v7739 = vpop.f32.mrb[0].mxu0
        %v7740 = vadd.f32 0.0, %v7739
        %v7741 = vpop.f32.mrb[0].mxu0
        %7742 = vmatprep.mubr.f32.mxu0 0.0
        %7743 = vmatmul.mubr.f32.gmra.mrb[0].mxu0 %v7432
        %v7744 = vpop.f32.mrb[0].mxu0
        %v7745 = vadd.f32 0.0, %v7744
        %v7746 = vpop.f32.mrb[0].mxu0
        %7747 = vmatprep.mubr.f32.mxu0 0.0
        %7748 = vmatmul.mubr.f32.gmra.mrb[0].mxu0 %v7435
        %v7749 = vpop.f32.mrb[0].mxu0
        %v7750 = vadd.f32 0.0, %v7749
        %v7751 = vpop.f32.mrb[0].mxu0
        %7752 = vmatprep.mubr.f32.mxu0 0.0
        %7753 = vmatmul.mubr.f32.gmra.mrb[0].mxu0 %v7438
        %v7754 = vpop.f32.mrb[0].mxu0
        %v7755 = vadd.f32 0.0, %v7754
        %v7756 = vpop.f32.mrb[0].mxu0
        %7757 = vmatprep.mubr.f32.mxu0 0.0
        %7758 = vmatmul.mubr.f32.gmra.mrb[0].mxu0 %v7441
        %v7759 = vpop.f32.mrb[0].mxu0
        %v7760 = vadd.f32 0.0, %v7759
        %v7761 = vpop.f32.mrb[0].mxu0
        %7762 = vmatprep.mubr.f32.mxu0 0.0
        %7763 = vmatmul.mubr.f32.gmra.mrb[0].mxu0 %v7444
        %v7764 = vpop.f32.mrb[0].mxu0
        %v7765 = vadd.f32 0.0, %v7764
        %v7766 = vpop.f32.mrb[0].mxu0
        %7767 = vmatprep.mubr.f32.mxu0 0.0
        %7768 = vmatmul.mubr.f32.gmra.mrb[0].mxu0 %v7447
        %v7769 = vpop.f32.mrb[0].mxu0
        %v7770 = vadd.f32 0.0, %v7769
        %v7771 = vpop.f32.mrb[0].mxu0
        %7772 = vmatprep.mubr.f32.mxu0 0.0
        %7773 = vmatmul.mubr.f32.gmra.mrb[0].mxu0 %v7450
        %v7774 = vpop.f32.mrb[0].mxu0
        %v7775 = vadd.f32 0.0, %v7774
        %v7776 = vpop.f32.mrb[0].mxu0
        %7777 = vmatprep.mubr.f32.mxu0 0.0
        %7778 = vmatmul.mubr.f32.gmra.mrb[0].mxu0 %v7453
        %v7779 = vpop.f32.mrb[0].mxu0
        %v7780 = vadd.f32 0.0, %v7779
        %v7781 = vpop.f32.mrb[0].mxu0
        %7782 = vmatprep.mubr.f32.mxu0 0.0
        %7783 = vmatmul.mubr.f32.gmra.mrb[0].mxu0 %v7456
        %v7784 = vpop.f32.mrb[0].mxu0
        %v7785 = vadd.f32 0.0, %v7784
        %v7786 = vpop.f32.mrb[0].mxu0
        %7787 = vmatprep.mubr.f32.mxu0 0.0
        %7788 = vmatmul.mubr.f32.gmra.mrb[0].mxu0 %v7459
        %v7789 = vpop.f32.mrb[0].mxu0
        %v7790 = vadd.f32 0.0, %v7789
        %v7791 = vpop.f32.mrb[0].mxu0
        %7792 = vmatprep.mubr.f32.mxu0 0.0
        %7793 = vmatmul.mubr.f32.gmra.mrb[0].mxu0 %v7462
        %v7794 = vpop.f32.mrb[0].mxu0
        %v7795 = vadd.f32 0.0, %v7794
        %v7796 = vpop.f32.mrb[0].mxu0
        %7797 = vmatprep.mubr.f32.mxu0 0.0
        %7798 = vmatmul.mubr.f32.gmra.mrb[0].mxu0 %v7465
        %v7799 = vpop.f32.mrb[0].mxu0
        %v7800 = vadd.f32 0.0, %v7799
        %v7801 = vpop.f32.mrb[0].mxu0
        %7802 = vmatprep.mubr.f32.mxu0 0.0
        %7803 = vmatmul.mubr.f32.gmra.mrb[0].mxu0 %v7468
        %v7804 = vpop.f32.mrb[0].mxu0
        %v7805 = vadd.f32 0.0, %v7804
        %v7806 = vpop.f32.mrb[0].mxu0
        %7807 = vmatprep.mubr.f32.mxu0 0.0
        %7808 = vmatmul.mubr.f32.gmra.mrb[0].mxu0 %v7471
        %v7809 = vpop.f32.mrb[0].mxu0
        %v7810 = vadd.f32 0.0, %v7809
        %v7811 = vpop.f32.mrb[0].mxu0
        %7812 = vmatprep.mubr.f32.mxu0 0.0
        %7813 = vmatmul.mubr.f32.gmra.mrb[0].mxu0 %v7474
        %v7814 = vpop.f32.mrb[0].mxu0
        %v7815 = vadd.f32 0.0, %v7814
        %v7816 = vpop.f32.mrb[0].mxu0
        %7817 = vmatprep.mubr.f32.mxu0 0.0
        %7818 = vmatmul.mubr.f32.gmra.mrb[0].mxu0 %v7477
        %v7819 = vpop.f32.mrb[0].mxu0
        %v7820 = vadd.f32 0.0, %v7819
        %v7821 = vpop.f32.mrb[0].mxu0
        %7822 = vmatprep.mubr.f32.mxu0 0.0
        %7823 = vmatmul.mubr.f32.gmra.mrb[0].mxu0 %v7480
        %v7824 = vpop.f32.mrb[0].mxu0
        %v7825 = vadd.f32 0.0, %v7824
        %v7826 = vpop.f32.mrb[0].mxu0
        %7827 = vmatprep.mubr.f32.mxu0 0.0
        %7828 = vmatmul.mubr.f32.gmra.mrb[0].mxu0 %v7483
        %v7829 = vpop.f32.mrb[0].mxu0
        %v7830 = vadd.f32 0.0, %v7829
        %v7831 = vpop.f32.mrb[0].mxu0
        %7832 = vmatprep.mubr.f32.mxu0 0.0
        %7833 = vmatmul.mubr.f32.gmra.mrb[0].mxu0 %v7486
        %v7834 = vpop.f32.mrb[0].mxu0
        %v7835 = vadd.f32 0.0, %v7834
        %v7836 = vpop.f32.mrb[0].mxu0
        %7837 = vmatprep.mubr.f32.mxu0 0.0
        %7838 = vmatmul.mubr.f32.gmra.mrb[0].mxu0 %v7489
        %v7839 = vpop.f32.mrb[0].mxu0
        %v7840 = vadd.f32 0.0, %v7839
        %v7841 = vpop.f32.mrb[0].mxu0
        %7842 = vmatprep.mubr.f32.mxu0 0.0
        %7843 = vmatmul.mubr.f32.gmra.mrb[0].mxu0 %v7492
        %v7844 = vpop.f32.mrb[0].mxu0
        %v7845 = vadd.f32 0.0, %v7844
        %v7846 = vpop.f32.mrb[0].mxu0
        %7847 = vmatprep.mubr.f32.mxu0 0.0
        %7848 = vmatmul.mubr.f32.gmra.mrb[0].mxu0 %v7495
        %v7849 = vpop.f32.mrb[0].mxu0
        %v7850 = vadd.f32 0.0, %v7849
        %v7851 = vpop.f32.mrb[0].mxu0
        %7852 = vmatprep.mubr.f32.mxu0 0.0
        %7853 = vmatmul.mubr.f32.gmra.mrb[0].mxu0 %v7498
        %v7854 = vpop.f32.mrb[0].mxu0
        %v7855 = vadd.f32 0.0, %v7854
        %v7856 = vpop.f32.mrb[0].mxu0
        %7857 = vmatprep.mubr.f32.mxu0 0.0
        %7858 = vmatmul.mubr.f32.gmra.mrb[0].mxu0 %v7501
        %v7859 = vpop.f32.mrb[0].mxu0
        %v7860 = vadd.f32 0.0, %v7859
        %v7861 = vpop.f32.mrb[0].mxu0
        %7862 = vmatprep.mubr.f32.mxu0 0.0
        %7863 = vmatmul.mubr.f32.gmra.mrb[0].mxu0 %v7504
        %v7864 = vpop.f32.mrb[0].mxu0
        %v7865 = vadd.f32 0.0, %v7864
        %v7866 = vpop.f32.mrb[0].mxu0
        %7867 = vmatprep.mubr.f32.mxu0 0.0
        %7868 = vmatmul.mubr.f32.gmra.mrb[0].mxu0 %v7507
        %v7869 = vpop.f32.mrb[0].mxu0
        %v7870 = vadd.f32 0.0, %v7869
        %v7871 = vpop.f32.mrb[0].mxu0
        %7872 = vmatprep.mubr.f32.mxu0 0.0
        %7873 = vmatmul.mubr.f32.gmra.mrb[0].mxu0 %v7510
        %v7874 = vpop.f32.mrb[0].mxu0
        %v7875 = vadd.f32 0.0, %v7874
        %v7876 = vpop.f32.mrb[0].mxu0
        %7877 = vmatprep.mubr.f32.mxu0 0.0
        %7878 = vmatmul.mubr.f32.gmra.mrb[0].mxu0 %v7513
        %v7879 = vpop.f32.mrb[0].mxu0
        %v7880 = vadd.f32 0.0, %v7879
        %v7881 = vpop.f32.mrb[0].mxu0
        %7882 = vdwg.mxu0
        %v7883 = vadd.f32 %v7211, %v7585
        %v7884 = vadd.f32 %v7212, %v7590
        %v7885 = vadd.f32 %v7213, %v7595
        %v7886 = vadd.f32 %v7214, %v7600
        %v7887 = vadd.f32 %v7215, %v7605
        %v7888 = vadd.f32 %v7216, %v7610
        %v7889 = vadd.f32 %v7217, %v7615
        %v7890 = vadd.f32 %v7218, %v7620
        %v7891 = vadd.f32 %v7219, %v7625
        %v7892 = vadd.f32 %v7220, %v7630
        %v7893 = vadd.f32 %v7221, %v7635
        %v7894 = vadd.f32 %v7222, %v7640
        %v7895 = vadd.f32 %v7223, %v7645
        %v7896 = vadd.f32 %v7224, %v7650
        %v7897 = vadd.f32 %v7225, %v7655
        %v7898 = vadd.f32 %v7226, %v7660
        %v7899 = vadd.f32 %v7227, %v7665
        %v7900 = vadd.f32 %v7228, %v7670
        %v7901 = vadd.f32 %v7229, %v7675
        %v7902 = vadd.f32 %v7230, %v7680
        %v7903 = vadd.f32 %v7231, %v7685
        %v7904 = vadd.f32 %v7232, %v7690
        %v7905 = vadd.f32 %v7233, %v7695
        %v7906 = vadd.f32 %v7234, %v7700
        %v7907 = vadd.f32 %v7235, %v7705
        %v7908 = vadd.f32 %v7236, %v7710
        %v7909 = vadd.f32 %v7237, %v7715
        %v7910 = vadd.f32 %v7238, %v7720
        %v7911 = vadd.f32 %v7239, %v7725
        %v7912 = vadd.f32 %v7240, %v7730
        %v7913 = vadd.f32 %v7241, %v7735
        %v7914 = vadd.f32 %v7242, %v7740
        %v7915 = vadd.f32 %v7243, %v7745
        %v7916 = vadd.f32 %v7244, %v7750
        %v7917 = vadd.f32 %v7245, %v7755
        %v7918 = vadd.f32 %v7246, %v7760
        %v7919 = vadd.f32 %v7247, %v7765
        %v7920 = vadd.f32 %v7248, %v7770
        %v7921 = vadd.f32 %v7249, %v7775
        %v7922 = vadd.f32 %v7250, %v7780
        %v7923 = vadd.f32 %v7251, %v7785
        %v7924 = vadd.f32 %v7252, %v7790
        %v7925 = vadd.f32 %v7253, %v7795
        %v7926 = vadd.f32 %v7254, %v7800
        %v7927 = vadd.f32 %v7255, %v7805
        %v7928 = vadd.f32 %v7256, %v7810
        %v7929 = vadd.f32 %v7257, %v7815
        %v7930 = vadd.f32 %v7258, %v7820
        %v7931 = vadd.f32 %v7259, %v7825
        %v7932 = vadd.f32 %v7260, %v7830
        %v7933 = vadd.f32 %v7261, %v7835
        %v7934 = vadd.f32 %v7262, %v7840
        %v7935 = vadd.f32 %v7263, %v7845
        %v7936 = vadd.f32 %v7264, %v7850
        %v7937 = vadd.f32 %v7265, %v7855
        %v7938 = vadd.f32 %v7266, %v7860
        %v7939 = vadd.f32 %v7267, %v7865
        %v7940 = vadd.f32 %v7268, %v7870
        %v7941 = vadd.f32 %v7269, %v7875
        %v7942 = vadd.f32 %v7270, %v7880
        %v7943 = vld [vmem:[%s6] sm:$0x1]
        %v7945 = vlaneseq
        %v7946 = vshrl.u32 %v7945, 7
        %v7947 = vsub.s32 0, %v7946
        %v7948 = vrot.slane %v7943, %v7947
        %v7950 = vadd.f32 %v7883, %v7948
        %v7951 = vadd.f32 %v7884, %v7948
        %v7952 = vadd.f32 %v7885, %v7948
        %v7953 = vadd.f32 %v7886, %v7948
        %v7954 = vadd.f32 %v7887, %v7948
        %v7955 = vadd.f32 %v7888, %v7948
        %v7956 = vadd.f32 %v7889, %v7948
        %v7957 = vadd.f32 %v7890, %v7948
        %v7958 = vadd.f32 %v7891, %v7948
        %v7959 = vadd.f32 %v7892, %v7948
        %v7960 = vadd.f32 %v7893, %v7948
        %v7961 = vadd.f32 %v7894, %v7948
        %v7962 = vadd.f32 %v7895, %v7948
        %v7963 = vadd.f32 %v7896, %v7948
        %v7964 = vadd.f32 %v7897, %v7948
        %v7965 = vadd.f32 %v7898, %v7948
        %v7966 = vadd.f32 %v7899, %v7948
        %v7967 = vadd.f32 %v7900, %v7948
        %v7968 = vadd.f32 %v7901, %v7948
        %v7969 = vadd.f32 %v7902, %v7948
        %v7970 = vadd.f32 %v7903, %v7948
        %v7971 = vadd.f32 %v7904, %v7948
        %v7972 = vadd.f32 %v7905, %v7948
        %v7973 = vadd.f32 %v7906, %v7948
        %v7974 = vadd.f32 %v7907, %v7948
        %v7975 = vadd.f32 %v7908, %v7948
        %v7976 = vadd.f32 %v7909, %v7948
        %v7977 = vadd.f32 %v7910, %v7948
        %v7978 = vadd.f32 %v7911, %v7948
        %v7979 = vadd.f32 %v7912, %v7948
        %v7980 = vadd.f32 %v7913, %v7948
        %v7981 = vadd.f32 %v7914, %v7948
        %v7982 = vadd.f32 %v7915, %v7948
        %v7983 = vadd.f32 %v7916, %v7948
        %v7984 = vadd.f32 %v7917, %v7948
        %v7985 = vadd.f32 %v7918, %v7948
        %v7986 = vadd.f32 %v7919, %v7948
        %v7987 = vadd.f32 %v7920, %v7948
        %v7988 = vadd.f32 %v7921, %v7948
        %v7989 = vadd.f32 %v7922, %v7948
        %v7990 = vadd.f32 %v7923, %v7948
        %v7991 = vadd.f32 %v7924, %v7948
        %v7992 = vadd.f32 %v7925, %v7948
        %v7993 = vadd.f32 %v7926, %v7948
        %v7994 = vadd.f32 %v7927, %v7948
        %v7995 = vadd.f32 %v7928, %v7948
        %v7996 = vadd.f32 %v7929, %v7948
        %v7997 = vadd.f32 %v7930, %v7948
        %v7998 = vadd.f32 %v7931, %v7948
        %v7999 = vadd.f32 %v7932, %v7948
        %v8000 = vadd.f32 %v7933, %v7948
        %v8001 = vadd.f32 %v7934, %v7948
        %v8002 = vadd.f32 %v7935, %v7948
        %v8003 = vadd.f32 %v7936, %v7948
        %v8004 = vadd.f32 %v7937, %v7948
        %v8005 = vadd.f32 %v7938, %v7948
        %v8006 = vadd.f32 %v7939, %v7948
        %v8007 = vadd.f32 %v7940, %v7948
        %v8008 = vadd.f32 %v7941, %v7948
        %v8009 = vadd.f32 %v7942, %v7948
        %v8010 = vmax.f32 %v7950, 0.0
        %v8011 = vmax.f32 %v7951, 0.0
        %v8012 = vmax.f32 %v7952, 0.0
        %v8013 = vmax.f32 %v7953, 0.0
        %v8014 = vmax.f32 %v7954, 0.0
        %v8015 = vmax.f32 %v7955, 0.0
        %v8016 = vmax.f32 %v7956, 0.0
        %v8017 = vmax.f32 %v7957, 0.0
        %v8018 = vmax.f32 %v7958, 0.0
        %v8019 = vmax.f32 %v7959, 0.0
        %v8020 = vmax.f32 %v7960, 0.0
        %v8021 = vmax.f32 %v7961, 0.0
        %v8022 = vmax.f32 %v7962, 0.0
        %v8023 = vmax.f32 %v7963, 0.0
        %v8024 = vmax.f32 %v7964, 0.0
        %v8025 = vmax.f32 %v7965, 0.0
        %v8026 = vmax.f32 %v7966, 0.0
        %v8027 = vmax.f32 %v7967, 0.0
        %v8028 = vmax.f32 %v7968, 0.0
        %v8029 = vmax.f32 %v7969, 0.0
        %v8030 = vmax.f32 %v7970, 0.0
        %v8031 = vmax.f32 %v7971, 0.0
        %v8032 = vmax.f32 %v7972, 0.0
        %v8033 = vmax.f32 %v7973, 0.0
        %v8034 = vmax.f32 %v7974, 0.0
        %v8035 = vmax.f32 %v7975, 0.0
        %v8036 = vmax.f32 %v7976, 0.0
        %v8037 = vmax.f32 %v7977, 0.0
        %v8038 = vmax.f32 %v7978, 0.0
        %v8039 = vmax.f32 %v7979, 0.0
        %v8040 = vmax.f32 %v7980, 0.0
        %v8041 = vmax.f32 %v7981, 0.0
        %v8042 = vmax.f32 %v7982, 0.0
        %v8043 = vmax.f32 %v7983, 0.0
        %v8044 = vmax.f32 %v7984, 0.0
        %v8045 = vmax.f32 %v7985, 0.0
        %v8046 = vmax.f32 %v7986, 0.0
        %v8047 = vmax.f32 %v7987, 0.0
        %v8048 = vmax.f32 %v7988, 0.0
        %v8049 = vmax.f32 %v7989, 0.0
        %v8050 = vmax.f32 %v7990, 0.0
        %v8051 = vmax.f32 %v7991, 0.0
        %v8052 = vmax.f32 %v7992, 0.0
        %v8053 = vmax.f32 %v7993, 0.0
        %v8054 = vmax.f32 %v7994, 0.0
        %v8055 = vmax.f32 %v7995, 0.0
        %v8056 = vmax.f32 %v7996, 0.0
        %v8057 = vmax.f32 %v7997, 0.0
        %v8058 = vmax.f32 %v7998, 0.0
        %v8059 = vmax.f32 %v7999, 0.0
        %v8060 = vmax.f32 %v8000, 0.0
        %v8061 = vmax.f32 %v8001, 0.0
        %v8062 = vmax.f32 %v8002, 0.0
        %v8063 = vmax.f32 %v8003, 0.0
        %v8064 = vmax.f32 %v8004, 0.0
        %v8065 = vmax.f32 %v8005, 0.0
        %v8066 = vmax.f32 %v8006, 0.0
        %v8067 = vmax.f32 %v8007, 0.0
        %v8068 = vmax.f32 %v8008, 0.0
        %v8069 = vmax.f32 %v8009, 0.0
        %8130 = vrot.lane.b32.xlu0 %v8010, 16
        %v8131 = vpop.permute.xlu0 %8130
        %8132 = vrot.lane.b32.xlu0 %v8011, 16
        %v8133 = vpop.permute.xlu0 %8132
        %8134 = vrot.lane.b32.xlu0 %v8012, 16
        %v8135 = vpop.permute.xlu0 %8134
        %8136 = vrot.lane.b32.xlu0 %v8013, 16
        %v8137 = vpop.permute.xlu0 %8136
        %8138 = vrot.lane.b32.xlu0 %v8014, 16
        %v8139 = vpop.permute.xlu0 %8138
        %8140 = vrot.lane.b32.xlu0 %v8015, 16
        %v8141 = vpop.permute.xlu0 %8140
        %8142 = vrot.lane.b32.xlu0 %v8016, 16
        %v8143 = vpop.permute.xlu0 %8142
        %8144 = vrot.lane.b32.xlu0 %v8017, 16
        %v8145 = vpop.permute.xlu0 %8144
        %8146 = vrot.lane.b32.xlu0 %v8018, 16
        %v8147 = vpop.permute.xlu0 %8146
        %8148 = vrot.lane.b32.xlu0 %v8019, 16
        %v8149 = vpop.permute.xlu0 %8148
        %8150 = vrot.lane.b32.xlu0 %v8020, 16
        %v8151 = vpop.permute.xlu0 %8150
        %8152 = vrot.lane.b32.xlu0 %v8021, 16
        %v8153 = vpop.permute.xlu0 %8152
        %8154 = vrot.lane.b32.xlu0 %v8022, 16
        %v8155 = vpop.permute.xlu0 %8154
        %8156 = vrot.lane.b32.xlu0 %v8023, 16
        %v8157 = vpop.permute.xlu0 %8156
        %8158 = vrot.lane.b32.xlu0 %v8024, 16
        %v8159 = vpop.permute.xlu0 %8158
        %8160 = vrot.lane.b32.xlu0 %v8025, 16
        %v8161 = vpop.permute.xlu0 %8160
        %8162 = vrot.lane.b32.xlu0 %v8026, 16
        %v8163 = vpop.permute.xlu0 %8162
        %8164 = vrot.lane.b32.xlu0 %v8027, 16
        %v8165 = vpop.permute.xlu0 %8164
        %8166 = vrot.lane.b32.xlu0 %v8028, 16
        %v8167 = vpop.permute.xlu0 %8166
        %8168 = vrot.lane.b32.xlu0 %v8029, 16
        %v8169 = vpop.permute.xlu0 %8168
        %8170 = vrot.lane.b32.xlu0 %v8030, 16
        %v8171 = vpop.permute.xlu0 %8170
        %8172 = vrot.lane.b32.xlu0 %v8031, 16
        %v8173 = vpop.permute.xlu0 %8172
        %8174 = vrot.lane.b32.xlu0 %v8032, 16
        %v8175 = vpop.permute.xlu0 %8174
        %8176 = vrot.lane.b32.xlu0 %v8033, 16
        %v8177 = vpop.permute.xlu0 %8176
        %8178 = vrot.lane.b32.xlu0 %v8034, 16
        %v8179 = vpop.permute.xlu0 %8178
        %8180 = vrot.lane.b32.xlu0 %v8035, 16
        %v8181 = vpop.permute.xlu0 %8180
        %8182 = vrot.lane.b32.xlu0 %v8036, 16
        %v8183 = vpop.permute.xlu0 %8182
        %8184 = vrot.lane.b32.xlu0 %v8037, 16
        %v8185 = vpop.permute.xlu0 %8184
        %8186 = vrot.lane.b32.xlu0 %v8038, 16
        %v8187 = vpop.permute.xlu0 %8186
        %8188 = vrot.lane.b32.xlu0 %v8039, 16
        %v8189 = vpop.permute.xlu0 %8188
        %8190 = vrot.lane.b32.xlu0 %v8040, 16
        %v8191 = vpop.permute.xlu0 %8190
        %8192 = vrot.lane.b32.xlu0 %v8041, 16
        %v8193 = vpop.permute.xlu0 %8192
        %8194 = vrot.lane.b32.xlu0 %v8042, 16
        %v8195 = vpop.permute.xlu0 %8194
        %8196 = vrot.lane.b32.xlu0 %v8043, 16
        %v8197 = vpop.permute.xlu0 %8196
        %8198 = vrot.lane.b32.xlu0 %v8044, 16
        %v8199 = vpop.permute.xlu0 %8198
        %8200 = vrot.lane.b32.xlu0 %v8045, 16
        %v8201 = vpop.permute.xlu0 %8200
        %8202 = vrot.lane.b32.xlu0 %v8046, 16
        %v8203 = vpop.permute.xlu0 %8202
        %8204 = vrot.lane.b32.xlu0 %v8047, 16
        %v8205 = vpop.permute.xlu0 %8204
        %8206 = vrot.lane.b32.xlu0 %v8048, 16
        %v8207 = vpop.permute.xlu0 %8206
        %8208 = vrot.lane.b32.xlu0 %v8049, 16
        %v8209 = vpop.permute.xlu0 %8208
        %8210 = vrot.lane.b32.xlu0 %v8050, 16
        %v8211 = vpop.permute.xlu0 %8210
        %8212 = vrot.lane.b32.xlu0 %v8051, 16
        %v8213 = vpop.permute.xlu0 %8212
        %8214 = vrot.lane.b32.xlu0 %v8052, 16
        %v8215 = vpop.permute.xlu0 %8214
        %8216 = vrot.lane.b32.xlu0 %v8053, 16
        %v8217 = vpop.permute.xlu0 %8216
        %8218 = vrot.lane.b32.xlu0 %v8054, 16
        %v8219 = vpop.permute.xlu0 %8218
        %8220 = vrot.lane.b32.xlu0 %v8055, 16
        %v8221 = vpop.permute.xlu0 %8220
        %8222 = vrot.lane.b32.xlu0 %v8056, 16
        %v8223 = vpop.permute.xlu0 %8222
        %8224 = vrot.lane.b32.xlu0 %v8057, 16
        %v8225 = vpop.permute.xlu0 %8224
        %8226 = vrot.lane.b32.xlu0 %v8058, 16
        %v8227 = vpop.permute.xlu0 %8226
        %8228 = vrot.lane.b32.xlu0 %v8059, 16
        %v8229 = vpop.permute.xlu0 %8228
        %8230 = vrot.lane.b32.xlu0 %v8060, 16
        %v8231 = vpop.permute.xlu0 %8230
        %8232 = vrot.lane.b32.xlu0 %v8061, 16
        %v8233 = vpop.permute.xlu0 %8232
        %8234 = vrot.lane.b32.xlu0 %v8062, 16
        %v8235 = vpop.permute.xlu0 %8234
        %8236 = vrot.lane.b32.xlu0 %v8063, 16
        %v8237 = vpop.permute.xlu0 %8236
        %8238 = vrot.lane.b32.xlu0 %v8064, 16
        %v8239 = vpop.permute.xlu0 %8238
        %8240 = vrot.lane.b32.xlu0 %v8065, 16
        %v8241 = vpop.permute.xlu0 %8240
        %8242 = vrot.lane.b32.xlu0 %v8066, 16
        %v8243 = vpop.permute.xlu0 %8242
        %8244 = vrot.lane.b32.xlu0 %v8067, 16
        %v8245 = vpop.permute.xlu0 %8244
        %8246 = vrot.lane.b32.xlu0 %v8068, 16
        %v8247 = vpop.permute.xlu0 %8246
        %8248 = vrot.lane.b32.xlu0 %v8069, 16
        %v8249 = vpop.permute.xlu0 %8248
        %vm8310 = vcmask 195712
        %8311 = vst.msk [vmem:[%s325] sm:$0xff] %vm8310, %v8131
        %8312 = vst.msk [vmem:[%s325 + $0x8] sm:$0xff] %vm8310, %v8133
        %8313 = vst.msk [vmem:[%s325 + $0x10] sm:$0xff] %vm8310, %v8135
        %8314 = vst.msk [vmem:[%s325 + $0x18] sm:$0xff] %vm8310, %v8137
        %8315 = vst.msk [vmem:[%s325 + $0x20] sm:$0xff] %vm8310, %v8139
        %8316 = vst.msk [vmem:[%s325 + $0x28] sm:$0xff] %vm8310, %v8141
        %8317 = vst.msk [vmem:[%s325 + $0x30] sm:$0xff] %vm8310, %v8143
        %8318 = vst.msk [vmem:[%s325 + $0x38] sm:$0xff] %vm8310, %v8145
        %8319 = vst.msk [vmem:[%s325 + $0x40] sm:$0xff] %vm8310, %v8147
        %8320 = vst.msk [vmem:[%s325 + $0x48] sm:$0xff] %vm8310, %v8149
        %8321 = vst.msk [vmem:[%s325 + $0x50] sm:$0xff] %vm8310, %v8151
        %8322 = vst.msk [vmem:[%s325 + $0x58] sm:$0xff] %vm8310, %v8153
        %8323 = vst.msk [vmem:[%s325 + $0x60] sm:$0xff] %vm8310, %v8155
        %8324 = vst.msk [vmem:[%s325 + $0x68] sm:$0xff] %vm8310, %v8157
        %8325 = vst.msk [vmem:[%s325 + $0x70] sm:$0xff] %vm8310, %v8159
        %8326 = vst.msk [vmem:[%s325 + $0x78] sm:$0xff] %vm8310, %v8161
        %8327 = vst.msk [vmem:[%s325 + $0x80] sm:$0xff] %vm8310, %v8163
        %8328 = vst.msk [vmem:[%s325 + $0x88] sm:$0xff] %vm8310, %v8165
        %8329 = vst.msk [vmem:[%s325 + $0x90] sm:$0xff] %vm8310, %v8167
        %8330 = vst.msk [vmem:[%s325 + $0x98] sm:$0xff] %vm8310, %v8169
        %8331 = vst.msk [vmem:[%s325 + $0xa0] sm:$0xff] %vm8310, %v8171
        %8332 = vst.msk [vmem:[%s325 + $0xa8] sm:$0xff] %vm8310, %v8173
        %8333 = vst.msk [vmem:[%s325 + $0xb0] sm:$0xff] %vm8310, %v8175
        %8334 = vst.msk [vmem:[%s325 + $0xb8] sm:$0xff] %vm8310, %v8177
        %8335 = vst.msk [vmem:[%s325 + $0xc0] sm:$0xff] %vm8310, %v8179
        %8336 = vst.msk [vmem:[%s325 + $0xc8] sm:$0xff] %vm8310, %v8181
        %8337 = vst.msk [vmem:[%s325 + $0xd0] sm:$0xff] %vm8310, %v8183
        %8338 = vst.msk [vmem:[%s325 + $0xd8] sm:$0xff] %vm8310, %v8185
        %8339 = vst.msk [vmem:[%s325 + $0xe0] sm:$0xff] %vm8310, %v8187
        %8340 = vst.msk [vmem:[%s325 + $0xe8] sm:$0xff] %vm8310, %v8189
        %8341 = vst.msk [vmem:[%s325 + $0xf0] sm:$0xff] %vm8310, %v8191
        %8342 = vst.msk [vmem:[%s325 + $0xf8] sm:$0xff] %vm8310, %v8193
        %8343 = vst.msk [vmem:[%s325 + $0x100] sm:$0xff] %vm8310, %v8195
        %8344 = vst.msk [vmem:[%s325 + $0x108] sm:$0xff] %vm8310, %v8197
        %8345 = vst.msk [vmem:[%s325 + $0x110] sm:$0xff] %vm8310, %v8199
        %8346 = vst.msk [vmem:[%s325 + $0x118] sm:$0xff] %vm8310, %v8201
        %8347 = vst.msk [vmem:[%s325 + $0x120] sm:$0xff] %vm8310, %v8203
        %8348 = vst.msk [vmem:[%s325 + $0x128] sm:$0xff] %vm8310, %v8205
        %8349 = vst.msk [vmem:[%s325 + $0x130] sm:$0xff] %vm8310, %v8207
        %8350 = vst.msk [vmem:[%s325 + $0x138] sm:$0xff] %vm8310, %v8209
        %8351 = vst.msk [vmem:[%s325 + $0x140] sm:$0xff] %vm8310, %v8211
        %8352 = vst.msk [vmem:[%s325 + $0x148] sm:$0xff] %vm8310, %v8213
        %8353 = vst.msk [vmem:[%s325 + $0x150] sm:$0xff] %vm8310, %v8215
        %8354 = vst.msk [vmem:[%s325 + $0x158] sm:$0xff] %vm8310, %v8217
        %8355 = vst.msk [vmem:[%s325 + $0x160] sm:$0xff] %vm8310, %v8219
        %8356 = vst.msk [vmem:[%s325 + $0x168] sm:$0xff] %vm8310, %v8221
        %8357 = vst.msk [vmem:[%s325 + $0x170] sm:$0xff] %vm8310, %v8223
        %8358 = vst.msk [vmem:[%s325 + $0x178] sm:$0xff] %vm8310, %v8225
        %8359 = vst.msk [vmem:[%s325 + $0x180] sm:$0xff] %vm8310, %v8227
        %8360 = vst.msk [vmem:[%s325 + $0x188] sm:$0xff] %vm8310, %v8229
        %8361 = vst.msk [vmem:[%s325 + $0x190] sm:$0xff] %vm8310, %v8231
        %8362 = vst.msk [vmem:[%s325 + $0x198] sm:$0xff] %vm8310, %v8233
        %8363 = vst.msk [vmem:[%s325 + $0x1a0] sm:$0xff] %vm8310, %v8235
        %8364 = vst.msk [vmem:[%s325 + $0x1a8] sm:$0xff] %vm8310, %v8237
        %8365 = vst.msk [vmem:[%s325 + $0x1b0] sm:$0xff] %vm8310, %v8239
        %8366 = vst.msk [vmem:[%s325 + $0x1b8] sm:$0xff] %vm8310, %v8241
        %8367 = vst.msk [vmem:[%s325 + $0x1c0] sm:$0xff] %vm8310, %v8243
        %8368 = vst.msk [vmem:[%s325 + $0x1c8] sm:$0xff] %vm8310, %v8245
        %8369 = vst.msk [vmem:[%s325 + $0x1d0] sm:$0xff] %vm8310, %v8247
        %8370 = vst.msk [vmem:[%s325 + $0x1d8] sm:$0xff] %vm8310, %v8249
        %v8371 = vld [vmem:[%s330] sm:$0xff]
        %v8372 = vld [vmem:[%s330 + $0x8] sm:$0xff]
        %v8373 = vld [vmem:[%s330 + $0x10] sm:$0xff]
        %v8374 = vld [vmem:[%s330 + $0x18] sm:$0xff]
        %v8375 = vld [vmem:[%s330 + $0x20] sm:$0xff]
        %v8376 = vld [vmem:[%s330 + $0x28] sm:$0xff]
        %v8377 = vld [vmem:[%s330 + $0x30] sm:$0xff]
        %v8378 = vld [vmem:[%s330 + $0x38] sm:$0xff]
        %v8379 = vld [vmem:[%s330 + $0x40] sm:$0xff]
        %v8380 = vld [vmem:[%s330 + $0x48] sm:$0xff]
        %v8381 = vld [vmem:[%s330 + $0x50] sm:$0xff]
        %v8382 = vld [vmem:[%s330 + $0x58] sm:$0xff]
        %v8383 = vld [vmem:[%s330 + $0x60] sm:$0xff]
        %v8384 = vld [vmem:[%s330 + $0x68] sm:$0xff]
        %v8385 = vld [vmem:[%s330 + $0x70] sm:$0xff]
        %v8386 = vld [vmem:[%s330 + $0x78] sm:$0xff]
        %v8387 = vld [vmem:[%s330 + $0x80] sm:$0xff]
        %v8388 = vld [vmem:[%s330 + $0x88] sm:$0xff]
        %v8389 = vld [vmem:[%s330 + $0x90] sm:$0xff]
        %v8390 = vld [vmem:[%s330 + $0x98] sm:$0xff]
        %v8391 = vld [vmem:[%s330 + $0xa0] sm:$0xff]
        %v8392 = vld [vmem:[%s330 + $0xa8] sm:$0xff]
        %v8393 = vld [vmem:[%s330 + $0xb0] sm:$0xff]
        %v8394 = vld [vmem:[%s330 + $0xb8] sm:$0xff]
        %v8395 = vld [vmem:[%s330 + $0xc0] sm:$0xff]
        %v8396 = vld [vmem:[%s330 + $0xc8] sm:$0xff]
        %v8397 = vld [vmem:[%s330 + $0xd0] sm:$0xff]
        %v8398 = vld [vmem:[%s330 + $0xd8] sm:$0xff]
        %v8399 = vld [vmem:[%s330 + $0xe0] sm:$0xff]
        %v8400 = vld [vmem:[%s330 + $0xe8] sm:$0xff]
        %v8401 = vld [vmem:[%s330 + $0xf0] sm:$0xff]
        %v8402 = vld [vmem:[%s330 + $0xf8] sm:$0xff]
        %v8403 = vld [vmem:[%s330 + $0x100] sm:$0xff]
        %v8404 = vld [vmem:[%s330 + $0x108] sm:$0xff]
        %v8405 = vld [vmem:[%s330 + $0x110] sm:$0xff]
        %v8406 = vld [vmem:[%s330 + $0x118] sm:$0xff]
        %v8407 = vld [vmem:[%s330 + $0x120] sm:$0xff]
        %v8408 = vld [vmem:[%s330 + $0x128] sm:$0xff]
        %v8409 = vld [vmem:[%s330 + $0x130] sm:$0xff]
        %v8410 = vld [vmem:[%s330 + $0x138] sm:$0xff]
        %v8411 = vld [vmem:[%s330 + $0x140] sm:$0xff]
        %v8412 = vld [vmem:[%s330 + $0x148] sm:$0xff]
        %v8413 = vld [vmem:[%s330 + $0x150] sm:$0xff]
        %v8414 = vld [vmem:[%s330 + $0x158] sm:$0xff]
        %v8415 = vld [vmem:[%s330 + $0x160] sm:$0xff]
        %v8416 = vld [vmem:[%s330 + $0x168] sm:$0xff]
        %v8417 = vld [vmem:[%s330 + $0x170] sm:$0xff]
        %v8418 = vld [vmem:[%s330 + $0x178] sm:$0xff]
        %v8419 = vld [vmem:[%s330 + $0x180] sm:$0xff]
        %v8420 = vld [vmem:[%s330 + $0x188] sm:$0xff]
        %v8421 = vld [vmem:[%s330 + $0x190] sm:$0xff]
        %v8422 = vld [vmem:[%s330 + $0x198] sm:$0xff]
        %v8423 = vld [vmem:[%s330 + $0x1a0] sm:$0xff]
        %v8424 = vld [vmem:[%s330 + $0x1a8] sm:$0xff]
        %v8425 = vld [vmem:[%s330 + $0x1b0] sm:$0xff]
        %v8426 = vld [vmem:[%s330 + $0x1b8] sm:$0xff]
        %v8427 = vld [vmem:[%s330 + $0x1c0] sm:$0xff]
        %v8428 = vld [vmem:[%s330 + $0x1c8] sm:$0xff]
        %v8429 = vld [vmem:[%s330 + $0x1d0] sm:$0xff]
        %v8430 = vld [vmem:[%s330 + $0x1d8] sm:$0xff]
        %v8431 = vld [vmem:[%s330 + $0x1e0] sm:$0xff]
        %v8432 = vld [vmem:[%s330 + $0x1e8] sm:$0xff]
        %v8433 = vld [vmem:[%s330 + $0x1f0] sm:$0xff]
        %v8434 = vmax.f32 %v8371, %v8374
        %v8435 = vmax.f32 %v8372, %v8375
        %v8436 = vmax.f32 %v8373, %v8376
        %v8437 = vmax.f32 %v8374, %v8377
        %v8438 = vmax.f32 %v8375, %v8378
        %v8439 = vmax.f32 %v8376, %v8379
        %v8440 = vmax.f32 %v8377, %v8380
        %v8441 = vmax.f32 %v8378, %v8381
        %v8442 = vmax.f32 %v8379, %v8382
        %v8443 = vmax.f32 %v8380, %v8383
        %v8444 = vmax.f32 %v8381, %v8384
        %v8445 = vmax.f32 %v8382, %v8385
        %v8446 = vmax.f32 %v8383, %v8386
        %v8447 = vmax.f32 %v8384, %v8387
        %v8448 = vmax.f32 %v8385, %v8388
        %v8449 = vmax.f32 %v8386, %v8389
        %v8450 = vmax.f32 %v8387, %v8390
        %v8451 = vmax.f32 %v8388, %v8391
        %v8452 = vmax.f32 %v8389, %v8392
        %v8453 = vmax.f32 %v8390, %v8393
        %v8454 = vmax.f32 %v8391, %v8394
        %v8455 = vmax.f32 %v8392, %v8395
        %v8456 = vmax.f32 %v8393, %v8396
        %v8457 = vmax.f32 %v8394, %v8397
        %v8458 = vmax.f32 %v8395, %v8398
        %v8459 = vmax.f32 %v8396, %v8399
        %v8460 = vmax.f32 %v8397, %v8400
        %v8461 = vmax.f32 %v8398, %v8401
        %v8462 = vmax.f32 %v8399, %v8402
        %v8463 = vmax.f32 %v8400, %v8403
        %v8464 = vmax.f32 %v8401, %v8404
        %v8465 = vmax.f32 %v8402, %v8405
        %v8466 = vmax.f32 %v8403, %v8406
        %v8467 = vmax.f32 %v8404, %v8407
        %v8468 = vmax.f32 %v8405, %v8408
        %v8469 = vmax.f32 %v8406, %v8409
        %v8470 = vmax.f32 %v8407, %v8410
        %v8471 = vmax.f32 %v8408, %v8411
        %v8472 = vmax.f32 %v8409, %v8412
        %v8473 = vmax.f32 %v8410, %v8413
        %v8474 = vmax.f32 %v8411, %v8414
        %v8475 = vmax.f32 %v8412, %v8415
        %v8476 = vmax.f32 %v8413, %v8416
        %v8477 = vmax.f32 %v8414, %v8417
        %v8478 = vmax.f32 %v8415, %v8418
        %v8479 = vmax.f32 %v8416, %v8419
        %v8480 = vmax.f32 %v8417, %v8420
        %v8481 = vmax.f32 %v8418, %v8421
        %v8482 = vmax.f32 %v8419, %v8422
        %v8483 = vmax.f32 %v8420, %v8423
        %v8484 = vmax.f32 %v8421, %v8424
        %v8485 = vmax.f32 %v8422, %v8425
        %v8486 = vmax.f32 %v8423, %v8426
        %v8487 = vmax.f32 %v8424, %v8427
        %v8488 = vmax.f32 %v8425, %v8428
        %v8489 = vmax.f32 %v8426, %v8429
        %v8490 = vmax.f32 %v8427, %v8430
        %v8491 = vmax.f32 %v8428, %v8431
        %v8492 = vmax.f32 %v8429, %v8432
        %v8493 = vmax.f32 %v8430, %v8433
        %v8494 = vld [vmem:[%s330 + $0x1f8] sm:$0xff]
        %v8495 = vld [vmem:[%s330 + $0x200] sm:$0xff]
        %v8496 = vld [vmem:[%s330 + $0x208] sm:$0xff]
        %v8497 = vmax.f32 %v8434, %v8377
        %v8498 = vmax.f32 %v8435, %v8378
        %v8499 = vmax.f32 %v8436, %v8379
        %v8500 = vmax.f32 %v8437, %v8380
        %v8501 = vmax.f32 %v8438, %v8381
        %v8502 = vmax.f32 %v8439, %v8382
        %v8503 = vmax.f32 %v8440, %v8383
        %v8504 = vmax.f32 %v8441, %v8384
        %v8505 = vmax.f32 %v8442, %v8385
        %v8506 = vmax.f32 %v8443, %v8386
        %v8507 = vmax.f32 %v8444, %v8387
        %v8508 = vmax.f32 %v8445, %v8388
        %v8509 = vmax.f32 %v8446, %v8389
        %v8510 = vmax.f32 %v8447, %v8390
        %v8511 = vmax.f32 %v8448, %v8391
        %v8512 = vmax.f32 %v8449, %v8392
        %v8513 = vmax.f32 %v8450, %v8393
        %v8514 = vmax.f32 %v8451, %v8394
        %v8515 = vmax.f32 %v8452, %v8395
        %v8516 = vmax.f32 %v8453, %v8396
        %v8517 = vmax.f32 %v8454, %v8397
        %v8518 = vmax.f32 %v8455, %v8398
        %v8519 = vmax.f32 %v8456, %v8399
        %v8520 = vmax.f32 %v8457, %v8400
        %v8521 = vmax.f32 %v8458, %v8401
        %v8522 = vmax.f32 %v8459, %v8402
        %v8523 = vmax.f32 %v8460, %v8403
        %v8524 = vmax.f32 %v8461, %v8404
        %v8525 = vmax.f32 %v8462, %v8405
        %v8526 = vmax.f32 %v8463, %v8406
        %v8527 = vmax.f32 %v8464, %v8407
        %v8528 = vmax.f32 %v8465, %v8408
        %v8529 = vmax.f32 %v8466, %v8409
        %v8530 = vmax.f32 %v8467, %v8410
        %v8531 = vmax.f32 %v8468, %v8411
        %v8532 = vmax.f32 %v8469, %v8412
        %v8533 = vmax.f32 %v8470, %v8413
        %v8534 = vmax.f32 %v8471, %v8414
        %v8535 = vmax.f32 %v8472, %v8415
        %v8536 = vmax.f32 %v8473, %v8416
        %v8537 = vmax.f32 %v8474, %v8417
        %v8538 = vmax.f32 %v8475, %v8418
        %v8539 = vmax.f32 %v8476, %v8419
        %v8540 = vmax.f32 %v8477, %v8420
        %v8541 = vmax.f32 %v8478, %v8421
        %v8542 = vmax.f32 %v8479, %v8422
        %v8543 = vmax.f32 %v8480, %v8423
        %v8544 = vmax.f32 %v8481, %v8424
        %v8545 = vmax.f32 %v8482, %v8425
        %v8546 = vmax.f32 %v8483, %v8426
        %v8547 = vmax.f32 %v8484, %v8427
        %v8548 = vmax.f32 %v8485, %v8428
        %v8549 = vmax.f32 %v8486, %v8429
        %v8550 = vmax.f32 %v8487, %v8430
        %v8551 = vmax.f32 %v8488, %v8431
        %v8552 = vmax.f32 %v8489, %v8432
        %v8553 = vmax.f32 %v8490, %v8433
        %v8554 = vmax.f32 %v8491, %v8494
        %v8555 = vmax.f32 %v8492, %v8495
        %v8556 = vmax.f32 %v8493, %v8496
        %8557 = vst.msk [vmem:[#allocation4] sm:$0xff] %vm819, -1e+30
        %8558 = vst.msk [vmem:[#allocation4 + $0x1e8] sm:$0xff] %vm819, -1e+30
        %8559 = vst.msk [vmem:[#allocation4 + $0x8] sm:$0xff] %vm819, %v8497
        %8560 = vst.msk [vmem:[#allocation4 + $0x10] sm:$0xff] %vm819, %v8498
        %8561 = vst.msk [vmem:[#allocation4 + $0x18] sm:$0xff] %vm819, %v8499
        %8562 = vst.msk [vmem:[#allocation4 + $0x20] sm:$0xff] %vm819, %v8500
        %8563 = vst.msk [vmem:[#allocation4 + $0x28] sm:$0xff] %vm819, %v8501
        %8564 = vst.msk [vmem:[#allocation4 + $0x30] sm:$0xff] %vm819, %v8502
        %8565 = vst.msk [vmem:[#allocation4 + $0x38] sm:$0xff] %vm819, %v8503
        %8566 = vst.msk [vmem:[#allocation4 + $0x40] sm:$0xff] %vm819, %v8504
        %8567 = vst.msk [vmem:[#allocation4 + $0x48] sm:$0xff] %vm819, %v8505
        %8568 = vst.msk [vmem:[#allocation4 + $0x50] sm:$0xff] %vm819, %v8506
        %8569 = vst.msk [vmem:[#allocation4 + $0x58] sm:$0xff] %vm819, %v8507
        %8570 = vst.msk [vmem:[#allocation4 + $0x60] sm:$0xff] %vm819, %v8508
        %8571 = vst.msk [vmem:[#allocation4 + $0x68] sm:$0xff] %vm819, %v8509
        %8572 = vst.msk [vmem:[#allocation4 + $0x70] sm:$0xff] %vm819, %v8510
        %8573 = vst.msk [vmem:[#allocation4 + $0x78] sm:$0xff] %vm819, %v8511
        %8574 = vst.msk [vmem:[#allocation4 + $0x80] sm:$0xff] %vm819, %v8512
        %8575 = vst.msk [vmem:[#allocation4 + $0x88] sm:$0xff] %vm819, %v8513
        %8576 = vst.msk [vmem:[#allocation4 + $0x90] sm:$0xff] %vm819, %v8514
        %8577 = vst.msk [vmem:[#allocation4 + $0x98] sm:$0xff] %vm819, %v8515
        %8578 = vst.msk [vmem:[#allocation4 + $0xa0] sm:$0xff] %vm819, %v8516
        %8579 = vst.msk [vmem:[#allocation4 + $0xa8] sm:$0xff] %vm819, %v8517
        %8580 = vst.msk [vmem:[#allocation4 + $0xb0] sm:$0xff] %vm819, %v8518
        %8581 = vst.msk [vmem:[#allocation4 + $0xb8] sm:$0xff] %vm819, %v8519
        %8582 = vst.msk [vmem:[#allocation4 + $0xc0] sm:$0xff] %vm819, %v8520
        %8583 = vst.msk [vmem:[#allocation4 + $0xc8] sm:$0xff] %vm819, %v8521
        %8584 = vst.msk [vmem:[#allocation4 + $0xd0] sm:$0xff] %vm819, %v8522
        %8585 = vst.msk [vmem:[#allocation4 + $0xd8] sm:$0xff] %vm819, %v8523
        %8586 = vst.msk [vmem:[#allocation4 + $0xe0] sm:$0xff] %vm819, %v8524
        %8587 = vst.msk [vmem:[#allocation4 + $0xe8] sm:$0xff] %vm819, %v8525
        %8588 = vst.msk [vmem:[#allocation4 + $0xf0] sm:$0xff] %vm819, %v8526
        %8589 = vst.msk [vmem:[#allocation4 + $0xf8] sm:$0xff] %vm819, %v8527
        %8590 = vst.msk [vmem:[#allocation4 + $0x100] sm:$0xff] %vm819, %v8528
        %8591 = vst.msk [vmem:[#allocation4 + $0x108] sm:$0xff] %vm819, %v8529
        %8592 = vst.msk [vmem:[#allocation4 + $0x110] sm:$0xff] %vm819, %v8530
        %8593 = vst.msk [vmem:[#allocation4 + $0x118] sm:$0xff] %vm819, %v8531
        %8594 = vst.msk [vmem:[#allocation4 + $0x120] sm:$0xff] %vm819, %v8532
        %8595 = vst.msk [vmem:[#allocation4 + $0x128] sm:$0xff] %vm819, %v8533
        %8596 = vst.msk [vmem:[#allocation4 + $0x130] sm:$0xff] %vm819, %v8534
        %8597 = vst.msk [vmem:[#allocation4 + $0x138] sm:$0xff] %vm819, %v8535
        %8598 = vst.msk [vmem:[#allocation4 + $0x140] sm:$0xff] %vm819, %v8536
        %8599 = vst.msk [vmem:[#allocation4 + $0x148] sm:$0xff] %vm819, %v8537
        %8600 = vst.msk [vmem:[#allocation4 + $0x150] sm:$0xff] %vm819, %v8538
        %8601 = vst.msk [vmem:[#allocation4 + $0x158] sm:$0xff] %vm819, %v8539
        %8602 = vst.msk [vmem:[#allocation4 + $0x160] sm:$0xff] %vm819, %v8540
        %8603 = vst.msk [vmem:[#allocation4 + $0x168] sm:$0xff] %vm819, %v8541
        %8604 = vst.msk [vmem:[#allocation4 + $0x170] sm:$0xff] %vm819, %v8542
        %8605 = vst.msk [vmem:[#allocation4 + $0x178] sm:$0xff] %vm819, %v8543
        %8606 = vst.msk [vmem:[#allocation4 + $0x180] sm:$0xff] %vm819, %v8544
        %8607 = vst.msk [vmem:[#allocation4 + $0x188] sm:$0xff] %vm819, %v8545
        %8608 = vst.msk [vmem:[#allocation4 + $0x190] sm:$0xff] %vm819, %v8546
        %8609 = vst.msk [vmem:[#allocation4 + $0x198] sm:$0xff] %vm819, %v8547
        %8610 = vst.msk [vmem:[#allocation4 + $0x1a0] sm:$0xff] %vm819, %v8548
        %8611 = vst.msk [vmem:[#allocation4 + $0x1a8] sm:$0xff] %vm819, %v8549
        %8612 = vst.msk [vmem:[#allocation4 + $0x1b0] sm:$0xff] %vm819, %v8550
        %8613 = vst.msk [vmem:[#allocation4 + $0x1b8] sm:$0xff] %vm819, %v8551
        %8614 = vst.msk [vmem:[#allocation4 + $0x1c0] sm:$0xff] %vm819, %v8552
        %8615 = vst.msk [vmem:[#allocation4 + $0x1c8] sm:$0xff] %vm819, %v8553
        %8616 = vst.msk [vmem:[#allocation4 + $0x1d0] sm:$0xff] %vm819, %v8554
        %8617 = vst.msk [vmem:[#allocation4 + $0x1d8] sm:$0xff] %vm819, %v8555
        %8618 = vst.msk [vmem:[#allocation4 + $0x1e0] sm:$0xff] %vm819, %v8556
        %v8619 = vld [vmem:[#allocation4 + $0x7] sm:$0xff]
        %v8620 = vld [vmem:[#allocation4 + $0xf] sm:$0xff]
        %v8621 = vld [vmem:[#allocation4 + $0x17] sm:$0xff]
        %v8622 = vld [vmem:[#allocation4 + $0x1f] sm:$0xff]
        %v8623 = vld [vmem:[#allocation4 + $0x27] sm:$0xff]
        %v8624 = vld [vmem:[#allocation4 + $0x2f] sm:$0xff]
        %v8625 = vld [vmem:[#allocation4 + $0x37] sm:$0xff]
        %v8626 = vld [vmem:[#allocation4 + $0x3f] sm:$0xff]
        %v8627 = vld [vmem:[#allocation4 + $0x47] sm:$0xff]
        %v8628 = vld [vmem:[#allocation4 + $0x4f] sm:$0xff]
        %v8629 = vld [vmem:[#allocation4 + $0x57] sm:$0xff]
        %v8630 = vld [vmem:[#allocation4 + $0x5f] sm:$0xff]
        %v8631 = vld [vmem:[#allocation4 + $0x67] sm:$0xff]
        %v8632 = vld [vmem:[#allocation4 + $0x6f] sm:$0xff]
        %v8633 = vld [vmem:[#allocation4 + $0x77] sm:$0xff]
        %v8634 = vld [vmem:[#allocation4 + $0x7f] sm:$0xff]
        %v8635 = vld [vmem:[#allocation4 + $0x87] sm:$0xff]
        %v8636 = vld [vmem:[#allocation4 + $0x8f] sm:$0xff]
        %v8637 = vld [vmem:[#allocation4 + $0x97] sm:$0xff]
        %v8638 = vld [vmem:[#allocation4 + $0x9f] sm:$0xff]
        %v8639 = vld [vmem:[#allocation4 + $0xa7] sm:$0xff]
        %v8640 = vld [vmem:[#allocation4 + $0xaf] sm:$0xff]
        %v8641 = vld [vmem:[#allocation4 + $0xb7] sm:$0xff]
        %v8642 = vld [vmem:[#allocation4 + $0xbf] sm:$0xff]
        %v8643 = vld [vmem:[#allocation4 + $0xc7] sm:$0xff]
        %v8644 = vld [vmem:[#allocation4 + $0xcf] sm:$0xff]
        %v8645 = vld [vmem:[#allocation4 + $0xd7] sm:$0xff]
        %v8646 = vld [vmem:[#allocation4 + $0xdf] sm:$0xff]
        %v8647 = vld [vmem:[#allocation4 + $0xe7] sm:$0xff]
        %v8648 = vld [vmem:[#allocation4 + $0xef] sm:$0xff]
        %v8649 = vld [vmem:[#allocation4 + $0xf7] sm:$0xff]
        %v8650 = vld [vmem:[#allocation4 + $0xff] sm:$0xff]
        %v8651 = vld [vmem:[#allocation4 + $0x107] sm:$0xff]
        %v8652 = vld [vmem:[#allocation4 + $0x10f] sm:$0xff]
        %v8653 = vld [vmem:[#allocation4 + $0x117] sm:$0xff]
        %v8654 = vld [vmem:[#allocation4 + $0x11f] sm:$0xff]
        %v8655 = vld [vmem:[#allocation4 + $0x127] sm:$0xff]
        %v8656 = vld [vmem:[#allocation4 + $0x12f] sm:$0xff]
        %v8657 = vld [vmem:[#allocation4 + $0x137] sm:$0xff]
        %v8658 = vld [vmem:[#allocation4 + $0x13f] sm:$0xff]
        %v8659 = vld [vmem:[#allocation4 + $0x147] sm:$0xff]
        %v8660 = vld [vmem:[#allocation4 + $0x14f] sm:$0xff]
        %v8661 = vld [vmem:[#allocation4 + $0x157] sm:$0xff]
        %v8662 = vld [vmem:[#allocation4 + $0x15f] sm:$0xff]
        %v8663 = vld [vmem:[#allocation4 + $0x167] sm:$0xff]
        %v8664 = vld [vmem:[#allocation4 + $0x16f] sm:$0xff]
        %v8665 = vld [vmem:[#allocation4 + $0x177] sm:$0xff]
        %v8666 = vld [vmem:[#allocation4 + $0x17f] sm:$0xff]
        %v8667 = vld [vmem:[#allocation4 + $0x187] sm:$0xff]
        %v8668 = vld [vmem:[#allocation4 + $0x18f] sm:$0xff]
        %v8669 = vld [vmem:[#allocation4 + $0x197] sm:$0xff]
        %v8670 = vld [vmem:[#allocation4 + $0x19f] sm:$0xff]
        %v8671 = vld [vmem:[#allocation4 + $0x1a7] sm:$0xff]
        %v8672 = vld [vmem:[#allocation4 + $0x1af] sm:$0xff]
        %v8673 = vld [vmem:[#allocation4 + $0x1b7] sm:$0xff]
        %v8674 = vld [vmem:[#allocation4 + $0x1bf] sm:$0xff]
        %v8675 = vld [vmem:[#allocation4 + $0x1c7] sm:$0xff]
        %v8676 = vld [vmem:[#allocation4 + $0x1cf] sm:$0xff]
        %v8677 = vld [vmem:[#allocation4 + $0x1d7] sm:$0xff]
        %v8678 = vld [vmem:[#allocation4 + $0x1df] sm:$0xff]
        %v8679 = vld [vmem:[#allocation4 + $0x8] sm:$0xff]
        %v8680 = vld [vmem:[#allocation4 + $0x10] sm:$0xff]
        %v8681 = vld [vmem:[#allocation4 + $0x18] sm:$0xff]
        %v8682 = vld [vmem:[#allocation4 + $0x20] sm:$0xff]
        %v8683 = vld [vmem:[#allocation4 + $0x28] sm:$0xff]
        %v8684 = vld [vmem:[#allocation4 + $0x30] sm:$0xff]
        %v8685 = vld [vmem:[#allocation4 + $0x38] sm:$0xff]
        %v8686 = vld [vmem:[#allocation4 + $0x40] sm:$0xff]
        %v8687 = vld [vmem:[#allocation4 + $0x48] sm:$0xff]
        %v8688 = vld [vmem:[#allocation4 + $0x50] sm:$0xff]
        %v8689 = vld [vmem:[#allocation4 + $0x58] sm:$0xff]
        %v8690 = vld [vmem:[#allocation4 + $0x60] sm:$0xff]
        %v8691 = vld [vmem:[#allocation4 + $0x68] sm:$0xff]
        %v8692 = vld [vmem:[#allocation4 + $0x70] sm:$0xff]
        %v8693 = vld [vmem:[#allocation4 + $0x78] sm:$0xff]
        %v8694 = vld [vmem:[#allocation4 + $0x80] sm:$0xff]
        %v8695 = vld [vmem:[#allocation4 + $0x88] sm:$0xff]
        %v8696 = vld [vmem:[#allocation4 + $0x90] sm:$0xff]
        %v8697 = vld [vmem:[#allocation4 + $0x98] sm:$0xff]
        %v8698 = vld [vmem:[#allocation4 + $0xa0] sm:$0xff]
        %v8699 = vld [vmem:[#allocation4 + $0xa8] sm:$0xff]
        %v8700 = vld [vmem:[#allocation4 + $0xb0] sm:$0xff]
        %v8701 = vld [vmem:[#allocation4 + $0xb8] sm:$0xff]
        %v8702 = vld [vmem:[#allocation4 + $0xc0] sm:$0xff]
        %v8703 = vld [vmem:[#allocation4 + $0xc8] sm:$0xff]
        %v8704 = vld [vmem:[#allocation4 + $0xd0] sm:$0xff]
        %v8705 = vld [vmem:[#allocation4 + $0xd8] sm:$0xff]
        %v8706 = vld [vmem:[#allocation4 + $0xe0] sm:$0xff]
        %v8707 = vld [vmem:[#allocation4 + $0xe8] sm:$0xff]
        %v8708 = vld [vmem:[#allocation4 + $0xf0] sm:$0xff]
        %v8709 = vld [vmem:[#allocation4 + $0xf8] sm:$0xff]
        %v8710 = vld [vmem:[#allocation4 + $0x100] sm:$0xff]
        %v8711 = vld [vmem:[#allocation4 + $0x108] sm:$0xff]
        %v8712 = vld [vmem:[#allocation4 + $0x110] sm:$0xff]
        %v8713 = vld [vmem:[#allocation4 + $0x118] sm:$0xff]
        %v8714 = vld [vmem:[#allocation4 + $0x120] sm:$0xff]
        %v8715 = vld [vmem:[#allocation4 + $0x128] sm:$0xff]
        %v8716 = vld [vmem:[#allocation4 + $0x130] sm:$0xff]
        %v8717 = vld [vmem:[#allocation4 + $0x138] sm:$0xff]
        %v8718 = vld [vmem:[#allocation4 + $0x140] sm:$0xff]
        %v8719 = vld [vmem:[#allocation4 + $0x148] sm:$0xff]
        %v8720 = vld [vmem:[#allocation4 + $0x150] sm:$0xff]
        %v8721 = vld [vmem:[#allocation4 + $0x158] sm:$0xff]
        %v8722 = vld [vmem:[#allocation4 + $0x160] sm:$0xff]
        %v8723 = vld [vmem:[#allocation4 + $0x168] sm:$0xff]
        %v8724 = vld [vmem:[#allocation4 + $0x170] sm:$0xff]
        %v8725 = vld [vmem:[#allocation4 + $0x178] sm:$0xff]
        %v8726 = vld [vmem:[#allocation4 + $0x180] sm:$0xff]
        %v8727 = vld [vmem:[#allocation4 + $0x188] sm:$0xff]
        %v8728 = vld [vmem:[#allocation4 + $0x190] sm:$0xff]
        %v8729 = vld [vmem:[#allocation4 + $0x198] sm:$0xff]
        %v8730 = vld [vmem:[#allocation4 + $0x1a0] sm:$0xff]
        %v8731 = vld [vmem:[#allocation4 + $0x1a8] sm:$0xff]
        %v8732 = vld [vmem:[#allocation4 + $0x1b0] sm:$0xff]
        %v8733 = vld [vmem:[#allocation4 + $0x1b8] sm:$0xff]
        %v8734 = vld [vmem:[#allocation4 + $0x1c0] sm:$0xff]
        %v8735 = vld [vmem:[#allocation4 + $0x1c8] sm:$0xff]
        %v8736 = vld [vmem:[#allocation4 + $0x1d0] sm:$0xff]
        %v8737 = vld [vmem:[#allocation4 + $0x1d8] sm:$0xff]
        %v8738 = vld [vmem:[#allocation4 + $0x1e0] sm:$0xff]
        %v8739 = vmax.f32 %v8619, %v8679
        %v8740 = vmax.f32 %v8620, %v8680
        %v8741 = vmax.f32 %v8621, %v8681
        %v8742 = vmax.f32 %v8622, %v8682
        %v8743 = vmax.f32 %v8623, %v8683
        %v8744 = vmax.f32 %v8624, %v8684
        %v8745 = vmax.f32 %v8625, %v8685
        %v8746 = vmax.f32 %v8626, %v8686
        %v8747 = vmax.f32 %v8627, %v8687
        %v8748 = vmax.f32 %v8628, %v8688
        %v8749 = vmax.f32 %v8629, %v8689
        %v8750 = vmax.f32 %v8630, %v8690
        %v8751 = vmax.f32 %v8631, %v8691
        %v8752 = vmax.f32 %v8632, %v8692
        %v8753 = vmax.f32 %v8633, %v8693
        %v8754 = vmax.f32 %v8634, %v8694
        %v8755 = vmax.f32 %v8635, %v8695
        %v8756 = vmax.f32 %v8636, %v8696
        %v8757 = vmax.f32 %v8637, %v8697
        %v8758 = vmax.f32 %v8638, %v8698
        %v8759 = vmax.f32 %v8639, %v8699
        %v8760 = vmax.f32 %v8640, %v8700
        %v8761 = vmax.f32 %v8641, %v8701
        %v8762 = vmax.f32 %v8642, %v8702
        %v8763 = vmax.f32 %v8643, %v8703
        %v8764 = vmax.f32 %v8644, %v8704
        %v8765 = vmax.f32 %v8645, %v8705
        %v8766 = vmax.f32 %v8646, %v8706
        %v8767 = vmax.f32 %v8647, %v8707
        %v8768 = vmax.f32 %v8648, %v8708
        %v8769 = vmax.f32 %v8649, %v8709
        %v8770 = vmax.f32 %v8650, %v8710
        %v8771 = vmax.f32 %v8651, %v8711
        %v8772 = vmax.f32 %v8652, %v8712
        %v8773 = vmax.f32 %v8653, %v8713
        %v8774 = vmax.f32 %v8654, %v8714
        %v8775 = vmax.f32 %v8655, %v8715
        %v8776 = vmax.f32 %v8656, %v8716
        %v8777 = vmax.f32 %v8657, %v8717
        %v8778 = vmax.f32 %v8658, %v8718
        %v8779 = vmax.f32 %v8659, %v8719
        %v8780 = vmax.f32 %v8660, %v8720
        %v8781 = vmax.f32 %v8661, %v8721
        %v8782 = vmax.f32 %v8662, %v8722
        %v8783 = vmax.f32 %v8663, %v8723
        %v8784 = vmax.f32 %v8664, %v8724
        %v8785 = vmax.f32 %v8665, %v8725
        %v8786 = vmax.f32 %v8666, %v8726
        %v8787 = vmax.f32 %v8667, %v8727
        %v8788 = vmax.f32 %v8668, %v8728
        %v8789 = vmax.f32 %v8669, %v8729
        %v8790 = vmax.f32 %v8670, %v8730
        %v8791 = vmax.f32 %v8671, %v8731
        %v8792 = vmax.f32 %v8672, %v8732
        %v8793 = vmax.f32 %v8673, %v8733
        %v8794 = vmax.f32 %v8674, %v8734
        %v8795 = vmax.f32 %v8675, %v8735
        %v8796 = vmax.f32 %v8676, %v8736
        %v8797 = vmax.f32 %v8677, %v8737
        %v8798 = vmax.f32 %v8678, %v8738
        %v8799 = vld [vmem:[#allocation4 + $0x9] sm:$0xff]
        %v8800 = vld [vmem:[#allocation4 + $0x11] sm:$0xff]
        %v8801 = vld [vmem:[#allocation4 + $0x19] sm:$0xff]
        %v8802 = vld [vmem:[#allocation4 + $0x21] sm:$0xff]
        %v8803 = vld [vmem:[#allocation4 + $0x29] sm:$0xff]
        %v8804 = vld [vmem:[#allocation4 + $0x31] sm:$0xff]
        %v8805 = vld [vmem:[#allocation4 + $0x39] sm:$0xff]
        %v8806 = vld [vmem:[#allocation4 + $0x41] sm:$0xff]
        %v8807 = vld [vmem:[#allocation4 + $0x49] sm:$0xff]
        %v8808 = vld [vmem:[#allocation4 + $0x51] sm:$0xff]
        %v8809 = vld [vmem:[#allocation4 + $0x59] sm:$0xff]
        %v8810 = vld [vmem:[#allocation4 + $0x61] sm:$0xff]
        %v8811 = vld [vmem:[#allocation4 + $0x69] sm:$0xff]
        %v8812 = vld [vmem:[#allocation4 + $0x71] sm:$0xff]
        %v8813 = vld [vmem:[#allocation4 + $0x79] sm:$0xff]
        %v8814 = vld [vmem:[#allocation4 + $0x81] sm:$0xff]
        %v8815 = vld [vmem:[#allocation4 + $0x89] sm:$0xff]
        %v8816 = vld [vmem:[#allocation4 + $0x91] sm:$0xff]
        %v8817 = vld [vmem:[#allocation4 + $0x99] sm:$0xff]
        %v8818 = vld [vmem:[#allocation4 + $0xa1] sm:$0xff]
        %v8819 = vld [vmem:[#allocation4 + $0xa9] sm:$0xff]
        %v8820 = vld [vmem:[#allocation4 + $0xb1] sm:$0xff]
        %v8821 = vld [vmem:[#allocation4 + $0xb9] sm:$0xff]
        %v8822 = vld [vmem:[#allocation4 + $0xc1] sm:$0xff]
        %v8823 = vld [vmem:[#allocation4 + $0xc9] sm:$0xff]
        %v8824 = vld [vmem:[#allocation4 + $0xd1] sm:$0xff]
        %v8825 = vld [vmem:[#allocation4 + $0xd9] sm:$0xff]
        %v8826 = vld [vmem:[#allocation4 + $0xe1] sm:$0xff]
        %v8827 = vld [vmem:[#allocation4 + $0xe9] sm:$0xff]
        %v8828 = vld [vmem:[#allocation4 + $0xf1] sm:$0xff]
        %v8829 = vld [vmem:[#allocation4 + $0xf9] sm:$0xff]
        %v8830 = vld [vmem:[#allocation4 + $0x101] sm:$0xff]
        %v8831 = vld [vmem:[#allocation4 + $0x109] sm:$0xff]
        %v8832 = vld [vmem:[#allocation4 + $0x111] sm:$0xff]
        %v8833 = vld [vmem:[#allocation4 + $0x119] sm:$0xff]
        %v8834 = vld [vmem:[#allocation4 + $0x121] sm:$0xff]
        %v8835 = vld [vmem:[#allocation4 + $0x129] sm:$0xff]
        %v8836 = vld [vmem:[#allocation4 + $0x131] sm:$0xff]
        %v8837 = vld [vmem:[#allocation4 + $0x139] sm:$0xff]
        %v8838 = vld [vmem:[#allocation4 + $0x141] sm:$0xff]
        %v8839 = vld [vmem:[#allocation4 + $0x149] sm:$0xff]
        %v8840 = vld [vmem:[#allocation4 + $0x151] sm:$0xff]
        %v8841 = vld [vmem:[#allocation4 + $0x159] sm:$0xff]
        %v8842 = vld [vmem:[#allocation4 + $0x161] sm:$0xff]
        %v8843 = vld [vmem:[#allocation4 + $0x169] sm:$0xff]
        %v8844 = vld [vmem:[#allocation4 + $0x171] sm:$0xff]
        %v8845 = vld [vmem:[#allocation4 + $0x179] sm:$0xff]
        %v8846 = vld [vmem:[#allocation4 + $0x181] sm:$0xff]
        %v8847 = vld [vmem:[#allocation4 + $0x189] sm:$0xff]
        %v8848 = vld [vmem:[#allocation4 + $0x191] sm:$0xff]
        %v8849 = vld [vmem:[#allocation4 + $0x199] sm:$0xff]
        %v8850 = vld [vmem:[#allocation4 + $0x1a1] sm:$0xff]
        %v8851 = vld [vmem:[#allocation4 + $0x1a9] sm:$0xff]
        %v8852 = vld [vmem:[#allocation4 + $0x1b1] sm:$0xff]
        %v8853 = vld [vmem:[#allocation4 + $0x1b9] sm:$0xff]
        %v8854 = vld [vmem:[#allocation4 + $0x1c1] sm:$0xff]
        %v8855 = vld [vmem:[#allocation4 + $0x1c9] sm:$0xff]
        %v8856 = vld [vmem:[#allocation4 + $0x1d1] sm:$0xff]
        %v8857 = vld [vmem:[#allocation4 + $0x1d9] sm:$0xff]
        %v8858 = vld [vmem:[#allocation4 + $0x1e1] sm:$0xff]
        %v8859 = vmax.f32 %v8739, %v8799
        %v8860 = vmax.f32 %v8740, %v8800
        %v8861 = vmax.f32 %v8741, %v8801
        %v8862 = vmax.f32 %v8742, %v8802
        %v8863 = vmax.f32 %v8743, %v8803
        %v8864 = vmax.f32 %v8744, %v8804
        %v8865 = vmax.f32 %v8745, %v8805
        %v8866 = vmax.f32 %v8746, %v8806
        %v8867 = vmax.f32 %v8747, %v8807
        %v8868 = vmax.f32 %v8748, %v8808
        %v8869 = vmax.f32 %v8749, %v8809
        %v8870 = vmax.f32 %v8750, %v8810
        %v8871 = vmax.f32 %v8751, %v8811
        %v8872 = vmax.f32 %v8752, %v8812
        %v8873 = vmax.f32 %v8753, %v8813
        %v8874 = vmax.f32 %v8754, %v8814
        %v8875 = vmax.f32 %v8755, %v8815
        %v8876 = vmax.f32 %v8756, %v8816
        %v8877 = vmax.f32 %v8757, %v8817
        %v8878 = vmax.f32 %v8758, %v8818
        %v8879 = vmax.f32 %v8759, %v8819
        %v8880 = vmax.f32 %v8760, %v8820
        %v8881 = vmax.f32 %v8761, %v8821
        %v8882 = vmax.f32 %v8762, %v8822
        %v8883 = vmax.f32 %v8763, %v8823
        %v8884 = vmax.f32 %v8764, %v8824
        %v8885 = vmax.f32 %v8765, %v8825
        %v8886 = vmax.f32 %v8766, %v8826
        %v8887 = vmax.f32 %v8767, %v8827
        %v8888 = vmax.f32 %v8768, %v8828
        %v8889 = vmax.f32 %v8769, %v8829
        %v8890 = vmax.f32 %v8770, %v8830
        %v8891 = vmax.f32 %v8771, %v8831
        %v8892 = vmax.f32 %v8772, %v8832
        %v8893 = vmax.f32 %v8773, %v8833
        %v8894 = vmax.f32 %v8774, %v8834
        %v8895 = vmax.f32 %v8775, %v8835
        %v8896 = vmax.f32 %v8776, %v8836
        %v8897 = vmax.f32 %v8777, %v8837
        %v8898 = vmax.f32 %v8778, %v8838
        %v8899 = vmax.f32 %v8779, %v8839
        %v8900 = vmax.f32 %v8780, %v8840
        %v8901 = vmax.f32 %v8781, %v8841
        %v8902 = vmax.f32 %v8782, %v8842
        %v8903 = vmax.f32 %v8783, %v8843
        %v8904 = vmax.f32 %v8784, %v8844
        %v8905 = vmax.f32 %v8785, %v8845
        %v8906 = vmax.f32 %v8786, %v8846
        %v8907 = vmax.f32 %v8787, %v8847
        %v8908 = vmax.f32 %v8788, %v8848
        %v8909 = vmax.f32 %v8789, %v8849
        %v8910 = vmax.f32 %v8790, %v8850
        %v8911 = vmax.f32 %v8791, %v8851
        %v8912 = vmax.f32 %v8792, %v8852
        %v8913 = vmax.f32 %v8793, %v8853
        %v8914 = vmax.f32 %v8794, %v8854
        %v8915 = vmax.f32 %v8795, %v8855
        %v8916 = vmax.f32 %v8796, %v8856
        %v8917 = vmax.f32 %v8797, %v8857
        %v8918 = vmax.f32 %v8798, %v8858
        %v8919 = vld [vmem:[%s7] sm:$0xf]
        %v8920 = vld [vmem:[%s8] sm:$0x1]
        %v8922 = vlaneseq
        %v8923 = vshrl.u32 %v8922, 7
        %v8924 = vsub.s32 0, %v8923
        %v8925 = vrot.slane %v8920, %v8924
        %v8928 = vsel %vm819, %v8859, 0
        %v8931 = vsel %vm819, %v8860, 0
        %v8934 = vsel %vm819, %v8861, 0
        %v8937 = vsel %vm819, %v8862, 0
        %v8940 = vsel %vm819, %v8863, 0
        %v8943 = vsel %vm819, %v8864, 0
        %v8946 = vsel %vm819, %v8865, 0
        %v8949 = vsel %vm819, %v8866, 0
        %v8952 = vsel %vm819, %v8867, 0
        %v8955 = vsel %vm819, %v8868, 0
        %v8958 = vsel %vm819, %v8869, 0
        %v8961 = vsel %vm819, %v8870, 0
        %v8964 = vsel %vm819, %v8871, 0
        %v8967 = vsel %vm819, %v8872, 0
        %v8970 = vsel %vm819, %v8873, 0
        %v8973 = vsel %vm819, %v8874, 0
        %v8976 = vsel %vm819, %v8875, 0
        %v8979 = vsel %vm819, %v8876, 0
        %v8982 = vsel %vm819, %v8877, 0
        %v8985 = vsel %vm819, %v8878, 0
        %v8988 = vsel %vm819, %v8879, 0
        %v8991 = vsel %vm819, %v8880, 0
        %v8994 = vsel %vm819, %v8881, 0
        %v8997 = vsel %vm819, %v8882, 0
        %v9000 = vsel %vm819, %v8883, 0
        %v9003 = vsel %vm819, %v8884, 0
        %v9006 = vsel %vm819, %v8885, 0
        %v9009 = vsel %vm819, %v8886, 0
        %v9012 = vsel %vm819, %v8887, 0
        %v9015 = vsel %vm819, %v8888, 0
        %v9018 = vsel %vm819, %v8889, 0
        %v9021 = vsel %vm819, %v8890, 0
        %v9024 = vsel %vm819, %v8891, 0
        %v9027 = vsel %vm819, %v8892, 0
        %v9030 = vsel %vm819, %v8893, 0
        %v9033 = vsel %vm819, %v8894, 0
        %v9036 = vsel %vm819, %v8895, 0
        %v9039 = vsel %vm819, %v8896, 0
        %v9042 = vsel %vm819, %v8897, 0
        %v9045 = vsel %vm819, %v8898, 0
        %v9048 = vsel %vm819, %v8899, 0
        %v9051 = vsel %vm819, %v8900, 0
        %v9054 = vsel %vm819, %v8901, 0
        %v9057 = vsel %vm819, %v8902, 0
        %v9060 = vsel %vm819, %v8903, 0
        %v9063 = vsel %vm819, %v8904, 0
        %v9066 = vsel %vm819, %v8905, 0
        %v9069 = vsel %vm819, %v8906, 0
        %v9072 = vsel %vm819, %v8907, 0
        %v9075 = vsel %vm819, %v8908, 0
        %v9078 = vsel %vm819, %v8909, 0
        %v9081 = vsel %vm819, %v8910, 0
        %v9084 = vsel %vm819, %v8911, 0
        %v9087 = vsel %vm819, %v8912, 0
        %v9090 = vsel %vm819, %v8913, 0
        %v9093 = vsel %vm819, %v8914, 0
        %v9096 = vsel %vm819, %v8915, 0
        %v9099 = vsel %vm819, %v8916, 0
        %v9102 = vsel %vm819, %v8917, 0
        %v9105 = vsel %vm819, %v8918, 0
        %v9108 = vsel %vm1000, %v8919, 0
        %9110 = vmatprep.subr.mxu0 0.0
        %9111 = vmatpush1.msra.mxu0 %v9108
        %9112 = vmatprep.subr.mxu0 0.0
        %9113 = vmatpush1.msra.mxu0 0.0
        %9114 = vmatprep.subr.mxu0 0.0
        %9115 = vmatpush1.msra.mxu0 0.0
        %9116 = vmatprep.subr.mxu0 0.0
        %9117 = vmatpush1.msra.mxu0 0.0
        %9118 = vmatprep.subr.mxu0 0.0
        %9119 = vmatpush1.msra.mxu0 0.0
        %9120 = vmatprep.subr.mxu0 0.0
        %9121 = vmatpush1.msra.mxu0 0.0
        %9122 = vmatprep.subr.mxu0 0.0
        %9123 = vmatpush1.msra.mxu0 0.0
        %9124 = vmatprep.subr.mxu0 0.0
        %9125 = vmatpush1.msra.mxu0 0.0
        %9126 = vmatprep.subr.mxu0 0.0
        %9127 = vmatpush1.msra.mxu0 0.0
        %9128 = vmatprep.subr.mxu0 0.0
        %9129 = vmatpush1.msra.mxu0 0.0
        %9130 = vmatprep.subr.mxu0 0.0
        %9131 = vmatpush1.msra.mxu0 0.0
        %9132 = vmatprep.subr.mxu0 0.0
        %9133 = vmatpush1.msra.mxu0 0.0
        %9134 = vmatprep.subr.mxu0 0.0
        %9135 = vmatpush1.msra.mxu0 0.0
        %9136 = vmatprep.subr.mxu0 0.0
        %9137 = vmatpush1.msra.mxu0 0.0
        %9138 = vmatprep.subr.mxu0 0.0
        %9139 = vmatpush1.msra.mxu0 0.0
        %9140 = vmatprep.subr.mxu0 0.0
        %9141 = vmatpush1.msra.mxu0 0.0
        %9142 = vmatprep.subr.mxu0 0.0
        %9143 = vmatpush1.msra.mxu0 0.0
        %9144 = vmatprep.subr.mxu0 0.0
        %9145 = vmatpush1.msra.mxu0 0.0
        %9146 = vmatprep.subr.mxu0 0.0
        %9147 = vmatpush1.msra.mxu0 0.0
        %9148 = vmatprep.subr.mxu0 0.0
        %9149 = vmatpush1.msra.mxu0 0.0
        %9150 = vmatprep.subr.mxu0 0.0
        %9151 = vmatpush1.msra.mxu0 0.0
        %9152 = vmatprep.subr.mxu0 0.0
        %9153 = vmatpush1.msra.mxu0 0.0
        %9154 = vmatprep.subr.mxu0 0.0
        %9155 = vmatpush1.msra.mxu0 0.0
        %9156 = vmatprep.subr.mxu0 0.0
        %9157 = vmatpush1.msra.mxu0 0.0
        %9158 = vmatprep.subr.mxu0 0.0
        %9159 = vmatpush1.msra.mxu0 0.0
        %9160 = vmatprep.subr.mxu0 0.0
        %9161 = vmatpush1.msra.mxu0 0.0
        %9162 = vmatprep.subr.mxu0 0.0
        %9163 = vmatpush1.msra.mxu0 0.0
        %9164 = vmatprep.subr.mxu0 0.0
        %9165 = vmatpush1.msra.mxu0 0.0
        %9166 = vmatprep.subr.mxu0 0.0
        %9167 = vmatpush1.msra.mxu0 0.0
        %9168 = vmatprep.subr.mxu0 0.0
        %9169 = vmatpush1.msra.mxu0 0.0
        %9170 = vmatprep.subr.mxu0 0.0
        %9171 = vmatpush1.msra.mxu0 0.0
        %9172 = vmatprep.subr.mxu0 0.0
        %9173 = vmatpush1.msra.mxu0 0.0
        %9174 = vmatprep.mubr.f32.mxu0 0.0
        %9175 = vmatmul.mubr.f32.gmra.mrb[0].mxu0 %v8928
        %v9176 = vpop.f32.mrb[0].mxu0
        %v9177 = vadd.f32 %v8925, %v9176
        %v9178 = vpop.f32.mrb[0].mxu0
        %9179 = vmatprep.mubr.f32.mxu0 0.0
        %9180 = vmatmul.mubr.f32.gmra.mrb[0].mxu0 %v8931
        %v9181 = vpop.f32.mrb[0].mxu0
        %v9182 = vadd.f32 %v8925, %v9181
        %v9183 = vpop.f32.mrb[0].mxu0
        %9184 = vmatprep.mubr.f32.mxu0 0.0
        %9185 = vmatmul.mubr.f32.gmra.mrb[0].mxu0 %v8934
        %v9186 = vpop.f32.mrb[0].mxu0
        %v9187 = vadd.f32 %v8925, %v9186
        %v9188 = vpop.f32.mrb[0].mxu0
        %9189 = vmatprep.mubr.f32.mxu0 0.0
        %9190 = vmatmul.mubr.f32.gmra.mrb[0].mxu0 %v8937
        %v9191 = vpop.f32.mrb[0].mxu0
        %v9192 = vadd.f32 %v8925, %v9191
        %v9193 = vpop.f32.mrb[0].mxu0
        %9194 = vmatprep.mubr.f32.mxu0 0.0
        %9195 = vmatmul.mubr.f32.gmra.mrb[0].mxu0 %v8940
        %v9196 = vpop.f32.mrb[0].mxu0
        %v9197 = vadd.f32 %v8925, %v9196
        %v9198 = vpop.f32.mrb[0].mxu0
        %9199 = vmatprep.mubr.f32.mxu0 0.0
        %9200 = vmatmul.mubr.f32.gmra.mrb[0].mxu0 %v8943
        %v9201 = vpop.f32.mrb[0].mxu0
        %v9202 = vadd.f32 %v8925, %v9201
        %v9203 = vpop.f32.mrb[0].mxu0
        %9204 = vmatprep.mubr.f32.mxu0 0.0
        %9205 = vmatmul.mubr.f32.gmra.mrb[0].mxu0 %v8946
        %v9206 = vpop.f32.mrb[0].mxu0
        %v9207 = vadd.f32 %v8925, %v9206
        %v9208 = vpop.f32.mrb[0].mxu0
        %9209 = vmatprep.mubr.f32.mxu0 0.0
        %9210 = vmatmul.mubr.f32.gmra.mrb[0].mxu0 %v8949
        %v9211 = vpop.f32.mrb[0].mxu0
        %v9212 = vadd.f32 %v8925, %v9211
        %v9213 = vpop.f32.mrb[0].mxu0
        %9214 = vmatprep.mubr.f32.mxu0 0.0
        %9215 = vmatmul.mubr.f32.gmra.mrb[0].mxu0 %v8952
        %v9216 = vpop.f32.mrb[0].mxu0
        %v9217 = vadd.f32 %v8925, %v9216
        %v9218 = vpop.f32.mrb[0].mxu0
        %9219 = vmatprep.mubr.f32.mxu0 0.0
        %9220 = vmatmul.mubr.f32.gmra.mrb[0].mxu0 %v8955
        %v9221 = vpop.f32.mrb[0].mxu0
        %v9222 = vadd.f32 %v8925, %v9221
        %v9223 = vpop.f32.mrb[0].mxu0
        %9224 = vmatprep.mubr.f32.mxu0 0.0
        %9225 = vmatmul.mubr.f32.gmra.mrb[0].mxu0 %v8958
        %v9226 = vpop.f32.mrb[0].mxu0
        %v9227 = vadd.f32 %v8925, %v9226
        %v9228 = vpop.f32.mrb[0].mxu0
        %9229 = vmatprep.mubr.f32.mxu0 0.0
        %9230 = vmatmul.mubr.f32.gmra.mrb[0].mxu0 %v8961
        %v9231 = vpop.f32.mrb[0].mxu0
        %v9232 = vadd.f32 %v8925, %v9231
        %v9233 = vpop.f32.mrb[0].mxu0
        %9234 = vmatprep.mubr.f32.mxu0 0.0
        %9235 = vmatmul.mubr.f32.gmra.mrb[0].mxu0 %v8964
        %v9236 = vpop.f32.mrb[0].mxu0
        %v9237 = vadd.f32 %v8925, %v9236
        %v9238 = vpop.f32.mrb[0].mxu0
        %9239 = vmatprep.mubr.f32.mxu0 0.0
        %9240 = vmatmul.mubr.f32.gmra.mrb[0].mxu0 %v8967
        %v9241 = vpop.f32.mrb[0].mxu0
        %v9242 = vadd.f32 %v8925, %v9241
        %v9243 = vpop.f32.mrb[0].mxu0
        %9244 = vmatprep.mubr.f32.mxu0 0.0
        %9245 = vmatmul.mubr.f32.gmra.mrb[0].mxu0 %v8970
        %v9246 = vpop.f32.mrb[0].mxu0
        %v9247 = vadd.f32 %v8925, %v9246
        %v9248 = vpop.f32.mrb[0].mxu0
        %9249 = vmatprep.mubr.f32.mxu0 0.0
        %9250 = vmatmul.mubr.f32.gmra.mrb[0].mxu0 %v8973
        %v9251 = vpop.f32.mrb[0].mxu0
        %v9252 = vadd.f32 %v8925, %v9251
        %v9253 = vpop.f32.mrb[0].mxu0
        %9254 = vmatprep.mubr.f32.mxu0 0.0
        %9255 = vmatmul.mubr.f32.gmra.mrb[0].mxu0 %v8976
        %v9256 = vpop.f32.mrb[0].mxu0
        %v9257 = vadd.f32 %v8925, %v9256
        %v9258 = vpop.f32.mrb[0].mxu0
        %9259 = vmatprep.mubr.f32.mxu0 0.0
        %9260 = vmatmul.mubr.f32.gmra.mrb[0].mxu0 %v8979
        %v9261 = vpop.f32.mrb[0].mxu0
        %v9262 = vadd.f32 %v8925, %v9261
        %v9263 = vpop.f32.mrb[0].mxu0
        %9264 = vmatprep.mubr.f32.mxu0 0.0
        %9265 = vmatmul.mubr.f32.gmra.mrb[0].mxu0 %v8982
        %v9266 = vpop.f32.mrb[0].mxu0
        %v9267 = vadd.f32 %v8925, %v9266
        %v9268 = vpop.f32.mrb[0].mxu0
        %9269 = vmatprep.mubr.f32.mxu0 0.0
        %9270 = vmatmul.mubr.f32.gmra.mrb[0].mxu0 %v8985
        %v9271 = vpop.f32.mrb[0].mxu0
        %v9272 = vadd.f32 %v8925, %v9271
        %v9273 = vpop.f32.mrb[0].mxu0
        %9274 = vmatprep.mubr.f32.mxu0 0.0
        %9275 = vmatmul.mubr.f32.gmra.mrb[0].mxu0 %v8988
        %v9276 = vpop.f32.mrb[0].mxu0
        %v9277 = vadd.f32 %v8925, %v9276
        %v9278 = vpop.f32.mrb[0].mxu0
        %9279 = vmatprep.mubr.f32.mxu0 0.0
        %9280 = vmatmul.mubr.f32.gmra.mrb[0].mxu0 %v8991
        %v9281 = vpop.f32.mrb[0].mxu0
        %v9282 = vadd.f32 %v8925, %v9281
        %v9283 = vpop.f32.mrb[0].mxu0
        %9284 = vmatprep.mubr.f32.mxu0 0.0
        %9285 = vmatmul.mubr.f32.gmra.mrb[0].mxu0 %v8994
        %v9286 = vpop.f32.mrb[0].mxu0
        %v9287 = vadd.f32 %v8925, %v9286
        %v9288 = vpop.f32.mrb[0].mxu0
        %9289 = vmatprep.mubr.f32.mxu0 0.0
        %9290 = vmatmul.mubr.f32.gmra.mrb[0].mxu0 %v8997
        %v9291 = vpop.f32.mrb[0].mxu0
        %v9292 = vadd.f32 %v8925, %v9291
        %v9293 = vpop.f32.mrb[0].mxu0
        %9294 = vmatprep.mubr.f32.mxu0 0.0
        %9295 = vmatmul.mubr.f32.gmra.mrb[0].mxu0 %v9000
        %v9296 = vpop.f32.mrb[0].mxu0
        %v9297 = vadd.f32 %v8925, %v9296
        %v9298 = vpop.f32.mrb[0].mxu0
        %9299 = vmatprep.mubr.f32.mxu0 0.0
        %9300 = vmatmul.mubr.f32.gmra.mrb[0].mxu0 %v9003
        %v9301 = vpop.f32.mrb[0].mxu0
        %v9302 = vadd.f32 %v8925, %v9301
        %v9303 = vpop.f32.mrb[0].mxu0
        %9304 = vmatprep.mubr.f32.mxu0 0.0
        %9305 = vmatmul.mubr.f32.gmra.mrb[0].mxu0 %v9006
        %v9306 = vpop.f32.mrb[0].mxu0
        %v9307 = vadd.f32 %v8925, %v9306
        %v9308 = vpop.f32.mrb[0].mxu0
        %9309 = vmatprep.mubr.f32.mxu0 0.0
        %9310 = vmatmul.mubr.f32.gmra.mrb[0].mxu0 %v9009
        %v9311 = vpop.f32.mrb[0].mxu0
        %v9312 = vadd.f32 %v8925, %v9311
        %v9313 = vpop.f32.mrb[0].mxu0
        %9314 = vmatprep.mubr.f32.mxu0 0.0
        %9315 = vmatmul.mubr.f32.gmra.mrb[0].mxu0 %v9012
        %v9316 = vpop.f32.mrb[0].mxu0
        %v9317 = vadd.f32 %v8925, %v9316
        %v9318 = vpop.f32.mrb[0].mxu0
        %9319 = vmatprep.mubr.f32.mxu0 0.0
        %9320 = vmatmul.mubr.f32.gmra.mrb[0].mxu0 %v9015
        %v9321 = vpop.f32.mrb[0].mxu0
        %v9322 = vadd.f32 %v8925, %v9321
        %v9323 = vpop.f32.mrb[0].mxu0
        %9324 = vmatprep.mubr.f32.mxu0 0.0
        %9325 = vmatmul.mubr.f32.gmra.mrb[0].mxu0 %v9018
        %v9326 = vpop.f32.mrb[0].mxu0
        %v9327 = vadd.f32 %v8925, %v9326
        %v9328 = vpop.f32.mrb[0].mxu0
        %9329 = vmatprep.mubr.f32.mxu0 0.0
        %9330 = vmatmul.mubr.f32.gmra.mrb[0].mxu0 %v9021
        %v9331 = vpop.f32.mrb[0].mxu0
        %v9332 = vadd.f32 %v8925, %v9331
        %v9333 = vpop.f32.mrb[0].mxu0
        %9334 = vmatprep.mubr.f32.mxu0 0.0
        %9335 = vmatmul.mubr.f32.gmra.mrb[0].mxu0 %v9024
        %v9336 = vpop.f32.mrb[0].mxu0
        %v9337 = vadd.f32 %v8925, %v9336
        %v9338 = vpop.f32.mrb[0].mxu0
        %9339 = vmatprep.mubr.f32.mxu0 0.0
        %9340 = vmatmul.mubr.f32.gmra.mrb[0].mxu0 %v9027
        %v9341 = vpop.f32.mrb[0].mxu0
        %v9342 = vadd.f32 %v8925, %v9341
        %v9343 = vpop.f32.mrb[0].mxu0
        %9344 = vmatprep.mubr.f32.mxu0 0.0
        %9345 = vmatmul.mubr.f32.gmra.mrb[0].mxu0 %v9030
        %v9346 = vpop.f32.mrb[0].mxu0
        %v9347 = vadd.f32 %v8925, %v9346
        %v9348 = vpop.f32.mrb[0].mxu0
        %9349 = vmatprep.mubr.f32.mxu0 0.0
        %9350 = vmatmul.mubr.f32.gmra.mrb[0].mxu0 %v9033
        %v9351 = vpop.f32.mrb[0].mxu0
        %v9352 = vadd.f32 %v8925, %v9351
        %v9353 = vpop.f32.mrb[0].mxu0
        %9354 = vmatprep.mubr.f32.mxu0 0.0
        %9355 = vmatmul.mubr.f32.gmra.mrb[0].mxu0 %v9036
        %v9356 = vpop.f32.mrb[0].mxu0
        %v9357 = vadd.f32 %v8925, %v9356
        %v9358 = vpop.f32.mrb[0].mxu0
        %9359 = vmatprep.mubr.f32.mxu0 0.0
        %9360 = vmatmul.mubr.f32.gmra.mrb[0].mxu0 %v9039
        %v9361 = vpop.f32.mrb[0].mxu0
        %v9362 = vadd.f32 %v8925, %v9361
        %v9363 = vpop.f32.mrb[0].mxu0
        %9364 = vmatprep.mubr.f32.mxu0 0.0
        %9365 = vmatmul.mubr.f32.gmra.mrb[0].mxu0 %v9042
        %v9366 = vpop.f32.mrb[0].mxu0
        %v9367 = vadd.f32 %v8925, %v9366
        %v9368 = vpop.f32.mrb[0].mxu0
        %9369 = vmatprep.mubr.f32.mxu0 0.0
        %9370 = vmatmul.mubr.f32.gmra.mrb[0].mxu0 %v9045
        %v9371 = vpop.f32.mrb[0].mxu0
        %v9372 = vadd.f32 %v8925, %v9371
        %v9373 = vpop.f32.mrb[0].mxu0
        %9374 = vmatprep.mubr.f32.mxu0 0.0
        %9375 = vmatmul.mubr.f32.gmra.mrb[0].mxu0 %v9048
        %v9376 = vpop.f32.mrb[0].mxu0
        %v9377 = vadd.f32 %v8925, %v9376
        %v9378 = vpop.f32.mrb[0].mxu0
        %9379 = vmatprep.mubr.f32.mxu0 0.0
        %9380 = vmatmul.mubr.f32.gmra.mrb[0].mxu0 %v9051
        %v9381 = vpop.f32.mrb[0].mxu0
        %v9382 = vadd.f32 %v8925, %v9381
        %v9383 = vpop.f32.mrb[0].mxu0
        %9384 = vmatprep.mubr.f32.mxu0 0.0
        %9385 = vmatmul.mubr.f32.gmra.mrb[0].mxu0 %v9054
        %v9386 = vpop.f32.mrb[0].mxu0
        %v9387 = vadd.f32 %v8925, %v9386
        %v9388 = vpop.f32.mrb[0].mxu0
        %9389 = vmatprep.mubr.f32.mxu0 0.0
        %9390 = vmatmul.mubr.f32.gmra.mrb[0].mxu0 %v9057
        %v9391 = vpop.f32.mrb[0].mxu0
        %v9392 = vadd.f32 %v8925, %v9391
        %v9393 = vpop.f32.mrb[0].mxu0
        %9394 = vmatprep.mubr.f32.mxu0 0.0
        %9395 = vmatmul.mubr.f32.gmra.mrb[0].mxu0 %v9060
        %v9396 = vpop.f32.mrb[0].mxu0
        %v9397 = vadd.f32 %v8925, %v9396
        %v9398 = vpop.f32.mrb[0].mxu0
        %9399 = vmatprep.mubr.f32.mxu0 0.0
        %9400 = vmatmul.mubr.f32.gmra.mrb[0].mxu0 %v9063
        %v9401 = vpop.f32.mrb[0].mxu0
        %v9402 = vadd.f32 %v8925, %v9401
        %v9403 = vpop.f32.mrb[0].mxu0
        %9404 = vmatprep.mubr.f32.mxu0 0.0
        %9405 = vmatmul.mubr.f32.gmra.mrb[0].mxu0 %v9066
        %v9406 = vpop.f32.mrb[0].mxu0
        %v9407 = vadd.f32 %v8925, %v9406
        %v9408 = vpop.f32.mrb[0].mxu0
        %9409 = vmatprep.mubr.f32.mxu0 0.0
        %9410 = vmatmul.mubr.f32.gmra.mrb[0].mxu0 %v9069
        %v9411 = vpop.f32.mrb[0].mxu0
        %v9412 = vadd.f32 %v8925, %v9411
        %v9413 = vpop.f32.mrb[0].mxu0
        %9414 = vmatprep.mubr.f32.mxu0 0.0
        %9415 = vmatmul.mubr.f32.gmra.mrb[0].mxu0 %v9072
        %v9416 = vpop.f32.mrb[0].mxu0
        %v9417 = vadd.f32 %v8925, %v9416
        %v9418 = vpop.f32.mrb[0].mxu0
        %9419 = vmatprep.mubr.f32.mxu0 0.0
        %9420 = vmatmul.mubr.f32.gmra.mrb[0].mxu0 %v9075
        %v9421 = vpop.f32.mrb[0].mxu0
        %v9422 = vadd.f32 %v8925, %v9421
        %v9423 = vpop.f32.mrb[0].mxu0
        %9424 = vmatprep.mubr.f32.mxu0 0.0
        %9425 = vmatmul.mubr.f32.gmra.mrb[0].mxu0 %v9078
        %v9426 = vpop.f32.mrb[0].mxu0
        %v9427 = vadd.f32 %v8925, %v9426
        %v9428 = vpop.f32.mrb[0].mxu0
        %9429 = vmatprep.mubr.f32.mxu0 0.0
        %9430 = vmatmul.mubr.f32.gmra.mrb[0].mxu0 %v9081
        %v9431 = vpop.f32.mrb[0].mxu0
        %v9432 = vadd.f32 %v8925, %v9431
        %v9433 = vpop.f32.mrb[0].mxu0
        %9434 = vmatprep.mubr.f32.mxu0 0.0
        %9435 = vmatmul.mubr.f32.gmra.mrb[0].mxu0 %v9084
        %v9436 = vpop.f32.mrb[0].mxu0
        %v9437 = vadd.f32 %v8925, %v9436
        %v9438 = vpop.f32.mrb[0].mxu0
        %9439 = vmatprep.mubr.f32.mxu0 0.0
        %9440 = vmatmul.mubr.f32.gmra.mrb[0].mxu0 %v9087
        %v9441 = vpop.f32.mrb[0].mxu0
        %v9442 = vadd.f32 %v8925, %v9441
        %v9443 = vpop.f32.mrb[0].mxu0
        %9444 = vmatprep.mubr.f32.mxu0 0.0
        %9445 = vmatmul.mubr.f32.gmra.mrb[0].mxu0 %v9090
        %v9446 = vpop.f32.mrb[0].mxu0
        %v9447 = vadd.f32 %v8925, %v9446
        %v9448 = vpop.f32.mrb[0].mxu0
        %9449 = vmatprep.mubr.f32.mxu0 0.0
        %9450 = vmatmul.mubr.f32.gmra.mrb[0].mxu0 %v9093
        %v9451 = vpop.f32.mrb[0].mxu0
        %v9452 = vadd.f32 %v8925, %v9451
        %v9453 = vpop.f32.mrb[0].mxu0
        %9454 = vmatprep.mubr.f32.mxu0 0.0
        %9455 = vmatmul.mubr.f32.gmra.mrb[0].mxu0 %v9096
        %v9456 = vpop.f32.mrb[0].mxu0
        %v9457 = vadd.f32 %v8925, %v9456
        %v9458 = vpop.f32.mrb[0].mxu0
        %9459 = vmatprep.mubr.f32.mxu0 0.0
        %9460 = vmatmul.mubr.f32.gmra.mrb[0].mxu0 %v9099
        %v9461 = vpop.f32.mrb[0].mxu0
        %v9462 = vadd.f32 %v8925, %v9461
        %v9463 = vpop.f32.mrb[0].mxu0
        %9464 = vmatprep.mubr.f32.mxu0 0.0
        %9465 = vmatmul.mubr.f32.gmra.mrb[0].mxu0 %v9102
        %v9466 = vpop.f32.mrb[0].mxu0
        %v9467 = vadd.f32 %v8925, %v9466
        %v9468 = vpop.f32.mrb[0].mxu0
        %9469 = vmatprep.mubr.f32.mxu0 0.0
        %9470 = vmatmul.mubr.f32.gmra.mrb[0].mxu0 %v9105
        %v9471 = vpop.f32.mrb[0].mxu0
        %v9472 = vadd.f32 %v8925, %v9471
        %v9473 = vpop.f32.mrb[0].mxu0
        %9474 = vdwg.mxu0
        %v9475 = vmax.f32 %v9177, 0.0
        %v9476 = vmax.f32 %v9182, 0.0
        %v9477 = vmax.f32 %v9187, 0.0
        %v9478 = vmax.f32 %v9192, 0.0
        %v9479 = vmax.f32 %v9197, 0.0
        %v9480 = vmax.f32 %v9202, 0.0
        %v9481 = vmax.f32 %v9207, 0.0
        %v9482 = vmax.f32 %v9212, 0.0
        %v9483 = vmax.f32 %v9217, 0.0
        %v9484 = vmax.f32 %v9222, 0.0
        %v9485 = vmax.f32 %v9227, 0.0
        %v9486 = vmax.f32 %v9232, 0.0
        %v9487 = vmax.f32 %v9237, 0.0
        %v9488 = vmax.f32 %v9242, 0.0
        %v9489 = vmax.f32 %v9247, 0.0
        %v9490 = vmax.f32 %v9252, 0.0
        %v9491 = vmax.f32 %v9257, 0.0
        %v9492 = vmax.f32 %v9262, 0.0
        %v9493 = vmax.f32 %v9267, 0.0
        %v9494 = vmax.f32 %v9272, 0.0
        %v9495 = vmax.f32 %v9277, 0.0
        %v9496 = vmax.f32 %v9282, 0.0
        %v9497 = vmax.f32 %v9287, 0.0
        %v9498 = vmax.f32 %v9292, 0.0
        %v9499 = vmax.f32 %v9297, 0.0
        %v9500 = vmax.f32 %v9302, 0.0
        %v9501 = vmax.f32 %v9307, 0.0
        %v9502 = vmax.f32 %v9312, 0.0
        %v9503 = vmax.f32 %v9317, 0.0
        %v9504 = vmax.f32 %v9322, 0.0
        %v9505 = vmax.f32 %v9327, 0.0
        %v9506 = vmax.f32 %v9332, 0.0
        %v9507 = vmax.f32 %v9337, 0.0
        %v9508 = vmax.f32 %v9342, 0.0
        %v9509 = vmax.f32 %v9347, 0.0
        %v9510 = vmax.f32 %v9352, 0.0
        %v9511 = vmax.f32 %v9357, 0.0
        %v9512 = vmax.f32 %v9362, 0.0
        %v9513 = vmax.f32 %v9367, 0.0
        %v9514 = vmax.f32 %v9372, 0.0
        %v9515 = vmax.f32 %v9377, 0.0
        %v9516 = vmax.f32 %v9382, 0.0
        %v9517 = vmax.f32 %v9387, 0.0
        %v9518 = vmax.f32 %v9392, 0.0
        %v9519 = vmax.f32 %v9397, 0.0
        %v9520 = vmax.f32 %v9402, 0.0
        %v9521 = vmax.f32 %v9407, 0.0
        %v9522 = vmax.f32 %v9412, 0.0
        %v9523 = vmax.f32 %v9417, 0.0
        %v9524 = vmax.f32 %v9422, 0.0
        %v9525 = vmax.f32 %v9427, 0.0
        %v9526 = vmax.f32 %v9432, 0.0
        %v9527 = vmax.f32 %v9437, 0.0
        %v9528 = vmax.f32 %v9442, 0.0
        %v9529 = vmax.f32 %v9447, 0.0
        %v9530 = vmax.f32 %v9452, 0.0
        %v9531 = vmax.f32 %v9457, 0.0
        %v9532 = vmax.f32 %v9462, 0.0
        %v9533 = vmax.f32 %v9467, 0.0
        %v9534 = vmax.f32 %v9472, 0.0
        %9595 = vrot.lane.b32.xlu0 %v9475, 24
        %v9596 = vpop.permute.xlu0 %9595
        %9597 = vrot.lane.b32.xlu0 %v9476, 24
        %v9598 = vpop.permute.xlu0 %9597
        %9599 = vrot.lane.b32.xlu0 %v9477, 24
        %v9600 = vpop.permute.xlu0 %9599
        %9601 = vrot.lane.b32.xlu0 %v9478, 24
        %v9602 = vpop.permute.xlu0 %9601
        %9603 = vrot.lane.b32.xlu0 %v9479, 24
        %v9604 = vpop.permute.xlu0 %9603
        %9605 = vrot.lane.b32.xlu0 %v9480, 24
        %v9606 = vpop.permute.xlu0 %9605
        %9607 = vrot.lane.b32.xlu0 %v9481, 24
        %v9608 = vpop.permute.xlu0 %9607
        %9609 = vrot.lane.b32.xlu0 %v9482, 24
        %v9610 = vpop.permute.xlu0 %9609
        %9611 = vrot.lane.b32.xlu0 %v9483, 24
        %v9612 = vpop.permute.xlu0 %9611
        %9613 = vrot.lane.b32.xlu0 %v9484, 24
        %v9614 = vpop.permute.xlu0 %9613
        %9615 = vrot.lane.b32.xlu0 %v9485, 24
        %v9616 = vpop.permute.xlu0 %9615
        %9617 = vrot.lane.b32.xlu0 %v9486, 24
        %v9618 = vpop.permute.xlu0 %9617
        %9619 = vrot.lane.b32.xlu0 %v9487, 24
        %v9620 = vpop.permute.xlu0 %9619
        %9621 = vrot.lane.b32.xlu0 %v9488, 24
        %v9622 = vpop.permute.xlu0 %9621
        %9623 = vrot.lane.b32.xlu0 %v9489, 24
        %v9624 = vpop.permute.xlu0 %9623
        %9625 = vrot.lane.b32.xlu0 %v9490, 24
        %v9626 = vpop.permute.xlu0 %9625
        %9627 = vrot.lane.b32.xlu0 %v9491, 24
        %v9628 = vpop.permute.xlu0 %9627
        %9629 = vrot.lane.b32.xlu0 %v9492, 24
        %v9630 = vpop.permute.xlu0 %9629
        %9631 = vrot.lane.b32.xlu0 %v9493, 24
        %v9632 = vpop.permute.xlu0 %9631
        %9633 = vrot.lane.b32.xlu0 %v9494, 24
        %v9634 = vpop.permute.xlu0 %9633
        %9635 = vrot.lane.b32.xlu0 %v9495, 24
        %v9636 = vpop.permute.xlu0 %9635
        %9637 = vrot.lane.b32.xlu0 %v9496, 24
        %v9638 = vpop.permute.xlu0 %9637
        %9639 = vrot.lane.b32.xlu0 %v9497, 24
        %v9640 = vpop.permute.xlu0 %9639
        %9641 = vrot.lane.b32.xlu0 %v9498, 24
        %v9642 = vpop.permute.xlu0 %9641
        %9643 = vrot.lane.b32.xlu0 %v9499, 24
        %v9644 = vpop.permute.xlu0 %9643
        %9645 = vrot.lane.b32.xlu0 %v9500, 24
        %v9646 = vpop.permute.xlu0 %9645
        %9647 = vrot.lane.b32.xlu0 %v9501, 24
        %v9648 = vpop.permute.xlu0 %9647
        %9649 = vrot.lane.b32.xlu0 %v9502, 24
        %v9650 = vpop.permute.xlu0 %9649
        %9651 = vrot.lane.b32.xlu0 %v9503, 24
        %v9652 = vpop.permute.xlu0 %9651
        %9653 = vrot.lane.b32.xlu0 %v9504, 24
        %v9654 = vpop.permute.xlu0 %9653
        %9655 = vrot.lane.b32.xlu0 %v9505, 24
        %v9656 = vpop.permute.xlu0 %9655
        %9657 = vrot.lane.b32.xlu0 %v9506, 24
        %v9658 = vpop.permute.xlu0 %9657
        %9659 = vrot.lane.b32.xlu0 %v9507, 24
        %v9660 = vpop.permute.xlu0 %9659
        %9661 = vrot.lane.b32.xlu0 %v9508, 24
        %v9662 = vpop.permute.xlu0 %9661
        %9663 = vrot.lane.b32.xlu0 %v9509, 24
        %v9664 = vpop.permute.xlu0 %9663
        %9665 = vrot.lane.b32.xlu0 %v9510, 24
        %v9666 = vpop.permute.xlu0 %9665
        %9667 = vrot.lane.b32.xlu0 %v9511, 24
        %v9668 = vpop.permute.xlu0 %9667
        %9669 = vrot.lane.b32.xlu0 %v9512, 24
        %v9670 = vpop.permute.xlu0 %9669
        %9671 = vrot.lane.b32.xlu0 %v9513, 24
        %v9672 = vpop.permute.xlu0 %9671
        %9673 = vrot.lane.b32.xlu0 %v9514, 24
        %v9674 = vpop.permute.xlu0 %9673
        %9675 = vrot.lane.b32.xlu0 %v9515, 24
        %v9676 = vpop.permute.xlu0 %9675
        %9677 = vrot.lane.b32.xlu0 %v9516, 24
        %v9678 = vpop.permute.xlu0 %9677
        %9679 = vrot.lane.b32.xlu0 %v9517, 24
        %v9680 = vpop.permute.xlu0 %9679
        %9681 = vrot.lane.b32.xlu0 %v9518, 24
        %v9682 = vpop.permute.xlu0 %9681
        %9683 = vrot.lane.b32.xlu0 %v9519, 24
        %v9684 = vpop.permute.xlu0 %9683
        %9685 = vrot.lane.b32.xlu0 %v9520, 24
        %v9686 = vpop.permute.xlu0 %9685
        %9687 = vrot.lane.b32.xlu0 %v9521, 24
        %v9688 = vpop.permute.xlu0 %9687
        %9689 = vrot.lane.b32.xlu0 %v9522, 24
        %v9690 = vpop.permute.xlu0 %9689
        %9691 = vrot.lane.b32.xlu0 %v9523, 24
        %v9692 = vpop.permute.xlu0 %9691
        %9693 = vrot.lane.b32.xlu0 %v9524, 24
        %v9694 = vpop.permute.xlu0 %9693
        %9695 = vrot.lane.b32.xlu0 %v9525, 24
        %v9696 = vpop.permute.xlu0 %9695
        %9697 = vrot.lane.b32.xlu0 %v9526, 24
        %v9698 = vpop.permute.xlu0 %9697
        %9699 = vrot.lane.b32.xlu0 %v9527, 24
        %v9700 = vpop.permute.xlu0 %9699
        %9701 = vrot.lane.b32.xlu0 %v9528, 24
        %v9702 = vpop.permute.xlu0 %9701
        %9703 = vrot.lane.b32.xlu0 %v9529, 24
        %v9704 = vpop.permute.xlu0 %9703
        %9705 = vrot.lane.b32.xlu0 %v9530, 24
        %v9706 = vpop.permute.xlu0 %9705
        %9707 = vrot.lane.b32.xlu0 %v9531, 24
        %v9708 = vpop.permute.xlu0 %9707
        %9709 = vrot.lane.b32.xlu0 %v9532, 24
        %v9710 = vpop.permute.xlu0 %9709
        %9711 = vrot.lane.b32.xlu0 %v9533, 24
        %v9712 = vpop.permute.xlu0 %9711
        %9713 = vrot.lane.b32.xlu0 %v9534, 24
        %v9714 = vpop.permute.xlu0 %9713
        %vm9775 = vcmask 1047744
        %9776 = vst.msk [vmem:[%s325] sm:$0xff] %vm9775, %v9596
        %9777 = vst.msk [vmem:[%s325 + $0x8] sm:$0xff] %vm9775, %v9598
        %9778 = vst.msk [vmem:[%s325 + $0x10] sm:$0xff] %vm9775, %v9600
        %9779 = vst.msk [vmem:[%s325 + $0x18] sm:$0xff] %vm9775, %v9602
        %9780 = vst.msk [vmem:[%s325 + $0x20] sm:$0xff] %vm9775, %v9604
        %9781 = vst.msk [vmem:[%s325 + $0x28] sm:$0xff] %vm9775, %v9606
        %9782 = vst.msk [vmem:[%s325 + $0x30] sm:$0xff] %vm9775, %v9608
        %9783 = vst.msk [vmem:[%s325 + $0x38] sm:$0xff] %vm9775, %v9610
        %9784 = vst.msk [vmem:[%s325 + $0x40] sm:$0xff] %vm9775, %v9612
        %9785 = vst.msk [vmem:[%s325 + $0x48] sm:$0xff] %vm9775, %v9614
        %9786 = vst.msk [vmem:[%s325 + $0x50] sm:$0xff] %vm9775, %v9616
        %9787 = vst.msk [vmem:[%s325 + $0x58] sm:$0xff] %vm9775, %v9618
        %9788 = vst.msk [vmem:[%s325 + $0x60] sm:$0xff] %vm9775, %v9620
        %9789 = vst.msk [vmem:[%s325 + $0x68] sm:$0xff] %vm9775, %v9622
        %9790 = vst.msk [vmem:[%s325 + $0x70] sm:$0xff] %vm9775, %v9624
        %9791 = vst.msk [vmem:[%s325 + $0x78] sm:$0xff] %vm9775, %v9626
        %9792 = vst.msk [vmem:[%s325 + $0x80] sm:$0xff] %vm9775, %v9628
        %9793 = vst.msk [vmem:[%s325 + $0x88] sm:$0xff] %vm9775, %v9630
        %9794 = vst.msk [vmem:[%s325 + $0x90] sm:$0xff] %vm9775, %v9632
        %9795 = vst.msk [vmem:[%s325 + $0x98] sm:$0xff] %vm9775, %v9634
        %9796 = vst.msk [vmem:[%s325 + $0xa0] sm:$0xff] %vm9775, %v9636
        %9797 = vst.msk [vmem:[%s325 + $0xa8] sm:$0xff] %vm9775, %v9638
        %9798 = vst.msk [vmem:[%s325 + $0xb0] sm:$0xff] %vm9775, %v9640
        %9799 = vst.msk [vmem:[%s325 + $0xb8] sm:$0xff] %vm9775, %v9642
        %9800 = vst.msk [vmem:[%s325 + $0xc0] sm:$0xff] %vm9775, %v9644
        %9801 = vst.msk [vmem:[%s325 + $0xc8] sm:$0xff] %vm9775, %v9646
        %9802 = vst.msk [vmem:[%s325 + $0xd0] sm:$0xff] %vm9775, %v9648
        %9803 = vst.msk [vmem:[%s325 + $0xd8] sm:$0xff] %vm9775, %v9650
        %9804 = vst.msk [vmem:[%s325 + $0xe0] sm:$0xff] %vm9775, %v9652
        %9805 = vst.msk [vmem:[%s325 + $0xe8] sm:$0xff] %vm9775, %v9654
        %9806 = vst.msk [vmem:[%s325 + $0xf0] sm:$0xff] %vm9775, %v9656
        %9807 = vst.msk [vmem:[%s325 + $0xf8] sm:$0xff] %vm9775, %v9658
        %9808 = vst.msk [vmem:[%s325 + $0x100] sm:$0xff] %vm9775, %v9660
        %9809 = vst.msk [vmem:[%s325 + $0x108] sm:$0xff] %vm9775, %v9662
        %9810 = vst.msk [vmem:[%s325 + $0x110] sm:$0xff] %vm9775, %v9664
        %9811 = vst.msk [vmem:[%s325 + $0x118] sm:$0xff] %vm9775, %v9666
        %9812 = vst.msk [vmem:[%s325 + $0x120] sm:$0xff] %vm9775, %v9668
        %9813 = vst.msk [vmem:[%s325 + $0x128] sm:$0xff] %vm9775, %v9670
        %9814 = vst.msk [vmem:[%s325 + $0x130] sm:$0xff] %vm9775, %v9672
        %9815 = vst.msk [vmem:[%s325 + $0x138] sm:$0xff] %vm9775, %v9674
        %9816 = vst.msk [vmem:[%s325 + $0x140] sm:$0xff] %vm9775, %v9676
        %9817 = vst.msk [vmem:[%s325 + $0x148] sm:$0xff] %vm9775, %v9678
        %9818 = vst.msk [vmem:[%s325 + $0x150] sm:$0xff] %vm9775, %v9680
        %9819 = vst.msk [vmem:[%s325 + $0x158] sm:$0xff] %vm9775, %v9682
        %9820 = vst.msk [vmem:[%s325 + $0x160] sm:$0xff] %vm9775, %v9684
        %9821 = vst.msk [vmem:[%s325 + $0x168] sm:$0xff] %vm9775, %v9686
        %9822 = vst.msk [vmem:[%s325 + $0x170] sm:$0xff] %vm9775, %v9688
        %9823 = vst.msk [vmem:[%s325 + $0x178] sm:$0xff] %vm9775, %v9690
        %9824 = vst.msk [vmem:[%s325 + $0x180] sm:$0xff] %vm9775, %v9692
        %9825 = vst.msk [vmem:[%s325 + $0x188] sm:$0xff] %vm9775, %v9694
        %9826 = vst.msk [vmem:[%s325 + $0x190] sm:$0xff] %vm9775, %v9696
        %9827 = vst.msk [vmem:[%s325 + $0x198] sm:$0xff] %vm9775, %v9698
        %9828 = vst.msk [vmem:[%s325 + $0x1a0] sm:$0xff] %vm9775, %v9700
        %9829 = vst.msk [vmem:[%s325 + $0x1a8] sm:$0xff] %vm9775, %v9702
        %9830 = vst.msk [vmem:[%s325 + $0x1b0] sm:$0xff] %vm9775, %v9704
        %9831 = vst.msk [vmem:[%s325 + $0x1b8] sm:$0xff] %vm9775, %v9706
        %9832 = vst.msk [vmem:[%s325 + $0x1c0] sm:$0xff] %vm9775, %v9708
        %9833 = vst.msk [vmem:[%s325 + $0x1c8] sm:$0xff] %vm9775, %v9710
        %9834 = vst.msk [vmem:[%s325 + $0x1d0] sm:$0xff] %vm9775, %v9712
        %9835 = vst.msk [vmem:[%s325 + $0x1d8] sm:$0xff] %vm9775, %v9714
        %s9836 = sand.u32 %s225, 1
        %s9837 = scalar_lea.sflag [#allocation6], %s9836
        %s9838 = sand.u32 %s225, 1
        %s9839 = smul.addr %s9838, 480
        %s9840 = scalar_lea.vmem [#allocation5], %s9839
        // Predicated region
        $region57: #{tpu_custom_call.1} parent=55 // pred_check
          %p9841 = pneg %p235
        $region58: #{tpu_custom_call.1} parent=55 // pred_check_branch
          %9843 = sbr.rel (%p9841) target = $region60
        $region59: #{tpu_custom_call.1} parent=55 // pred_region
          %s9845 = ssub.s32 7680, 7680
          %9846 = vsyncadd %s9837, %s9845
          %s9847 = smul.addr %s23, 60
          %s9848 = smul.addr %s9847, 128
          %s9849 = scalar_lea.hbm %s9, %s9848
          %s9850 = sshll.u32 %s9840, 4
          %s9851 = int_to_ptr.vmem [resolvable:$true] %s9850
          %9856 = dma.vmem_to_hbm [thread:$0]  %s9851, 7680, %s9849, %s9837, 128, 128, 8
        $region60: #{tpu_custom_call.1} parent=55 // pred_fallthru
          _
      $region56: #{tpu_custom_call.1} parent=5 // pred_fallthru
        _
      %p9857 = scmp.le.s32.totalorder 2, %s18
      // Predicated region
      $region61: #{tpu_custom_call.1} parent=5 // pred_check
        %p9858 = pneg %p9857
      $region62: #{tpu_custom_call.1} parent=5 // pred_check_branch
        %9860 = sbr.rel (%p9858) target = $region64
      $region63: #{tpu_custom_call.1} parent=5 // pred_region
        %s9861 = ssub.s32 %s18, 2
        // Predicated region
        $region65: #{tpu_custom_call.1} parent=63 // pred_check
          %p9862 = pneg %p241
        $region66: #{tpu_custom_call.1} parent=63 // pred_check_branch
          %9864 = sbr.rel (%p9862) target = $region68
        $region67: #{tpu_custom_call.1} parent=63 // pred_region
          %s9865 = sand.u32 %s226, 1
          %s9866 = scalar_lea.sflag [#allocation6], %s9865
          %s9867 = sand.u32 %s226, 1
          %s9868 = smul.addr %s9867, 480
          %s9869 = scalar_lea.vmem [#allocation5], %s9868
          %9870 = dma.done %s9866, 7680
        $region68: #{tpu_custom_call.1} parent=63 // pred_fallthru
          _
      $region64: #{tpu_custom_call.1} parent=5 // pred_fallthru
        _
    $region6: #{tpu_custom_call.1} parent=1 // loop_footer
      %s22 = sadd.s32 1, %s18
    $region7: #{tpu_custom_call.1} parent=1 // loop_footer_branch
      %17 = sbr.rel target = $region3
    $region8: #{tpu_custom_call.1} parent=1 // loop_exit
      _
    %9871 = vsyncpa [#allocation6], 1
    %s9872 = scalar_lea.sflag [#allocation6], 1
    %9873 = vsyncpa %s9872, 1

</llo_original>
